<compile_context>
chip_gen: v7x
topology: tpu7x:2x2x1
jax: 0.10.0
libtpu: 0.0.40
codegen_flags: <defaults>
</compile_context>

<pallas_src>
import functools
from math import sqrt

import jax
import jax.numpy as jnp
from jax.experimental import pallas as pl
from jax.experimental.pallas import tpu as pltpu

EPS_LN = 1e-5
EPS_BN = 1e-5

_VMEM_LIMIT = None


def _vmem_limit_bytes():
    # Generation aware: ~3/4 of physical VMEM, capped at 100 MiB.
    # v5e/v6e (128 MiB) -> 96 MiB; v7x (64 MiB) -> 48 MiB; unknown -> 48 MiB.
    global _VMEM_LIMIT
    if _VMEM_LIMIT is None:
        cap = 64 * 1024 * 1024
        try:
            cap = int(pltpu.get_tpu_info().vmem_capacity_bytes)
        except Exception:
            pass
        _VMEM_LIMIT = min(100 * 1024 * 1024, (cap * 3) // 4)
    return _VMEM_LIMIT


def _cparams(*sem):
    return pltpu.CompilerParams(
        dimension_semantics=sem,
        vmem_limit_bytes=_vmem_limit_bytes(),
    )


def _pick_row_tile(L):
    for t in (256, 128, 64, 32, 16, 8):
        if L % t == 0:
            return t
    return L


# ----------------------------- in-kernel helpers -----------------------------

def _ln(x, g, b):
    mu = jnp.mean(x, axis=-1, keepdims=True)
    var = jnp.mean((x - mu) ** 2, axis=-1, keepdims=True)
    return (x - mu) * jax.lax.rsqrt(var + EPS_LN) * g + b


def _gelu_exact(x):
    # Exact (erf-based) GELU via the Abramowitz-Stegun 7.1.26 rational
    # approximation (|abs err| < 1.5e-7), built from add/mul/exp/where only.
    # TODO(synk): switch to lax.erf once its Mosaic lowering is guaranteed.
    z = x * 0.7071067811865476
    az = jnp.abs(z)
    t = 1.0 / (1.0 + 0.3275911 * az)
    poly = t * (0.254829592 + t * (-0.284496736 + t * (1.421413741
             + t * (-1.453152027 + t * 1.061405429))))
    erf_abs = 1.0 - poly * jnp.exp(-az * az)
    erf_z = jnp.where(z < 0.0, -erf_abs, erf_abs)
    return 0.5 * x * (1.0 + erf_z)


# -------------------- kernel 1: LN1 + q proj + reduce conv --------------------

def _stage1_kernel(x_ref, g_ref, b_ref, qw_ref, qb_ref, rw_ref, rs_ref,
                   q_ref, r_ref):
    x = x_ref[0].astype(jnp.float32)                       # (tile, C)
    xn = _ln(x, g_ref[...], b_ref[...])
    # Single full-width q projection -> lane-dense (tile, C), heads packed in C.
    q = jnp.dot(xn, qw_ref[...], preferred_element_type=jnp.float32) + qb_ref[...]
    q_ref[0] = q.astype(q_ref.dtype)
    # reduce 1x1 conv + folded BN + ReLU
    r = jnp.dot(xn, rw_ref[...], preferred_element_type=jnp.float32) + rs_ref[...]
    r_ref[0] = jnp.maximum(r, 0.0).astype(r_ref.dtype)


def stage1(x, ln_g, ln_b, qw, qb, red_w, red_shift, *, row_tile):
    B, L, C = x.shape
    Cq = red_w.shape[1]
    T = L // row_tile
    q, r = pl.pallas_call(
        _stage1_kernel,
        grid=(B, T),
        in_specs=[
            pl.BlockSpec((1, row_tile, C), lambda b, t: (b, t, 0)),
            pl.BlockSpec((1, C), lambda b, t: (0, 0)),
            pl.BlockSpec((1, C), lambda b, t: (0, 0)),
            pl.BlockSpec((C, C), lambda b, t: (0, 0)),
            pl.BlockSpec((1, C), lambda b, t: (0, 0)),
            pl.BlockSpec((C, Cq), lambda b, t: (0, 0)),
            pl.BlockSpec((1, Cq), lambda b, t: (0, 0)),
        ],
        out_specs=[
            pl.BlockSpec((1, row_tile, C), lambda b, t: (b, t, 0)),
            pl.BlockSpec((1, row_tile, Cq), lambda b, t: (b, t, 0)),
        ],
        out_shape=[
            jax.ShapeDtypeStruct((B, L, C), x.dtype),
            jax.ShapeDtypeStruct((B, L, Cq), x.dtype),
        ],
        compiler_params=_cparams("parallel", "parallel"),
    )(x, ln_g, ln_b, qw, qb, red_w, red_shift)
    return q, r


# ---- kernel 2: (DWT folded) 3x3 filter conv + BN + ReLU + Haar IDWT butterfly ----

def _filter_kernel(xp_ref, w_ref, sh_ref, df_ref, iw_ref, *, h2, wp, cq):
    # xp_ref: (1, Np+2, C) flattened zero-padded space-to-depth feature map.
    # 3x3 conv as 9 shifted matmul accumulations on the VMEM tile.  Each row of
    # output has wp = W2+2 columns; last 2 are junk, dropped in the wrapper.
    n_out = h2 * wp
    c_out = w_ref.shape[-1]
    acc = jnp.zeros((n_out, c_out), jnp.float32)
    for t in range(9):
        kh, kw = divmod(t, 3)
        base = kh * wp + kw
        patch = xp_ref[0, base:base + n_out, :].astype(jnp.float32)
        acc = acc + jnp.dot(patch, w_ref[t], preferred_element_type=jnp.float32)
    y = jnp.maximum(acc + sh_ref[...], 0.0)                # folded BN + ReLU
    df_ref[0] = y.astype(df_ref.dtype)                     # filtered DWT map
    # Haar IDWT = structured +/-0.5 butterfly over the 4 channel quadrants (VPU).
    y0 = y[:, 0 * cq:1 * cq]
    y1 = y[:, 1 * cq:2 * cq]
    y2 = y[:, 2 * cq:3 * cq]
    y3 = y[:, 3 * cq:4 * cq]
    su = y0 + y1
    sv = y2 + y3
    du = y0 - y1
    dv = y2 - y3
    iw = jnp.concatenate(
        [0.5 * (su + sv), 0.5 * (su - sv), 0.5 * (du + dv), 0.5 * (du - dv)],
        axis=-1)
    iw_ref[0] = iw.astype(iw_ref.dtype)                    # s2d-layout IDWT


def dwt_filter_idwt(xp_flat, w_filt, filt_shift, *, h2, wp, cq):
    B, Np2, C = xp_flat.shape
    n_out = h2 * wp
    df, iw = pl.pallas_call(
        functools.partial(_filter_kernel, h2=h2, wp=wp, cq=cq),
        grid=(B,),
        in_specs=[
            pl.BlockSpec((1, Np2, C), lambda b: (b, 0, 0)),
            pl.BlockSpec((9, C, C), lambda b: (0, 0, 0)),
            pl.BlockSpec((1, C), lambda b: (0, 0)),
        ],
        out_specs=[
            pl.BlockSpec((1, n_out, C), lambda b: (b, 0, 0)),
            pl.BlockSpec((1, n_out, C), lambda b: (b, 0, 0)),
        ],
        out_shape=[jax.ShapeDtypeStruct((B, n_out, C), xp_flat.dtype)] * 2,
        compiler_params=_cparams("parallel"),
    )(xp_flat, w_filt, filt_shift)
    return df, iw


# ---- kernel 3: kv-LN + kv proj (cached) + attention + proj + residual ----

def _attn_proj_kernel(x_ref, q_ref, xdf_ref, xidwt_ref,
                      lng_ref, lnb_ref, wkv_ref, bkv_ref,
                      pw1_ref, pw2_ref, pb_ref,
                      x1_ref, probs_ref,
                      k_scr, v_scr, *, num_heads, head_dim, scale):
    C = num_heads * head_dim

    # k/v depend only on the batch index: compute once per b (query-tile 0) with
    # a single (Lk,C)x(C,2C) matmul and keep them resident in VMEM scratch.
    @pl.when(pl.program_id(1) == 0)
    def _():
        kvn = _ln(xdf_ref[0].astype(jnp.float32), lng_ref[...], lnb_ref[...])
        kv = jnp.dot(kvn, wkv_ref[...],
                     preferred_element_type=jnp.float32) + bkv_ref[...]
        k_scr[...] = kv[:, :C]                             # heads packed in C
        v_scr[...] = kv[:, C:]

    k = k_scr[...]
    v = v_scr[...]

    # residual + x_idwt half of the proj (no concat materialized)
    acc = x_ref[0].astype(jnp.float32)
    acc = acc + jnp.dot(xidwt_ref[0].astype(jnp.float32), pw2_ref[...],
                        preferred_element_type=jnp.float32)
    acc = acc + pb_ref[...]

    q_all = q_ref[0].astype(jnp.float32) * scale           # (tile, C) lane-dense
    outs, ps = [], []
    for h in range(num_heads):
        lo = h * head_dim
        qh = q_all[:, lo:lo + head_dim]
        kh = k[:, lo:lo + head_dim]
        vh = v[:, lo:lo + head_dim]
        s = jax.lax.dot_general(qh, kh, (((1,), (1,)), ((), ())),
                                preferred_element_type=jnp.float32)  # (tile, Lk)
        m = jnp.max(s, axis=-1, keepdims=True)
        e = jnp.exp(s - m)
        inv = 1.0 / jnp.sum(e, axis=-1, keepdims=True)     # one recip per row
        p = e * inv
        ps.append(p)
        outs.append(jnp.dot(p, vh, preferred_element_type=jnp.float32))
    probs_ref[0] = jnp.stack(ps, axis=0).astype(probs_ref.dtype)    # one store
    attn_cat = jnp.concatenate(outs, axis=-1)              # (tile, C) lane-dense
    acc = acc + jnp.dot(attn_cat, pw1_ref[...], preferred_element_type=jnp.float32)
    x1_ref[0] = acc.astype(x1_ref.dtype)


def attn_proj_residual(x, q_all, x_dwt_f, x_idwt, prm, *, num_heads, scale,
                       row_tile):
    B, L, C = x.shape
    nh = num_heads
    hd = C // nh
    Lk = x_dwt_f.shape[1]
    Cq = x_idwt.shape[2]
    T = L // row_tile
    x1, probs = pl.pallas_call(
        functools.partial(_attn_proj_kernel, num_heads=nh, head_dim=hd,
                          scale=scale),
        grid=(B, T),
        in_specs=[
            pl.BlockSpec((1, row_tile, C), lambda b, t: (b, t, 0)),
            pl.BlockSpec((1, row_tile, C), lambda b, t: (b, t, 0)),
            pl.BlockSpec((1, Lk, C), lambda b, t: (b, 0, 0)),
            pl.BlockSpec((1, row_tile, Cq), lambda b, t: (b, t, 0)),
            pl.BlockSpec((1, C), lambda b, t: (0, 0)),
            pl.BlockSpec((1, C), lambda b, t: (0, 0)),
            pl.BlockSpec((C, 2 * C), lambda b, t: (0, 0)),
            pl.BlockSpec((1, 2 * C), lambda b, t: (0, 0)),
            pl.BlockSpec((C, C), lambda b, t: (0, 0)),
            pl.BlockSpec((Cq, C), lambda b, t: (0, 0)),
            pl.BlockSpec((1, C), lambda b, t: (0, 0)),
        ],
        out_specs=[
            pl.BlockSpec((1, row_tile, C), lambda b, t: (b, t, 0)),
            pl.BlockSpec((1, nh, row_tile, Lk), lambda b, t: (b, 0, t, 0)),
        ],
        out_shape=[
            jax.ShapeDtypeStruct((B, L, C), x.dtype),
            jax.ShapeDtypeStruct((B, nh, L, Lk), x.dtype),
        ],
        scratch_shapes=[pltpu.VMEM((Lk, C), jnp.float32),
                        pltpu.VMEM((Lk, C), jnp.float32)],
        compiler_params=_cparams("parallel", "arbitrary"),
    )(x, q_all, x_dwt_f, x_idwt,
      prm["kv_ln_g"], prm["kv_ln_b"], prm["wkv"], prm["bkv"],
      prm["pw1"], prm["pw2"], prm["pb"])
    return x1, probs


# ---------------- kernel 4: LN2 + fc1 + GELU + fc2 + residual ----------------

def _mlp_kernel(x_ref, g_ref, b_ref, w1_ref, b1_ref, w2_ref, b2_ref, o_ref):
    x = x_ref[0].astype(jnp.float32)
    xn = _ln(x, g_ref[...], b_ref[...])
    h = jnp.dot(xn, w1_ref[...], preferred_element_type=jnp.float32) + b1_ref[...]
    h = _gelu_exact(h)
    y = jnp.dot(h, w2_ref[...], preferred_element_type=jnp.float32) + b2_ref[...]
    o_ref[0] = (x + y).astype(o_ref.dtype)


def mlp_residual(x1, g, b, w1, b1, w2, b2, *, row_tile):
    B, L, C = x1.shape
    Hd = w1.shape[1]
    T = L // row_tile
    return pl.pallas_call(
        _mlp_kernel,
        grid=(B, T),
        in_specs=[
            pl.BlockSpec((1, row_tile, C), lambda bb, t: (bb, t, 0)),
            pl.BlockSpec((1, C), lambda bb, t: (0, 0)),
            pl.BlockSpec((1, C), lambda bb, t: (0, 0)),
            pl.BlockSpec((C, Hd), lambda bb, t: (0, 0)),
            pl.BlockSpec((1, Hd), lambda bb, t: (0, 0)),
            pl.BlockSpec((Hd, C), lambda bb, t: (0, 0)),
            pl.BlockSpec((1, C), lambda bb, t: (0, 0)),
        ],
        out_specs=pl.BlockSpec((1, row_tile, C), lambda bb, t: (bb, t, 0)),
        out_shape=jax.ShapeDtypeStruct((B, L, C), x1.dtype),
        compiler_params=_cparams("parallel", "parallel"),
    )(x1, g, b, w1, b1, w2, b2)


# ----------------------------- forward pass -----------------------------

def wavelet_block_forward(x, p, *, num_heads):
    B, L, C = x.shape
    H = W = int(sqrt(L))
    H2, W2 = H // 2, W // 2
    Lk = H2 * W2
    nh = num_heads
    hd = C // nh
    Cq = C // 4
    scale = hd ** (-0.5)
    Wp = W2 + 2                      # padded width of the half-res feature map
    Np = (H2 + 2) * Wp
    row_tile = _pick_row_tile(L)
    f32 = jnp.float32

    # ---- fold / repack parameters into kernel layouts (weight-sized work) ----
    ln1_g = p["norm1_g"].reshape(1, C); ln1_b = p["norm1_b"].reshape(1, C)
    ln2_g = p["norm2_g"].reshape(1, C); ln2_b = p["norm2_b"].reshape(1, C)
    kvg = p["kv_ln_g"].reshape(1, C);   kvb = p["kv_ln_b"].reshape(1, C)

    qw = p["q_w"]                                   # (C, C), heads packed in out dim
    qb = p["q_b"].reshape(1, C)
    wkv = p["kv_w"]                                 # (C, 2C): [:C]=k, [C:]=v (head-packed)
    bkv = p["kv_b"].reshape(1, 2 * C)
    pw1 = p["proj_w"][:C]                           # (C, C)   attn half of proj
    pw2 = p["proj_w"][C:]                           # (Cq, C)  idwt half of proj
    pb = p["proj_b"].reshape(1, C)

    # reduce 1x1 conv + inference BatchNorm folded to scale/shift
    red_w = p["red_w"] * p["red_bn_s"][None, :]
    red_shift = (p["red_b"] * p["red_bn_s"] + p["red_bn_t"]).reshape(1, Cq)

    # Haar block-Hadamard mix, folded into the 3x3 conv weights (DWT side only;
    # the IDWT side is done as a butterfly inside kernel 2).
    had = 0.5 * jnp.array([[1, 1, 1, 1],
                           [1, 1, -1, -1],
                           [1, -1, 1, -1],
                           [1, -1, -1, 1]], f32)
    m_haar = jnp.kron(had, jnp.eye(Cq, dtype=f32))                 # (C, C)

    # filter 3x3 conv (pad 1), PyTorch OIHW -> (tap, in, out), DWT + BN folded
    wf = jnp.transpose(p["filt_w"], (2, 3, 1, 0)).reshape(9, C, C)
    w_filt = jnp.einsum("ij,tjo->tio", m_haar, wf) * p["filt_bn_s"][None, None, :]
    filt_shift = (p["filt_b"] * p["filt_bn_s"] + p["filt_bn_t"]).reshape(1, C)

    # ---- stage 1: LN1 + q projection + reduce conv (fused) ----
    q_all, r = stage1(x, ln1_g, ln1_b, qw, qb, red_w, red_shift,
                      row_tile=row_tile)

    # ---- space-to-depth + zero pad of the reduced map (pure layout, XLA) ----
    # TODO(synk): fold these layout passes into the stage-1/2 out/in specs.
    s2d = jnp.transpose(r.reshape(B, H2, 2, W2, 2, Cq),
                        (0, 1, 3, 2, 4, 5)).reshape(B, H2, W2, C)
    xp = jnp.pad(s2d, ((0, 0), (1, 1), (1, 1), (0, 0)))
    xp_flat = jnp.pad(xp.reshape(B, Np, C), ((0, 0), (0, 2), (0, 0)))

    # ---- stage 2: (DWT folded) filter conv + BN + ReLU + IDWT (fused) ----
    df_slab, iw_slab = dwt_filter_idwt(xp_flat, w_filt, filt_shift,
                                       h2=H2, wp=Wp, cq=Cq)
    x_dwt_f = df_slab.reshape(B, H2, Wp, C)[:, :, :W2, :].reshape(B, Lk, C)
    x_idwt = jnp.transpose(
        iw_slab.reshape(B, H2, Wp, C)[:, :, :W2, :].reshape(B, H2, W2, 2, 2, Cq),
        (0, 1, 3, 2, 4, 5)).reshape(B, L, Cq)

    # ---- stage 3: kv LN + kv proj + attention + proj + residual (fused) ----
    prm = dict(kv_ln_g=kvg, kv_ln_b=kvb, wkv=wkv, bkv=bkv,
               pw1=pw1, pw2=pw2, pb=pb)
    x1, attn_probs = attn_proj_residual(x, q_all, x_dwt_f, x_idwt, prm,
                                        num_heads=nh, scale=scale,
                                        row_tile=row_tile)

    # ---- stage 4: LN2 + fc1 + GELU + fc2 + residual (fused) ----
    out = mlp_residual(x1, ln2_g, ln2_b,
                       p["fc1_w"], p["fc1_b"].reshape(1, -1),
                       p["fc2_w"], p["fc2_b"].reshape(1, C),
                       row_tile=row_tile)
    return out, attn_probs


# ----------------------------- parameter init -----------------------------

def init_params(key, C, mlp_ratio=4.0):
    Cq = C // 4
    hidden = round(C * mlp_ratio)
    ks = jax.random.split(key, 8)

    def tn(k, shape, std=0.02):
        return (std * jax.random.truncated_normal(k, -2.0, 2.0, shape)).astype(jnp.float32)

    p = {}
    p["norm1_g"] = jnp.ones((C,), jnp.float32); p["norm1_b"] = jnp.zeros((C,), jnp.float32)
    p["norm2_g"] = jnp.ones((C,), jnp.float32); p["norm2_b"] = jnp.zeros((C,), jnp.float32)
    p["kv_ln_g"] = jnp.ones((C,), jnp.float32); p["kv_ln_b"] = jnp.zeros((C,), jnp.float32)
    # Linear layers stored as (in, out) for y = x @ W + b
    p["q_w"] = tn(ks[0], (C, C));            p["q_b"] = jnp.zeros((C,), jnp.float32)
    p["kv_w"] = tn(ks[1], (C, 2 * C));       p["kv_b"] = jnp.zeros((2 * C,), jnp.float32)
    p["proj_w"] = tn(ks[2], (C + Cq, C));    p["proj_b"] = jnp.zeros((C,), jnp.float32)
    p["fc1_w"] = tn(ks[3], (C, hidden));     p["fc1_b"] = jnp.zeros((hidden,), jnp.float32)
    p["fc2_w"] = tn(ks[4], (hidden, C));     p["fc2_b"] = jnp.zeros((C,), jnp.float32)
    # reduce conv 1x1 (C -> C/4); BN (inference) as scale/shift
    p["red_w"] = (sqrt(2.0 / (1 * 1 * Cq)) *
                  jax.random.normal(ks[5], (C, Cq))).astype(jnp.float32)
    p["red_b"] = jnp.zeros((Cq,), jnp.float32)
    rg, rb = jnp.ones((Cq,), jnp.float32), jnp.zeros((Cq,), jnp.float32)
    rm, rv = jnp.zeros((Cq,), jnp.float32), jnp.ones((Cq,), jnp.float32)
    p["red_bn_s"] = (rg / jnp.sqrt(rv + EPS_BN)).astype(jnp.float32)
    p["red_bn_t"] = (rb - rm * rg / jnp.sqrt(rv + EPS_BN)).astype(jnp.float32)
    # filter conv 3x3 (C -> C), raw PyTorch layout (O, I, kH, kW)
    p["filt_w"] = (sqrt(2.0 / (3 * 3 * C)) *
                   jax.random.normal(ks[6], (C, C, 3, 3))).astype(jnp.float32)
    p["filt_b"] = jnp.zeros((C,), jnp.float32)
    fg, fb = jnp.ones((C,), jnp.float32), jnp.zeros((C,), jnp.float32)
    fm, fv = jnp.zeros((C,), jnp.float32), jnp.ones((C,), jnp.float32)
    p["filt_bn_s"] = (fg / jnp.sqrt(fv + EPS_BN)).astype(jnp.float32)
    p["filt_bn_t"] = (fb - fm * fg / jnp.sqrt(fv + EPS_BN)).astype(jnp.float32)
    return p


# ----------------------------- pure-JAX reference -----------------------------

def reference_forward(x, p, *, num_heads):
    B, L, C = x.shape
    H = W = int(sqrt(L))
    H2, W2 = H // 2, W // 2
    nh, hd, Cq = num_heads, C // num_heads, C // 4
    scale = hd ** (-0.5)

    def ln(v, g, b):
        mu = v.mean(-1, keepdims=True)
        var = ((v - mu) ** 2).mean(-1, keepdims=True)
        return (v - mu) / jnp.sqrt(var + EPS_LN) * g + b

    xn = ln(x, p["norm1_g"], p["norm1_b"])
    q = (xn @ p["q_w"] + p["q_b"]).reshape(B, L, nh, hd).transpose(0, 2, 1, 3)

    r = (xn @ p["red_w"] + p["red_b"]) * p["red_bn_s"] + p["red_bn_t"]
    r = jnp.maximum(r, 0.0).reshape(B, H, W, Cq)

    a = r[:, 0::2, 0::2]; b_ = r[:, 0::2, 1::2]
    c = r[:, 1::2, 0::2]; d = r[:, 1::2, 1::2]
    x_dwt = jnp.concatenate([0.5 * (a + b_ + c + d), 0.5 * (a + b_ - c - d),
                             0.5 * (a - b_ + c - d), 0.5 * (a - b_ - c + d)],
                            axis=-1)

    wf = jnp.transpose(p["filt_w"], (2, 3, 1, 0))           # HWIO
    y = jax.lax.conv_general_dilated(x_dwt, wf, (1, 1), "SAME",
                                     dimension_numbers=("NHWC", "HWIO", "NHWC"))
    y = jnp.maximum((y + p["filt_b"]) * p["filt_bn_s"] + p["filt_bn_t"], 0.0)

    ll, lh, hl, hh = jnp.split(y, 4, axis=-1)
    idwt = jnp.zeros((B, H, W, Cq), x.dtype)
    idwt = idwt.at[:, 0::2, 0::2].set(0.5 * (ll + lh + hl + hh))
    idwt = idwt.at[:, 0::2, 1::2].set(0.5 * (ll + lh - hl - hh))
    idwt = idwt.at[:, 1::2, 0::2].set(0.5 * (ll - lh + hl - hh))
    idwt = idwt.at[:, 1::2, 1::2].set(0.5 * (ll - lh - hl + hh))
    x_idwt = idwt.reshape(B, L, Cq)

    kvn = ln(y.reshape(B, H2 * W2, C), p["kv_ln_g"], p["kv_ln_b"])
    kv = kvn @ p["kv_w"] + p["kv_b"]
    k = kv[..., :C].reshape(B, -1, nh, hd).transpose(0, 2, 1, 3)
    v = kv[..., C:].reshape(B, -1, nh, hd).transpose(0, 2, 1, 3)

    attn = jnp.einsum("bhqe,bhke->bhqk", q * scale, k)
    attn = jax.nn.softmax(attn, axis=-1)
    xo = jnp.einsum("bhqk,bhke->bhqe", attn, v).transpose(0, 2, 1, 3).reshape(B, L, C)
    xo = jnp.concatenate([xo, x_idwt], axis=-1) @ p["proj_w"] + p["proj_b"]
    x1 = x + xo

    x2n = ln(x1, p["norm2_g"], p["norm2_b"])
    h1 = jax.nn.gelu(x2n @ p["fc1_w"] + p["fc1_b"], approximate=False)
    out = x1 + (h1 @ p["fc2_w"] + p["fc2_b"])
    return out, attn


# ----------------------------- main -----------------------------

if __name__ == "__main__":
    B, C, num_heads, H = 2, 16, 4, 8       # dim=16, patches_resolution=8, sr_ratio=1
    L = H * H
    key = jax.random.PRNGKey(0)
    kx, kp = jax.random.split(key)
    x = jax.random.normal(kx, (B, L, C), dtype=jnp.float32)
    params = init_params(kp, C)

    fwd = jax.jit(functools.partial(wavelet_block_forward, num_heads=num_heads))
    out, attn = fwd(x, params)
    jax.block_until_ready((out, attn))

    assert out.shape == (B, L, C)
    assert attn.shape == (B, num_heads, L, (H // 2) * (H // 2))
    assert bool(jnp.all(jnp.isfinite(out))) and bool(jnp.all(jnp.isfinite(attn)))

    with jax.default_matmul_precision("highest"):
        ref_out, ref_attn = reference_forward(x, params, num_heads=num_heads)
    assert bool(jnp.allclose(out, ref_out, atol=1e-2, rtol=1e-2)), \
        float(jnp.max(jnp.abs(out - ref_out)))
    assert bool(jnp.allclose(attn, ref_attn, atol=1e-2, rtol=1e-2)), \
        float(jnp.max(jnp.abs(attn - ref_attn)))
    print("KERNEL_OK")
</pallas_src>

<mosaic_0001>
module attributes {stable_mosaic.version = 11 : i64} {
  func.func @_stage1_kernel(%arg0: i32, %arg1: i32, %arg2: memref<1x64x16xf32, #tpu.memory_space<vmem>>, %arg3: memref<1x16xf32, #tpu.memory_space<vmem>>, %arg4: memref<1x16xf32, #tpu.memory_space<vmem>>, %arg5: memref<16x16xf32, #tpu.memory_space<vmem>>, %arg6: memref<1x16xf32, #tpu.memory_space<vmem>>, %arg7: memref<16x4xf32, #tpu.memory_space<vmem>>, %arg8: memref<1x4xf32, #tpu.memory_space<vmem>>, %arg9: memref<1x64x16xf32, #tpu.memory_space<vmem>>, %arg10: memref<1x64x4xf32, #tpu.memory_space<vmem>>) attributes {dimension_semantics = [#tpu.dimension_semantics<parallel>, #tpu.dimension_semantics<parallel>], iteration_bounds = array<i64: 2, 1>, scalar_prefetch = 0 : i64, scratch_operands = 0 : i64, tpu.core_type = #tpu.core_type<tc>, window_params = [{transform_indices = @transform_0, window_bounds = array<i64: 1, 64, 16>}, {pipeline_mode = #tpu.pipeline_mode<synchronous>, transform_indices = @transform_1, window_bounds = array<i64: 1, 16>}, {pipeline_mode = #tpu.pipeline_mode<synchronous>, transform_indices = @transform_2, window_bounds = array<i64: 1, 16>}, {pipeline_mode = #tpu.pipeline_mode<synchronous>, transform_indices = @transform_3, window_bounds = array<i64: 16, 16>}, {pipeline_mode = #tpu.pipeline_mode<synchronous>, transform_indices = @transform_4, window_bounds = array<i64: 1, 16>}, {pipeline_mode = #tpu.pipeline_mode<synchronous>, transform_indices = @transform_5, window_bounds = array<i64: 16, 4>}, {pipeline_mode = #tpu.pipeline_mode<synchronous>, transform_indices = @transform_6, window_bounds = array<i64: 1, 4>}, {transform_indices = @transform_7, window_bounds = array<i64: 1, 64, 16>}, {transform_indices = @transform_8, window_bounds = array<i64: 1, 64, 4>}]} {
    %c0 = arith.constant 0 : index
    %c0_0 = arith.constant 0 : index
    %c0_1 = arith.constant 0 : index
    %0 = vector.load %arg2[%c0, %c0_0, %c0_1] : memref<1x64x16xf32, #tpu.memory_space<vmem>>, vector<1x64x16xf32>
    %1 = vector.shape_cast %0 : vector<1x64x16xf32> to vector<64x16xf32>
    %c0_2 = arith.constant 0 : index
    %c0_3 = arith.constant 0 : index
    %2 = vector.load %arg3[%c0_2, %c0_3] : memref<1x16xf32, #tpu.memory_space<vmem>>, vector<1x16xf32>
    %c0_4 = arith.constant 0 : index
    %c0_5 = arith.constant 0 : index
    %3 = vector.load %arg4[%c0_4, %c0_5] : memref<1x16xf32, #tpu.memory_space<vmem>>, vector<1x16xf32>
    %cst = arith.constant dense<0.000000e+00> : vector<64xf32>
    %4 = vector.multi_reduction <add>, %1, %cst [1] : vector<64x16xf32> to vector<64xf32>
    %5 = vector.shape_cast %4 : vector<64xf32> to vector<64x1xf32>
    %cst_6 = arith.constant 1.600000e+01 : f32
    %6 = vector.broadcast %cst_6 : f32 to vector<64x1xf32>
    %7 = arith.divf %5, %6 : vector<64x1xf32>
    %8 = vector.broadcast %7 : vector<64x1xf32> to vector<64x16xf32>
    %9 = arith.subf %1, %8 : vector<64x16xf32>
    %10 = arith.mulf %9, %9 : vector<64x16xf32>
    %cst_7 = arith.constant dense<0.000000e+00> : vector<64xf32>
    %11 = vector.multi_reduction <add>, %10, %cst_7 [1] : vector<64x16xf32> to vector<64xf32>
    %12 = vector.shape_cast %11 : vector<64xf32> to vector<64x1xf32>
    %cst_8 = arith.constant 1.600000e+01 : f32
    %13 = vector.broadcast %cst_8 : f32 to vector<64x1xf32>
    %14 = arith.divf %12, %13 : vector<64x1xf32>
    %15 = vector.broadcast %7 : vector<64x1xf32> to vector<64x16xf32>
    %16 = arith.subf %1, %15 : vector<64x16xf32>
    %cst_9 = arith.constant 9.99999974E-6 : f32
    %17 = vector.broadcast %cst_9 : f32 to vector<64x1xf32>
    %18 = arith.addf %14, %17 : vector<64x1xf32>
    %19 = math.rsqrt %18 : vector<64x1xf32>
    %20 = vector.broadcast %19 : vector<64x1xf32> to vector<64x16xf32>
    %21 = arith.mulf %16, %20 : vector<64x16xf32>
    %22 = vector.broadcast %2 : vector<1x16xf32> to vector<64x16xf32>
    %23 = arith.mulf %21, %22 : vector<64x16xf32>
    %24 = vector.broadcast %3 : vector<1x16xf32> to vector<64x16xf32>
    %25 = arith.addf %23, %24 : vector<64x16xf32>
    %c0_10 = arith.constant 0 : index
    %c0_11 = arith.constant 0 : index
    %26 = vector.load %arg5[%c0_10, %c0_11] : memref<16x16xf32, #tpu.memory_space<vmem>>, vector<16x16xf32>
    %cst_12 = arith.constant dense<0.000000e+00> : vector<64x16xf32>
    %27 = tpu.matmul %25, %26, %cst_12 {dimension_numbers = #tpu.dot_dimension_numbers<[1], [0], [0], [1], [0, 0, 1, 1], [], []>} : vector<64x16xf32>, vector<16x16xf32>, vector<64x16xf32> -> vector<64x16xf32>
    %c0_13 = arith.constant 0 : index
    %c0_14 = arith.constant 0 : index
    %28 = vector.load %arg6[%c0_13, %c0_14] : memref<1x16xf32, #tpu.memory_space<vmem>>, vector<1x16xf32>
    %29 = vector.broadcast %28 : vector<1x16xf32> to vector<64x16xf32>
    %30 = arith.addf %27, %29 : vector<64x16xf32>
    %c0_15 = arith.constant 0 : index
    %c0_16 = arith.constant 0 : index
    %c0_17 = arith.constant 0 : index
    %31 = vector.load %arg9[%c0_15, %c0_16, %c0_17] : memref<1x64x16xf32, #tpu.memory_space<vmem>>, vector<1x64x16xf32>
    %32 = vector.shape_cast %31 : vector<1x64x16xf32> to vector<64x16xf32>
    %33 = vector.shape_cast %30 : vector<64x16xf32> to vector<1x64x16xf32>
    tpu.vector_store %arg9[%c0_15, %c0_16, %c0_17], %33 {strides = array<i32>} : memref<1x64x16xf32, #tpu.memory_space<vmem>>, vector<1x64x16xf32>,
    %c0_18 = arith.constant 0 : index
    %c0_19 = arith.constant 0 : index
    %34 = vector.load %arg7[%c0_18, %c0_19] : memref<16x4xf32, #tpu.memory_space<vmem>>, vector<16x4xf32>
    %cst_20 = arith.constant dense<0.000000e+00> : vector<64x4xf32>
    %35 = tpu.matmul %25, %34, %cst_20 {dimension_numbers = #tpu.dot_dimension_numbers<[1], [0], [0], [1], [0, 0, 1, 1], [], []>} : vector<64x16xf32>, vector<16x4xf32>, vector<64x4xf32> -> vector<64x4xf32>
    %c0_21 = arith.constant 0 : index
    %c0_22 = arith.constant 0 : index
    %36 = vector.load %arg8[%c0_21, %c0_22] : memref<1x4xf32, #tpu.memory_space<vmem>>, vector<1x4xf32>
    %37 = vector.broadcast %36 : vector<1x4xf32> to vector<64x4xf32>
    %38 = arith.addf %35, %37 : vector<64x4xf32>
    %cst_23 = arith.constant 0.000000e+00 : f32
    %39 = vector.broadcast %cst_23 : f32 to vector<64x4xf32>
    %40 = arith.maximumf %38, %39 : vector<64x4xf32>
    %c0_24 = arith.constant 0 : index
    %c0_25 = arith.constant 0 : index
    %c0_26 = arith.constant 0 : index
    %41 = vector.load %arg10[%c0_24, %c0_25, %c0_26] : memref<1x64x4xf32, #tpu.memory_space<vmem>>, vector<1x64x4xf32>
    %42 = vector.shape_cast %41 : vector<1x64x4xf32> to vector<64x4xf32>
    %43 = vector.shape_cast %40 : vector<64x4xf32> to vector<1x64x4xf32>
    tpu.vector_store %arg10[%c0_24, %c0_25, %c0_26], %43 {strides = array<i32>} : memref<1x64x4xf32, #tpu.memory_space<vmem>>, vector<1x64x4xf32>,
    return
  }
  func.func @transform_0(%arg0: i32, %arg1: i32) -> (i32, i32, i32) {
    %c0_i32 = arith.constant 0 : i32
    %c0_i32_0 = arith.constant 0 : i32
    return %arg0, %arg1, %c0_i32 : i32, i32, i32
  }
  func.func @transform_1(%arg0: i32, %arg1: i32) -> (i32, i32) {
    %c0_i32 = arith.constant 0 : i32
    %c0_i32_0 = arith.constant 0 : i32
    %c0_i32_1 = arith.constant 0 : i32
    return %c0_i32, %c0_i32_0 : i32, i32
  }
  func.func @transform_2(%arg0: i32, %arg1: i32) -> (i32, i32) {
    %c0_i32 = arith.constant 0 : i32
    %c0_i32_0 = arith.constant 0 : i32
    %c0_i32_1 = arith.constant 0 : i32
    return %c0_i32, %c0_i32_0 : i32, i32
  }
  func.func @transform_3(%arg0: i32, %arg1: i32) -> (i32, i32) {
    %c0_i32 = arith.constant 0 : i32
    %c0_i32_0 = arith.constant 0 : i32
    %c0_i32_1 = arith.constant 0 : i32
    return %c0_i32, %c0_i32_0 : i32, i32
  }
  func.func @transform_4(%arg0: i32, %arg1: i32) -> (i32, i32) {
    %c0_i32 = arith.constant 0 : i32
    %c0_i32_0 = arith.constant 0 : i32
    %c0_i32_1 = arith.constant 0 : i32
    return %c0_i32, %c0_i32_0 : i32, i32
  }
  func.func @transform_5(%arg0: i32, %arg1: i32) -> (i32, i32) {
    %c0_i32 = arith.constant 0 : i32
    %c0_i32_0 = arith.constant 0 : i32
    %c0_i32_1 = arith.constant 0 : i32
    return %c0_i32, %c0_i32_0 : i32, i32
  }
  func.func @transform_6(%arg0: i32, %arg1: i32) -> (i32, i32) {
    %c0_i32 = arith.constant 0 : i32
    %c0_i32_0 = arith.constant 0 : i32
    %c0_i32_1 = arith.constant 0 : i32
    return %c0_i32, %c0_i32_0 : i32, i32
  }
  func.func @transform_7(%arg0: i32, %arg1: i32) -> (i32, i32, i32) {
    %c0_i32 = arith.constant 0 : i32
    %c0_i32_0 = arith.constant 0 : i32
    return %arg0, %arg1, %c0_i32 : i32, i32, i32
  }
  func.func @transform_8(%arg0: i32, %arg1: i32) -> (i32, i32, i32) {
    %c0_i32 = arith.constant 0 : i32
    %c0_i32_0 = arith.constant 0 : i32
    return %arg0, %arg1, %c0_i32 : i32, i32, i32
  }
}

module attributes {stable_mosaic.version = 11 : i64} {
  func.func @_filter_kernel(%arg0: i32, %arg1: memref<1x38x16xf32, #tpu.memory_space<vmem>>, %arg2: memref<9x16x16xf32, #tpu.memory_space<vmem>>, %arg3: memref<1x16xf32, #tpu.memory_space<vmem>>, %arg4: memref<1x24x16xf32, #tpu.memory_space<vmem>>, %arg5: memref<1x24x16xf32, #tpu.memory_space<vmem>>) attributes {dimension_semantics = [#tpu.dimension_semantics<parallel>], iteration_bounds = array<i64: 2>, scalar_prefetch = 0 : i64, scratch_operands = 0 : i64, tpu.core_type = #tpu.core_type<tc>, window_params = [{transform_indices = @transform_0, window_bounds = array<i64: 1, 38, 16>}, {pipeline_mode = #tpu.pipeline_mode<synchronous>, transform_indices = @transform_1, window_bounds = array<i64: 9, 16, 16>}, {pipeline_mode = #tpu.pipeline_mode<synchronous>, transform_indices = @transform_2, window_bounds = array<i64: 1, 16>}, {transform_indices = @transform_3, window_bounds = array<i64: 1, 24, 16>}, {transform_indices = @transform_4, window_bounds = array<i64: 1, 24, 16>}]} {
    %cst = arith.constant 0.000000e+00 : f32
    %0 = vector.broadcast %cst : f32 to vector<24x16xf32>
    %c0 = arith.constant 0 : index
    %c0_0 = arith.constant 0 : index
    %c0_1 = arith.constant 0 : index
    %1 = vector.load %arg1[%c0, %c0_0, %c0_1] : memref<1x38x16xf32, #tpu.memory_space<vmem>>, vector<1x24x16xf32>
    %2 = vector.shape_cast %1 : vector<1x24x16xf32> to vector<24x16xf32>
    %c0_2 = arith.constant 0 : index
    %c0_3 = arith.constant 0 : index
    %c0_4 = arith.constant 0 : index
    %3 = vector.load %arg2[%c0_2, %c0_3, %c0_4] : memref<9x16x16xf32, #tpu.memory_space<vmem>>, vector<1x16x16xf32>
    %4 = vector.shape_cast %3 : vector<1x16x16xf32> to vector<16x16xf32>
    %cst_5 = arith.constant dense<0.000000e+00> : vector<24x16xf32>
    %5 = tpu.matmul %2, %4, %cst_5 {dimension_numbers = #tpu.dot_dimension_numbers<[1], [0], [0], [1], [0, 0, 1, 1], [], []>} : vector<24x16xf32>, vector<16x16xf32>, vector<24x16xf32> -> vector<24x16xf32>
    %6 = arith.addf %0, %5 : vector<24x16xf32>
    %c0_6 = arith.constant 0 : index
    %c1 = arith.constant 1 : index
    %c0_7 = arith.constant 0 : index
    %7 = vector.load %arg1[%c0_6, %c1, %c0_7] : memref<1x38x16xf32, #tpu.memory_space<vmem>>, vector<1x24x16xf32>
    %8 = vector.shape_cast %7 : vector<1x24x16xf32> to vector<24x16xf32>
    %c1_8 = arith.constant 1 : index
    %c0_9 = arith.constant 0 : index
    %c0_10 = arith.constant 0 : index
    %9 = vector.load %arg2[%c1_8, %c0_9, %c0_10] : memref<9x16x16xf32, #tpu.memory_space<vmem>>, vector<1x16x16xf32>
    %10 = vector.shape_cast %9 : vector<1x16x16xf32> to vector<16x16xf32>
    %cst_11 = arith.constant dense<0.000000e+00> : vector<24x16xf32>
    %11 = tpu.matmul %8, %10, %cst_11 {dimension_numbers = #tpu.dot_dimension_numbers<[1], [0], [0], [1], [0, 0, 1, 1], [], []>} : vector<24x16xf32>, vector<16x16xf32>, vector<24x16xf32> -> vector<24x16xf32>
    %12 = arith.addf %6, %11 : vector<24x16xf32>
    %c0_12 = arith.constant 0 : index
    %c2 = arith.constant 2 : index
    %c0_13 = arith.constant 0 : index
    %13 = vector.load %arg1[%c0_12, %c2, %c0_13] : memref<1x38x16xf32, #tpu.memory_space<vmem>>, vector<1x24x16xf32>
    %14 = vector.shape_cast %13 : vector<1x24x16xf32> to vector<24x16xf32>
    %c2_14 = arith.constant 2 : index
    %c0_15 = arith.constant 0 : index
    %c0_16 = arith.constant 0 : index
    %15 = vector.load %arg2[%c2_14, %c0_15, %c0_16] : memref<9x16x16xf32, #tpu.memory_space<vmem>>, vector<1x16x16xf32>
    %16 = vector.shape_cast %15 : vector<1x16x16xf32> to vector<16x16xf32>
    %cst_17 = arith.constant dense<0.000000e+00> : vector<24x16xf32>
    %17 = tpu.matmul %14, %16, %cst_17 {dimension_numbers = #tpu.dot_dimension_numbers<[1], [0], [0], [1], [0, 0, 1, 1], [], []>} : vector<24x16xf32>, vector<16x16xf32>, vector<24x16xf32> -> vector<24x16xf32>
    %18 = arith.addf %12, %17 : vector<24x16xf32>
    %c0_18 = arith.constant 0 : index
    %c6 = arith.constant 6 : index
    %c0_19 = arith.constant 0 : index
    %19 = vector.load %arg1[%c0_18, %c6, %c0_19] : memref<1x38x16xf32, #tpu.memory_space<vmem>>, vector<1x24x16xf32>
    %20 = vector.shape_cast %19 : vector<1x24x16xf32> to vector<24x16xf32>
    %c3 = arith.constant 3 : index
    %c0_20 = arith.constant 0 : index
    %c0_21 = arith.constant 0 : index
    %21 = vector.load %arg2[%c3, %c0_20, %c0_21] : memref<9x16x16xf32, #tpu.memory_space<vmem>>, vector<1x16x16xf32>
    %22 = vector.shape_cast %21 : vector<1x16x16xf32> to vector<16x16xf32>
    %cst_22 = arith.constant dense<0.000000e+00> : vector<24x16xf32>
    %23 = tpu.matmul %20, %22, %cst_22 {dimension_numbers = #tpu.dot_dimension_numbers<[1], [0], [0], [1], [0, 0, 1, 1], [], []>} : vector<24x16xf32>, vector<16x16xf32>, vector<24x16xf32> -> vector<24x16xf32>
    %24 = arith.addf %18, %23 : vector<24x16xf32>
    %c0_23 = arith.constant 0 : index
    %c7 = arith.constant 7 : index
    %c0_24 = arith.constant 0 : index
    %25 = vector.load %arg1[%c0_23, %c7, %c0_24] : memref<1x38x16xf32, #tpu.memory_space<vmem>>, vector<1x24x16xf32>
    %26 = vector.shape_cast %25 : vector<1x24x16xf32> to vector<24x16xf32>
    %c4 = arith.constant 4 : index
    %c0_25 = arith.constant 0 : index
    %c0_26 = arith.constant 0 : index
    %27 = vector.load %arg2[%c4, %c0_25, %c0_26] : memref<9x16x16xf32, #tpu.memory_space<vmem>>, vector<1x16x16xf32>
    %28 = vector.shape_cast %27 : vector<1x16x16xf32> to vector<16x16xf32>
    %cst_27 = arith.constant dense<0.000000e+00> : vector<24x16xf32>
    %29 = tpu.matmul %26, %28, %cst_27 {dimension_numbers = #tpu.dot_dimension_numbers<[1], [0], [0], [1], [0, 0, 1, 1], [], []>} : vector<24x16xf32>, vector<16x16xf32>, vector<24x16xf32> -> vector<24x16xf32>
    %30 = arith.addf %24, %29 : vector<24x16xf32>
    %c0_28 = arith.constant 0 : index
    %c8 = arith.constant 8 : index
    %c0_29 = arith.constant 0 : index
    %31 = vector.load %arg1[%c0_28, %c8, %c0_29] : memref<1x38x16xf32, #tpu.memory_space<vmem>>, vector<1x24x16xf32>
    %32 = vector.shape_cast %31 : vector<1x24x16xf32> to vector<24x16xf32>
    %c5 = arith.constant 5 : index
    %c0_30 = arith.constant 0 : index
    %c0_31 = arith.constant 0 : index
    %33 = vector.load %arg2[%c5, %c0_30, %c0_31] : memref<9x16x16xf32, #tpu.memory_space<vmem>>, vector<1x16x16xf32>
    %34 = vector.shape_cast %33 : vector<1x16x16xf32> to vector<16x16xf32>
    %cst_32 = arith.constant dense<0.000000e+00> : vector<24x16xf32>
    %35 = tpu.matmul %32, %34, %cst_32 {dimension_numbers = #tpu.dot_dimension_numbers<[1], [0], [0], [1], [0, 0, 1, 1], [], []>} : vector<24x16xf32>, vector<16x16xf32>, vector<24x16xf32> -> vector<24x16xf32>
    %36 = arith.addf %30, %35 : vector<24x16xf32>
    %c0_33 = arith.constant 0 : index
    %c12 = arith.constant 12 : index
    %c0_34 = arith.constant 0 : index
    %37 = vector.load %arg1[%c0_33, %c12, %c0_34] : memref<1x38x16xf32, #tpu.memory_space<vmem>>, vector<1x24x16xf32>
    %38 = vector.shape_cast %37 : vector<1x24x16xf32> to vector<24x16xf32>
    %c6_35 = arith.constant 6 : index
    %c0_36 = arith.constant 0 : index
    %c0_37 = arith.constant 0 : index
    %39 = vector.load %arg2[%c6_35, %c0_36, %c0_37] : memref<9x16x16xf32, #tpu.memory_space<vmem>>, vector<1x16x16xf32>
    %40 = vector.shape_cast %39 : vector<1x16x16xf32> to vector<16x16xf32>
    %cst_38 = arith.constant dense<0.000000e+00> : vector<24x16xf32>
    %41 = tpu.matmul %38, %40, %cst_38 {dimension_numbers = #tpu.dot_dimension_numbers<[1], [0], [0], [1], [0, 0, 1, 1], [], []>} : vector<24x16xf32>, vector<16x16xf32>, vector<24x16xf32> -> vector<24x16xf32>
    %42 = arith.addf %36, %41 : vector<24x16xf32>
    %c0_39 = arith.constant 0 : index
    %c13 = arith.constant 13 : index
    %c0_40 = arith.constant 0 : index
    %43 = vector.load %arg1[%c0_39, %c13, %c0_40] : memref<1x38x16xf32, #tpu.memory_space<vmem>>, vector<1x24x16xf32>
    %44 = vector.shape_cast %43 : vector<1x24x16xf32> to vector<24x16xf32>
    %c7_41 = arith.constant 7 : index
    %c0_42 = arith.constant 0 : index
    %c0_43 = arith.constant 0 : index
    %45 = vector.load %arg2[%c7_41, %c0_42, %c0_43] : memref<9x16x16xf32, #tpu.memory_space<vmem>>, vector<1x16x16xf32>
    %46 = vector.shape_cast %45 : vector<1x16x16xf32> to vector<16x16xf32>
    %cst_44 = arith.constant dense<0.000000e+00> : vector<24x16xf32>
    %47 = tpu.matmul %44, %46, %cst_44 {dimension_numbers = #tpu.dot_dimension_numbers<[1], [0], [0], [1], [0, 0, 1, 1], [], []>} : vector<24x16xf32>, vector<16x16xf32>, vector<24x16xf32> -> vector<24x16xf32>
    %48 = arith.addf %42, %47 : vector<24x16xf32>
    %c0_45 = arith.constant 0 : index
    %c14 = arith.constant 14 : index
    %c0_46 = arith.constant 0 : index
    %49 = vector.load %arg1[%c0_45, %c14, %c0_46] : memref<1x38x16xf32, #tpu.memory_space<vmem>>, vector<1x24x16xf32>
    %50 = vector.shape_cast %49 : vector<1x24x16xf32> to vector<24x16xf32>
    %c8_47 = arith.constant 8 : index
    %c0_48 = arith.constant 0 : index
    %c0_49 = arith.constant 0 : index
    %51 = vector.load %arg2[%c8_47, %c0_48, %c0_49] : memref<9x16x16xf32, #tpu.memory_space<vmem>>, vector<1x16x16xf32>
    %52 = vector.shape_cast %51 : vector<1x16x16xf32> to vector<16x16xf32>
    %cst_50 = arith.constant dense<0.000000e+00> : vector<24x16xf32>
    %53 = tpu.matmul %50, %52, %cst_50 {dimension_numbers = #tpu.dot_dimension_numbers<[1], [0], [0], [1], [0, 0, 1, 1], [], []>} : vector<24x16xf32>, vector<16x16xf32>, vector<24x16xf32> -> vector<24x16xf32>
    %54 = arith.addf %48, %53 : vector<24x16xf32>
    %c0_51 = arith.constant 0 : index
    %c0_52 = arith.constant 0 : index
    %55 = vector.load %arg3[%c0_51, %c0_52] : memref<1x16xf32, #tpu.memory_space<vmem>>, vector<1x16xf32>
    %56 = vector.broadcast %55 : vector<1x16xf32> to vector<24x16xf32>
    %57 = arith.addf %54, %56 : vector<24x16xf32>
    %cst_53 = arith.constant 0.000000e+00 : f32
    %58 = vector.broadcast %cst_53 : f32 to vector<24x16xf32>
    %59 = arith.maximumf %57, %58 : vector<24x16xf32>
    %c0_54 = arith.constant 0 : index
    %c0_55 = arith.constant 0 : index
    %c0_56 = arith.constant 0 : index
    %60 = vector.load %arg4[%c0_54, %c0_55, %c0_56] : memref<1x24x16xf32, #tpu.memory_space<vmem>>, vector<1x24x16xf32>
    %61 = vector.shape_cast %60 : vector<1x24x16xf32> to vector<24x16xf32>
    %62 = vector.shape_cast %59 : vector<24x16xf32> to vector<1x24x16xf32>
    tpu.vector_store %arg4[%c0_54, %c0_55, %c0_56], %62 {strides = array<i32>} : memref<1x24x16xf32, #tpu.memory_space<vmem>>, vector<1x24x16xf32>,
    %63 = vector.extract_strided_slice %59 {offsets = [0, 0], sizes = [24, 4], strides = [1, 1]} : vector<24x16xf32> to vector<24x4xf32>
    %64 = vector.extract_strided_slice %59 {offsets = [0, 4], sizes = [24, 4], strides = [1, 1]} : vector<24x16xf32> to vector<24x4xf32>
    %65 = vector.extract_strided_slice %59 {offsets = [0, 8], sizes = [24, 4], strides = [1, 1]} : vector<24x16xf32> to vector<24x4xf32>
    %66 = vector.extract_strided_slice %59 {offsets = [0, 12], sizes = [24, 4], strides = [1, 1]} : vector<24x16xf32> to vector<24x4xf32>
    %67 = arith.addf %63, %64 : vector<24x4xf32>
    %68 = arith.addf %65, %66 : vector<24x4xf32>
    %69 = arith.subf %63, %64 : vector<24x4xf32>
    %70 = arith.subf %65, %66 : vector<24x4xf32>
    %71 = arith.addf %67, %68 : vector<24x4xf32>
    %cst_57 = arith.constant 5.000000e-01 : f32
    %72 = vector.broadcast %cst_57 : f32 to vector<24x4xf32>
    %73 = arith.mulf %72, %71 : vector<24x4xf32>
    %74 = arith.subf %67, %68 : vector<24x4xf32>
    %cst_58 = arith.constant 5.000000e-01 : f32
    %75 = vector.broadcast %cst_58 : f32 to vector<24x4xf32>
    %76 = arith.mulf %75, %74 : vector<24x4xf32>
    %77 = arith.addf %69, %70 : vector<24x4xf32>
    %cst_59 = arith.constant 5.000000e-01 : f32
    %78 = vector.broadcast %cst_59 : f32 to vector<24x4xf32>
    %79 = arith.mulf %78, %77 : vector<24x4xf32>
    %80 = arith.subf %69, %70 : vector<24x4xf32>
    %cst_60 = arith.constant 5.000000e-01 : f32
    %81 = vector.broadcast %cst_60 : f32 to vector<24x4xf32>
    %82 = arith.mulf %81, %80 : vector<24x4xf32>
    %83 = tpu.concatenate %73, %76, %79, %82 in 1 : vector<24x4xf32>, vector<24x4xf32>, vector<24x4xf32>, vector<24x4xf32> -> vector<24x16xf32>
    %c0_61 = arith.constant 0 : index
    %c0_62 = arith.constant 0 : index
    %c0_63 = arith.constant 0 : index
    %84 = vector.load %arg5[%c0_61, %c0_62, %c0_63] : memref<1x24x16xf32, #tpu.memory_space<vmem>>, vector<1x24x16xf32>
    %85 = vector.shape_cast %84 : vector<1x24x16xf32> to vector<24x16xf32>
    %86 = vector.shape_cast %83 : vector<24x16xf32> to vector<1x24x16xf32>
    tpu.vector_store %arg5[%c0_61, %c0_62, %c0_63], %86 {strides = array<i32>} : memref<1x24x16xf32, #tpu.memory_space<vmem>>, vector<1x24x16xf32>,
    return
  }
  func.func @transform_0(%arg0: i32) -> (i32, i32, i32) {
    %c0_i32 = arith.constant 0 : i32
    %c0_i32_0 = arith.constant 0 : i32
    %c0_i32_1 = arith.constant 0 : i32
    return %arg0, %c0_i32, %c0_i32_0 : i32, i32, i32
  }
  func.func @transform_1(%arg0: i32) -> (i32, i32, i32) {
    %c0_i32 = arith.constant 0 : i32
    %c0_i32_0 = arith.constant 0 : i32
    %c0_i32_1 = arith.constant 0 : i32
    %c0_i32_2 = arith.constant 0 : i32
    return %c0_i32, %c0_i32_0, %c0_i32_1 : i32, i32, i32
  }
  func.func @transform_2(%arg0: i32) -> (i32, i32) {
    %c0_i32 = arith.constant 0 : i32
    %c0_i32_0 = arith.constant 0 : i32
    %c0_i32_1 = arith.constant 0 : i32
    return %c0_i32, %c0_i32_0 : i32, i32
  }
  func.func @transform_3(%arg0: i32) -> (i32, i32, i32) {
    %c0_i32 = arith.constant 0 : i32
    %c0_i32_0 = arith.constant 0 : i32
    %c0_i32_1 = arith.constant 0 : i32
    return %arg0, %c0_i32, %c0_i32_0 : i32, i32, i32
  }
  func.func @transform_4(%arg0: i32) -> (i32, i32, i32) {
    %c0_i32 = arith.constant 0 : i32
    %c0_i32_0 = arith.constant 0 : i32
    %c0_i32_1 = arith.constant 0 : i32
    return %arg0, %c0_i32, %c0_i32_0 : i32, i32, i32
  }
}

module attributes {stable_mosaic.version = 11 : i64} {
  func.func @_attn_proj_kernel(%arg0: i32, %arg1: i32, %arg2: memref<1x64x16xf32, #tpu.memory_space<vmem>>, %arg3: memref<1x64x16xf32, #tpu.memory_space<vmem>>, %arg4: memref<1x16x16xf32, #tpu.memory_space<vmem>>, %arg5: memref<1x64x4xf32, #tpu.memory_space<vmem>>, %arg6: memref<1x16xf32, #tpu.memory_space<vmem>>, %arg7: memref<1x16xf32, #tpu.memory_space<vmem>>, %arg8: memref<16x32xf32, #tpu.memory_space<vmem>>, %arg9: memref<1x32xf32, #tpu.memory_space<vmem>>, %arg10: memref<16x16xf32, #tpu.memory_space<vmem>>, %arg11: memref<4x16xf32, #tpu.memory_space<vmem>>, %arg12: memref<1x16xf32, #tpu.memory_space<vmem>>, %arg13: memref<1x64x16xf32, #tpu.memory_space<vmem>>, %arg14: memref<1x4x64x16xf32, #tpu.memory_space<vmem>>, %arg15: memref<16x16xf32, #tpu.memory_space<vmem>>, %arg16: memref<16x16xf32, #tpu.memory_space<vmem>>) attributes {dimension_semantics = [#tpu.dimension_semantics<parallel>, #tpu.dimension_semantics<arbitrary>], iteration_bounds = array<i64: 2, 1>, scalar_prefetch = 0 : i64, scratch_operands = 2 : i64, tpu.core_type = #tpu.core_type<tc>, window_params = [{transform_indices = @transform_0, window_bounds = array<i64: 1, 64, 16>}, {transform_indices = @transform_1, window_bounds = array<i64: 1, 64, 16>}, {transform_indices = @transform_2, window_bounds = array<i64: 1, 16, 16>}, {transform_indices = @transform_3, window_bounds = array<i64: 1, 64, 4>}, {pipeline_mode = #tpu.pipeline_mode<synchronous>, transform_indices = @transform_4, window_bounds = array<i64: 1, 16>}, {pipeline_mode = #tpu.pipeline_mode<synchronous>, transform_indices = @transform_5, window_bounds = array<i64: 1, 16>}, {pipeline_mode = #tpu.pipeline_mode<synchronous>, transform_indices = @transform_6, window_bounds = array<i64: 16, 32>}, {pipeline_mode = #tpu.pipeline_mode<synchronous>, transform_indices = @transform_7, window_bounds = array<i64: 1, 32>}, {pipeline_mode = #tpu.pipeline_mode<synchronous>, transform_indices = @transform_8, window_bounds = array<i64: 16, 16>}, {pipeline_mode = #tpu.pipeline_mode<synchronous>, transform_indices = @transform_9, window_bounds = array<i64: 4, 16>}, {pipeline_mode = #tpu.pipeline_mode<synchronous>, transform_indices = @transform_10, window_bounds = array<i64: 1, 16>}, {transform_indices = @transform_11, window_bounds = array<i64: 1, 64, 16>}, {transform_indices = @transform_12, window_bounds = array<i64: 1, 4, 64, 16>}]} {
    %c0_i32 = arith.constant 0 : i32
    %0 = arith.cmpi eq, %arg1, %c0_i32 : i32
    %1 = arith.extui %0 : i1 to i32
    %c0_i32_0 = arith.constant 0 : i32
    %2 = arith.cmpi ne, %1, %c0_i32_0 : i32
    scf.if %2 {
      %c0_48 = arith.constant 0 : index
      %c0_49 = arith.constant 0 : index
      %c0_50 = arith.constant 0 : index
      %98 = vector.load %arg4[%c0_48, %c0_49, %c0_50] : memref<1x16x16xf32, #tpu.memory_space<vmem>>, vector<1x16x16xf32>
      %99 = vector.shape_cast %98 : vector<1x16x16xf32> to vector<16x16xf32>
      %c0_51 = arith.constant 0 : index
      %c0_52 = arith.constant 0 : index
      %100 = vector.load %arg6[%c0_51, %c0_52] : memref<1x16xf32, #tpu.memory_space<vmem>>, vector<1x16xf32>
      %c0_53 = arith.constant 0 : index
      %c0_54 = arith.constant 0 : index
      %101 = vector.load %arg7[%c0_53, %c0_54] : memref<1x16xf32, #tpu.memory_space<vmem>>, vector<1x16xf32>
      %cst_55 = arith.constant dense<0.000000e+00> : vector<16xf32>
      %102 = vector.multi_reduction <add>, %99, %cst_55 [1] : vector<16x16xf32> to vector<16xf32>
      %103 = vector.shape_cast %102 : vector<16xf32> to vector<16x1xf32>
      %cst_56 = arith.constant 1.600000e+01 : f32
      %104 = vector.broadcast %cst_56 : f32 to vector<16x1xf32>
      %105 = arith.divf %103, %104 : vector<16x1xf32>
      %106 = vector.broadcast %105 : vector<16x1xf32> to vector<16x16xf32>
      %107 = arith.subf %99, %106 : vector<16x16xf32>
      %108 = arith.mulf %107, %107 : vector<16x16xf32>
      %cst_57 = arith.constant dense<0.000000e+00> : vector<16xf32>
      %109 = vector.multi_reduction <add>, %108, %cst_57 [1] : vector<16x16xf32> to vector<16xf32>
      %110 = vector.shape_cast %109 : vector<16xf32> to vector<16x1xf32>
      %cst_58 = arith.constant 1.600000e+01 : f32
      %111 = vector.broadcast %cst_58 : f32 to vector<16x1xf32>
      %112 = arith.divf %110, %111 : vector<16x1xf32>
      %113 = vector.broadcast %105 : vector<16x1xf32> to vector<16x16xf32>
      %114 = arith.subf %99, %113 : vector<16x16xf32>
      %cst_59 = arith.constant 9.99999974E-6 : f32
      %115 = vector.broadcast %cst_59 : f32 to vector<16x1xf32>
      %116 = arith.addf %112, %115 : vector<16x1xf32>
      %117 = math.rsqrt %116 : vector<16x1xf32>
      %118 = vector.broadcast %117 : vector<16x1xf32> to vector<16x16xf32>
      %119 = arith.mulf %114, %118 : vector<16x16xf32>
      %120 = vector.broadcast %100 : vector<1x16xf32> to vector<16x16xf32>
      %121 = arith.mulf %119, %120 : vector<16x16xf32>
      %122 = vector.broadcast %101 : vector<1x16xf32> to vector<16x16xf32>
      %123 = arith.addf %121, %122 : vector<16x16xf32>
      %c0_60 = arith.constant 0 : index
      %c0_61 = arith.constant 0 : index
      %124 = vector.load %arg8[%c0_60, %c0_61] : memref<16x32xf32, #tpu.memory_space<vmem>>, vector<16x32xf32>
      %cst_62 = arith.constant dense<0.000000e+00> : vector<16x32xf32>
      %125 = tpu.matmul %123, %124, %cst_62 {dimension_numbers = #tpu.dot_dimension_numbers<[1], [0], [0], [1], [0, 0, 1, 1], [], []>} : vector<16x16xf32>, vector<16x32xf32>, vector<16x32xf32> -> vector<16x32xf32>
      %c0_63 = arith.constant 0 : index
      %c0_64 = arith.constant 0 : index
      %126 = vector.load %arg9[%c0_63, %c0_64] : memref<1x32xf32, #tpu.memory_space<vmem>>, vector<1x32xf32>
      %127 = vector.broadcast %126 : vector<1x32xf32> to vector<16x32xf32>
      %128 = arith.addf %125, %127 : vector<16x32xf32>
      %129 = vector.extract_strided_slice %128 {offsets = [0, 0], sizes = [16, 16], strides = [1, 1]} : vector<16x32xf32> to vector<16x16xf32>
      %c0_65 = arith.constant 0 : index
      %c0_66 = arith.constant 0 : index
      %130 = vector.load %arg15[%c0_65, %c0_66] : memref<16x16xf32, #tpu.memory_space<vmem>>, vector<16x16xf32>
      tpu.vector_store %arg15[%c0_65, %c0_66], %129 {strides = array<i32>} : memref<16x16xf32, #tpu.memory_space<vmem>>, vector<16x16xf32>,
      %131 = vector.extract_strided_slice %128 {offsets = [0, 16], sizes = [16, 16], strides = [1, 1]} : vector<16x32xf32> to vector<16x16xf32>
      %c0_67 = arith.constant 0 : index
      %c0_68 = arith.constant 0 : index
      %132 = vector.load %arg16[%c0_67, %c0_68] : memref<16x16xf32, #tpu.memory_space<vmem>>, vector<16x16xf32>
      tpu.vector_store %arg16[%c0_67, %c0_68], %131 {strides = array<i32>} : memref<16x16xf32, #tpu.memory_space<vmem>>, vector<16x16xf32>,
    } else {
    }
    %c0 = arith.constant 0 : index
    %c0_1 = arith.constant 0 : index
    %3 = vector.load %arg15[%c0, %c0_1] : memref<16x16xf32, #tpu.memory_space<vmem>>, vector<16x16xf32>
    %c0_2 = arith.constant 0 : index
    %c0_3 = arith.constant 0 : index
    %4 = vector.load %arg16[%c0_2, %c0_3] : memref<16x16xf32, #tpu.memory_space<vmem>>, vector<16x16xf32>
    %c0_4 = arith.constant 0 : index
    %c0_5 = arith.constant 0 : index
    %c0_6 = arith.constant 0 : index
    %5 = vector.load %arg2[%c0_4, %c0_5, %c0_6] : memref<1x64x16xf32, #tpu.memory_space<vmem>>, vector<1x64x16xf32>
    %6 = vector.shape_cast %5 : vector<1x64x16xf32> to vector<64x16xf32>
    %c0_7 = arith.constant 0 : index
    %c0_8 = arith.constant 0 : index
    %c0_9 = arith.constant 0 : index
    %7 = vector.load %arg5[%c0_7, %c0_8, %c0_9] : memref<1x64x4xf32, #tpu.memory_space<vmem>>, vector<1x64x4xf32>
    %8 = vector.shape_cast %7 : vector<1x64x4xf32> to vector<64x4xf32>
    %c0_10 = arith.constant 0 : index
    %c0_11 = arith.constant 0 : index
    %9 = vector.load %arg11[%c0_10, %c0_11] : memref<4x16xf32, #tpu.memory_space<vmem>>, vector<4x16xf32>
    %cst = arith.constant dense<0.000000e+00> : vector<64x16xf32>
    %10 = tpu.matmul %8, %9, %cst {dimension_numbers = #tpu.dot_dimension_numbers<[1], [0], [0], [1], [0, 0, 1, 1], [], []>} : vector<64x4xf32>, vector<4x16xf32>, vector<64x16xf32> -> vector<64x16xf32>
    %11 = arith.addf %6, %10 : vector<64x16xf32>
    %c0_12 = arith.constant 0 : index
    %c0_13 = arith.constant 0 : index
    %12 = vector.load %arg12[%c0_12, %c0_13] : memref<1x16xf32, #tpu.memory_space<vmem>>, vector<1x16xf32>
    %13 = vector.broadcast %12 : vector<1x16xf32> to vector<64x16xf32>
    %14 = arith.addf %11, %13 : vector<64x16xf32>
    %c0_14 = arith.constant 0 : index
    %c0_15 = arith.constant 0 : index
    %c0_16 = arith.constant 0 : index
    %15 = vector.load %arg3[%c0_14, %c0_15, %c0_16] : memref<1x64x16xf32, #tpu.memory_space<vmem>>, vector<1x64x16xf32>
    %16 = vector.shape_cast %15 : vector<1x64x16xf32> to vector<64x16xf32>
    %cst_17 = arith.constant 5.000000e-01 : f32
    %17 = vector.broadcast %cst_17 : f32 to vector<64x16xf32>
    %18 = arith.mulf %16, %17 : vector<64x16xf32>
    %19 = vector.extract_strided_slice %18 {offsets = [0, 0], sizes = [64, 4], strides = [1, 1]} : vector<64x16xf32> to vector<64x4xf32>
    %20 = vector.extract_strided_slice %3 {offsets = [0, 0], sizes = [16, 4], strides = [1, 1]} : vector<16x16xf32> to vector<16x4xf32>
    %21 = vector.extract_strided_slice %4 {offsets = [0, 0], sizes = [16, 4], strides = [1, 1]} : vector<16x16xf32> to vector<16x4xf32>
    %cst_18 = arith.constant dense<0.000000e+00> : vector<64x16xf32>
    %22 = tpu.matmul %19, %20, %cst_18 {dimension_numbers = #tpu.dot_dimension_numbers<[1], [1], [0], [0], [0, 0, 1, 0], [], []>} : vector<64x4xf32>, vector<16x4xf32>, vector<64x16xf32> -> vector<64x16xf32>
    %cst_19 = arith.constant dense<0xFF800000> : vector<64xf32>
    %23 = vector.multi_reduction <maximumf>, %22, %cst_19 [1] : vector<64x16xf32> to vector<64xf32>
    %24 = vector.shape_cast %23 : vector<64xf32> to vector<64x1xf32>
    %25 = vector.broadcast %24 : vector<64x1xf32> to vector<64x16xf32>
    %26 = arith.subf %22, %25 : vector<64x16xf32>
    %27 = math.exp %26 : vector<64x16xf32>
    %cst_20 = arith.constant dense<0.000000e+00> : vector<64xf32>
    %28 = vector.multi_reduction <add>, %27, %cst_20 [1] : vector<64x16xf32> to vector<64xf32>
    %29 = vector.shape_cast %28 : vector<64xf32> to vector<64x1xf32>
    %cst_21 = arith.constant 1.000000e+00 : f32
    %30 = vector.broadcast %cst_21 : f32 to vector<64x1xf32>
    %31 = arith.divf %30, %29 : vector<64x1xf32>
    %32 = vector.broadcast %31 : vector<64x1xf32> to vector<64x16xf32>
    %33 = arith.mulf %27, %32 : vector<64x16xf32>
    %cst_22 = arith.constant dense<0.000000e+00> : vector<64x4xf32>
    %34 = tpu.matmul %33, %21, %cst_22 {dimension_numbers = #tpu.dot_dimension_numbers<[1], [0], [0], [1], [0, 0, 1, 1], [], []>} : vector<64x16xf32>, vector<16x4xf32>, vector<64x4xf32> -> vector<64x4xf32>
    %35 = vector.extract_strided_slice %18 {offsets = [0, 4], sizes = [64, 4], strides = [1, 1]} : vector<64x16xf32> to vector<64x4xf32>
    %36 = vector.extract_strided_slice %3 {offsets = [0, 4], sizes = [16, 4], strides = [1, 1]} : vector<16x16xf32> to vector<16x4xf32>
    %37 = vector.extract_strided_slice %4 {offsets = [0, 4], sizes = [16, 4], strides = [1, 1]} : vector<16x16xf32> to vector<16x4xf32>
    %cst_23 = arith.constant dense<0.000000e+00> : vector<64x16xf32>
    %38 = tpu.matmul %35, %36, %cst_23 {dimension_numbers = #tpu.dot_dimension_numbers<[1], [1], [0], [0], [0, 0, 1, 0], [], []>} : vector<64x4xf32>, vector<16x4xf32>, vector<64x16xf32> -> vector<64x16xf32>
    %cst_24 = arith.constant dense<0xFF800000> : vector<64xf32>
    %39 = vector.multi_reduction <maximumf>, %38, %cst_24 [1] : vector<64x16xf32> to vector<64xf32>
    %40 = vector.shape_cast %39 : vector<64xf32> to vector<64x1xf32>
    %41 = vector.broadcast %40 : vector<64x1xf32> to vector<64x16xf32>
    %42 = arith.subf %38, %41 : vector<64x16xf32>
    %43 = math.exp %42 : vector<64x16xf32>
    %cst_25 = arith.constant dense<0.000000e+00> : vector<64xf32>
    %44 = vector.multi_reduction <add>, %43, %cst_25 [1] : vector<64x16xf32> to vector<64xf32>
    %45 = vector.shape_cast %44 : vector<64xf32> to vector<64x1xf32>
    %cst_26 = arith.constant 1.000000e+00 : f32
    %46 = vector.broadcast %cst_26 : f32 to vector<64x1xf32>
    %47 = arith.divf %46, %45 : vector<64x1xf32>
    %48 = vector.broadcast %47 : vector<64x1xf32> to vector<64x16xf32>
    %49 = arith.mulf %43, %48 : vector<64x16xf32>
    %cst_27 = arith.constant dense<0.000000e+00> : vector<64x4xf32>
    %50 = tpu.matmul %49, %37, %cst_27 {dimension_numbers = #tpu.dot_dimension_numbers<[1], [0], [0], [1], [0, 0, 1, 1], [], []>} : vector<64x16xf32>, vector<16x4xf32>, vector<64x4xf32> -> vector<64x4xf32>
    %51 = vector.extract_strided_slice %18 {offsets = [0, 8], sizes = [64, 4], strides = [1, 1]} : vector<64x16xf32> to vector<64x4xf32>
    %52 = vector.extract_strided_slice %3 {offsets = [0, 8], sizes = [16, 4], strides = [1, 1]} : vector<16x16xf32> to vector<16x4xf32>
    %53 = vector.extract_strided_slice %4 {offsets = [0, 8], sizes = [16, 4], strides = [1, 1]} : vector<16x16xf32> to vector<16x4xf32>
    %cst_28 = arith.constant dense<0.000000e+00> : vector<64x16xf32>
    %54 = tpu.matmul %51, %52, %cst_28 {dimension_numbers = #tpu.dot_dimension_numbers<[1], [1], [0], [0], [0, 0, 1, 0], [], []>} : vector<64x4xf32>, vector<16x4xf32>, vector<64x16xf32> -> vector<64x16xf32>
    %cst_29 = arith.constant dense<0xFF800000> : vector<64xf32>
    %55 = vector.multi_reduction <maximumf>, %54, %cst_29 [1] : vector<64x16xf32> to vector<64xf32>
    %56 = vector.shape_cast %55 : vector<64xf32> to vector<64x1xf32>
    %57 = vector.broadcast %56 : vector<64x1xf32> to vector<64x16xf32>
    %58 = arith.subf %54, %57 : vector<64x16xf32>
    %59 = math.exp %58 : vector<64x16xf32>
    %cst_30 = arith.constant dense<0.000000e+00> : vector<64xf32>
    %60 = vector.multi_reduction <add>, %59, %cst_30 [1] : vector<64x16xf32> to vector<64xf32>
    %61 = vector.shape_cast %60 : vector<64xf32> to vector<64x1xf32>
    %cst_31 = arith.constant 1.000000e+00 : f32
    %62 = vector.broadcast %cst_31 : f32 to vector<64x1xf32>
    %63 = arith.divf %62, %61 : vector<64x1xf32>
    %64 = vector.broadcast %63 : vector<64x1xf32> to vector<64x16xf32>
    %65 = arith.mulf %59, %64 : vector<64x16xf32>
    %cst_32 = arith.constant dense<0.000000e+00> : vector<64x4xf32>
    %66 = tpu.matmul %65, %53, %cst_32 {dimension_numbers = #tpu.dot_dimension_numbers<[1], [0], [0], [1], [0, 0, 1, 1], [], []>} : vector<64x16xf32>, vector<16x4xf32>, vector<64x4xf32> -> vector<64x4xf32>
    %67 = vector.extract_strided_slice %18 {offsets = [0, 12], sizes = [64, 4], strides = [1, 1]} : vector<64x16xf32> to vector<64x4xf32>
    %68 = vector.extract_strided_slice %3 {offsets = [0, 12], sizes = [16, 4], strides = [1, 1]} : vector<16x16xf32> to vector<16x4xf32>
    %69 = vector.extract_strided_slice %4 {offsets = [0, 12], sizes = [16, 4], strides = [1, 1]} : vector<16x16xf32> to vector<16x4xf32>
    %cst_33 = arith.constant dense<0.000000e+00> : vector<64x16xf32>
    %70 = tpu.matmul %67, %68, %cst_33 {dimension_numbers = #tpu.dot_dimension_numbers<[1], [1], [0], [0], [0, 0, 1, 0], [], []>} : vector<64x4xf32>, vector<16x4xf32>, vector<64x16xf32> -> vector<64x16xf32>
    %cst_34 = arith.constant dense<0xFF800000> : vector<64xf32>
    %71 = vector.multi_reduction <maximumf>, %70, %cst_34 [1] : vector<64x16xf32> to vector<64xf32>
    %72 = vector.shape_cast %71 : vector<64xf32> to vector<64x1xf32>
    %73 = vector.broadcast %72 : vector<64x1xf32> to vector<64x16xf32>
    %74 = arith.subf %70, %73 : vector<64x16xf32>
    %75 = math.exp %74 : vector<64x16xf32>
    %cst_35 = arith.constant dense<0.000000e+00> : vector<64xf32>
    %76 = vector.multi_reduction <add>, %75, %cst_35 [1] : vector<64x16xf32> to vector<64xf32>
    %77 = vector.shape_cast %76 : vector<64xf32> to vector<64x1xf32>
    %cst_36 = arith.constant 1.000000e+00 : f32
    %78 = vector.broadcast %cst_36 : f32 to vector<64x1xf32>
    %79 = arith.divf %78, %77 : vector<64x1xf32>
    %80 = vector.broadcast %79 : vector<64x1xf32> to vector<64x16xf32>
    %81 = arith.mulf %75, %80 : vector<64x16xf32>
    %cst_37 = arith.constant dense<0.000000e+00> : vector<64x4xf32>
    %82 = tpu.matmul %81, %69, %cst_37 {dimension_numbers = #tpu.dot_dimension_numbers<[1], [0], [0], [1], [0, 0, 1, 1], [], []>} : vector<64x16xf32>, vector<16x4xf32>, vector<64x4xf32> -> vector<64x4xf32>
    %83 = vector.shape_cast %33 : vector<64x16xf32> to vector<1x64x16xf32>
    %84 = vector.shape_cast %49 : vector<64x16xf32> to vector<1x64x16xf32>
    %85 = vector.shape_cast %65 : vector<64x16xf32> to vector<1x64x16xf32>
    %86 = vector.shape_cast %81 : vector<64x16xf32> to vector<1x64x16xf32>
    %87 = tpu.concatenate %83, %84, %85, %86 in 0 : vector<1x64x16xf32>, vector<1x64x16xf32>, vector<1x64x16xf32>, vector<1x64x16xf32> -> vector<4x64x16xf32>
    %c0_38 = arith.constant 0 : index
    %c0_39 = arith.constant 0 : index
    %c0_40 = arith.constant 0 : index
    %c0_41 = arith.constant 0 : index
    %88 = vector.load %arg14[%c0_38, %c0_39, %c0_40, %c0_41] : memref<1x4x64x16xf32, #tpu.memory_space<vmem>>, vector<1x4x64x16xf32>
    %89 = vector.shape_cast %88 : vector<1x4x64x16xf32> to vector<4x64x16xf32>
    %90 = vector.shape_cast %87 : vector<4x64x16xf32> to vector<1x4x64x16xf32>
    tpu.vector_store %arg14[%c0_38, %c0_39, %c0_40, %c0_41], %90 {strides = array<i32>} : memref<1x4x64x16xf32, #tpu.memory_space<vmem>>, vector<1x4x64x16xf32>,
    %91 = tpu.concatenate %34, %50, %66, %82 in 1 : vector<64x4xf32>, vector<64x4xf32>, vector<64x4xf32>, vector<64x4xf32> -> vector<64x16xf32>
    %c0_42 = arith.constant 0 : index
    %c0_43 = arith.constant 0 : index
    %92 = vector.load %arg10[%c0_42, %c0_43] : memref<16x16xf32, #tpu.memory_space<vmem>>, vector<16x16xf32>
    %cst_44 = arith.constant dense<0.000000e+00> : vector<64x16xf32>
    %93 = tpu.matmul %91, %92, %cst_44 {dimension_numbers = #tpu.dot_dimension_numbers<[1], [0], [0], [1], [0, 0, 1, 1], [], []>} : vector<64x16xf32>, vector<16x16xf32>, vector<64x16xf32> -> vector<64x16xf32>
    %94 = arith.addf %14, %93 : vector<64x16xf32>
    %c0_45 = arith.constant 0 : index
    %c0_46 = arith.constant 0 : index
    %c0_47 = arith.constant 0 : index
    %95 = vector.load %arg13[%c0_45, %c0_46, %c0_47] : memref<1x64x16xf32, #tpu.memory_space<vmem>>, vector<1x64x16xf32>
    %96 = vector.shape_cast %95 : vector<1x64x16xf32> to vector<64x16xf32>
    %97 = vector.shape_cast %94 : vector<64x16xf32> to vector<1x64x16xf32>
    tpu.vector_store %arg13[%c0_45, %c0_46, %c0_47], %97 {strides = array<i32>} : memref<1x64x16xf32, #tpu.memory_space<vmem>>, vector<1x64x16xf32>,
    return
  }
  func.func @transform_0(%arg0: i32, %arg1: i32) -> (i32, i32, i32) {
    %c0_i32 = arith.constant 0 : i32
    %c0_i32_0 = arith.constant 0 : i32
    return %arg0, %arg1, %c0_i32 : i32, i32, i32
  }
  func.func @transform_1(%arg0: i32, %arg1: i32) -> (i32, i32, i32) {
    %c0_i32 = arith.constant 0 : i32
    %c0_i32_0 = arith.constant 0 : i32
    return %arg0, %arg1, %c0_i32 : i32, i32, i32
  }
  func.func @transform_2(%arg0: i32, %arg1: i32) -> (i32, i32, i32) {
    %c0_i32 = arith.constant 0 : i32
    %c0_i32_0 = arith.constant 0 : i32
    %c0_i32_1 = arith.constant 0 : i32
    return %arg0, %c0_i32, %c0_i32_0 : i32, i32, i32
  }
  func.func @transform_3(%arg0: i32, %arg1: i32) -> (i32, i32, i32) {
    %c0_i32 = arith.constant 0 : i32
    %c0_i32_0 = arith.constant 0 : i32
    return %arg0, %arg1, %c0_i32 : i32, i32, i32
  }
  func.func @transform_4(%arg0: i32, %arg1: i32) -> (i32, i32) {
    %c0_i32 = arith.constant 0 : i32
    %c0_i32_0 = arith.constant 0 : i32
    %c0_i32_1 = arith.constant 0 : i32
    return %c0_i32, %c0_i32_0 : i32, i32
  }
  func.func @transform_5(%arg0: i32, %arg1: i32) -> (i32, i32) {
    %c0_i32 = arith.constant 0 : i32
    %c0_i32_0 = arith.constant 0 : i32
    %c0_i32_1 = arith.constant 0 : i32
    return %c0_i32, %c0_i32_0 : i32, i32
  }
  func.func @transform_6(%arg0: i32, %arg1: i32) -> (i32, i32) {
    %c0_i32 = arith.constant 0 : i32
    %c0_i32_0 = arith.constant 0 : i32
    %c0_i32_1 = arith.constant 0 : i32
    return %c0_i32, %c0_i32_0 : i32, i32
  }
  func.func @transform_7(%arg0: i32, %arg1: i32) -> (i32, i32) {
    %c0_i32 = arith.constant 0 : i32
    %c0_i32_0 = arith.constant 0 : i32
    %c0_i32_1 = arith.constant 0 : i32
    return %c0_i32, %c0_i32_0 : i32, i32
  }
  func.func @transform_8(%arg0: i32, %arg1: i32) -> (i32, i32) {
    %c0_i32 = arith.constant 0 : i32
    %c0_i32_0 = arith.constant 0 : i32
    %c0_i32_1 = arith.constant 0 : i32
    return %c0_i32, %c0_i32_0 : i32, i32
  }
  func.func @transform_9(%arg0: i32, %arg1: i32) -> (i32, i32) {
    %c0_i32 = arith.constant 0 : i32
    %c0_i32_0 = arith.constant 0 : i32
    %c0_i32_1 = arith.constant 0 : i32
    return %c0_i32, %c0_i32_0 : i32, i32
  }
  func.func @transform_10(%arg0: i32, %arg1: i32) -> (i32, i32) {
    %c0_i32 = arith.constant 0 : i32
    %c0_i32_0 = arith.constant 0 : i32
    %c0_i32_1 = arith.constant 0 : i32
    return %c0_i32, %c0_i32_0 : i32, i32
  }
  func.func @transform_11(%arg0: i32, %arg1: i32) -> (i32, i32, i32) {
    %c0_i32 = arith.constant 0 : i32
    %c0_i32_0 = arith.constant 0 : i32
    return %arg0, %arg1, %c0_i32 : i32, i32, i32
  }
  func.func @transform_12(%arg0: i32, %arg1: i32) -> (i32, i32, i32, i32) {
    %c0_i32 = arith.constant 0 : i32
    %c0_i32_0 = arith.constant 0 : i32
    %c0_i32_1 = arith.constant 0 : i32
    return %arg0, %c0_i32, %arg1, %c0_i32_0 : i32, i32, i32, i32
  }
}

module attributes {stable_mosaic.version = 11 : i64} {
  func.func @_mlp_kernel(%arg0: i32, %arg1: i32, %arg2: memref<1x64x16xf32, #tpu.memory_space<vmem>>, %arg3: memref<1x16xf32, #tpu.memory_space<vmem>>, %arg4: memref<1x16xf32, #tpu.memory_space<vmem>>, %arg5: memref<16x64xf32, #tpu.memory_space<vmem>>, %arg6: memref<1x64xf32, #tpu.memory_space<vmem>>, %arg7: memref<64x16xf32, #tpu.memory_space<vmem>>, %arg8: memref<1x16xf32, #tpu.memory_space<vmem>>, %arg9: memref<1x64x16xf32, #tpu.memory_space<vmem>>) attributes {dimension_semantics = [#tpu.dimension_semantics<parallel>, #tpu.dimension_semantics<parallel>], iteration_bounds = array<i64: 2, 1>, scalar_prefetch = 0 : i64, scratch_operands = 0 : i64, tpu.core_type = #tpu.core_type<tc>, window_params = [{transform_indices = @transform_0, window_bounds = array<i64: 1, 64, 16>}, {pipeline_mode = #tpu.pipeline_mode<synchronous>, transform_indices = @transform_1, window_bounds = array<i64: 1, 16>}, {pipeline_mode = #tpu.pipeline_mode<synchronous>, transform_indices = @transform_2, window_bounds = array<i64: 1, 16>}, {pipeline_mode = #tpu.pipeline_mode<synchronous>, transform_indices = @transform_3, window_bounds = array<i64: 16, 64>}, {pipeline_mode = #tpu.pipeline_mode<synchronous>, transform_indices = @transform_4, window_bounds = array<i64: 1, 64>}, {pipeline_mode = #tpu.pipeline_mode<synchronous>, transform_indices = @transform_5, window_bounds = array<i64: 64, 16>}, {pipeline_mode = #tpu.pipeline_mode<synchronous>, transform_indices = @transform_6, window_bounds = array<i64: 1, 16>}, {transform_indices = @transform_7, window_bounds = array<i64: 1, 64, 16>}]} {
    %c0 = arith.constant 0 : index
    %c0_0 = arith.constant 0 : index
    %c0_1 = arith.constant 0 : index
    %0 = vector.load %arg2[%c0, %c0_0, %c0_1] : memref<1x64x16xf32, #tpu.memory_space<vmem>>, vector<1x64x16xf32>
    %1 = vector.shape_cast %0 : vector<1x64x16xf32> to vector<64x16xf32>
    %c0_2 = arith.constant 0 : index
    %c0_3 = arith.constant 0 : index
    %2 = vector.load %arg3[%c0_2, %c0_3] : memref<1x16xf32, #tpu.memory_space<vmem>>, vector<1x16xf32>
    %c0_4 = arith.constant 0 : index
    %c0_5 = arith.constant 0 : index
    %3 = vector.load %arg4[%c0_4, %c0_5] : memref<1x16xf32, #tpu.memory_space<vmem>>, vector<1x16xf32>
    %cst = arith.constant dense<0.000000e+00> : vector<64xf32>
    %4 = vector.multi_reduction <add>, %1, %cst [1] : vector<64x16xf32> to vector<64xf32>
    %5 = vector.shape_cast %4 : vector<64xf32> to vector<64x1xf32>
    %cst_6 = arith.constant 1.600000e+01 : f32
    %6 = vector.broadcast %cst_6 : f32 to vector<64x1xf32>
    %7 = arith.divf %5, %6 : vector<64x1xf32>
    %8 = vector.broadcast %7 : vector<64x1xf32> to vector<64x16xf32>
    %9 = arith.subf %1, %8 : vector<64x16xf32>
    %10 = arith.mulf %9, %9 : vector<64x16xf32>
    %cst_7 = arith.constant dense<0.000000e+00> : vector<64xf32>
    %11 = vector.multi_reduction <add>, %10, %cst_7 [1] : vector<64x16xf32> to vector<64xf32>
    %12 = vector.shape_cast %11 : vector<64xf32> to vector<64x1xf32>
    %cst_8 = arith.constant 1.600000e+01 : f32
    %13 = vector.broadcast %cst_8 : f32 to vector<64x1xf32>
    %14 = arith.divf %12, %13 : vector<64x1xf32>
    %15 = vector.broadcast %7 : vector<64x1xf32> to vector<64x16xf32>
    %16 = arith.subf %1, %15 : vector<64x16xf32>
    %cst_9 = arith.constant 9.99999974E-6 : f32
    %17 = vector.broadcast %cst_9 : f32 to vector<64x1xf32>
    %18 = arith.addf %14, %17 : vector<64x1xf32>
    %19 = math.rsqrt %18 : vector<64x1xf32>
    %20 = vector.broadcast %19 : vector<64x1xf32> to vector<64x16xf32>
    %21 = arith.mulf %16, %20 : vector<64x16xf32>
    %22 = vector.broadcast %2 : vector<1x16xf32> to vector<64x16xf32>
    %23 = arith.mulf %21, %22 : vector<64x16xf32>
    %24 = vector.broadcast %3 : vector<1x16xf32> to vector<64x16xf32>
    %25 = arith.addf %23, %24 : vector<64x16xf32>
    %c0_10 = arith.constant 0 : index
    %c0_11 = arith.constant 0 : index
    %26 = vector.load %arg5[%c0_10, %c0_11] : memref<16x64xf32, #tpu.memory_space<vmem>>, vector<16x64xf32>
    %cst_12 = arith.constant dense<0.000000e+00> : vector<64x64xf32>
    %27 = tpu.matmul %25, %26, %cst_12 {dimension_numbers = #tpu.dot_dimension_numbers<[1], [0], [0], [1], [0, 0, 1, 1], [], []>} : vector<64x16xf32>, vector<16x64xf32>, vector<64x64xf32> -> vector<64x64xf32>
    %c0_13 = arith.constant 0 : index
    %c0_14 = arith.constant 0 : index
    %28 = vector.load %arg6[%c0_13, %c0_14] : memref<1x64xf32, #tpu.memory_space<vmem>>, vector<1x64xf32>
    %29 = vector.broadcast %28 : vector<1x64xf32> to vector<64x64xf32>
    %30 = arith.addf %27, %29 : vector<64x64xf32>
    %cst_15 = arith.constant 0.707106769 : f32
    %31 = vector.broadcast %cst_15 : f32 to vector<64x64xf32>
    %32 = arith.mulf %30, %31 : vector<64x64xf32>
    %33 = math.absf %32 : vector<64x64xf32>
    %cst_16 = arith.constant 0.327591091 : f32
    %34 = vector.broadcast %cst_16 : f32 to vector<64x64xf32>
    %35 = arith.mulf %34, %33 : vector<64x64xf32>
    %cst_17 = arith.constant 1.000000e+00 : f32
    %36 = vector.broadcast %cst_17 : f32 to vector<64x64xf32>
    %37 = arith.addf %36, %35 : vector<64x64xf32>
    %cst_18 = arith.constant 1.000000e+00 : f32
    %38 = vector.broadcast %cst_18 : f32 to vector<64x64xf32>
    %39 = arith.divf %38, %37 : vector<64x64xf32>
    %cst_19 = arith.constant 1.06140542 : f32
    %40 = vector.broadcast %cst_19 : f32 to vector<64x64xf32>
    %41 = arith.mulf %39, %40 : vector<64x64xf32>
    %cst_20 = arith.constant -1.45315206 : f32
    %42 = vector.broadcast %cst_20 : f32 to vector<64x64xf32>
    %43 = arith.addf %42, %41 : vector<64x64xf32>
    %44 = arith.mulf %39, %43 : vector<64x64xf32>
    %cst_21 = arith.constant 1.42141378 : f32
    %45 = vector.broadcast %cst_21 : f32 to vector<64x64xf32>
    %46 = arith.addf %45, %44 : vector<64x64xf32>
    %47 = arith.mulf %39, %46 : vector<64x64xf32>
    %cst_22 = arith.constant -0.284496725 : f32
    %48 = vector.broadcast %cst_22 : f32 to vector<64x64xf32>
    %49 = arith.addf %48, %47 : vector<64x64xf32>
    %50 = arith.mulf %39, %49 : vector<64x64xf32>
    %cst_23 = arith.constant 0.254829586 : f32
    %51 = vector.broadcast %cst_23 : f32 to vector<64x64xf32>
    %52 = arith.addf %51, %50 : vector<64x64xf32>
    %53 = arith.mulf %39, %52 : vector<64x64xf32>
    %cst_24 = arith.constant 0.000000e+00 : f32
    %54 = vector.broadcast %cst_24 : f32 to vector<64x64xf32>
    %55 = arith.subf %54, %33 : vector<64x64xf32>
    %56 = arith.mulf %55, %33 : vector<64x64xf32>
    %57 = math.exp %56 : vector<64x64xf32>
    %58 = arith.mulf %53, %57 : vector<64x64xf32>
    %cst_25 = arith.constant 1.000000e+00 : f32
    %59 = vector.broadcast %cst_25 : f32 to vector<64x64xf32>
    %60 = arith.subf %59, %58 : vector<64x64xf32>
    %cst_26 = arith.constant 0.000000e+00 : f32
    %61 = vector.broadcast %cst_26 : f32 to vector<64x64xf32>
    %62 = arith.cmpf olt, %32, %61 : vector<64x64xf32>
    %cst_27 = arith.constant 0.000000e+00 : f32
    %63 = vector.broadcast %cst_27 : f32 to vector<64x64xf32>
    %64 = arith.subf %63, %60 : vector<64x64xf32>
    %65 = arith.select %62, %64, %60 : vector<64x64xi1>, vector<64x64xf32>
    %cst_28 = arith.constant 5.000000e-01 : f32
    %66 = vector.broadcast %cst_28 : f32 to vector<64x64xf32>
    %67 = arith.mulf %66, %30 : vector<64x64xf32>
    %cst_29 = arith.constant 1.000000e+00 : f32
    %68 = vector.broadcast %cst_29 : f32 to vector<64x64xf32>
    %69 = arith.addf %68, %65 : vector<64x64xf32>
    %70 = arith.mulf %67, %69 : vector<64x64xf32>
    %c0_30 = arith.constant 0 : index
    %c0_31 = arith.constant 0 : index
    %71 = vector.load %arg7[%c0_30, %c0_31] : memref<64x16xf32, #tpu.memory_space<vmem>>, vector<64x16xf32>
    %cst_32 = arith.constant dense<0.000000e+00> : vector<64x16xf32>
    %72 = tpu.matmul %70, %71, %cst_32 {dimension_numbers = #tpu.dot_dimension_numbers<[1], [0], [0], [1], [0, 0, 1, 1], [], []>} : vector<64x64xf32>, vector<64x16xf32>, vector<64x16xf32> -> vector<64x16xf32>
    %c0_33 = arith.constant 0 : index
    %c0_34 = arith.constant 0 : index
    %73 = vector.load %arg8[%c0_33, %c0_34] : memref<1x16xf32, #tpu.memory_space<vmem>>, vector<1x16xf32>
    %74 = vector.broadcast %73 : vector<1x16xf32> to vector<64x16xf32>
    %75 = arith.addf %72, %74 : vector<64x16xf32>
    %76 = arith.addf %1, %75 : vector<64x16xf32>
    %c0_35 = arith.constant 0 : index
    %c0_36 = arith.constant 0 : index
    %c0_37 = arith.constant 0 : index
    %77 = vector.load %arg9[%c0_35, %c0_36, %c0_37] : memref<1x64x16xf32, #tpu.memory_space<vmem>>, vector<1x64x16xf32>
    %78 = vector.shape_cast %77 : vector<1x64x16xf32> to vector<64x16xf32>
    %79 = vector.shape_cast %76 : vector<64x16xf32> to vector<1x64x16xf32>
    tpu.vector_store %arg9[%c0_35, %c0_36, %c0_37], %79 {strides = array<i32>} : memref<1x64x16xf32, #tpu.memory_space<vmem>>, vector<1x64x16xf32>,
    return
  }
  func.func @transform_0(%arg0: i32, %arg1: i32) -> (i32, i32, i32) {
    %c0_i32 = arith.constant 0 : i32
    %c0_i32_0 = arith.constant 0 : i32
    return %arg0, %arg1, %c0_i32 : i32, i32, i32
  }
  func.func @transform_1(%arg0: i32, %arg1: i32) -> (i32, i32) {
    %c0_i32 = arith.constant 0 : i32
    %c0_i32_0 = arith.constant 0 : i32
    %c0_i32_1 = arith.constant 0 : i32
    return %c0_i32, %c0_i32_0 : i32, i32
  }
  func.func @transform_2(%arg0: i32, %arg1: i32) -> (i32, i32) {
    %c0_i32 = arith.constant 0 : i32
    %c0_i32_0 = arith.constant 0 : i32
    %c0_i32_1 = arith.constant 0 : i32
    return %c0_i32, %c0_i32_0 : i32, i32
  }
  func.func @transform_3(%arg0: i32, %arg1: i32) -> (i32, i32) {
    %c0_i32 = arith.constant 0 : i32
    %c0_i32_0 = arith.constant 0 : i32
    %c0_i32_1 = arith.constant 0 : i32
    return %c0_i32, %c0_i32_0 : i32, i32
  }
  func.func @transform_4(%arg0: i32, %arg1: i32) -> (i32, i32) {
    %c0_i32 = arith.constant 0 : i32
    %c0_i32_0 = arith.constant 0 : i32
    %c0_i32_1 = arith.constant 0 : i32
    return %c0_i32, %c0_i32_0 : i32, i32
  }
  func.func @transform_5(%arg0: i32, %arg1: i32) -> (i32, i32) {
    %c0_i32 = arith.constant 0 : i32
    %c0_i32_0 = arith.constant 0 : i32
    %c0_i32_1 = arith.constant 0 : i32
    return %c0_i32, %c0_i32_0 : i32, i32
  }
  func.func @transform_6(%arg0: i32, %arg1: i32) -> (i32, i32) {
    %c0_i32 = arith.constant 0 : i32
    %c0_i32_0 = arith.constant 0 : i32
    %c0_i32_1 = arith.constant 0 : i32
    return %c0_i32, %c0_i32_0 : i32, i32
  }
  func.func @transform_7(%arg0: i32, %arg1: i32) -> (i32, i32, i32) {
    %c0_i32 = arith.constant 0 : i32
    %c0_i32_0 = arith.constant 0 : i32
    return %arg0, %arg1, %c0_i32 : i32, i32, i32
  }
}

</mosaic_0001>

<llo_original>
// kernel: wavelet_block_forward.4
$region0: #{wavelet_block_forward.4}
  #allocation0 [shape = 'u32[]', space=smem, size = 0x4, offset = 0x4, fixed_abs, tag = 'smem constant byte address 0x4 - core index']
  #allocation1 [shape = 'u32[144,128]{1,0:T(1,128)}', space=vmem, size = 0x12000, scoped, tag = 'internal scratch']
  %s0 = inlined_call_operand.vmem [shape: f32[2,64,16], index: 0, kind: input, shape index: {}]
  %s1 = inlined_call_operand.vmem [shape: f32[1,16], index: 1, kind: input, shape index: {}]
  %s2 = inlined_call_operand.vmem [shape: f32[1,16], index: 2, kind: input, shape index: {}]
  %s3 = inlined_call_operand.vmem [shape: f32[16,16], index: 3, kind: input, shape index: {}]
  %s4 = inlined_call_operand.vmem [shape: f32[1,16], index: 4, kind: input, shape index: {}]
  %s5 = inlined_call_operand.vmem [shape: f32[16,4], index: 5, kind: input, shape index: {}]
  %s6 = inlined_call_operand.vmem [shape: f32[1,4], index: 6, kind: input, shape index: {}]
  %s7 = inlined_call_operand.vmem [shape: f32[2,64,16], index: 7, kind: output, shape index: {0}]
  %s8 = inlined_call_operand.vmem [shape: f32[2,64,4], index: 8, kind: output, shape index: {1}]
  %9 = xla_tuple %s7, %s8
  %s10 = sld [smem:[#allocation0]]
  $region69: #{wavelet_block_forward.4} parent=0
    _
  %s12 = ssub.s32 1, %s10
  %s13 = scalar_select 0, %s12, %s10
  loop: start=0, step=1, limit=4
  $region2: #{wavelet_block_forward.4} parent=0 // loop_pre_header
    _
  $region3: #{wavelet_block_forward.4} parent=0 // loop_header
    %s15 = sphi 0, %s19
    %p16 = scmp.ge.s32.totalorder %s15, 4
    %s22 = sphi 0, %s34
    %s23 = sphi 0, %s30
    %s24 = sphi 0, %s22
    %s25 = sphi 0, %s23
    %s26 = sphi 0, %s24
    %s27 = sphi 0, %s25
    %s39 = sphi 0, %s41
    %s42 = sphi 0, %s39
    %s43 = sphi 0, %s42
    %s59 = sphi 0, %s43
    %s63 = sphi 0, %s63
    %s65 = sphi 0, %s63
    %s66 = sphi 0, %s65
    %s80 = sphi 0, %s66
    %s84 = sphi 0, %s84
    %s86 = sphi 0, %s84
    %s87 = sphi 0, %s86
    %s101 = sphi 0, %s87
    %s105 = sphi 0, %s105
    %s107 = sphi 0, %s105
    %s108 = sphi 0, %s107
    %s122 = sphi 0, %s108
    %s126 = sphi 0, %s126
    %s128 = sphi 0, %s126
    %s129 = sphi 0, %s128
    %s143 = sphi 0, %s129
    %s147 = sphi 0, %s147
    %s149 = sphi 0, %s147
    %s150 = sphi 0, %s149
    %s164 = sphi 0, %s150
    %s168 = sphi 0, %s168
    %s170 = sphi 0, %s168
    %s171 = sphi 0, %s170
    %s185 = sphi 0, %s171
    %s193 = sphi 0, %s195
    %s196 = sphi 0, %s193
    %s197 = sphi 0, %s196
    %s213 = sphi 0, %s197
    %s221 = sphi 0, %s223
    %s224 = sphi 0, %s221
    %s225 = sphi 0, %s224
    %s241 = sphi 0, %s225
  $region4: #{wavelet_block_forward.4} parent=0 // loop_header_branch
    %18 = sbr.rel (%p16) target = $region8
  $region5: #{wavelet_block_forward.4} parent=0 // loop_body
    %s20 = ssub.s32 %s15, 1
    %s21 = ssub.s32 %s15, 2
    %s28 = sadd.s32 1, %s23
    %p29 = scmp.ge.s32.totalorder %s28, 1
    %s30 = scalar_select %p29, 0, %s28
    %s31 = sadd.s32 1, %s22
    %s32 = scalar_select %p29, %s31, %s22
    %p33 = scmp.ge.s32.totalorder %s32, 2
    %s34 = scalar_select %p33, 0, %s32
    %s35 = ssub.s32 %s22, %s34
    %s36 = ssub.s32 %s23, %s30
    %s37 = sor.u32 %s35, %s36
    %p38 = scmp.eq.s32.totalorder %s37, 0
    %s40 = sadd.s32 %s39, 1
    %s41 = scalar_select %p38, %s39, %s40
    %p44 = pneg %p38
    %p45 = scmp.eq.s32.totalorder %s15, 1
    %p46 = por %p44, %p45
    %p47 = scmp.ne.s32.totalorder %s39, %s42
    %p48 = scmp.eq.s32.totalorder %s15, 0
    %p49 = por %p47, %p48
    %p50 = scmp.ne.s32.totalorder %s39, %s42
    %p51 = scmp.eq.s32.totalorder %s20, 1
    %p52 = por %p50, %p51
    %p53 = scmp.ne.s32.totalorder %s42, %s43
    %p54 = scmp.eq.s32.totalorder %s20, 0
    %p55 = por %p53, %p54
    %p56 = scmp.ne.s32.totalorder %s42, %s43
    %p57 = scmp.eq.s32.totalorder %s21, 1
    %p58 = por %p56, %p57
    %p60 = scmp.ne.s32.totalorder %s43, %s59
    %p61 = scmp.eq.s32.totalorder %s21, 0
    %p62 = por %p60, %p61
    %s64 = sadd.s32 %s63, 1
    %p67 = scmp.eq.s32.totalorder %s15, 1
    %p68 = scmp.ne.s32.totalorder %s63, %s65
    %p69 = scmp.eq.s32.totalorder %s15, 0
    %p70 = por %p68, %p69
    %p71 = scmp.ne.s32.totalorder %s63, %s65
    %p72 = scmp.eq.s32.totalorder %s20, 1
    %p73 = por %p71, %p72
    %p74 = scmp.ne.s32.totalorder %s65, %s66
    %p75 = scmp.eq.s32.totalorder %s20, 0
    %p76 = por %p74, %p75
    %p77 = scmp.ne.s32.totalorder %s65, %s66
    %p78 = scmp.eq.s32.totalorder %s21, 1
    %p79 = por %p77, %p78
    %p81 = scmp.ne.s32.totalorder %s66, %s80
    %p82 = scmp.eq.s32.totalorder %s21, 0
    %p83 = por %p81, %p82
    %s85 = sadd.s32 %s84, 1
    %p88 = scmp.eq.s32.totalorder %s15, 1
    %p89 = scmp.ne.s32.totalorder %s84, %s86
    %p90 = scmp.eq.s32.totalorder %s15, 0
    %p91 = por %p89, %p90
    %p92 = scmp.ne.s32.totalorder %s84, %s86
    %p93 = scmp.eq.s32.totalorder %s20, 1
    %p94 = por %p92, %p93
    %p95 = scmp.ne.s32.totalorder %s86, %s87
    %p96 = scmp.eq.s32.totalorder %s20, 0
    %p97 = por %p95, %p96
    %p98 = scmp.ne.s32.totalorder %s86, %s87
    %p99 = scmp.eq.s32.totalorder %s21, 1
    %p100 = por %p98, %p99
    %p102 = scmp.ne.s32.totalorder %s87, %s101
    %p103 = scmp.eq.s32.totalorder %s21, 0
    %p104 = por %p102, %p103
    %s106 = sadd.s32 %s105, 1
    %p109 = scmp.eq.s32.totalorder %s15, 1
    %p110 = scmp.ne.s32.totalorder %s105, %s107
    %p111 = scmp.eq.s32.totalorder %s15, 0
    %p112 = por %p110, %p111
    %p113 = scmp.ne.s32.totalorder %s105, %s107
    %p114 = scmp.eq.s32.totalorder %s20, 1
    %p115 = por %p113, %p114
    %p116 = scmp.ne.s32.totalorder %s107, %s108
    %p117 = scmp.eq.s32.totalorder %s20, 0
    %p118 = por %p116, %p117
    %p119 = scmp.ne.s32.totalorder %s107, %s108
    %p120 = scmp.eq.s32.totalorder %s21, 1
    %p121 = por %p119, %p120
    %p123 = scmp.ne.s32.totalorder %s108, %s122
    %p124 = scmp.eq.s32.totalorder %s21, 0
    %p125 = por %p123, %p124
    %s127 = sadd.s32 %s126, 1
    %p130 = scmp.eq.s32.totalorder %s15, 1
    %p131 = scmp.ne.s32.totalorder %s126, %s128
    %p132 = scmp.eq.s32.totalorder %s15, 0
    %p133 = por %p131, %p132
    %p134 = scmp.ne.s32.totalorder %s126, %s128
    %p135 = scmp.eq.s32.totalorder %s20, 1
    %p136 = por %p134, %p135
    %p137 = scmp.ne.s32.totalorder %s128, %s129
    %p138 = scmp.eq.s32.totalorder %s20, 0
    %p139 = por %p137, %p138
    %p140 = scmp.ne.s32.totalorder %s128, %s129
    %p141 = scmp.eq.s32.totalorder %s21, 1
    %p142 = por %p140, %p141
    %p144 = scmp.ne.s32.totalorder %s129, %s143
    %p145 = scmp.eq.s32.totalorder %s21, 0
    %p146 = por %p144, %p145
    %s148 = sadd.s32 %s147, 1
    %p151 = scmp.eq.s32.totalorder %s15, 1
    %p152 = scmp.ne.s32.totalorder %s147, %s149
    %p153 = scmp.eq.s32.totalorder %s15, 0
    %p154 = por %p152, %p153
    %p155 = scmp.ne.s32.totalorder %s147, %s149
    %p156 = scmp.eq.s32.totalorder %s20, 1
    %p157 = por %p155, %p156
    %p158 = scmp.ne.s32.totalorder %s149, %s150
    %p159 = scmp.eq.s32.totalorder %s20, 0
    %p160 = por %p158, %p159
    %p161 = scmp.ne.s32.totalorder %s149, %s150
    %p162 = scmp.eq.s32.totalorder %s21, 1
    %p163 = por %p161, %p162
    %p165 = scmp.ne.s32.totalorder %s150, %s164
    %p166 = scmp.eq.s32.totalorder %s21, 0
    %p167 = por %p165, %p166
    %s169 = sadd.s32 %s168, 1
    %p172 = scmp.eq.s32.totalorder %s15, 1
    %p173 = scmp.ne.s32.totalorder %s168, %s170
    %p174 = scmp.eq.s32.totalorder %s15, 0
    %p175 = por %p173, %p174
    %p176 = scmp.ne.s32.totalorder %s168, %s170
    %p177 = scmp.eq.s32.totalorder %s20, 1
    %p178 = por %p176, %p177
    %p179 = scmp.ne.s32.totalorder %s170, %s171
    %p180 = scmp.eq.s32.totalorder %s20, 0
    %p181 = por %p179, %p180
    %p182 = scmp.ne.s32.totalorder %s170, %s171
    %p183 = scmp.eq.s32.totalorder %s21, 1
    %p184 = por %p182, %p183
    %p186 = scmp.ne.s32.totalorder %s171, %s185
    %p187 = scmp.eq.s32.totalorder %s21, 0
    %p188 = por %p186, %p187
    %s189 = ssub.s32 %s22, %s34
    %s190 = ssub.s32 %s23, %s30
    %s191 = sor.u32 %s189, %s190
    %p192 = scmp.eq.s32.totalorder %s191, 0
    %s194 = sadd.s32 %s193, 1
    %s195 = scalar_select %p192, %s193, %s194
    %p198 = pneg %p192
    %p199 = scmp.eq.s32.totalorder %s15, 1
    %p200 = por %p198, %p199
    %p201 = scmp.ne.s32.totalorder %s193, %s196
    %p202 = scmp.eq.s32.totalorder %s15, 0
    %p203 = por %p201, %p202
    %p204 = scmp.ne.s32.totalorder %s193, %s196
    %p205 = scmp.eq.s32.totalorder %s20, 1
    %p206 = por %p204, %p205
    %p207 = scmp.ne.s32.totalorder %s196, %s197
    %p208 = scmp.eq.s32.totalorder %s20, 0
    %p209 = por %p207, %p208
    %p210 = scmp.ne.s32.totalorder %s196, %s197
    %p211 = scmp.eq.s32.totalorder %s21, 1
    %p212 = por %p210, %p211
    %p214 = scmp.ne.s32.totalorder %s197, %s213
    %p215 = scmp.eq.s32.totalorder %s21, 0
    %p216 = por %p214, %p215
    %s217 = ssub.s32 %s22, %s34
    %s218 = ssub.s32 %s23, %s30
    %s219 = sor.u32 %s217, %s218
    %p220 = scmp.eq.s32.totalorder %s219, 0
    %s222 = sadd.s32 %s221, 1
    %s223 = scalar_select %p220, %s221, %s222
    %p226 = pneg %p220
    %p227 = scmp.eq.s32.totalorder %s15, 1
    %p228 = por %p226, %p227
    %p229 = scmp.ne.s32.totalorder %s221, %s224
    %p230 = scmp.eq.s32.totalorder %s15, 0
    %p231 = por %p229, %p230
    %p232 = scmp.ne.s32.totalorder %s221, %s224
    %p233 = scmp.eq.s32.totalorder %s20, 1
    %p234 = por %p232, %p233
    %p235 = scmp.ne.s32.totalorder %s224, %s225
    %p236 = scmp.eq.s32.totalorder %s20, 0
    %p237 = por %p235, %p236
    %p238 = scmp.ne.s32.totalorder %s224, %s225
    %p239 = scmp.eq.s32.totalorder %s21, 1
    %p240 = por %p238, %p239
    %p242 = scmp.ne.s32.totalorder %s225, %s241
    %p243 = scmp.eq.s32.totalorder %s21, 0
    %p244 = por %p242, %p243
    %p245 = scmp.le.s32.totalorder 1, %s15
    %p246 = scmp.lt.s32.totalorder %s15, 3
    %p247 = pnand %p245, %p246
    %p248 = pneg %p247
    // Predicated region
    $region9: #{wavelet_block_forward.4} parent=5 // pred_check
      _
    $region10: #{wavelet_block_forward.4} parent=5 // pred_check_branch
      %250 = sbr.rel (%p247) target = $region12
    $region11: #{wavelet_block_forward.4} parent=5 // pred_region
      %s251 = ssub.s32 %s15, 1
      // Predicated region
      $region13: #{wavelet_block_forward.4} parent=11 // pred_check
        %p252 = pneg %p76
      $region14: #{wavelet_block_forward.4} parent=11 // pred_check_branch
        %254 = sbr.rel (%p252) target = $region16
      $region15: #{wavelet_block_forward.4} parent=11 // pred_region
        _
      $region16: #{wavelet_block_forward.4} parent=11 // pred_fallthru
        _
      // Predicated region
      $region17: #{wavelet_block_forward.4} parent=11 // pred_check
        %p255 = pneg %p97
      $region18: #{wavelet_block_forward.4} parent=11 // pred_check_branch
        %257 = sbr.rel (%p255) target = $region20
      $region19: #{wavelet_block_forward.4} parent=11 // pred_region
        _
      $region20: #{wavelet_block_forward.4} parent=11 // pred_fallthru
        _
      // Predicated region
      $region21: #{wavelet_block_forward.4} parent=11 // pred_check
        %p258 = pneg %p118
      $region22: #{wavelet_block_forward.4} parent=11 // pred_check_branch
        %260 = sbr.rel (%p258) target = $region24
      $region23: #{wavelet_block_forward.4} parent=11 // pred_region
        _
      $region24: #{wavelet_block_forward.4} parent=11 // pred_fallthru
        _
      // Predicated region
      $region25: #{wavelet_block_forward.4} parent=11 // pred_check
        %p261 = pneg %p139
      $region26: #{wavelet_block_forward.4} parent=11 // pred_check_branch
        %263 = sbr.rel (%p261) target = $region28
      $region27: #{wavelet_block_forward.4} parent=11 // pred_region
        _
      $region28: #{wavelet_block_forward.4} parent=11 // pred_fallthru
        _
      // Predicated region
      $region29: #{wavelet_block_forward.4} parent=11 // pred_check
        %p264 = pneg %p160
      $region30: #{wavelet_block_forward.4} parent=11 // pred_check_branch
        %266 = sbr.rel (%p264) target = $region32
      $region31: #{wavelet_block_forward.4} parent=11 // pred_region
        _
      $region32: #{wavelet_block_forward.4} parent=11 // pred_fallthru
        _
      // Predicated region
      $region33: #{wavelet_block_forward.4} parent=11 // pred_check
        %p267 = pneg %p181
      $region34: #{wavelet_block_forward.4} parent=11 // pred_check_branch
        %269 = sbr.rel (%p267) target = $region36
      $region35: #{wavelet_block_forward.4} parent=11 // pred_region
        _
      $region36: #{wavelet_block_forward.4} parent=11 // pred_fallthru
        _
    $region12: #{wavelet_block_forward.4} parent=5 // pred_fallthru
      _
    %p270 = scmp.lt.s32.totalorder %s15, 2
    // Predicated region
    $region37: #{wavelet_block_forward.4} parent=5 // pred_check
      %p271 = pneg %p270
    $region38: #{wavelet_block_forward.4} parent=5 // pred_check_branch
      %273 = sbr.rel (%p271) target = $region40
    $region39: #{wavelet_block_forward.4} parent=5 // pred_region
      // Predicated region
      $region41: #{wavelet_block_forward.4} parent=39 // pred_check
        %p274 = pneg %p49
      $region42: #{wavelet_block_forward.4} parent=39 // pred_check_branch
        %276 = sbr.rel (%p274) target = $region44
      $region43: #{wavelet_block_forward.4} parent=39 // pred_region
        %s277 = smul.u32 8, %s23
        %p278 = scmp.lt.s32.totalorder %s22, 1
        %s279 = scalar_select %p278, %s22, 1
        %p280 = scmp.lt.s32.totalorder %s277, 7
        %s281 = scalar_select %p280, %s277, 7
        %s282 = smul.addr %s279, 8
        %s283 = sadd.s32 %s281, %s282
        %s284 = smul.addr %s283, 8
        %s285 = scalar_lea.vmem %s0, %s284
        %s286 = smul.u32 8, %s23
      $region44: #{wavelet_block_forward.4} parent=39 // pred_fallthru
        _
    $region40: #{wavelet_block_forward.4} parent=5 // pred_fallthru
      _
    %p287 = scmp.le.s32.totalorder 1, %s15
    %p288 = scmp.lt.s32.totalorder %s15, 3
    %p289 = pnand %p287, %p288
    %p290 = pneg %p289
    // Predicated region
    $region45: #{wavelet_block_forward.4} parent=5 // pred_check
      _
    $region46: #{wavelet_block_forward.4} parent=5 // pred_check_branch
      %292 = sbr.rel (%p289) target = $region48
    $region47: #{wavelet_block_forward.4} parent=5 // pred_region
      %s293 = ssub.s32 %s15, 1
      %s294 = smul.u32 8, %s25
      %p295 = scmp.lt.s32.totalorder %s24, 1
      %s296 = scalar_select %p295, %s24, 1
      %p297 = scmp.lt.s32.totalorder %s294, 7
      %s298 = scalar_select %p297, %s294, 7
      %s299 = smul.addr %s296, 8
      %s300 = sadd.s32 %s298, %s299
      %s301 = smul.addr %s300, 8
      %s302 = scalar_lea.vmem %s0, %s301
      %p303 = pneg %p55
      %p304 = pneg %p52
      %p305 = pneg %p76
      %p306 = pneg %p73
      %p307 = pneg %p97
      %p308 = pneg %p94
      %p309 = pneg %p118
      %p310 = pneg %p115
      %p311 = pneg %p139
      %p312 = pneg %p136
      %p313 = pneg %p160
      %p314 = pneg %p157
      %p315 = pneg %p181
      %p316 = pneg %p178
      %p317 = pneg %p209
      %p318 = pneg %p206
      %s319 = smul.u32 8, %s25
      %p320 = scmp.lt.s32.totalorder %s24, 1
      %s321 = scalar_select %p320, %s24, 1
      %p322 = scmp.lt.s32.totalorder %s319, 7
      %s323 = scalar_select %p322, %s319, 7
      %s324 = smul.addr %s321, 8
      %s325 = sadd.s32 %s323, %s324
      %s326 = smul.addr %s325, 8
      %s327 = scalar_lea.vmem %s7, %s326
      %p328 = pneg %p237
      %p329 = pneg %p234
      %s330 = smul.u32 8, %s25
      %p331 = scmp.lt.s32.totalorder %s24, 1
      %s332 = scalar_select %p331, %s24, 1
      %p333 = scmp.lt.s32.totalorder %s330, 7
      %s334 = scalar_select %p333, %s330, 7
      %s335 = smul.addr %s332, 8
      %s336 = sadd.s32 %s334, %s335
      %s337 = smul.addr %s336, 8
      %s338 = scalar_lea.vmem %s8, %s337
      %s339 = smul.u32 8, %s25
      %p340 = scmp.lt.s32.totalorder %s24, 1
      %s341 = scalar_select %p340, %s24, 1
      %p342 = scmp.lt.s32.totalorder %s339, 7
      %s343 = scalar_select %p342, %s339, 7
      %s344 = smul.addr %s341, 8
      %s345 = sadd.s32 %s343, %s344
      %s346 = smul.addr %s345, 8
      %s347 = scalar_lea.vmem %s0, %s346
      %s348 = smul.u32 8, %s25
      %s349 = smul.u32 8, %s25
      %p350 = scmp.lt.s32.totalorder %s24, 1
      %s351 = scalar_select %p350, %s24, 1
      %p352 = scmp.lt.s32.totalorder %s349, 7
      %s353 = scalar_select %p352, %s349, 7
      %s354 = smul.addr %s351, 8
      %s355 = sadd.s32 %s353, %s354
      %s356 = smul.addr %s355, 8
      %s357 = scalar_lea.vmem %s7, %s356
      %s358 = smul.u32 8, %s25
      %s359 = smul.u32 8, %s25
      %p360 = scmp.lt.s32.totalorder %s24, 1
      %s361 = scalar_select %p360, %s24, 1
      %p362 = scmp.lt.s32.totalorder %s359, 7
      %s363 = scalar_select %p362, %s359, 7
      %s364 = smul.addr %s361, 8
      %s365 = sadd.s32 %s363, %s364
      %s366 = smul.addr %s365, 8
      %s367 = scalar_lea.vmem %s8, %s366
      %s368 = smul.u32 8, %s25
      %v369 = vld [vmem:[%s347] sm:$0xff]
      %v370 = vld [vmem:[%s347 + $0x8] sm:$0xff]
      %v371 = vld [vmem:[%s347 + $0x10] sm:$0xff]
      %v372 = vld [vmem:[%s347 + $0x18] sm:$0xff]
      %v373 = vld [vmem:[%s347 + $0x20] sm:$0xff]
      %v374 = vld [vmem:[%s347 + $0x28] sm:$0xff]
      %v375 = vld [vmem:[%s347 + $0x30] sm:$0xff]
      %v376 = vld [vmem:[%s347 + $0x38] sm:$0xff]
      %v377 = vld [vmem:[%s1] sm:$0x1]
      %v378 = vld [vmem:[%s2] sm:$0x1]
      %vm379 = vcmask 130048
      %v380 = vsel %vm379, %v369, 0.0
      %381 = vadd.xlane.f32.xlu0 %v380
      %v382 = vpop.xlane.xlu0 %381
      %v383 = vsel %vm379, %v370, 0.0
      %384 = vadd.xlane.f32.xlu0 %v383
      %v385 = vpop.xlane.xlu0 %384
      %v386 = vsel %vm379, %v371, 0.0
      %387 = vadd.xlane.f32.xlu0 %v386
      %v388 = vpop.xlane.xlu0 %387
      %v389 = vsel %vm379, %v372, 0.0
      %390 = vadd.xlane.f32.xlu0 %v389
      %v391 = vpop.xlane.xlu0 %390
      %v392 = vsel %vm379, %v373, 0.0
      %393 = vadd.xlane.f32.xlu0 %v392
      %v394 = vpop.xlane.xlu0 %393
      %v395 = vsel %vm379, %v374, 0.0
      %396 = vadd.xlane.f32.xlu0 %v395
      %v397 = vpop.xlane.xlu0 %396
      %v398 = vsel %vm379, %v375, 0.0
      %399 = vadd.xlane.f32.xlu0 %v398
      %v400 = vpop.xlane.xlu0 %399
      %v401 = vsel %vm379, %v376, 0.0
      %402 = vadd.xlane.f32.xlu0 %v401
      %v403 = vpop.xlane.xlu0 %402
      %v404 = vrcp.pop 16.0
      %v405 = vmul.f32 %v382, %v404
      %v406 = vmul.f32 %v385, %v404
      %v407 = vmul.f32 %v388, %v404
      %v408 = vmul.f32 %v391, %v404
      %v409 = vmul.f32 %v394, %v404
      %v410 = vmul.f32 %v397, %v404
      %v411 = vmul.f32 %v400, %v404
      %v412 = vmul.f32 %v403, %v404
      %v413 = vsub.f32 %v369, %v405
      %v414 = vsub.f32 %v370, %v406
      %v415 = vsub.f32 %v371, %v407
      %v416 = vsub.f32 %v372, %v408
      %v417 = vsub.f32 %v373, %v409
      %v418 = vsub.f32 %v374, %v410
      %v419 = vsub.f32 %v375, %v411
      %v420 = vsub.f32 %v376, %v412
      %v421 = vmul.f32 %v413, %v413
      %v422 = vmul.f32 %v414, %v414
      %v423 = vmul.f32 %v415, %v415
      %v424 = vmul.f32 %v416, %v416
      %v425 = vmul.f32 %v417, %v417
      %v426 = vmul.f32 %v418, %v418
      %v427 = vmul.f32 %v419, %v419
      %v428 = vmul.f32 %v420, %v420
      %v429 = vsel %vm379, %v421, 0.0
      %430 = vadd.xlane.f32.xlu0 %v429
      %v431 = vpop.xlane.xlu0 %430
      %v432 = vsel %vm379, %v422, 0.0
      %433 = vadd.xlane.f32.xlu0 %v432
      %v434 = vpop.xlane.xlu0 %433
      %v435 = vsel %vm379, %v423, 0.0
      %436 = vadd.xlane.f32.xlu0 %v435
      %v437 = vpop.xlane.xlu0 %436
      %v438 = vsel %vm379, %v424, 0.0
      %439 = vadd.xlane.f32.xlu0 %v438
      %v440 = vpop.xlane.xlu0 %439
      %v441 = vsel %vm379, %v425, 0.0
      %442 = vadd.xlane.f32.xlu0 %v441
      %v443 = vpop.xlane.xlu0 %442
      %v444 = vsel %vm379, %v426, 0.0
      %445 = vadd.xlane.f32.xlu0 %v444
      %v446 = vpop.xlane.xlu0 %445
      %v447 = vsel %vm379, %v427, 0.0
      %448 = vadd.xlane.f32.xlu0 %v447
      %v449 = vpop.xlane.xlu0 %448
      %v450 = vsel %vm379, %v428, 0.0
      %451 = vadd.xlane.f32.xlu0 %v450
      %v452 = vpop.xlane.xlu0 %451
      %v453 = vmul.f32 %v431, %v404
      %v454 = vmul.f32 %v434, %v404
      %v455 = vmul.f32 %v437, %v404
      %v456 = vmul.f32 %v440, %v404
      %v457 = vmul.f32 %v443, %v404
      %v458 = vmul.f32 %v446, %v404
      %v459 = vmul.f32 %v449, %v404
      %v460 = vmul.f32 %v452, %v404
      %v461 = vadd.f32 %v453, 1e-05
      %v462 = vadd.f32 %v454, 1e-05
      %v463 = vadd.f32 %v455, 1e-05
      %v464 = vadd.f32 %v456, 1e-05
      %v465 = vadd.f32 %v457, 1e-05
      %v466 = vadd.f32 %v458, 1e-05
      %v467 = vadd.f32 %v459, 1e-05
      %v468 = vadd.f32 %v460, 1e-05
      %v469 = vrsqrt.pop %v461
      %v470 = vrsqrt.pop %v462
      %v471 = vrsqrt.pop %v463
      %v472 = vrsqrt.pop %v464
      %v473 = vrsqrt.pop %v465
      %v474 = vrsqrt.pop %v466
      %v475 = vrsqrt.pop %v467
      %v476 = vrsqrt.pop %v468
      %v477 = vmul.f32 %v413, %v469
      %v478 = vmul.f32 %v414, %v470
      %v479 = vmul.f32 %v415, %v471
      %v480 = vmul.f32 %v416, %v472
      %v481 = vmul.f32 %v417, %v473
      %v482 = vmul.f32 %v418, %v474
      %v483 = vmul.f32 %v419, %v475
      %v484 = vmul.f32 %v420, %v476
      %v486 = vlaneseq
      %v487 = vshrl.u32 %v486, 7
      %v488 = vsub.s32 0, %v487
      %v489 = vrot.slane %v377, %v488
      %v491 = vmul.f32 %v477, %v489
      %v492 = vmul.f32 %v478, %v489
      %v493 = vmul.f32 %v479, %v489
      %v494 = vmul.f32 %v480, %v489
      %v495 = vmul.f32 %v481, %v489
      %v496 = vmul.f32 %v482, %v489
      %v497 = vmul.f32 %v483, %v489
      %v498 = vmul.f32 %v484, %v489
      %v500 = vlaneseq
      %v501 = vshrl.u32 %v500, 7
      %v502 = vsub.s32 0, %v501
      %v503 = vrot.slane %v378, %v502
      %v505 = vadd.f32 %v491, %v503
      %v506 = vadd.f32 %v492, %v503
      %v507 = vadd.f32 %v493, %v503
      %v508 = vadd.f32 %v494, %v503
      %v509 = vadd.f32 %v495, %v503
      %v510 = vadd.f32 %v496, %v503
      %v511 = vadd.f32 %v497, %v503
      %v512 = vadd.f32 %v498, %v503
      %v513 = vld [vmem:[%s3] sm:$0xff]
      %v514 = vld [vmem:[%s3 + $0x8] sm:$0xff]
      %v515 = vld [vmem:[%s4] sm:$0x1]
      %v517 = vlaneseq
      %v518 = vshrl.u32 %v517, 7
      %v519 = vsub.s32 0, %v518
      %v520 = vrot.slane %v515, %v519
      %v523 = vsel %vm379, %v505, 0
      %v526 = vsel %vm379, %v506, 0
      %v529 = vsel %vm379, %v507, 0
      %v532 = vsel %vm379, %v508, 0
      %v535 = vsel %vm379, %v509, 0
      %v538 = vsel %vm379, %v510, 0
      %v541 = vsel %vm379, %v511, 0
      %v544 = vsel %vm379, %v512, 0
      %546 = vmatprep.subr.mxu0 0.0
      %547 = vmatpush1.msra.mxu0 %v513
      %548 = vmatprep.subr.mxu0 0.0
      %549 = vmatpush1.msra.mxu0 %v514
      %550 = vmatprep.subr.mxu0 0.0
      %551 = vmatpush1.msra.mxu0 0.0
      %552 = vmatprep.subr.mxu0 0.0
      %553 = vmatpush1.msra.mxu0 0.0
      %554 = vmatprep.subr.mxu0 0.0
      %555 = vmatpush1.msra.mxu0 0.0
      %556 = vmatprep.subr.mxu0 0.0
      %557 = vmatpush1.msra.mxu0 0.0
      %558 = vmatprep.subr.mxu0 0.0
      %559 = vmatpush1.msra.mxu0 0.0
      %560 = vmatprep.subr.mxu0 0.0
      %561 = vmatpush1.msra.mxu0 0.0
      %562 = vmatprep.subr.mxu0 0.0
      %563 = vmatpush1.msra.mxu0 0.0
      %564 = vmatprep.subr.mxu0 0.0
      %565 = vmatpush1.msra.mxu0 0.0
      %566 = vmatprep.subr.mxu0 0.0
      %567 = vmatpush1.msra.mxu0 0.0
      %568 = vmatprep.subr.mxu0 0.0
      %569 = vmatpush1.msra.mxu0 0.0
      %570 = vmatprep.subr.mxu0 0.0
      %571 = vmatpush1.msra.mxu0 0.0
      %572 = vmatprep.subr.mxu0 0.0
      %573 = vmatpush1.msra.mxu0 0.0
      %574 = vmatprep.subr.mxu0 0.0
      %575 = vmatpush1.msra.mxu0 0.0
      %576 = vmatprep.subr.mxu0 0.0
      %577 = vmatpush1.msra.mxu0 0.0
      %578 = vmatprep.subr.mxu0 0.0
      %579 = vmatpush1.msra.mxu0 0.0
      %580 = vmatprep.subr.mxu0 0.0
      %581 = vmatpush1.msra.mxu0 0.0
      %582 = vmatprep.subr.mxu0 0.0
      %583 = vmatpush1.msra.mxu0 0.0
      %584 = vmatprep.subr.mxu0 0.0
      %585 = vmatpush1.msra.mxu0 0.0
      %586 = vmatprep.subr.mxu0 0.0
      %587 = vmatpush1.msra.mxu0 0.0
      %588 = vmatprep.subr.mxu0 0.0
      %589 = vmatpush1.msra.mxu0 0.0
      %590 = vmatprep.subr.mxu0 0.0
      %591 = vmatpush1.msra.mxu0 0.0
      %592 = vmatprep.subr.mxu0 0.0
      %593 = vmatpush1.msra.mxu0 0.0
      %594 = vmatprep.subr.mxu0 0.0
      %595 = vmatpush1.msra.mxu0 0.0
      %596 = vmatprep.subr.mxu0 0.0
      %597 = vmatpush1.msra.mxu0 0.0
      %598 = vmatprep.subr.mxu0 0.0
      %599 = vmatpush1.msra.mxu0 0.0
      %600 = vmatprep.subr.mxu0 0.0
      %601 = vmatpush1.msra.mxu0 0.0
      %602 = vmatprep.subr.mxu0 0.0
      %603 = vmatpush1.msra.mxu0 0.0
      %604 = vmatprep.subr.mxu0 0.0
      %605 = vmatpush1.msra.mxu0 0.0
      %606 = vmatprep.subr.mxu0 0.0
      %607 = vmatpush1.msra.mxu0 0.0
      %608 = vmatprep.subr.mxu0 0.0
      %609 = vmatpush1.msra.mxu0 0.0
      %610 = vmatprep.mubr.f32.mxu0 0.0
      %611 = vmatmul.mubr.f32.gmra.mrb[0].mxu0 %v523
      %v612 = vpop.f32.mrb[0].mxu0
      %v613 = vadd.f32 %v520, %v612
      %v614 = vpop.f32.mrb[0].mxu0
      %615 = vmatprep.mubr.f32.mxu0 0.0
      %616 = vmatmul.mubr.f32.gmra.mrb[0].mxu0 %v526
      %v617 = vpop.f32.mrb[0].mxu0
      %v618 = vadd.f32 %v520, %v617
      %v619 = vpop.f32.mrb[0].mxu0
      %620 = vmatprep.mubr.f32.mxu0 0.0
      %621 = vmatmul.mubr.f32.gmra.mrb[0].mxu0 %v529
      %v622 = vpop.f32.mrb[0].mxu0
      %v623 = vadd.f32 %v520, %v622
      %v624 = vpop.f32.mrb[0].mxu0
      %625 = vmatprep.mubr.f32.mxu0 0.0
      %626 = vmatmul.mubr.f32.gmra.mrb[0].mxu0 %v532
      %v627 = vpop.f32.mrb[0].mxu0
      %v628 = vadd.f32 %v520, %v627
      %v629 = vpop.f32.mrb[0].mxu0
      %630 = vmatprep.mubr.f32.mxu0 0.0
      %631 = vmatmul.mubr.f32.gmra.mrb[0].mxu0 %v535
      %v632 = vpop.f32.mrb[0].mxu0
      %v633 = vadd.f32 %v520, %v632
      %v634 = vpop.f32.mrb[0].mxu0
      %635 = vmatprep.mubr.f32.mxu0 0.0
      %636 = vmatmul.mubr.f32.gmra.mrb[0].mxu0 %v538
      %v637 = vpop.f32.mrb[0].mxu0
      %v638 = vadd.f32 %v520, %v637
      %v639 = vpop.f32.mrb[0].mxu0
      %640 = vmatprep.mubr.f32.mxu0 0.0
      %641 = vmatmul.mubr.f32.gmra.mrb[0].mxu0 %v541
      %v642 = vpop.f32.mrb[0].mxu0
      %v643 = vadd.f32 %v520, %v642
      %v644 = vpop.f32.mrb[0].mxu0
      %645 = vmatprep.mubr.f32.mxu0 0.0
      %646 = vmatmul.mubr.f32.gmra.mrb[0].mxu0 %v544
      %v647 = vpop.f32.mrb[0].mxu0
      %v648 = vadd.f32 %v520, %v647
      %v649 = vpop.f32.mrb[0].mxu0
      %650 = vdwg.mxu0
      %651 = vst.msk [vmem:[%s357] sm:$0xff] %vm379, %v613
      %652 = vst.msk [vmem:[%s357 + $0x8] sm:$0xff] %vm379, %v618
      %653 = vst.msk [vmem:[%s357 + $0x10] sm:$0xff] %vm379, %v623
      %654 = vst.msk [vmem:[%s357 + $0x18] sm:$0xff] %vm379, %v628
      %655 = vst.msk [vmem:[%s357 + $0x20] sm:$0xff] %vm379, %v633
      %656 = vst.msk [vmem:[%s357 + $0x28] sm:$0xff] %vm379, %v638
      %657 = vst.msk [vmem:[%s357 + $0x30] sm:$0xff] %vm379, %v643
      %658 = vst.msk [vmem:[%s357 + $0x38] sm:$0xff] %vm379, %v648
      %v659 = vld [vmem:[%s5] sm:$0xff]
      %v660 = vld [vmem:[%s5 + $0x8] sm:$0xff]
      %v661 = vld [vmem:[%s6] sm:$0x1]
      %v663 = vlaneseq
      %v664 = vshrl.u32 %v663, 7
      %v665 = vsub.s32 0, %v664
      %v666 = vrot.slane %v661, %v665
      %668 = vmatprep.subr.mxu0 0.0
      %669 = vmatpush1.msra.mxu0 %v659
      %670 = vmatprep.subr.mxu0 0.0
      %671 = vmatpush1.msra.mxu0 %v660
      %672 = vmatprep.subr.mxu0 0.0
      %673 = vmatpush1.msra.mxu0 0.0
      %674 = vmatprep.subr.mxu0 0.0
      %675 = vmatpush1.msra.mxu0 0.0
      %676 = vmatprep.subr.mxu0 0.0
      %677 = vmatpush1.msra.mxu0 0.0
      %678 = vmatprep.subr.mxu0 0.0
      %679 = vmatpush1.msra.mxu0 0.0
      %680 = vmatprep.subr.mxu0 0.0
      %681 = vmatpush1.msra.mxu0 0.0
      %682 = vmatprep.subr.mxu0 0.0
      %683 = vmatpush1.msra.mxu0 0.0
      %684 = vmatprep.subr.mxu0 0.0
      %685 = vmatpush1.msra.mxu0 0.0
      %686 = vmatprep.subr.mxu0 0.0
      %687 = vmatpush1.msra.mxu0 0.0
      %688 = vmatprep.subr.mxu0 0.0
      %689 = vmatpush1.msra.mxu0 0.0
      %690 = vmatprep.subr.mxu0 0.0
      %691 = vmatpush1.msra.mxu0 0.0
      %692 = vmatprep.subr.mxu0 0.0
      %693 = vmatpush1.msra.mxu0 0.0
      %694 = vmatprep.subr.mxu0 0.0
      %695 = vmatpush1.msra.mxu0 0.0
      %696 = vmatprep.subr.mxu0 0.0
      %697 = vmatpush1.msra.mxu0 0.0
      %698 = vmatprep.subr.mxu0 0.0
      %699 = vmatpush1.msra.mxu0 0.0
      %700 = vmatprep.subr.mxu0 0.0
      %701 = vmatpush1.msra.mxu0 0.0
      %702 = vmatprep.subr.mxu0 0.0
      %703 = vmatpush1.msra.mxu0 0.0
      %704 = vmatprep.subr.mxu0 0.0
      %705 = vmatpush1.msra.mxu0 0.0
      %706 = vmatprep.subr.mxu0 0.0
      %707 = vmatpush1.msra.mxu0 0.0
      %708 = vmatprep.subr.mxu0 0.0
      %709 = vmatpush1.msra.mxu0 0.0
      %710 = vmatprep.subr.mxu0 0.0
      %711 = vmatpush1.msra.mxu0 0.0
      %712 = vmatprep.subr.mxu0 0.0
      %713 = vmatpush1.msra.mxu0 0.0
      %714 = vmatprep.subr.mxu0 0.0
      %715 = vmatpush1.msra.mxu0 0.0
      %716 = vmatprep.subr.mxu0 0.0
      %717 = vmatpush1.msra.mxu0 0.0
      %718 = vmatprep.subr.mxu0 0.0
      %719 = vmatpush1.msra.mxu0 0.0
      %720 = vmatprep.subr.mxu0 0.0
      %721 = vmatpush1.msra.mxu0 0.0
      %722 = vmatprep.subr.mxu0 0.0
      %723 = vmatpush1.msra.mxu0 0.0
      %724 = vmatprep.subr.mxu0 0.0
      %725 = vmatpush1.msra.mxu0 0.0
      %726 = vmatprep.subr.mxu0 0.0
      %727 = vmatpush1.msra.mxu0 0.0
      %728 = vmatprep.subr.mxu0 0.0
      %729 = vmatpush1.msra.mxu0 0.0
      %730 = vmatprep.subr.mxu0 0.0
      %731 = vmatpush1.msra.mxu0 0.0
      %732 = vmatprep.mubr.f32.mxu0 0.0
      %733 = vmatmul.mubr.f32.gmra.mrb[0].mxu0 %v523
      %v734 = vpop.f32.mrb[0].mxu0
      %v735 = vadd.f32 %v666, %v734
      %v736 = vpop.f32.mrb[0].mxu0
      %737 = vmatprep.mubr.f32.mxu0 0.0
      %738 = vmatmul.mubr.f32.gmra.mrb[0].mxu0 %v526
      %v739 = vpop.f32.mrb[0].mxu0
      %v740 = vadd.f32 %v666, %v739
      %v741 = vpop.f32.mrb[0].mxu0
      %742 = vmatprep.mubr.f32.mxu0 0.0
      %743 = vmatmul.mubr.f32.gmra.mrb[0].mxu0 %v529
      %v744 = vpop.f32.mrb[0].mxu0
      %v745 = vadd.f32 %v666, %v744
      %v746 = vpop.f32.mrb[0].mxu0
      %747 = vmatprep.mubr.f32.mxu0 0.0
      %748 = vmatmul.mubr.f32.gmra.mrb[0].mxu0 %v532
      %v749 = vpop.f32.mrb[0].mxu0
      %v750 = vadd.f32 %v666, %v749
      %v751 = vpop.f32.mrb[0].mxu0
      %752 = vmatprep.mubr.f32.mxu0 0.0
      %753 = vmatmul.mubr.f32.gmra.mrb[0].mxu0 %v535
      %v754 = vpop.f32.mrb[0].mxu0
      %v755 = vadd.f32 %v666, %v754
      %v756 = vpop.f32.mrb[0].mxu0
      %757 = vmatprep.mubr.f32.mxu0 0.0
      %758 = vmatmul.mubr.f32.gmra.mrb[0].mxu0 %v538
      %v759 = vpop.f32.mrb[0].mxu0
      %v760 = vadd.f32 %v666, %v759
      %v761 = vpop.f32.mrb[0].mxu0
      %762 = vmatprep.mubr.f32.mxu0 0.0
      %763 = vmatmul.mubr.f32.gmra.mrb[0].mxu0 %v541
      %v764 = vpop.f32.mrb[0].mxu0
      %v765 = vadd.f32 %v666, %v764
      %v766 = vpop.f32.mrb[0].mxu0
      %767 = vmatprep.mubr.f32.mxu0 0.0
      %768 = vmatmul.mubr.f32.gmra.mrb[0].mxu0 %v544
      %v769 = vpop.f32.mrb[0].mxu0
      %v770 = vadd.f32 %v666, %v769
      %v771 = vpop.f32.mrb[0].mxu0
      %772 = vdwg.mxu0
      %v773 = vmax.f32 %v735, 0.0
      %v774 = vmax.f32 %v740, 0.0
      %v775 = vmax.f32 %v745, 0.0
      %v776 = vmax.f32 %v750, 0.0
      %v777 = vmax.f32 %v755, 0.0
      %v778 = vmax.f32 %v760, 0.0
      %v779 = vmax.f32 %v765, 0.0
      %v780 = vmax.f32 %v770, 0.0
      %vm781 = vcmask 31744
      %782 = vst.msk [vmem:[%s367] sm:$0xff] %vm781, %v773
      %783 = vst.msk [vmem:[%s367 + $0x8] sm:$0xff] %vm781, %v774
      %784 = vst.msk [vmem:[%s367 + $0x10] sm:$0xff] %vm781, %v775
      %785 = vst.msk [vmem:[%s367 + $0x18] sm:$0xff] %vm781, %v776
      %786 = vst.msk [vmem:[%s367 + $0x20] sm:$0xff] %vm781, %v777
      %787 = vst.msk [vmem:[%s367 + $0x28] sm:$0xff] %vm781, %v778
      %788 = vst.msk [vmem:[%s367 + $0x30] sm:$0xff] %vm781, %v779
      %789 = vst.msk [vmem:[%s367 + $0x38] sm:$0xff] %vm781, %v780
      %s790 = smul.u32 8, %s25
      %p791 = scmp.lt.s32.totalorder %s24, 1
      %s792 = scalar_select %p791, %s24, 1
      %p793 = scmp.lt.s32.totalorder %s790, 7
      %s794 = scalar_select %p793, %s790, 7
      %s795 = smul.addr %s792, 8
      %s796 = sadd.s32 %s794, %s795
      %s797 = smul.addr %s796, 8
      %s798 = scalar_lea.vmem %s7, %s797
      %s799 = smul.u32 8, %s25
      %p800 = scmp.lt.s32.totalorder %s24, 1
      %s801 = scalar_select %p800, %s24, 1
      %p802 = scmp.lt.s32.totalorder %s799, 7
      %s803 = scalar_select %p802, %s799, 7
      %s804 = smul.addr %s801, 8
      %s805 = sadd.s32 %s803, %s804
      %s806 = smul.addr %s805, 8
      %s807 = scalar_lea.vmem %s8, %s806
      // Predicated region
      $region49: #{wavelet_block_forward.4} parent=47 // pred_check
        %p808 = pneg %p206
      $region50: #{wavelet_block_forward.4} parent=47 // pred_check_branch
        %810 = sbr.rel (%p808) target = $region52
      $region51: #{wavelet_block_forward.4} parent=47 // pred_region
        %s811 = smul.u32 8, %s25
      $region52: #{wavelet_block_forward.4} parent=47 // pred_fallthru
        _
      // Predicated region
      $region53: #{wavelet_block_forward.4} parent=47 // pred_check
        %p812 = pneg %p234
      $region54: #{wavelet_block_forward.4} parent=47 // pred_check_branch
        %814 = sbr.rel (%p812) target = $region56
      $region55: #{wavelet_block_forward.4} parent=47 // pred_region
        %s815 = smul.u32 8, %s25
      $region56: #{wavelet_block_forward.4} parent=47 // pred_fallthru
        _
    $region48: #{wavelet_block_forward.4} parent=5 // pred_fallthru
      _
    %p816 = scmp.le.s32.totalorder 2, %s15
    // Predicated region
    $region57: #{wavelet_block_forward.4} parent=5 // pred_check
      %p817 = pneg %p816
    $region58: #{wavelet_block_forward.4} parent=5 // pred_check_branch
      %819 = sbr.rel (%p817) target = $region60
    $region59: #{wavelet_block_forward.4} parent=5 // pred_region
      %s820 = ssub.s32 %s15, 2
      // Predicated region
      $region61: #{wavelet_block_forward.4} parent=59 // pred_check
        %p821 = pneg %p212
      $region62: #{wavelet_block_forward.4} parent=59 // pred_check_branch
        %823 = sbr.rel (%p821) target = $region64
      $region63: #{wavelet_block_forward.4} parent=59 // pred_region
        %s824 = smul.u32 8, %s27
        %p825 = scmp.lt.s32.totalorder %s26, 1
        %s826 = scalar_select %p825, %s26, 1
        %p827 = scmp.lt.s32.totalorder %s824, 7
        %s828 = scalar_select %p827, %s824, 7
        %s829 = smul.addr %s826, 8
        %s830 = sadd.s32 %s828, %s829
        %s831 = smul.addr %s830, 8
        %s832 = scalar_lea.vmem %s7, %s831
      $region64: #{wavelet_block_forward.4} parent=59 // pred_fallthru
        _
      // Predicated region
      $region65: #{wavelet_block_forward.4} parent=59 // pred_check
        %p833 = pneg %p240
      $region66: #{wavelet_block_forward.4} parent=59 // pred_check_branch
        %835 = sbr.rel (%p833) target = $region68
      $region67: #{wavelet_block_forward.4} parent=59 // pred_region
        %s836 = smul.u32 8, %s27
        %p837 = scmp.lt.s32.totalorder %s26, 1
        %s838 = scalar_select %p837, %s26, 1
        %p839 = scmp.lt.s32.totalorder %s836, 7
        %s840 = scalar_select %p839, %s836, 7
        %s841 = smul.addr %s838, 8
        %s842 = sadd.s32 %s840, %s841
        %s843 = smul.addr %s842, 8
        %s844 = scalar_lea.vmem %s8, %s843
      $region68: #{wavelet_block_forward.4} parent=59 // pred_fallthru
        _
    $region60: #{wavelet_block_forward.4} parent=5 // pred_fallthru
      _
  $region6: #{wavelet_block_forward.4} parent=0 // loop_footer
    %s19 = sadd.s32 1, %s15
  $region7: #{wavelet_block_forward.4} parent=0 // loop_footer_branch
    %14 = sbr.rel target = $region3
  $region8: #{wavelet_block_forward.4} parent=0 // loop_exit
    _

// kernel: wavelet_block_forward.5
$region0: #{wavelet_block_forward.5}
  #allocation0 [shape = 'u32[]', space=smem, size = 0x4, offset = 0x4, fixed_abs, tag = 'smem constant byte address 0x4 - core index']
  #allocation1 [shape = 'u32[144,128]{1,0:T(1,128)}', space=vmem, size = 0x12000, scoped, tag = 'internal scratch']
  %s0 = inlined_call_operand.vmem [shape: f32[2,38,16], index: 0, kind: input, shape index: {}]
  %s1 = inlined_call_operand.vmem [shape: f32[9,16,16], index: 1, kind: input, shape index: {}]
  %s2 = inlined_call_operand.vmem [shape: f32[1,16], index: 2, kind: input, shape index: {}]
  %s3 = inlined_call_operand.vmem [shape: f32[2,24,16], index: 3, kind: output, shape index: {0}]
  %s4 = inlined_call_operand.vmem [shape: f32[2,24,16], index: 4, kind: output, shape index: {1}]
  %5 = xla_tuple %s3, %s4
  %s6 = sld [smem:[#allocation0]]
  $region53: #{wavelet_block_forward.5} parent=0
    _
  %s8 = ssub.s32 1, %s6
  %s9 = scalar_select 0, %s8, %s6
  loop: start=0, step=1, limit=4
  $region2: #{wavelet_block_forward.5} parent=0 // loop_pre_header
    _
  $region3: #{wavelet_block_forward.5} parent=0 // loop_header
    %s11 = sphi 0, %s15
    %p12 = scmp.ge.s32.totalorder %s11, 4
    %s21 = sphi 0, %s23
    %s24 = sphi 0, %s21
    %s25 = sphi 0, %s24
    %s41 = sphi 0, %s25
    %s45 = sphi 0, %s45
    %s47 = sphi 0, %s45
    %s48 = sphi 0, %s47
    %s62 = sphi 0, %s48
    %s66 = sphi 0, %s66
    %s68 = sphi 0, %s66
    %s69 = sphi 0, %s68
    %s83 = sphi 0, %s69
    %s89 = sphi 0, %s91
    %s92 = sphi 0, %s89
    %s93 = sphi 0, %s92
    %s109 = sphi 0, %s93
    %s115 = sphi 0, %s117
    %s118 = sphi 0, %s115
    %s119 = sphi 0, %s118
    %s135 = sphi 0, %s119
  $region4: #{wavelet_block_forward.5} parent=0 // loop_header_branch
    %14 = sbr.rel (%p12) target = $region8
  $region5: #{wavelet_block_forward.5} parent=0 // loop_body
    %s16 = ssub.s32 %s11, 1
    %s17 = ssub.s32 %s11, 2
    %s18 = sadd.s32 %s11, 1
    %s19 = ssub.s32 %s11, %s18
    %p20 = scmp.eq.s32.totalorder %s19, 0
    %s22 = sadd.s32 %s21, 1
    %s23 = scalar_select %p20, %s21, %s22
    %p26 = pneg %p20
    %p27 = scmp.eq.s32.totalorder %s11, 1
    %p28 = por %p26, %p27
    %p29 = scmp.ne.s32.totalorder %s21, %s24
    %p30 = scmp.eq.s32.totalorder %s11, 0
    %p31 = por %p29, %p30
    %p32 = scmp.ne.s32.totalorder %s21, %s24
    %p33 = scmp.eq.s32.totalorder %s16, 1
    %p34 = por %p32, %p33
    %p35 = scmp.ne.s32.totalorder %s24, %s25
    %p36 = scmp.eq.s32.totalorder %s16, 0
    %p37 = por %p35, %p36
    %p38 = scmp.ne.s32.totalorder %s24, %s25
    %p39 = scmp.eq.s32.totalorder %s17, 1
    %p40 = por %p38, %p39
    %p42 = scmp.ne.s32.totalorder %s25, %s41
    %p43 = scmp.eq.s32.totalorder %s17, 0
    %p44 = por %p42, %p43
    %s46 = sadd.s32 %s45, 1
    %p49 = scmp.eq.s32.totalorder %s11, 1
    %p50 = scmp.ne.s32.totalorder %s45, %s47
    %p51 = scmp.eq.s32.totalorder %s11, 0
    %p52 = por %p50, %p51
    %p53 = scmp.ne.s32.totalorder %s45, %s47
    %p54 = scmp.eq.s32.totalorder %s16, 1
    %p55 = por %p53, %p54
    %p56 = scmp.ne.s32.totalorder %s47, %s48
    %p57 = scmp.eq.s32.totalorder %s16, 0
    %p58 = por %p56, %p57
    %p59 = scmp.ne.s32.totalorder %s47, %s48
    %p60 = scmp.eq.s32.totalorder %s17, 1
    %p61 = por %p59, %p60
    %p63 = scmp.ne.s32.totalorder %s48, %s62
    %p64 = scmp.eq.s32.totalorder %s17, 0
    %p65 = por %p63, %p64
    %s67 = sadd.s32 %s66, 1
    %p70 = scmp.eq.s32.totalorder %s11, 1
    %p71 = scmp.ne.s32.totalorder %s66, %s68
    %p72 = scmp.eq.s32.totalorder %s11, 0
    %p73 = por %p71, %p72
    %p74 = scmp.ne.s32.totalorder %s66, %s68
    %p75 = scmp.eq.s32.totalorder %s16, 1
    %p76 = por %p74, %p75
    %p77 = scmp.ne.s32.totalorder %s68, %s69
    %p78 = scmp.eq.s32.totalorder %s16, 0
    %p79 = por %p77, %p78
    %p80 = scmp.ne.s32.totalorder %s68, %s69
    %p81 = scmp.eq.s32.totalorder %s17, 1
    %p82 = por %p80, %p81
    %p84 = scmp.ne.s32.totalorder %s69, %s83
    %p85 = scmp.eq.s32.totalorder %s17, 0
    %p86 = por %p84, %p85
    %s87 = ssub.s32 %s11, %s18
    %p88 = scmp.eq.s32.totalorder %s87, 0
    %s90 = sadd.s32 %s89, 1
    %s91 = scalar_select %p88, %s89, %s90
    %p94 = pneg %p88
    %p95 = scmp.eq.s32.totalorder %s11, 1
    %p96 = por %p94, %p95
    %p97 = scmp.ne.s32.totalorder %s89, %s92
    %p98 = scmp.eq.s32.totalorder %s11, 0
    %p99 = por %p97, %p98
    %p100 = scmp.ne.s32.totalorder %s89, %s92
    %p101 = scmp.eq.s32.totalorder %s16, 1
    %p102 = por %p100, %p101
    %p103 = scmp.ne.s32.totalorder %s92, %s93
    %p104 = scmp.eq.s32.totalorder %s16, 0
    %p105 = por %p103, %p104
    %p106 = scmp.ne.s32.totalorder %s92, %s93
    %p107 = scmp.eq.s32.totalorder %s17, 1
    %p108 = por %p106, %p107
    %p110 = scmp.ne.s32.totalorder %s93, %s109
    %p111 = scmp.eq.s32.totalorder %s17, 0
    %p112 = por %p110, %p111
    %s113 = ssub.s32 %s11, %s18
    %p114 = scmp.eq.s32.totalorder %s113, 0
    %s116 = sadd.s32 %s115, 1
    %s117 = scalar_select %p114, %s115, %s116
    %p120 = pneg %p114
    %p121 = scmp.eq.s32.totalorder %s11, 1
    %p122 = por %p120, %p121
    %p123 = scmp.ne.s32.totalorder %s115, %s118
    %p124 = scmp.eq.s32.totalorder %s11, 0
    %p125 = por %p123, %p124
    %p126 = scmp.ne.s32.totalorder %s115, %s118
    %p127 = scmp.eq.s32.totalorder %s16, 1
    %p128 = por %p126, %p127
    %p129 = scmp.ne.s32.totalorder %s118, %s119
    %p130 = scmp.eq.s32.totalorder %s16, 0
    %p131 = por %p129, %p130
    %p132 = scmp.ne.s32.totalorder %s118, %s119
    %p133 = scmp.eq.s32.totalorder %s17, 1
    %p134 = por %p132, %p133
    %p136 = scmp.ne.s32.totalorder %s119, %s135
    %p137 = scmp.eq.s32.totalorder %s17, 0
    %p138 = por %p136, %p137
    %p139 = scmp.le.s32.totalorder 1, %s11
    %p140 = scmp.lt.s32.totalorder %s11, 3
    %p141 = pnand %p139, %p140
    %p142 = pneg %p141
    // Predicated region
    $region9: #{wavelet_block_forward.5} parent=5 // pred_check
      _
    $region10: #{wavelet_block_forward.5} parent=5 // pred_check_branch
      %144 = sbr.rel (%p141) target = $region12
    $region11: #{wavelet_block_forward.5} parent=5 // pred_region
      %s145 = ssub.s32 %s11, 1
      // Predicated region
      $region13: #{wavelet_block_forward.5} parent=11 // pred_check
        %p146 = pneg %p58
      $region14: #{wavelet_block_forward.5} parent=11 // pred_check_branch
        %148 = sbr.rel (%p146) target = $region16
      $region15: #{wavelet_block_forward.5} parent=11 // pred_region
        _
      $region16: #{wavelet_block_forward.5} parent=11 // pred_fallthru
        _
      // Predicated region
      $region17: #{wavelet_block_forward.5} parent=11 // pred_check
        %p149 = pneg %p79
      $region18: #{wavelet_block_forward.5} parent=11 // pred_check_branch
        %151 = sbr.rel (%p149) target = $region20
      $region19: #{wavelet_block_forward.5} parent=11 // pred_region
        _
      $region20: #{wavelet_block_forward.5} parent=11 // pred_fallthru
        _
    $region12: #{wavelet_block_forward.5} parent=5 // pred_fallthru
      _
    %p152 = scmp.lt.s32.totalorder %s11, 2
    // Predicated region
    $region21: #{wavelet_block_forward.5} parent=5 // pred_check
      %p153 = pneg %p152
    $region22: #{wavelet_block_forward.5} parent=5 // pred_check_branch
      %155 = sbr.rel (%p153) target = $region24
    $region23: #{wavelet_block_forward.5} parent=5 // pred_region
      // Predicated region
      $region25: #{wavelet_block_forward.5} parent=23 // pred_check
        %p156 = pneg %p31
      $region26: #{wavelet_block_forward.5} parent=23 // pred_check_branch
        %158 = sbr.rel (%p156) target = $region28
      $region27: #{wavelet_block_forward.5} parent=23 // pred_region
        %p159 = scmp.lt.s32.totalorder %s11, 1
        %s160 = scalar_select %p159, %s11, 1
        %s161 = smul.addr %s160, 5
        %s162 = smul.addr %s161, 8
        %s163 = scalar_lea.vmem %s0, %s162
      $region28: #{wavelet_block_forward.5} parent=23 // pred_fallthru
        _
    $region24: #{wavelet_block_forward.5} parent=5 // pred_fallthru
      _
    %p164 = scmp.le.s32.totalorder 1, %s11
    %p165 = scmp.lt.s32.totalorder %s11, 3
    %p166 = pnand %p164, %p165
    %p167 = pneg %p166
    // Predicated region
    $region29: #{wavelet_block_forward.5} parent=5 // pred_check
      _
    $region30: #{wavelet_block_forward.5} parent=5 // pred_check_branch
      %169 = sbr.rel (%p166) target = $region32
    $region31: #{wavelet_block_forward.5} parent=5 // pred_region
      %s170 = ssub.s32 %s11, 1
      %p171 = scmp.lt.s32.totalorder %s16, 1
      %s172 = scalar_select %p171, %s16, 1
      %s173 = smul.addr %s172, 5
      %s174 = smul.addr %s173, 8
      %s175 = scalar_lea.vmem %s0, %s174
      %p176 = pneg %p37
      %p177 = pneg %p34
      %p178 = pneg %p58
      %p179 = pneg %p55
      %p180 = pneg %p79
      %p181 = pneg %p76
      %p182 = pneg %p105
      %p183 = pneg %p102
      %p184 = scmp.lt.s32.totalorder %s16, 1
      %s185 = scalar_select %p184, %s16, 1
      %s186 = smul.addr %s185, 3
      %s187 = smul.addr %s186, 8
      %s188 = scalar_lea.vmem %s3, %s187
      %p189 = pneg %p131
      %p190 = pneg %p128
      %p191 = scmp.lt.s32.totalorder %s16, 1
      %s192 = scalar_select %p191, %s16, 1
      %s193 = smul.addr %s192, 3
      %s194 = smul.addr %s193, 8
      %s195 = scalar_lea.vmem %s4, %s194
      %p196 = scmp.lt.s32.totalorder %s16, 1
      %s197 = scalar_select %p196, %s16, 1
      %s198 = smul.addr %s197, 5
      %s199 = smul.addr %s198, 8
      %s200 = scalar_lea.vmem %s0, %s199
      %p201 = scmp.lt.s32.totalorder %s16, 1
      %s202 = scalar_select %p201, %s16, 1
      %s203 = smul.addr %s202, 3
      %s204 = smul.addr %s203, 8
      %s205 = scalar_lea.vmem %s3, %s204
      %p206 = scmp.lt.s32.totalorder %s16, 1
      %s207 = scalar_select %p206, %s16, 1
      %s208 = smul.addr %s207, 3
      %s209 = smul.addr %s208, 8
      %s210 = scalar_lea.vmem %s4, %s209
      %v211 = vld [vmem:[%s200] sm:$0xff]
      %v212 = vld [vmem:[%s200 + $0x8] sm:$0xff]
      %v213 = vld [vmem:[%s200 + $0x10] sm:$0xff]
      %v214 = vld [vmem:[%s1] sm:$0xff]
      %v215 = vld [vmem:[%s1 + $0x8] sm:$0xff]
      %v216 = vld [vmem:[%s200 + $0x1] sm:$0xff]
      %v217 = vld [vmem:[%s200 + $0x9] sm:$0xff]
      %v218 = vld [vmem:[%s200 + $0x11] sm:$0xff]
      %s219 = scalar_lea.vmem %s1, 16
      %v220 = vld [vmem:[%s219] sm:$0xff]
      %v221 = vld [vmem:[%s219 + $0x8] sm:$0xff]
      %vm222 = vcmask 130048
      %v224 = vsel %vm222, %v216, 0
      %v227 = vsel %vm222, %v217, 0
      %v230 = vsel %vm222, %v218, 0
      %232 = vmatprep.subr.mxu0 0.0
      %233 = vmatpush1.msra.mxu0 %v220
      %234 = vmatprep.subr.mxu0 0.0
      %235 = vmatpush1.msra.mxu0 %v221
      %236 = vmatprep.subr.mxu0 0.0
      %237 = vmatpush1.msra.mxu0 0.0
      %238 = vmatprep.subr.mxu0 0.0
      %239 = vmatpush1.msra.mxu0 0.0
      %240 = vmatprep.subr.mxu0 0.0
      %241 = vmatpush1.msra.mxu0 0.0
      %242 = vmatprep.subr.mxu0 0.0
      %243 = vmatpush1.msra.mxu0 0.0
      %244 = vmatprep.subr.mxu0 0.0
      %245 = vmatpush1.msra.mxu0 0.0
      %246 = vmatprep.subr.mxu0 0.0
      %247 = vmatpush1.msra.mxu0 0.0
      %248 = vmatprep.subr.mxu0 0.0
      %249 = vmatpush1.msra.mxu0 0.0
      %250 = vmatprep.subr.mxu0 0.0
      %251 = vmatpush1.msra.mxu0 0.0
      %252 = vmatprep.subr.mxu0 0.0
      %253 = vmatpush1.msra.mxu0 0.0
      %254 = vmatprep.subr.mxu0 0.0
      %255 = vmatpush1.msra.mxu0 0.0
      %256 = vmatprep.subr.mxu0 0.0
      %257 = vmatpush1.msra.mxu0 0.0
      %258 = vmatprep.subr.mxu0 0.0
      %259 = vmatpush1.msra.mxu0 0.0
      %260 = vmatprep.subr.mxu0 0.0
      %261 = vmatpush1.msra.mxu0 0.0
      %262 = vmatprep.subr.mxu0 0.0
      %263 = vmatpush1.msra.mxu0 0.0
      %264 = vmatprep.subr.mxu0 0.0
      %265 = vmatpush1.msra.mxu0 0.0
      %266 = vmatprep.subr.mxu0 0.0
      %267 = vmatpush1.msra.mxu0 0.0
      %268 = vmatprep.subr.mxu0 0.0
      %269 = vmatpush1.msra.mxu0 0.0
      %270 = vmatprep.subr.mxu0 0.0
      %271 = vmatpush1.msra.mxu0 0.0
      %272 = vmatprep.subr.mxu0 0.0
      %273 = vmatpush1.msra.mxu0 0.0
      %274 = vmatprep.subr.mxu0 0.0
      %275 = vmatpush1.msra.mxu0 0.0
      %276 = vmatprep.subr.mxu0 0.0
      %277 = vmatpush1.msra.mxu0 0.0
      %278 = vmatprep.subr.mxu0 0.0
      %279 = vmatpush1.msra.mxu0 0.0
      %280 = vmatprep.subr.mxu0 0.0
      %281 = vmatpush1.msra.mxu0 0.0
      %282 = vmatprep.subr.mxu0 0.0
      %283 = vmatpush1.msra.mxu0 0.0
      %284 = vmatprep.subr.mxu0 0.0
      %285 = vmatpush1.msra.mxu0 0.0
      %286 = vmatprep.subr.mxu0 0.0
      %287 = vmatpush1.msra.mxu0 0.0
      %288 = vmatprep.subr.mxu0 0.0
      %289 = vmatpush1.msra.mxu0 0.0
      %290 = vmatprep.subr.mxu0 0.0
      %291 = vmatpush1.msra.mxu0 0.0
      %292 = vmatprep.subr.mxu0 0.0
      %293 = vmatpush1.msra.mxu0 0.0
      %294 = vmatprep.subr.mxu0 0.0
      %295 = vmatpush1.msra.mxu0 0.0
      %296 = vmatprep.mubr.f32.mxu0 0.0
      %297 = vmatmul.mubr.f32.gmra.mrb[0].mxu0 %v224
      %v298 = vpop.f32.mrb[0].mxu0
      %v299 = vadd.f32 0.0, %v298
      %v300 = vpop.f32.mrb[0].mxu0
      %301 = vmatprep.mubr.f32.mxu0 0.0
      %302 = vmatmul.mubr.f32.gmra.mrb[0].mxu0 %v227
      %v303 = vpop.f32.mrb[0].mxu0
      %v304 = vadd.f32 0.0, %v303
      %v305 = vpop.f32.mrb[0].mxu0
      %306 = vmatprep.mubr.f32.mxu0 0.0
      %307 = vmatmul.mubr.f32.gmra.mrb[0].mxu0 %v230
      %v308 = vpop.f32.mrb[0].mxu0
      %v309 = vadd.f32 0.0, %v308
      %v310 = vpop.f32.mrb[0].mxu0
      %311 = vdwg.mxu0
      %v313 = vsel %vm222, %v211, 0
      %v316 = vsel %vm222, %v212, 0
      %v319 = vsel %vm222, %v213, 0
      %321 = vmatprep.subr.mxu0 0.0
      %322 = vmatpush1.msra.mxu0 %v214
      %323 = vmatprep.subr.mxu0 0.0
      %324 = vmatpush1.msra.mxu0 %v215
      %325 = vmatprep.subr.mxu0 0.0
      %326 = vmatpush1.msra.mxu0 0.0
      %327 = vmatprep.subr.mxu0 0.0
      %328 = vmatpush1.msra.mxu0 0.0
      %329 = vmatprep.subr.mxu0 0.0
      %330 = vmatpush1.msra.mxu0 0.0
      %331 = vmatprep.subr.mxu0 0.0
      %332 = vmatpush1.msra.mxu0 0.0
      %333 = vmatprep.subr.mxu0 0.0
      %334 = vmatpush1.msra.mxu0 0.0
      %335 = vmatprep.subr.mxu0 0.0
      %336 = vmatpush1.msra.mxu0 0.0
      %337 = vmatprep.subr.mxu0 0.0
      %338 = vmatpush1.msra.mxu0 0.0
      %339 = vmatprep.subr.mxu0 0.0
      %340 = vmatpush1.msra.mxu0 0.0
      %341 = vmatprep.subr.mxu0 0.0
      %342 = vmatpush1.msra.mxu0 0.0
      %343 = vmatprep.subr.mxu0 0.0
      %344 = vmatpush1.msra.mxu0 0.0
      %345 = vmatprep.subr.mxu0 0.0
      %346 = vmatpush1.msra.mxu0 0.0
      %347 = vmatprep.subr.mxu0 0.0
      %348 = vmatpush1.msra.mxu0 0.0
      %349 = vmatprep.subr.mxu0 0.0
      %350 = vmatpush1.msra.mxu0 0.0
      %351 = vmatprep.subr.mxu0 0.0
      %352 = vmatpush1.msra.mxu0 0.0
      %353 = vmatprep.subr.mxu0 0.0
      %354 = vmatpush1.msra.mxu0 0.0
      %355 = vmatprep.subr.mxu0 0.0
      %356 = vmatpush1.msra.mxu0 0.0
      %357 = vmatprep.subr.mxu0 0.0
      %358 = vmatpush1.msra.mxu0 0.0
      %359 = vmatprep.subr.mxu0 0.0
      %360 = vmatpush1.msra.mxu0 0.0
      %361 = vmatprep.subr.mxu0 0.0
      %362 = vmatpush1.msra.mxu0 0.0
      %363 = vmatprep.subr.mxu0 0.0
      %364 = vmatpush1.msra.mxu0 0.0
      %365 = vmatprep.subr.mxu0 0.0
      %366 = vmatpush1.msra.mxu0 0.0
      %367 = vmatprep.subr.mxu0 0.0
      %368 = vmatpush1.msra.mxu0 0.0
      %369 = vmatprep.subr.mxu0 0.0
      %370 = vmatpush1.msra.mxu0 0.0
      %371 = vmatprep.subr.mxu0 0.0
      %372 = vmatpush1.msra.mxu0 0.0
      %373 = vmatprep.subr.mxu0 0.0
      %374 = vmatpush1.msra.mxu0 0.0
      %375 = vmatprep.subr.mxu0 0.0
      %376 = vmatpush1.msra.mxu0 0.0
      %377 = vmatprep.subr.mxu0 0.0
      %378 = vmatpush1.msra.mxu0 0.0
      %379 = vmatprep.subr.mxu0 0.0
      %380 = vmatpush1.msra.mxu0 0.0
      %381 = vmatprep.subr.mxu0 0.0
      %382 = vmatpush1.msra.mxu0 0.0
      %383 = vmatprep.subr.mxu0 0.0
      %384 = vmatpush1.msra.mxu0 0.0
      %385 = vmatprep.mubr.f32.mxu0 0.0
      %386 = vmatmul.mubr.f32.gmra.mrb[0].mxu0 %v313
      %v387 = vpop.f32.mrb[0].mxu0
      %v388 = vadd.f32 %v299, %v387
      %v389 = vpop.f32.mrb[0].mxu0
      %390 = vmatprep.mubr.f32.mxu0 0.0
      %391 = vmatmul.mubr.f32.gmra.mrb[0].mxu0 %v316
      %v392 = vpop.f32.mrb[0].mxu0
      %v393 = vadd.f32 %v304, %v392
      %v394 = vpop.f32.mrb[0].mxu0
      %395 = vmatprep.mubr.f32.mxu0 0.0
      %396 = vmatmul.mubr.f32.gmra.mrb[0].mxu0 %v319
      %v397 = vpop.f32.mrb[0].mxu0
      %v398 = vadd.f32 %v309, %v397
      %v399 = vpop.f32.mrb[0].mxu0
      %400 = vdwg.mxu0
      %v401 = vld [vmem:[%s200 + $0x2] sm:$0xff]
      %v402 = vld [vmem:[%s200 + $0xa] sm:$0xff]
      %v403 = vld [vmem:[%s200 + $0x12] sm:$0xff]
      %s404 = scalar_lea.vmem %s1, 32
      %v405 = vld [vmem:[%s404] sm:$0xff]
      %v406 = vld [vmem:[%s404 + $0x8] sm:$0xff]
      %v408 = vsel %vm222, %v401, 0
      %v411 = vsel %vm222, %v402, 0
      %v414 = vsel %vm222, %v403, 0
      %416 = vmatprep.subr.mxu0 0.0
      %417 = vmatpush1.msra.mxu0 %v405
      %418 = vmatprep.subr.mxu0 0.0
      %419 = vmatpush1.msra.mxu0 %v406
      %420 = vmatprep.subr.mxu0 0.0
      %421 = vmatpush1.msra.mxu0 0.0
      %422 = vmatprep.subr.mxu0 0.0
      %423 = vmatpush1.msra.mxu0 0.0
      %424 = vmatprep.subr.mxu0 0.0
      %425 = vmatpush1.msra.mxu0 0.0
      %426 = vmatprep.subr.mxu0 0.0
      %427 = vmatpush1.msra.mxu0 0.0
      %428 = vmatprep.subr.mxu0 0.0
      %429 = vmatpush1.msra.mxu0 0.0
      %430 = vmatprep.subr.mxu0 0.0
      %431 = vmatpush1.msra.mxu0 0.0
      %432 = vmatprep.subr.mxu0 0.0
      %433 = vmatpush1.msra.mxu0 0.0
      %434 = vmatprep.subr.mxu0 0.0
      %435 = vmatpush1.msra.mxu0 0.0
      %436 = vmatprep.subr.mxu0 0.0
      %437 = vmatpush1.msra.mxu0 0.0
      %438 = vmatprep.subr.mxu0 0.0
      %439 = vmatpush1.msra.mxu0 0.0
      %440 = vmatprep.subr.mxu0 0.0
      %441 = vmatpush1.msra.mxu0 0.0
      %442 = vmatprep.subr.mxu0 0.0
      %443 = vmatpush1.msra.mxu0 0.0
      %444 = vmatprep.subr.mxu0 0.0
      %445 = vmatpush1.msra.mxu0 0.0
      %446 = vmatprep.subr.mxu0 0.0
      %447 = vmatpush1.msra.mxu0 0.0
      %448 = vmatprep.subr.mxu0 0.0
      %449 = vmatpush1.msra.mxu0 0.0
      %450 = vmatprep.subr.mxu0 0.0
      %451 = vmatpush1.msra.mxu0 0.0
      %452 = vmatprep.subr.mxu0 0.0
      %453 = vmatpush1.msra.mxu0 0.0
      %454 = vmatprep.subr.mxu0 0.0
      %455 = vmatpush1.msra.mxu0 0.0
      %456 = vmatprep.subr.mxu0 0.0
      %457 = vmatpush1.msra.mxu0 0.0
      %458 = vmatprep.subr.mxu0 0.0
      %459 = vmatpush1.msra.mxu0 0.0
      %460 = vmatprep.subr.mxu0 0.0
      %461 = vmatpush1.msra.mxu0 0.0
      %462 = vmatprep.subr.mxu0 0.0
      %463 = vmatpush1.msra.mxu0 0.0
      %464 = vmatprep.subr.mxu0 0.0
      %465 = vmatpush1.msra.mxu0 0.0
      %466 = vmatprep.subr.mxu0 0.0
      %467 = vmatpush1.msra.mxu0 0.0
      %468 = vmatprep.subr.mxu0 0.0
      %469 = vmatpush1.msra.mxu0 0.0
      %470 = vmatprep.subr.mxu0 0.0
      %471 = vmatpush1.msra.mxu0 0.0
      %472 = vmatprep.subr.mxu0 0.0
      %473 = vmatpush1.msra.mxu0 0.0
      %474 = vmatprep.subr.mxu0 0.0
      %475 = vmatpush1.msra.mxu0 0.0
      %476 = vmatprep.subr.mxu0 0.0
      %477 = vmatpush1.msra.mxu0 0.0
      %478 = vmatprep.subr.mxu0 0.0
      %479 = vmatpush1.msra.mxu0 0.0
      %480 = vmatprep.mubr.f32.mxu0 0.0
      %481 = vmatmul.mubr.f32.gmra.mrb[0].mxu0 %v408
      %v482 = vpop.f32.mrb[0].mxu0
      %v483 = vadd.f32 0.0, %v482
      %v484 = vpop.f32.mrb[0].mxu0
      %485 = vmatprep.mubr.f32.mxu0 0.0
      %486 = vmatmul.mubr.f32.gmra.mrb[0].mxu0 %v411
      %v487 = vpop.f32.mrb[0].mxu0
      %v488 = vadd.f32 0.0, %v487
      %v489 = vpop.f32.mrb[0].mxu0
      %490 = vmatprep.mubr.f32.mxu0 0.0
      %491 = vmatmul.mubr.f32.gmra.mrb[0].mxu0 %v414
      %v492 = vpop.f32.mrb[0].mxu0
      %v493 = vadd.f32 0.0, %v492
      %v494 = vpop.f32.mrb[0].mxu0
      %495 = vdwg.mxu0
      %v496 = vadd.f32 %v388, %v483
      %v497 = vadd.f32 %v393, %v488
      %v498 = vadd.f32 %v398, %v493
      %v499 = vld [vmem:[%s200 + $0x6] sm:$0xff]
      %v500 = vld [vmem:[%s200 + $0xe] sm:$0xff]
      %v501 = vld [vmem:[%s200 + $0x16] sm:$0xff]
      %s502 = scalar_lea.vmem %s1, 48
      %v503 = vld [vmem:[%s502] sm:$0xff]
      %v504 = vld [vmem:[%s502 + $0x8] sm:$0xff]
      %v506 = vsel %vm222, %v499, 0
      %v509 = vsel %vm222, %v500, 0
      %v512 = vsel %vm222, %v501, 0
      %514 = vmatprep.subr.mxu0 0.0
      %515 = vmatpush1.msra.mxu0 %v503
      %516 = vmatprep.subr.mxu0 0.0
      %517 = vmatpush1.msra.mxu0 %v504
      %518 = vmatprep.subr.mxu0 0.0
      %519 = vmatpush1.msra.mxu0 0.0
      %520 = vmatprep.subr.mxu0 0.0
      %521 = vmatpush1.msra.mxu0 0.0
      %522 = vmatprep.subr.mxu0 0.0
      %523 = vmatpush1.msra.mxu0 0.0
      %524 = vmatprep.subr.mxu0 0.0
      %525 = vmatpush1.msra.mxu0 0.0
      %526 = vmatprep.subr.mxu0 0.0
      %527 = vmatpush1.msra.mxu0 0.0
      %528 = vmatprep.subr.mxu0 0.0
      %529 = vmatpush1.msra.mxu0 0.0
      %530 = vmatprep.subr.mxu0 0.0
      %531 = vmatpush1.msra.mxu0 0.0
      %532 = vmatprep.subr.mxu0 0.0
      %533 = vmatpush1.msra.mxu0 0.0
      %534 = vmatprep.subr.mxu0 0.0
      %535 = vmatpush1.msra.mxu0 0.0
      %536 = vmatprep.subr.mxu0 0.0
      %537 = vmatpush1.msra.mxu0 0.0
      %538 = vmatprep.subr.mxu0 0.0
      %539 = vmatpush1.msra.mxu0 0.0
      %540 = vmatprep.subr.mxu0 0.0
      %541 = vmatpush1.msra.mxu0 0.0
      %542 = vmatprep.subr.mxu0 0.0
      %543 = vmatpush1.msra.mxu0 0.0
      %544 = vmatprep.subr.mxu0 0.0
      %545 = vmatpush1.msra.mxu0 0.0
      %546 = vmatprep.subr.mxu0 0.0
      %547 = vmatpush1.msra.mxu0 0.0
      %548 = vmatprep.subr.mxu0 0.0
      %549 = vmatpush1.msra.mxu0 0.0
      %550 = vmatprep.subr.mxu0 0.0
      %551 = vmatpush1.msra.mxu0 0.0
      %552 = vmatprep.subr.mxu0 0.0
      %553 = vmatpush1.msra.mxu0 0.0
      %554 = vmatprep.subr.mxu0 0.0
      %555 = vmatpush1.msra.mxu0 0.0
      %556 = vmatprep.subr.mxu0 0.0
      %557 = vmatpush1.msra.mxu0 0.0
      %558 = vmatprep.subr.mxu0 0.0
      %559 = vmatpush1.msra.mxu0 0.0
      %560 = vmatprep.subr.mxu0 0.0
      %561 = vmatpush1.msra.mxu0 0.0
      %562 = vmatprep.subr.mxu0 0.0
      %563 = vmatpush1.msra.mxu0 0.0
      %564 = vmatprep.subr.mxu0 0.0
      %565 = vmatpush1.msra.mxu0 0.0
      %566 = vmatprep.subr.mxu0 0.0
      %567 = vmatpush1.msra.mxu0 0.0
      %568 = vmatprep.subr.mxu0 0.0
      %569 = vmatpush1.msra.mxu0 0.0
      %570 = vmatprep.subr.mxu0 0.0
      %571 = vmatpush1.msra.mxu0 0.0
      %572 = vmatprep.subr.mxu0 0.0
      %573 = vmatpush1.msra.mxu0 0.0
      %574 = vmatprep.subr.mxu0 0.0
      %575 = vmatpush1.msra.mxu0 0.0
      %576 = vmatprep.subr.mxu0 0.0
      %577 = vmatpush1.msra.mxu0 0.0
      %578 = vmatprep.mubr.f32.mxu0 0.0
      %579 = vmatmul.mubr.f32.gmra.mrb[0].mxu0 %v506
      %v580 = vpop.f32.mrb[0].mxu0
      %v581 = vadd.f32 0.0, %v580
      %v582 = vpop.f32.mrb[0].mxu0
      %583 = vmatprep.mubr.f32.mxu0 0.0
      %584 = vmatmul.mubr.f32.gmra.mrb[0].mxu0 %v509
      %v585 = vpop.f32.mrb[0].mxu0
      %v586 = vadd.f32 0.0, %v585
      %v587 = vpop.f32.mrb[0].mxu0
      %588 = vmatprep.mubr.f32.mxu0 0.0
      %589 = vmatmul.mubr.f32.gmra.mrb[0].mxu0 %v512
      %v590 = vpop.f32.mrb[0].mxu0
      %v591 = vadd.f32 0.0, %v590
      %v592 = vpop.f32.mrb[0].mxu0
      %593 = vdwg.mxu0
      %v594 = vadd.f32 %v496, %v581
      %v595 = vadd.f32 %v497, %v586
      %v596 = vadd.f32 %v498, %v591
      %v597 = vld [vmem:[%s200 + $0x7] sm:$0xff]
      %v598 = vld [vmem:[%s200 + $0xf] sm:$0xff]
      %v599 = vld [vmem:[%s200 + $0x17] sm:$0xff]
      %s600 = scalar_lea.vmem %s1, 64
      %v601 = vld [vmem:[%s600] sm:$0xff]
      %v602 = vld [vmem:[%s600 + $0x8] sm:$0xff]
      %v604 = vsel %vm222, %v597, 0
      %v607 = vsel %vm222, %v598, 0
      %v610 = vsel %vm222, %v599, 0
      %612 = vmatprep.subr.mxu0 0.0
      %613 = vmatpush1.msra.mxu0 %v601
      %614 = vmatprep.subr.mxu0 0.0
      %615 = vmatpush1.msra.mxu0 %v602
      %616 = vmatprep.subr.mxu0 0.0
      %617 = vmatpush1.msra.mxu0 0.0
      %618 = vmatprep.subr.mxu0 0.0
      %619 = vmatpush1.msra.mxu0 0.0
      %620 = vmatprep.subr.mxu0 0.0
      %621 = vmatpush1.msra.mxu0 0.0
      %622 = vmatprep.subr.mxu0 0.0
      %623 = vmatpush1.msra.mxu0 0.0
      %624 = vmatprep.subr.mxu0 0.0
      %625 = vmatpush1.msra.mxu0 0.0
      %626 = vmatprep.subr.mxu0 0.0
      %627 = vmatpush1.msra.mxu0 0.0
      %628 = vmatprep.subr.mxu0 0.0
      %629 = vmatpush1.msra.mxu0 0.0
      %630 = vmatprep.subr.mxu0 0.0
      %631 = vmatpush1.msra.mxu0 0.0
      %632 = vmatprep.subr.mxu0 0.0
      %633 = vmatpush1.msra.mxu0 0.0
      %634 = vmatprep.subr.mxu0 0.0
      %635 = vmatpush1.msra.mxu0 0.0
      %636 = vmatprep.subr.mxu0 0.0
      %637 = vmatpush1.msra.mxu0 0.0
      %638 = vmatprep.subr.mxu0 0.0
      %639 = vmatpush1.msra.mxu0 0.0
      %640 = vmatprep.subr.mxu0 0.0
      %641 = vmatpush1.msra.mxu0 0.0
      %642 = vmatprep.subr.mxu0 0.0
      %643 = vmatpush1.msra.mxu0 0.0
      %644 = vmatprep.subr.mxu0 0.0
      %645 = vmatpush1.msra.mxu0 0.0
      %646 = vmatprep.subr.mxu0 0.0
      %647 = vmatpush1.msra.mxu0 0.0
      %648 = vmatprep.subr.mxu0 0.0
      %649 = vmatpush1.msra.mxu0 0.0
      %650 = vmatprep.subr.mxu0 0.0
      %651 = vmatpush1.msra.mxu0 0.0
      %652 = vmatprep.subr.mxu0 0.0
      %653 = vmatpush1.msra.mxu0 0.0
      %654 = vmatprep.subr.mxu0 0.0
      %655 = vmatpush1.msra.mxu0 0.0
      %656 = vmatprep.subr.mxu0 0.0
      %657 = vmatpush1.msra.mxu0 0.0
      %658 = vmatprep.subr.mxu0 0.0
      %659 = vmatpush1.msra.mxu0 0.0
      %660 = vmatprep.subr.mxu0 0.0
      %661 = vmatpush1.msra.mxu0 0.0
      %662 = vmatprep.subr.mxu0 0.0
      %663 = vmatpush1.msra.mxu0 0.0
      %664 = vmatprep.subr.mxu0 0.0
      %665 = vmatpush1.msra.mxu0 0.0
      %666 = vmatprep.subr.mxu0 0.0
      %667 = vmatpush1.msra.mxu0 0.0
      %668 = vmatprep.subr.mxu0 0.0
      %669 = vmatpush1.msra.mxu0 0.0
      %670 = vmatprep.subr.mxu0 0.0
      %671 = vmatpush1.msra.mxu0 0.0
      %672 = vmatprep.subr.mxu0 0.0
      %673 = vmatpush1.msra.mxu0 0.0
      %674 = vmatprep.subr.mxu0 0.0
      %675 = vmatpush1.msra.mxu0 0.0
      %676 = vmatprep.mubr.f32.mxu0 0.0
      %677 = vmatmul.mubr.f32.gmra.mrb[0].mxu0 %v604
      %v678 = vpop.f32.mrb[0].mxu0
      %v679 = vadd.f32 0.0, %v678
      %v680 = vpop.f32.mrb[0].mxu0
      %681 = vmatprep.mubr.f32.mxu0 0.0
      %682 = vmatmul.mubr.f32.gmra.mrb[0].mxu0 %v607
      %v683 = vpop.f32.mrb[0].mxu0
      %v684 = vadd.f32 0.0, %v683
      %v685 = vpop.f32.mrb[0].mxu0
      %686 = vmatprep.mubr.f32.mxu0 0.0
      %687 = vmatmul.mubr.f32.gmra.mrb[0].mxu0 %v610
      %v688 = vpop.f32.mrb[0].mxu0
      %v689 = vadd.f32 0.0, %v688
      %v690 = vpop.f32.mrb[0].mxu0
      %691 = vdwg.mxu0
      %v692 = vadd.f32 %v594, %v679
      %v693 = vadd.f32 %v595, %v684
      %v694 = vadd.f32 %v596, %v689
      %v695 = vld [vmem:[%s200 + $0x8] sm:$0xff]
      %v696 = vld [vmem:[%s200 + $0x10] sm:$0xff]
      %v697 = vld [vmem:[%s200 + $0x18] sm:$0xff]
      %s698 = scalar_lea.vmem %s1, 80
      %v699 = vld [vmem:[%s698] sm:$0xff]
      %v700 = vld [vmem:[%s698 + $0x8] sm:$0xff]
      %v702 = vsel %vm222, %v695, 0
      %v705 = vsel %vm222, %v696, 0
      %v708 = vsel %vm222, %v697, 0
      %710 = vmatprep.subr.mxu0 0.0
      %711 = vmatpush1.msra.mxu0 %v699
      %712 = vmatprep.subr.mxu0 0.0
      %713 = vmatpush1.msra.mxu0 %v700
      %714 = vmatprep.subr.mxu0 0.0
      %715 = vmatpush1.msra.mxu0 0.0
      %716 = vmatprep.subr.mxu0 0.0
      %717 = vmatpush1.msra.mxu0 0.0
      %718 = vmatprep.subr.mxu0 0.0
      %719 = vmatpush1.msra.mxu0 0.0
      %720 = vmatprep.subr.mxu0 0.0
      %721 = vmatpush1.msra.mxu0 0.0
      %722 = vmatprep.subr.mxu0 0.0
      %723 = vmatpush1.msra.mxu0 0.0
      %724 = vmatprep.subr.mxu0 0.0
      %725 = vmatpush1.msra.mxu0 0.0
      %726 = vmatprep.subr.mxu0 0.0
      %727 = vmatpush1.msra.mxu0 0.0
      %728 = vmatprep.subr.mxu0 0.0
      %729 = vmatpush1.msra.mxu0 0.0
      %730 = vmatprep.subr.mxu0 0.0
      %731 = vmatpush1.msra.mxu0 0.0
      %732 = vmatprep.subr.mxu0 0.0
      %733 = vmatpush1.msra.mxu0 0.0
      %734 = vmatprep.subr.mxu0 0.0
      %735 = vmatpush1.msra.mxu0 0.0
      %736 = vmatprep.subr.mxu0 0.0
      %737 = vmatpush1.msra.mxu0 0.0
      %738 = vmatprep.subr.mxu0 0.0
      %739 = vmatpush1.msra.mxu0 0.0
      %740 = vmatprep.subr.mxu0 0.0
      %741 = vmatpush1.msra.mxu0 0.0
      %742 = vmatprep.subr.mxu0 0.0
      %743 = vmatpush1.msra.mxu0 0.0
      %744 = vmatprep.subr.mxu0 0.0
      %745 = vmatpush1.msra.mxu0 0.0
      %746 = vmatprep.subr.mxu0 0.0
      %747 = vmatpush1.msra.mxu0 0.0
      %748 = vmatprep.subr.mxu0 0.0
      %749 = vmatpush1.msra.mxu0 0.0
      %750 = vmatprep.subr.mxu0 0.0
      %751 = vmatpush1.msra.mxu0 0.0
      %752 = vmatprep.subr.mxu0 0.0
      %753 = vmatpush1.msra.mxu0 0.0
      %754 = vmatprep.subr.mxu0 0.0
      %755 = vmatpush1.msra.mxu0 0.0
      %756 = vmatprep.subr.mxu0 0.0
      %757 = vmatpush1.msra.mxu0 0.0
      %758 = vmatprep.subr.mxu0 0.0
      %759 = vmatpush1.msra.mxu0 0.0
      %760 = vmatprep.subr.mxu0 0.0
      %761 = vmatpush1.msra.mxu0 0.0
      %762 = vmatprep.subr.mxu0 0.0
      %763 = vmatpush1.msra.mxu0 0.0
      %764 = vmatprep.subr.mxu0 0.0
      %765 = vmatpush1.msra.mxu0 0.0
      %766 = vmatprep.subr.mxu0 0.0
      %767 = vmatpush1.msra.mxu0 0.0
      %768 = vmatprep.subr.mxu0 0.0
      %769 = vmatpush1.msra.mxu0 0.0
      %770 = vmatprep.subr.mxu0 0.0
      %771 = vmatpush1.msra.mxu0 0.0
      %772 = vmatprep.subr.mxu0 0.0
      %773 = vmatpush1.msra.mxu0 0.0
      %774 = vmatprep.mubr.f32.mxu0 0.0
      %775 = vmatmul.mubr.f32.gmra.mrb[0].mxu0 %v702
      %v776 = vpop.f32.mrb[0].mxu0
      %v777 = vadd.f32 0.0, %v776
      %v778 = vpop.f32.mrb[0].mxu0
      %779 = vmatprep.mubr.f32.mxu0 0.0
      %780 = vmatmul.mubr.f32.gmra.mrb[0].mxu0 %v705
      %v781 = vpop.f32.mrb[0].mxu0
      %v782 = vadd.f32 0.0, %v781
      %v783 = vpop.f32.mrb[0].mxu0
      %784 = vmatprep.mubr.f32.mxu0 0.0
      %785 = vmatmul.mubr.f32.gmra.mrb[0].mxu0 %v708
      %v786 = vpop.f32.mrb[0].mxu0
      %v787 = vadd.f32 0.0, %v786
      %v788 = vpop.f32.mrb[0].mxu0
      %789 = vdwg.mxu0
      %v790 = vadd.f32 %v692, %v777
      %v791 = vadd.f32 %v693, %v782
      %v792 = vadd.f32 %v694, %v787
      %v793 = vld [vmem:[%s200 + $0xc] sm:$0xff]
      %v794 = vld [vmem:[%s200 + $0x14] sm:$0xff]
      %v795 = vld [vmem:[%s200 + $0x1c] sm:$0xff]
      %s796 = scalar_lea.vmem %s1, 96
      %v797 = vld [vmem:[%s796] sm:$0xff]
      %v798 = vld [vmem:[%s796 + $0x8] sm:$0xff]
      %v800 = vsel %vm222, %v793, 0
      %v803 = vsel %vm222, %v794, 0
      %v806 = vsel %vm222, %v795, 0
      %808 = vmatprep.subr.mxu0 0.0
      %809 = vmatpush1.msra.mxu0 %v797
      %810 = vmatprep.subr.mxu0 0.0
      %811 = vmatpush1.msra.mxu0 %v798
      %812 = vmatprep.subr.mxu0 0.0
      %813 = vmatpush1.msra.mxu0 0.0
      %814 = vmatprep.subr.mxu0 0.0
      %815 = vmatpush1.msra.mxu0 0.0
      %816 = vmatprep.subr.mxu0 0.0
      %817 = vmatpush1.msra.mxu0 0.0
      %818 = vmatprep.subr.mxu0 0.0
      %819 = vmatpush1.msra.mxu0 0.0
      %820 = vmatprep.subr.mxu0 0.0
      %821 = vmatpush1.msra.mxu0 0.0
      %822 = vmatprep.subr.mxu0 0.0
      %823 = vmatpush1.msra.mxu0 0.0
      %824 = vmatprep.subr.mxu0 0.0
      %825 = vmatpush1.msra.mxu0 0.0
      %826 = vmatprep.subr.mxu0 0.0
      %827 = vmatpush1.msra.mxu0 0.0
      %828 = vmatprep.subr.mxu0 0.0
      %829 = vmatpush1.msra.mxu0 0.0
      %830 = vmatprep.subr.mxu0 0.0
      %831 = vmatpush1.msra.mxu0 0.0
      %832 = vmatprep.subr.mxu0 0.0
      %833 = vmatpush1.msra.mxu0 0.0
      %834 = vmatprep.subr.mxu0 0.0
      %835 = vmatpush1.msra.mxu0 0.0
      %836 = vmatprep.subr.mxu0 0.0
      %837 = vmatpush1.msra.mxu0 0.0
      %838 = vmatprep.subr.mxu0 0.0
      %839 = vmatpush1.msra.mxu0 0.0
      %840 = vmatprep.subr.mxu0 0.0
      %841 = vmatpush1.msra.mxu0 0.0
      %842 = vmatprep.subr.mxu0 0.0
      %843 = vmatpush1.msra.mxu0 0.0
      %844 = vmatprep.subr.mxu0 0.0
      %845 = vmatpush1.msra.mxu0 0.0
      %846 = vmatprep.subr.mxu0 0.0
      %847 = vmatpush1.msra.mxu0 0.0
      %848 = vmatprep.subr.mxu0 0.0
      %849 = vmatpush1.msra.mxu0 0.0
      %850 = vmatprep.subr.mxu0 0.0
      %851 = vmatpush1.msra.mxu0 0.0
      %852 = vmatprep.subr.mxu0 0.0
      %853 = vmatpush1.msra.mxu0 0.0
      %854 = vmatprep.subr.mxu0 0.0
      %855 = vmatpush1.msra.mxu0 0.0
      %856 = vmatprep.subr.mxu0 0.0
      %857 = vmatpush1.msra.mxu0 0.0
      %858 = vmatprep.subr.mxu0 0.0
      %859 = vmatpush1.msra.mxu0 0.0
      %860 = vmatprep.subr.mxu0 0.0
      %861 = vmatpush1.msra.mxu0 0.0
      %862 = vmatprep.subr.mxu0 0.0
      %863 = vmatpush1.msra.mxu0 0.0
      %864 = vmatprep.subr.mxu0 0.0
      %865 = vmatpush1.msra.mxu0 0.0
      %866 = vmatprep.subr.mxu0 0.0
      %867 = vmatpush1.msra.mxu0 0.0
      %868 = vmatprep.subr.mxu0 0.0
      %869 = vmatpush1.msra.mxu0 0.0
      %870 = vmatprep.subr.mxu0 0.0
      %871 = vmatpush1.msra.mxu0 0.0
      %872 = vmatprep.mubr.f32.mxu0 0.0
      %873 = vmatmul.mubr.f32.gmra.mrb[0].mxu0 %v800
      %v874 = vpop.f32.mrb[0].mxu0
      %v875 = vadd.f32 0.0, %v874
      %v876 = vpop.f32.mrb[0].mxu0
      %877 = vmatprep.mubr.f32.mxu0 0.0
      %878 = vmatmul.mubr.f32.gmra.mrb[0].mxu0 %v803
      %v879 = vpop.f32.mrb[0].mxu0
      %v880 = vadd.f32 0.0, %v879
      %v881 = vpop.f32.mrb[0].mxu0
      %882 = vmatprep.mubr.f32.mxu0 0.0
      %883 = vmatmul.mubr.f32.gmra.mrb[0].mxu0 %v806
      %v884 = vpop.f32.mrb[0].mxu0
      %v885 = vadd.f32 0.0, %v884
      %v886 = vpop.f32.mrb[0].mxu0
      %887 = vdwg.mxu0
      %v888 = vadd.f32 %v790, %v875
      %v889 = vadd.f32 %v791, %v880
      %v890 = vadd.f32 %v792, %v885
      %v891 = vld [vmem:[%s200 + $0xd] sm:$0xff]
      %v892 = vld [vmem:[%s200 + $0x15] sm:$0xff]
      %v893 = vld [vmem:[%s200 + $0x1d] sm:$0xff]
      %s894 = scalar_lea.vmem %s1, 112
      %v895 = vld [vmem:[%s894] sm:$0xff]
      %v896 = vld [vmem:[%s894 + $0x8] sm:$0xff]
      %v898 = vsel %vm222, %v891, 0
      %v901 = vsel %vm222, %v892, 0
      %v904 = vsel %vm222, %v893, 0
      %906 = vmatprep.subr.mxu0 0.0
      %907 = vmatpush1.msra.mxu0 %v895
      %908 = vmatprep.subr.mxu0 0.0
      %909 = vmatpush1.msra.mxu0 %v896
      %910 = vmatprep.subr.mxu0 0.0
      %911 = vmatpush1.msra.mxu0 0.0
      %912 = vmatprep.subr.mxu0 0.0
      %913 = vmatpush1.msra.mxu0 0.0
      %914 = vmatprep.subr.mxu0 0.0
      %915 = vmatpush1.msra.mxu0 0.0
      %916 = vmatprep.subr.mxu0 0.0
      %917 = vmatpush1.msra.mxu0 0.0
      %918 = vmatprep.subr.mxu0 0.0
      %919 = vmatpush1.msra.mxu0 0.0
      %920 = vmatprep.subr.mxu0 0.0
      %921 = vmatpush1.msra.mxu0 0.0
      %922 = vmatprep.subr.mxu0 0.0
      %923 = vmatpush1.msra.mxu0 0.0
      %924 = vmatprep.subr.mxu0 0.0
      %925 = vmatpush1.msra.mxu0 0.0
      %926 = vmatprep.subr.mxu0 0.0
      %927 = vmatpush1.msra.mxu0 0.0
      %928 = vmatprep.subr.mxu0 0.0
      %929 = vmatpush1.msra.mxu0 0.0
      %930 = vmatprep.subr.mxu0 0.0
      %931 = vmatpush1.msra.mxu0 0.0
      %932 = vmatprep.subr.mxu0 0.0
      %933 = vmatpush1.msra.mxu0 0.0
      %934 = vmatprep.subr.mxu0 0.0
      %935 = vmatpush1.msra.mxu0 0.0
      %936 = vmatprep.subr.mxu0 0.0
      %937 = vmatpush1.msra.mxu0 0.0
      %938 = vmatprep.subr.mxu0 0.0
      %939 = vmatpush1.msra.mxu0 0.0
      %940 = vmatprep.subr.mxu0 0.0
      %941 = vmatpush1.msra.mxu0 0.0
      %942 = vmatprep.subr.mxu0 0.0
      %943 = vmatpush1.msra.mxu0 0.0
      %944 = vmatprep.subr.mxu0 0.0
      %945 = vmatpush1.msra.mxu0 0.0
      %946 = vmatprep.subr.mxu0 0.0
      %947 = vmatpush1.msra.mxu0 0.0
      %948 = vmatprep.subr.mxu0 0.0
      %949 = vmatpush1.msra.mxu0 0.0
      %950 = vmatprep.subr.mxu0 0.0
      %951 = vmatpush1.msra.mxu0 0.0
      %952 = vmatprep.subr.mxu0 0.0
      %953 = vmatpush1.msra.mxu0 0.0
      %954 = vmatprep.subr.mxu0 0.0
      %955 = vmatpush1.msra.mxu0 0.0
      %956 = vmatprep.subr.mxu0 0.0
      %957 = vmatpush1.msra.mxu0 0.0
      %958 = vmatprep.subr.mxu0 0.0
      %959 = vmatpush1.msra.mxu0 0.0
      %960 = vmatprep.subr.mxu0 0.0
      %961 = vmatpush1.msra.mxu0 0.0
      %962 = vmatprep.subr.mxu0 0.0
      %963 = vmatpush1.msra.mxu0 0.0
      %964 = vmatprep.subr.mxu0 0.0
      %965 = vmatpush1.msra.mxu0 0.0
      %966 = vmatprep.subr.mxu0 0.0
      %967 = vmatpush1.msra.mxu0 0.0
      %968 = vmatprep.subr.mxu0 0.0
      %969 = vmatpush1.msra.mxu0 0.0
      %970 = vmatprep.mubr.f32.mxu0 0.0
      %971 = vmatmul.mubr.f32.gmra.mrb[0].mxu0 %v898
      %v972 = vpop.f32.mrb[0].mxu0
      %v973 = vadd.f32 0.0, %v972
      %v974 = vpop.f32.mrb[0].mxu0
      %975 = vmatprep.mubr.f32.mxu0 0.0
      %976 = vmatmul.mubr.f32.gmra.mrb[0].mxu0 %v901
      %v977 = vpop.f32.mrb[0].mxu0
      %v978 = vadd.f32 0.0, %v977
      %v979 = vpop.f32.mrb[0].mxu0
      %980 = vmatprep.mubr.f32.mxu0 0.0
      %981 = vmatmul.mubr.f32.gmra.mrb[0].mxu0 %v904
      %v982 = vpop.f32.mrb[0].mxu0
      %v983 = vadd.f32 0.0, %v982
      %v984 = vpop.f32.mrb[0].mxu0
      %985 = vdwg.mxu0
      %v986 = vadd.f32 %v888, %v973
      %v987 = vadd.f32 %v889, %v978
      %v988 = vadd.f32 %v890, %v983
      %v989 = vld [vmem:[%s200 + $0xe] sm:$0xff]
      %v990 = vld [vmem:[%s200 + $0x16] sm:$0xff]
      %v991 = vld [vmem:[%s200 + $0x1e] sm:$0xff]
      %s992 = scalar_lea.vmem %s1, 128
      %v993 = vld [vmem:[%s992] sm:$0xff]
      %v994 = vld [vmem:[%s992 + $0x8] sm:$0xff]
      %v996 = vsel %vm222, %v989, 0
      %v999 = vsel %vm222, %v990, 0
      %v1002 = vsel %vm222, %v991, 0
      %1004 = vmatprep.subr.mxu0 0.0
      %1005 = vmatpush1.msra.mxu0 %v993
      %1006 = vmatprep.subr.mxu0 0.0
      %1007 = vmatpush1.msra.mxu0 %v994
      %1008 = vmatprep.subr.mxu0 0.0
      %1009 = vmatpush1.msra.mxu0 0.0
      %1010 = vmatprep.subr.mxu0 0.0
      %1011 = vmatpush1.msra.mxu0 0.0
      %1012 = vmatprep.subr.mxu0 0.0
      %1013 = vmatpush1.msra.mxu0 0.0
      %1014 = vmatprep.subr.mxu0 0.0
      %1015 = vmatpush1.msra.mxu0 0.0
      %1016 = vmatprep.subr.mxu0 0.0
      %1017 = vmatpush1.msra.mxu0 0.0
      %1018 = vmatprep.subr.mxu0 0.0
      %1019 = vmatpush1.msra.mxu0 0.0
      %1020 = vmatprep.subr.mxu0 0.0
      %1021 = vmatpush1.msra.mxu0 0.0
      %1022 = vmatprep.subr.mxu0 0.0
      %1023 = vmatpush1.msra.mxu0 0.0
      %1024 = vmatprep.subr.mxu0 0.0
      %1025 = vmatpush1.msra.mxu0 0.0
      %1026 = vmatprep.subr.mxu0 0.0
      %1027 = vmatpush1.msra.mxu0 0.0
      %1028 = vmatprep.subr.mxu0 0.0
      %1029 = vmatpush1.msra.mxu0 0.0
      %1030 = vmatprep.subr.mxu0 0.0
      %1031 = vmatpush1.msra.mxu0 0.0
      %1032 = vmatprep.subr.mxu0 0.0
      %1033 = vmatpush1.msra.mxu0 0.0
      %1034 = vmatprep.subr.mxu0 0.0
      %1035 = vmatpush1.msra.mxu0 0.0
      %1036 = vmatprep.subr.mxu0 0.0
      %1037 = vmatpush1.msra.mxu0 0.0
      %1038 = vmatprep.subr.mxu0 0.0
      %1039 = vmatpush1.msra.mxu0 0.0
      %1040 = vmatprep.subr.mxu0 0.0
      %1041 = vmatpush1.msra.mxu0 0.0
      %1042 = vmatprep.subr.mxu0 0.0
      %1043 = vmatpush1.msra.mxu0 0.0
      %1044 = vmatprep.subr.mxu0 0.0
      %1045 = vmatpush1.msra.mxu0 0.0
      %1046 = vmatprep.subr.mxu0 0.0
      %1047 = vmatpush1.msra.mxu0 0.0
      %1048 = vmatprep.subr.mxu0 0.0
      %1049 = vmatpush1.msra.mxu0 0.0
      %1050 = vmatprep.subr.mxu0 0.0
      %1051 = vmatpush1.msra.mxu0 0.0
      %1052 = vmatprep.subr.mxu0 0.0
      %1053 = vmatpush1.msra.mxu0 0.0
      %1054 = vmatprep.subr.mxu0 0.0
      %1055 = vmatpush1.msra.mxu0 0.0
      %1056 = vmatprep.subr.mxu0 0.0
      %1057 = vmatpush1.msra.mxu0 0.0
      %1058 = vmatprep.subr.mxu0 0.0
      %1059 = vmatpush1.msra.mxu0 0.0
      %1060 = vmatprep.subr.mxu0 0.0
      %1061 = vmatpush1.msra.mxu0 0.0
      %1062 = vmatprep.subr.mxu0 0.0
      %1063 = vmatpush1.msra.mxu0 0.0
      %1064 = vmatprep.subr.mxu0 0.0
      %1065 = vmatpush1.msra.mxu0 0.0
      %1066 = vmatprep.subr.mxu0 0.0
      %1067 = vmatpush1.msra.mxu0 0.0
      %1068 = vmatprep.mubr.f32.mxu0 0.0
      %1069 = vmatmul.mubr.f32.gmra.mrb[0].mxu0 %v996
      %v1070 = vpop.f32.mrb[0].mxu0
      %v1071 = vadd.f32 0.0, %v1070
      %v1072 = vpop.f32.mrb[0].mxu0
      %1073 = vmatprep.mubr.f32.mxu0 0.0
      %1074 = vmatmul.mubr.f32.gmra.mrb[0].mxu0 %v999
      %v1075 = vpop.f32.mrb[0].mxu0
      %v1076 = vadd.f32 0.0, %v1075
      %v1077 = vpop.f32.mrb[0].mxu0
      %1078 = vmatprep.mubr.f32.mxu0 0.0
      %1079 = vmatmul.mubr.f32.gmra.mrb[0].mxu0 %v1002
      %v1080 = vpop.f32.mrb[0].mxu0
      %v1081 = vadd.f32 0.0, %v1080
      %v1082 = vpop.f32.mrb[0].mxu0
      %1083 = vdwg.mxu0
      %v1084 = vadd.f32 %v986, %v1071
      %v1085 = vadd.f32 %v987, %v1076
      %v1086 = vadd.f32 %v988, %v1081
      %v1087 = vld [vmem:[%s2] sm:$0x1]
      %v1089 = vlaneseq
      %v1090 = vshrl.u32 %v1089, 7
      %v1091 = vsub.s32 0, %v1090
      %v1092 = vrot.slane %v1087, %v1091
      %v1094 = vadd.f32 %v1084, %v1092
      %v1095 = vadd.f32 %v1085, %v1092
      %v1096 = vadd.f32 %v1086, %v1092
      %v1097 = vmax.f32 %v1094, 0.0
      %v1098 = vmax.f32 %v1095, 0.0
      %v1099 = vmax.f32 %v1096, 0.0
      %1100 = vst.msk [vmem:[%s205] sm:$0xff] %vm222, %v1097
      %1101 = vst.msk [vmem:[%s205 + $0x8] sm:$0xff] %vm222, %v1098
      %1102 = vst.msk [vmem:[%s205 + $0x10] sm:$0xff] %vm222, %v1099
      %1106 = vrot.lane.b32.xlu0 %v1097, 124
      %v1107 = vpop.permute.xlu0 %1106
      %1108 = vrot.lane.b32.xlu0 %v1098, 124
      %v1109 = vpop.permute.xlu0 %1108
      %1110 = vrot.lane.b32.xlu0 %v1099, 124
      %v1111 = vpop.permute.xlu0 %1110
      %v1115 = vadd.f32 %v1097, %v1107
      %v1116 = vadd.f32 %v1098, %v1109
      %v1117 = vadd.f32 %v1099, %v1111
      %v1118 = vsub.f32 %v1097, %v1107
      %v1119 = vsub.f32 %v1098, %v1109
      %v1120 = vsub.f32 %v1099, %v1111
      %1124 = vrot.lane.b32.xlu0 %v1115, 120
      %v1125 = vpop.permute.xlu0 %1124
      %1126 = vrot.lane.b32.xlu0 %v1116, 120
      %v1127 = vpop.permute.xlu0 %1126
      %1128 = vrot.lane.b32.xlu0 %v1117, 120
      %v1129 = vpop.permute.xlu0 %1128
      %v1133 = vadd.f32 %v1115, %v1125
      %v1134 = vadd.f32 %v1116, %v1127
      %v1135 = vadd.f32 %v1117, %v1129
      %v1136 = vmul.f32 %v1133, 0.5
      %v1137 = vmul.f32 %v1134, 0.5
      %v1138 = vmul.f32 %v1135, 0.5
      %v1139 = vsub.f32 %v1115, %v1125
      %v1140 = vsub.f32 %v1116, %v1127
      %v1141 = vsub.f32 %v1117, %v1129
      %v1142 = vmul.f32 %v1139, 0.5
      %v1143 = vmul.f32 %v1140, 0.5
      %v1144 = vmul.f32 %v1141, 0.5
      %1148 = vrot.lane.b32.xlu0 %v1118, 120
      %v1149 = vpop.permute.xlu0 %1148
      %1150 = vrot.lane.b32.xlu0 %v1119, 120
      %v1151 = vpop.permute.xlu0 %1150
      %1152 = vrot.lane.b32.xlu0 %v1120, 120
      %v1153 = vpop.permute.xlu0 %1152
      %v1157 = vadd.f32 %v1118, %v1149
      %v1158 = vadd.f32 %v1119, %v1151
      %v1159 = vadd.f32 %v1120, %v1153
      %v1160 = vmul.f32 %v1157, 0.5
      %v1161 = vmul.f32 %v1158, 0.5
      %v1162 = vmul.f32 %v1159, 0.5
      %v1163 = vsub.f32 %v1118, %v1149
      %v1164 = vsub.f32 %v1119, %v1151
      %v1165 = vsub.f32 %v1120, %v1153
      %v1166 = vmul.f32 %v1163, 0.5
      %v1167 = vmul.f32 %v1164, 0.5
      %v1168 = vmul.f32 %v1165, 0.5
      %1172 = vrot.lane.b32.xlu0 %v1142, 4
      %v1173 = vpop.permute.xlu0 %1172
      %1174 = vrot.lane.b32.xlu0 %v1143, 4
      %v1175 = vpop.permute.xlu0 %1174
      %1176 = vrot.lane.b32.xlu0 %v1144, 4
      %v1177 = vpop.permute.xlu0 %1176
      %1184 = vrot.lane.b32.xlu0 %v1160, 8
      %v1185 = vpop.permute.xlu0 %1184
      %1186 = vrot.lane.b32.xlu0 %v1161, 8
      %v1187 = vpop.permute.xlu0 %1186
      %1188 = vrot.lane.b32.xlu0 %v1162, 8
      %v1189 = vpop.permute.xlu0 %1188
      %1196 = vrot.lane.b32.xlu0 %v1166, 12
      %v1197 = vpop.permute.xlu0 %1196
      %1198 = vrot.lane.b32.xlu0 %v1167, 12
      %v1199 = vpop.permute.xlu0 %1198
      %1200 = vrot.lane.b32.xlu0 %v1168, 12
      %v1201 = vpop.permute.xlu0 %1200
      %vm1205 = vcmask 31744
      %v1206 = vsel %vm1205, %v1136, %v1173
      %v1207 = vsel %vm1205, %v1137, %v1175
      %v1208 = vsel %vm1205, %v1138, %v1177
      %vm1209 = vcmask 64512
      %v1210 = vsel %vm1209, %v1206, %v1185
      %v1211 = vsel %vm1209, %v1207, %v1187
      %v1212 = vsel %vm1209, %v1208, %v1189
      %vm1213 = vcmask 97280
      %v1214 = vsel %vm1213, %v1210, %v1197
      %v1215 = vsel %vm1213, %v1211, %v1199
      %v1216 = vsel %vm1213, %v1212, %v1201
      %1217 = vst.msk [vmem:[%s210] sm:$0xff] %vm222, %v1214
      %1218 = vst.msk [vmem:[%s210 + $0x8] sm:$0xff] %vm222, %v1215
      %1219 = vst.msk [vmem:[%s210 + $0x10] sm:$0xff] %vm222, %v1216
      %p1220 = scmp.lt.s32.totalorder %s16, 1
      %s1221 = scalar_select %p1220, %s16, 1
      %s1222 = smul.addr %s1221, 3
      %s1223 = smul.addr %s1222, 8
      %s1224 = scalar_lea.vmem %s3, %s1223
      %p1225 = scmp.lt.s32.totalorder %s16, 1
      %s1226 = scalar_select %p1225, %s16, 1
      %s1227 = smul.addr %s1226, 3
      %s1228 = smul.addr %s1227, 8
      %s1229 = scalar_lea.vmem %s4, %s1228
      // Predicated region
      $region33: #{wavelet_block_forward.5} parent=31 // pred_check
        %p1230 = pneg %p102
      $region34: #{wavelet_block_forward.5} parent=31 // pred_check_branch
        %1232 = sbr.rel (%p1230) target = $region36
      $region35: #{wavelet_block_forward.5} parent=31 // pred_region
        _
      $region36: #{wavelet_block_forward.5} parent=31 // pred_fallthru
        _
      // Predicated region
      $region37: #{wavelet_block_forward.5} parent=31 // pred_check
        %p1233 = pneg %p128
      $region38: #{wavelet_block_forward.5} parent=31 // pred_check_branch
        %1235 = sbr.rel (%p1233) target = $region40
      $region39: #{wavelet_block_forward.5} parent=31 // pred_region
        _
      $region40: #{wavelet_block_forward.5} parent=31 // pred_fallthru
        _
    $region32: #{wavelet_block_forward.5} parent=5 // pred_fallthru
      _
    %p1236 = scmp.le.s32.totalorder 2, %s11
    // Predicated region
    $region41: #{wavelet_block_forward.5} parent=5 // pred_check
      %p1237 = pneg %p1236
    $region42: #{wavelet_block_forward.5} parent=5 // pred_check_branch
      %1239 = sbr.rel (%p1237) target = $region44
    $region43: #{wavelet_block_forward.5} parent=5 // pred_region
      %s1240 = ssub.s32 %s11, 2
      // Predicated region
      $region45: #{wavelet_block_forward.5} parent=43 // pred_check
        %p1241 = pneg %p108
      $region46: #{wavelet_block_forward.5} parent=43 // pred_check_branch
        %1243 = sbr.rel (%p1241) target = $region48
      $region47: #{wavelet_block_forward.5} parent=43 // pred_region
        %p1244 = scmp.lt.s32.totalorder %s17, 1
        %s1245 = scalar_select %p1244, %s17, 1
        %s1246 = smul.addr %s1245, 3
        %s1247 = smul.addr %s1246, 8
        %s1248 = scalar_lea.vmem %s3, %s1247
      $region48: #{wavelet_block_forward.5} parent=43 // pred_fallthru
        _
      // Predicated region
      $region49: #{wavelet_block_forward.5} parent=43 // pred_check
        %p1249 = pneg %p134
      $region50: #{wavelet_block_forward.5} parent=43 // pred_check_branch
        %1251 = sbr.rel (%p1249) target = $region52
      $region51: #{wavelet_block_forward.5} parent=43 // pred_region
        %p1252 = scmp.lt.s32.totalorder %s17, 1
        %s1253 = scalar_select %p1252, %s17, 1
        %s1254 = smul.addr %s1253, 3
        %s1255 = smul.addr %s1254, 8
        %s1256 = scalar_lea.vmem %s4, %s1255
      $region52: #{wavelet_block_forward.5} parent=43 // pred_fallthru
        _
    $region44: #{wavelet_block_forward.5} parent=5 // pred_fallthru
      _
  $region6: #{wavelet_block_forward.5} parent=0 // loop_footer
    %s15 = sadd.s32 1, %s11
  $region7: #{wavelet_block_forward.5} parent=0 // loop_footer_branch
    %10 = sbr.rel target = $region3
  $region8: #{wavelet_block_forward.5} parent=0 // loop_exit
    _

// kernel: wavelet_block_forward.7
$region0: #{wavelet_block_forward.7}
  #allocation0 [shape = 'u32[]', space=smem, size = 0x4, offset = 0x4, fixed_abs, tag = 'smem constant byte address 0x4 - core index']
  #allocation1 [shape = 'u32[144,128]{1,0:T(1,128)}', space=vmem, size = 0x12000, scoped, tag = 'internal scratch']
  %s0 = inlined_call_operand.vmem [shape: f32[2,64,16], index: 0, kind: input, shape index: {}]
  %s1 = inlined_call_operand.vmem [shape: f32[1,16], index: 1, kind: input, shape index: {}]
  %s2 = inlined_call_operand.vmem [shape: f32[1,16], index: 2, kind: input, shape index: {}]
  %s3 = inlined_call_operand.vmem [shape: f32[16,64], index: 3, kind: input, shape index: {}]
  %s4 = inlined_call_operand.vmem [shape: f32[1,64], index: 4, kind: input, shape index: {}]
  %s5 = inlined_call_operand.vmem [shape: f32[64,16], index: 5, kind: input, shape index: {}]
  %s6 = inlined_call_operand.vmem [shape: f32[1,16], index: 6, kind: input, shape index: {}]
  %s7 = inlined_call_operand.vmem [shape: f32[2,64,16], index: 7, kind: output, shape index: {}]
  %s8 = sld [smem:[#allocation0]]
  $region61: #{wavelet_block_forward.7} parent=0
    _
  %s10 = ssub.s32 1, %s8
  %s11 = scalar_select 0, %s10, %s8
  loop: start=0, step=1, limit=4
  $region2: #{wavelet_block_forward.7} parent=0 // loop_pre_header
    _
  $region3: #{wavelet_block_forward.7} parent=0 // loop_header
    %s13 = sphi 0, %s17
    %p14 = scmp.ge.s32.totalorder %s13, 4
    %s20 = sphi 0, %s32
    %s21 = sphi 0, %s28
    %s22 = sphi 0, %s20
    %s23 = sphi 0, %s21
    %s24 = sphi 0, %s22
    %s25 = sphi 0, %s23
    %s37 = sphi 0, %s39
    %s40 = sphi 0, %s37
    %s41 = sphi 0, %s40
    %s57 = sphi 0, %s41
    %s61 = sphi 0, %s61
    %s63 = sphi 0, %s61
    %s64 = sphi 0, %s63
    %s78 = sphi 0, %s64
    %s82 = sphi 0, %s82
    %s84 = sphi 0, %s82
    %s85 = sphi 0, %s84
    %s99 = sphi 0, %s85
    %s103 = sphi 0, %s103
    %s105 = sphi 0, %s103
    %s106 = sphi 0, %s105
    %s120 = sphi 0, %s106
    %s124 = sphi 0, %s124
    %s126 = sphi 0, %s124
    %s127 = sphi 0, %s126
    %s141 = sphi 0, %s127
    %s145 = sphi 0, %s145
    %s147 = sphi 0, %s145
    %s148 = sphi 0, %s147
    %s162 = sphi 0, %s148
    %s166 = sphi 0, %s166
    %s168 = sphi 0, %s166
    %s169 = sphi 0, %s168
    %s183 = sphi 0, %s169
    %s191 = sphi 0, %s193
    %s194 = sphi 0, %s191
    %s195 = sphi 0, %s194
    %s211 = sphi 0, %s195
  $region4: #{wavelet_block_forward.7} parent=0 // loop_header_branch
    %16 = sbr.rel (%p14) target = $region8
  $region5: #{wavelet_block_forward.7} parent=0 // loop_body
    %s18 = ssub.s32 %s13, 1
    %s19 = ssub.s32 %s13, 2
    %s26 = sadd.s32 1, %s21
    %p27 = scmp.ge.s32.totalorder %s26, 1
    %s28 = scalar_select %p27, 0, %s26
    %s29 = sadd.s32 1, %s20
    %s30 = scalar_select %p27, %s29, %s20
    %p31 = scmp.ge.s32.totalorder %s30, 2
    %s32 = scalar_select %p31, 0, %s30
    %s33 = ssub.s32 %s20, %s32
    %s34 = ssub.s32 %s21, %s28
    %s35 = sor.u32 %s33, %s34
    %p36 = scmp.eq.s32.totalorder %s35, 0
    %s38 = sadd.s32 %s37, 1
    %s39 = scalar_select %p36, %s37, %s38
    %p42 = pneg %p36
    %p43 = scmp.eq.s32.totalorder %s13, 1
    %p44 = por %p42, %p43
    %p45 = scmp.ne.s32.totalorder %s37, %s40
    %p46 = scmp.eq.s32.totalorder %s13, 0
    %p47 = por %p45, %p46
    %p48 = scmp.ne.s32.totalorder %s37, %s40
    %p49 = scmp.eq.s32.totalorder %s18, 1
    %p50 = por %p48, %p49
    %p51 = scmp.ne.s32.totalorder %s40, %s41
    %p52 = scmp.eq.s32.totalorder %s18, 0
    %p53 = por %p51, %p52
    %p54 = scmp.ne.s32.totalorder %s40, %s41
    %p55 = scmp.eq.s32.totalorder %s19, 1
    %p56 = por %p54, %p55
    %p58 = scmp.ne.s32.totalorder %s41, %s57
    %p59 = scmp.eq.s32.totalorder %s19, 0
    %p60 = por %p58, %p59
    %s62 = sadd.s32 %s61, 1
    %p65 = scmp.eq.s32.totalorder %s13, 1
    %p66 = scmp.ne.s32.totalorder %s61, %s63
    %p67 = scmp.eq.s32.totalorder %s13, 0
    %p68 = por %p66, %p67
    %p69 = scmp.ne.s32.totalorder %s61, %s63
    %p70 = scmp.eq.s32.totalorder %s18, 1
    %p71 = por %p69, %p70
    %p72 = scmp.ne.s32.totalorder %s63, %s64
    %p73 = scmp.eq.s32.totalorder %s18, 0
    %p74 = por %p72, %p73
    %p75 = scmp.ne.s32.totalorder %s63, %s64
    %p76 = scmp.eq.s32.totalorder %s19, 1
    %p77 = por %p75, %p76
    %p79 = scmp.ne.s32.totalorder %s64, %s78
    %p80 = scmp.eq.s32.totalorder %s19, 0
    %p81 = por %p79, %p80
    %s83 = sadd.s32 %s82, 1
    %p86 = scmp.eq.s32.totalorder %s13, 1
    %p87 = scmp.ne.s32.totalorder %s82, %s84
    %p88 = scmp.eq.s32.totalorder %s13, 0
    %p89 = por %p87, %p88
    %p90 = scmp.ne.s32.totalorder %s82, %s84
    %p91 = scmp.eq.s32.totalorder %s18, 1
    %p92 = por %p90, %p91
    %p93 = scmp.ne.s32.totalorder %s84, %s85
    %p94 = scmp.eq.s32.totalorder %s18, 0
    %p95 = por %p93, %p94
    %p96 = scmp.ne.s32.totalorder %s84, %s85
    %p97 = scmp.eq.s32.totalorder %s19, 1
    %p98 = por %p96, %p97
    %p100 = scmp.ne.s32.totalorder %s85, %s99
    %p101 = scmp.eq.s32.totalorder %s19, 0
    %p102 = por %p100, %p101
    %s104 = sadd.s32 %s103, 1
    %p107 = scmp.eq.s32.totalorder %s13, 1
    %p108 = scmp.ne.s32.totalorder %s103, %s105
    %p109 = scmp.eq.s32.totalorder %s13, 0
    %p110 = por %p108, %p109
    %p111 = scmp.ne.s32.totalorder %s103, %s105
    %p112 = scmp.eq.s32.totalorder %s18, 1
    %p113 = por %p111, %p112
    %p114 = scmp.ne.s32.totalorder %s105, %s106
    %p115 = scmp.eq.s32.totalorder %s18, 0
    %p116 = por %p114, %p115
    %p117 = scmp.ne.s32.totalorder %s105, %s106
    %p118 = scmp.eq.s32.totalorder %s19, 1
    %p119 = por %p117, %p118
    %p121 = scmp.ne.s32.totalorder %s106, %s120
    %p122 = scmp.eq.s32.totalorder %s19, 0
    %p123 = por %p121, %p122
    %s125 = sadd.s32 %s124, 1
    %p128 = scmp.eq.s32.totalorder %s13, 1
    %p129 = scmp.ne.s32.totalorder %s124, %s126
    %p130 = scmp.eq.s32.totalorder %s13, 0
    %p131 = por %p129, %p130
    %p132 = scmp.ne.s32.totalorder %s124, %s126
    %p133 = scmp.eq.s32.totalorder %s18, 1
    %p134 = por %p132, %p133
    %p135 = scmp.ne.s32.totalorder %s126, %s127
    %p136 = scmp.eq.s32.totalorder %s18, 0
    %p137 = por %p135, %p136
    %p138 = scmp.ne.s32.totalorder %s126, %s127
    %p139 = scmp.eq.s32.totalorder %s19, 1
    %p140 = por %p138, %p139
    %p142 = scmp.ne.s32.totalorder %s127, %s141
    %p143 = scmp.eq.s32.totalorder %s19, 0
    %p144 = por %p142, %p143
    %s146 = sadd.s32 %s145, 1
    %p149 = scmp.eq.s32.totalorder %s13, 1
    %p150 = scmp.ne.s32.totalorder %s145, %s147
    %p151 = scmp.eq.s32.totalorder %s13, 0
    %p152 = por %p150, %p151
    %p153 = scmp.ne.s32.totalorder %s145, %s147
    %p154 = scmp.eq.s32.totalorder %s18, 1
    %p155 = por %p153, %p154
    %p156 = scmp.ne.s32.totalorder %s147, %s148
    %p157 = scmp.eq.s32.totalorder %s18, 0
    %p158 = por %p156, %p157
    %p159 = scmp.ne.s32.totalorder %s147, %s148
    %p160 = scmp.eq.s32.totalorder %s19, 1
    %p161 = por %p159, %p160
    %p163 = scmp.ne.s32.totalorder %s148, %s162
    %p164 = scmp.eq.s32.totalorder %s19, 0
    %p165 = por %p163, %p164
    %s167 = sadd.s32 %s166, 1
    %p170 = scmp.eq.s32.totalorder %s13, 1
    %p171 = scmp.ne.s32.totalorder %s166, %s168
    %p172 = scmp.eq.s32.totalorder %s13, 0
    %p173 = por %p171, %p172
    %p174 = scmp.ne.s32.totalorder %s166, %s168
    %p175 = scmp.eq.s32.totalorder %s18, 1
    %p176 = por %p174, %p175
    %p177 = scmp.ne.s32.totalorder %s168, %s169
    %p178 = scmp.eq.s32.totalorder %s18, 0
    %p179 = por %p177, %p178
    %p180 = scmp.ne.s32.totalorder %s168, %s169
    %p181 = scmp.eq.s32.totalorder %s19, 1
    %p182 = por %p180, %p181
    %p184 = scmp.ne.s32.totalorder %s169, %s183
    %p185 = scmp.eq.s32.totalorder %s19, 0
    %p186 = por %p184, %p185
    %s187 = ssub.s32 %s20, %s32
    %s188 = ssub.s32 %s21, %s28
    %s189 = sor.u32 %s187, %s188
    %p190 = scmp.eq.s32.totalorder %s189, 0
    %s192 = sadd.s32 %s191, 1
    %s193 = scalar_select %p190, %s191, %s192
    %p196 = pneg %p190
    %p197 = scmp.eq.s32.totalorder %s13, 1
    %p198 = por %p196, %p197
    %p199 = scmp.ne.s32.totalorder %s191, %s194
    %p200 = scmp.eq.s32.totalorder %s13, 0
    %p201 = por %p199, %p200
    %p202 = scmp.ne.s32.totalorder %s191, %s194
    %p203 = scmp.eq.s32.totalorder %s18, 1
    %p204 = por %p202, %p203
    %p205 = scmp.ne.s32.totalorder %s194, %s195
    %p206 = scmp.eq.s32.totalorder %s18, 0
    %p207 = por %p205, %p206
    %p208 = scmp.ne.s32.totalorder %s194, %s195
    %p209 = scmp.eq.s32.totalorder %s19, 1
    %p210 = por %p208, %p209
    %p212 = scmp.ne.s32.totalorder %s195, %s211
    %p213 = scmp.eq.s32.totalorder %s19, 0
    %p214 = por %p212, %p213
    %p215 = scmp.le.s32.totalorder 1, %s13
    %p216 = scmp.lt.s32.totalorder %s13, 3
    %p217 = pnand %p215, %p216
    %p218 = pneg %p217
    // Predicated region
    $region9: #{wavelet_block_forward.7} parent=5 // pred_check
      _
    $region10: #{wavelet_block_forward.7} parent=5 // pred_check_branch
      %220 = sbr.rel (%p217) target = $region12
    $region11: #{wavelet_block_forward.7} parent=5 // pred_region
      %s221 = ssub.s32 %s13, 1
      // Predicated region
      $region13: #{wavelet_block_forward.7} parent=11 // pred_check
        %p222 = pneg %p74
      $region14: #{wavelet_block_forward.7} parent=11 // pred_check_branch
        %224 = sbr.rel (%p222) target = $region16
      $region15: #{wavelet_block_forward.7} parent=11 // pred_region
        _
      $region16: #{wavelet_block_forward.7} parent=11 // pred_fallthru
        _
      // Predicated region
      $region17: #{wavelet_block_forward.7} parent=11 // pred_check
        %p225 = pneg %p95
      $region18: #{wavelet_block_forward.7} parent=11 // pred_check_branch
        %227 = sbr.rel (%p225) target = $region20
      $region19: #{wavelet_block_forward.7} parent=11 // pred_region
        _
      $region20: #{wavelet_block_forward.7} parent=11 // pred_fallthru
        _
      // Predicated region
      $region21: #{wavelet_block_forward.7} parent=11 // pred_check
        %p228 = pneg %p116
      $region22: #{wavelet_block_forward.7} parent=11 // pred_check_branch
        %230 = sbr.rel (%p228) target = $region24
      $region23: #{wavelet_block_forward.7} parent=11 // pred_region
        _
      $region24: #{wavelet_block_forward.7} parent=11 // pred_fallthru
        _
      // Predicated region
      $region25: #{wavelet_block_forward.7} parent=11 // pred_check
        %p231 = pneg %p137
      $region26: #{wavelet_block_forward.7} parent=11 // pred_check_branch
        %233 = sbr.rel (%p231) target = $region28
      $region27: #{wavelet_block_forward.7} parent=11 // pred_region
        _
      $region28: #{wavelet_block_forward.7} parent=11 // pred_fallthru
        _
      // Predicated region
      $region29: #{wavelet_block_forward.7} parent=11 // pred_check
        %p234 = pneg %p158
      $region30: #{wavelet_block_forward.7} parent=11 // pred_check_branch
        %236 = sbr.rel (%p234) target = $region32
      $region31: #{wavelet_block_forward.7} parent=11 // pred_region
        _
      $region32: #{wavelet_block_forward.7} parent=11 // pred_fallthru
        _
      // Predicated region
      $region33: #{wavelet_block_forward.7} parent=11 // pred_check
        %p237 = pneg %p179
      $region34: #{wavelet_block_forward.7} parent=11 // pred_check_branch
        %239 = sbr.rel (%p237) target = $region36
      $region35: #{wavelet_block_forward.7} parent=11 // pred_region
        _
      $region36: #{wavelet_block_forward.7} parent=11 // pred_fallthru
        _
    $region12: #{wavelet_block_forward.7} parent=5 // pred_fallthru
      _
    %p240 = scmp.lt.s32.totalorder %s13, 2
    // Predicated region
    $region37: #{wavelet_block_forward.7} parent=5 // pred_check
      %p241 = pneg %p240
    $region38: #{wavelet_block_forward.7} parent=5 // pred_check_branch
      %243 = sbr.rel (%p241) target = $region40
    $region39: #{wavelet_block_forward.7} parent=5 // pred_region
      // Predicated region
      $region41: #{wavelet_block_forward.7} parent=39 // pred_check
        %p244 = pneg %p47
      $region42: #{wavelet_block_forward.7} parent=39 // pred_check_branch
        %246 = sbr.rel (%p244) target = $region44
      $region43: #{wavelet_block_forward.7} parent=39 // pred_region
        %s247 = smul.u32 8, %s21
        %p248 = scmp.lt.s32.totalorder %s20, 1
        %s249 = scalar_select %p248, %s20, 1
        %p250 = scmp.lt.s32.totalorder %s247, 7
        %s251 = scalar_select %p250, %s247, 7
        %s252 = smul.addr %s249, 8
        %s253 = sadd.s32 %s251, %s252
        %s254 = smul.addr %s253, 8
        %s255 = scalar_lea.vmem %s0, %s254
        %s256 = smul.u32 8, %s21
      $region44: #{wavelet_block_forward.7} parent=39 // pred_fallthru
        _
    $region40: #{wavelet_block_forward.7} parent=5 // pred_fallthru
      _
    %p257 = scmp.le.s32.totalorder 1, %s13
    %p258 = scmp.lt.s32.totalorder %s13, 3
    %p259 = pnand %p257, %p258
    %p260 = pneg %p259
    // Predicated region
    $region45: #{wavelet_block_forward.7} parent=5 // pred_check
      _
    $region46: #{wavelet_block_forward.7} parent=5 // pred_check_branch
      %262 = sbr.rel (%p259) target = $region48
    $region47: #{wavelet_block_forward.7} parent=5 // pred_region
      %s263 = ssub.s32 %s13, 1
      %s264 = smul.u32 8, %s23
      %p265 = scmp.lt.s32.totalorder %s22, 1
      %s266 = scalar_select %p265, %s22, 1
      %p267 = scmp.lt.s32.totalorder %s264, 7
      %s268 = scalar_select %p267, %s264, 7
      %s269 = smul.addr %s266, 8
      %s270 = sadd.s32 %s268, %s269
      %s271 = smul.addr %s270, 8
      %s272 = scalar_lea.vmem %s0, %s271
      %p273 = pneg %p53
      %p274 = pneg %p50
      %p275 = pneg %p74
      %p276 = pneg %p71
      %p277 = pneg %p95
      %p278 = pneg %p92
      %p279 = pneg %p116
      %p280 = pneg %p113
      %p281 = pneg %p137
      %p282 = pneg %p134
      %p283 = pneg %p158
      %p284 = pneg %p155
      %p285 = pneg %p179
      %p286 = pneg %p176
      %p287 = pneg %p207
      %p288 = pneg %p204
      %s289 = smul.u32 8, %s23
      %p290 = scmp.lt.s32.totalorder %s22, 1
      %s291 = scalar_select %p290, %s22, 1
      %p292 = scmp.lt.s32.totalorder %s289, 7
      %s293 = scalar_select %p292, %s289, 7
      %s294 = smul.addr %s291, 8
      %s295 = sadd.s32 %s293, %s294
      %s296 = smul.addr %s295, 8
      %s297 = scalar_lea.vmem %s7, %s296
      %s298 = smul.u32 8, %s23
      %p299 = scmp.lt.s32.totalorder %s22, 1
      %s300 = scalar_select %p299, %s22, 1
      %p301 = scmp.lt.s32.totalorder %s298, 7
      %s302 = scalar_select %p301, %s298, 7
      %s303 = smul.addr %s300, 8
      %s304 = sadd.s32 %s302, %s303
      %s305 = smul.addr %s304, 8
      %s306 = scalar_lea.vmem %s0, %s305
      %s307 = smul.u32 8, %s23
      %s308 = smul.u32 8, %s23
      %p309 = scmp.lt.s32.totalorder %s22, 1
      %s310 = scalar_select %p309, %s22, 1
      %p311 = scmp.lt.s32.totalorder %s308, 7
      %s312 = scalar_select %p311, %s308, 7
      %s313 = smul.addr %s310, 8
      %s314 = sadd.s32 %s312, %s313
      %s315 = smul.addr %s314, 8
      %s316 = scalar_lea.vmem %s7, %s315
      %s317 = smul.u32 8, %s23
      %v318 = vld [vmem:[%s306] sm:$0xff]
      %v319 = vld [vmem:[%s306 + $0x8] sm:$0xff]
      %v320 = vld [vmem:[%s306 + $0x10] sm:$0xff]
      %v321 = vld [vmem:[%s306 + $0x18] sm:$0xff]
      %v322 = vld [vmem:[%s306 + $0x20] sm:$0xff]
      %v323 = vld [vmem:[%s306 + $0x28] sm:$0xff]
      %v324 = vld [vmem:[%s306 + $0x30] sm:$0xff]
      %v325 = vld [vmem:[%s306 + $0x38] sm:$0xff]
      %v326 = vld [vmem:[%s1] sm:$0x1]
      %v327 = vld [vmem:[%s2] sm:$0x1]
      %vm328 = vcmask 130048
      %v329 = vsel %vm328, %v318, 0.0
      %330 = vadd.xlane.f32.xlu0 %v329
      %v331 = vpop.xlane.xlu0 %330
      %v332 = vsel %vm328, %v319, 0.0
      %333 = vadd.xlane.f32.xlu0 %v332
      %v334 = vpop.xlane.xlu0 %333
      %v335 = vsel %vm328, %v320, 0.0
      %336 = vadd.xlane.f32.xlu0 %v335
      %v337 = vpop.xlane.xlu0 %336
      %v338 = vsel %vm328, %v321, 0.0
      %339 = vadd.xlane.f32.xlu0 %v338
      %v340 = vpop.xlane.xlu0 %339
      %v341 = vsel %vm328, %v322, 0.0
      %342 = vadd.xlane.f32.xlu0 %v341
      %v343 = vpop.xlane.xlu0 %342
      %v344 = vsel %vm328, %v323, 0.0
      %345 = vadd.xlane.f32.xlu0 %v344
      %v346 = vpop.xlane.xlu0 %345
      %v347 = vsel %vm328, %v324, 0.0
      %348 = vadd.xlane.f32.xlu0 %v347
      %v349 = vpop.xlane.xlu0 %348
      %v350 = vsel %vm328, %v325, 0.0
      %351 = vadd.xlane.f32.xlu0 %v350
      %v352 = vpop.xlane.xlu0 %351
      %v353 = vrcp.pop 16.0
      %v354 = vmul.f32 %v331, %v353
      %v355 = vmul.f32 %v334, %v353
      %v356 = vmul.f32 %v337, %v353
      %v357 = vmul.f32 %v340, %v353
      %v358 = vmul.f32 %v343, %v353
      %v359 = vmul.f32 %v346, %v353
      %v360 = vmul.f32 %v349, %v353
      %v361 = vmul.f32 %v352, %v353
      %v362 = vsub.f32 %v318, %v354
      %v363 = vsub.f32 %v319, %v355
      %v364 = vsub.f32 %v320, %v356
      %v365 = vsub.f32 %v321, %v357
      %v366 = vsub.f32 %v322, %v358
      %v367 = vsub.f32 %v323, %v359
      %v368 = vsub.f32 %v324, %v360
      %v369 = vsub.f32 %v325, %v361
      %v370 = vmul.f32 %v362, %v362
      %v371 = vmul.f32 %v363, %v363
      %v372 = vmul.f32 %v364, %v364
      %v373 = vmul.f32 %v365, %v365
      %v374 = vmul.f32 %v366, %v366
      %v375 = vmul.f32 %v367, %v367
      %v376 = vmul.f32 %v368, %v368
      %v377 = vmul.f32 %v369, %v369
      %v378 = vsel %vm328, %v370, 0.0
      %379 = vadd.xlane.f32.xlu0 %v378
      %v380 = vpop.xlane.xlu0 %379
      %v381 = vsel %vm328, %v371, 0.0
      %382 = vadd.xlane.f32.xlu0 %v381
      %v383 = vpop.xlane.xlu0 %382
      %v384 = vsel %vm328, %v372, 0.0
      %385 = vadd.xlane.f32.xlu0 %v384
      %v386 = vpop.xlane.xlu0 %385
      %v387 = vsel %vm328, %v373, 0.0
      %388 = vadd.xlane.f32.xlu0 %v387
      %v389 = vpop.xlane.xlu0 %388
      %v390 = vsel %vm328, %v374, 0.0
      %391 = vadd.xlane.f32.xlu0 %v390
      %v392 = vpop.xlane.xlu0 %391
      %v393 = vsel %vm328, %v375, 0.0
      %394 = vadd.xlane.f32.xlu0 %v393
      %v395 = vpop.xlane.xlu0 %394
      %v396 = vsel %vm328, %v376, 0.0
      %397 = vadd.xlane.f32.xlu0 %v396
      %v398 = vpop.xlane.xlu0 %397
      %v399 = vsel %vm328, %v377, 0.0
      %400 = vadd.xlane.f32.xlu0 %v399
      %v401 = vpop.xlane.xlu0 %400
      %v402 = vmul.f32 %v380, %v353
      %v403 = vmul.f32 %v383, %v353
      %v404 = vmul.f32 %v386, %v353
      %v405 = vmul.f32 %v389, %v353
      %v406 = vmul.f32 %v392, %v353
      %v407 = vmul.f32 %v395, %v353
      %v408 = vmul.f32 %v398, %v353
      %v409 = vmul.f32 %v401, %v353
      %v410 = vadd.f32 %v402, 1e-05
      %v411 = vadd.f32 %v403, 1e-05
      %v412 = vadd.f32 %v404, 1e-05
      %v413 = vadd.f32 %v405, 1e-05
      %v414 = vadd.f32 %v406, 1e-05
      %v415 = vadd.f32 %v407, 1e-05
      %v416 = vadd.f32 %v408, 1e-05
      %v417 = vadd.f32 %v409, 1e-05
      %v418 = vrsqrt.pop %v410
      %v419 = vrsqrt.pop %v411
      %v420 = vrsqrt.pop %v412
      %v421 = vrsqrt.pop %v413
      %v422 = vrsqrt.pop %v414
      %v423 = vrsqrt.pop %v415
      %v424 = vrsqrt.pop %v416
      %v425 = vrsqrt.pop %v417
      %v426 = vmul.f32 %v362, %v418
      %v427 = vmul.f32 %v363, %v419
      %v428 = vmul.f32 %v364, %v420
      %v429 = vmul.f32 %v365, %v421
      %v430 = vmul.f32 %v366, %v422
      %v431 = vmul.f32 %v367, %v423
      %v432 = vmul.f32 %v368, %v424
      %v433 = vmul.f32 %v369, %v425
      %v435 = vlaneseq
      %v436 = vshrl.u32 %v435, 7
      %v437 = vsub.s32 0, %v436
      %v438 = vrot.slane %v326, %v437
      %v440 = vmul.f32 %v426, %v438
      %v441 = vmul.f32 %v427, %v438
      %v442 = vmul.f32 %v428, %v438
      %v443 = vmul.f32 %v429, %v438
      %v444 = vmul.f32 %v430, %v438
      %v445 = vmul.f32 %v431, %v438
      %v446 = vmul.f32 %v432, %v438
      %v447 = vmul.f32 %v433, %v438
      %v449 = vlaneseq
      %v450 = vshrl.u32 %v449, 7
      %v451 = vsub.s32 0, %v450
      %v452 = vrot.slane %v327, %v451
      %v454 = vadd.f32 %v440, %v452
      %v455 = vadd.f32 %v441, %v452
      %v456 = vadd.f32 %v442, %v452
      %v457 = vadd.f32 %v443, %v452
      %v458 = vadd.f32 %v444, %v452
      %v459 = vadd.f32 %v445, %v452
      %v460 = vadd.f32 %v446, %v452
      %v461 = vadd.f32 %v447, %v452
      %v462 = vld [vmem:[%s3] sm:$0xff]
      %v463 = vld [vmem:[%s3 + $0x8] sm:$0xff]
      %v464 = vld [vmem:[%s4] sm:$0x1]
      %v466 = vlaneseq
      %v467 = vshrl.u32 %v466, 7
      %v468 = vsub.s32 0, %v467
      %v469 = vrot.slane %v464, %v468
      %v472 = vsel %vm328, %v454, 0
      %v475 = vsel %vm328, %v455, 0
      %v478 = vsel %vm328, %v456, 0
      %v481 = vsel %vm328, %v457, 0
      %v484 = vsel %vm328, %v458, 0
      %v487 = vsel %vm328, %v459, 0
      %v490 = vsel %vm328, %v460, 0
      %v493 = vsel %vm328, %v461, 0
      %495 = vmatprep.subr.mxu0 0.0
      %496 = vmatpush1.msra.mxu0 %v462
      %497 = vmatprep.subr.mxu0 0.0
      %498 = vmatpush1.msra.mxu0 %v463
      %499 = vmatprep.subr.mxu0 0.0
      %500 = vmatpush1.msra.mxu0 0.0
      %501 = vmatprep.subr.mxu0 0.0
      %502 = vmatpush1.msra.mxu0 0.0
      %503 = vmatprep.subr.mxu0 0.0
      %504 = vmatpush1.msra.mxu0 0.0
      %505 = vmatprep.subr.mxu0 0.0
      %506 = vmatpush1.msra.mxu0 0.0
      %507 = vmatprep.subr.mxu0 0.0
      %508 = vmatpush1.msra.mxu0 0.0
      %509 = vmatprep.subr.mxu0 0.0
      %510 = vmatpush1.msra.mxu0 0.0
      %511 = vmatprep.subr.mxu0 0.0
      %512 = vmatpush1.msra.mxu0 0.0
      %513 = vmatprep.subr.mxu0 0.0
      %514 = vmatpush1.msra.mxu0 0.0
      %515 = vmatprep.subr.mxu0 0.0
      %516 = vmatpush1.msra.mxu0 0.0
      %517 = vmatprep.subr.mxu0 0.0
      %518 = vmatpush1.msra.mxu0 0.0
      %519 = vmatprep.subr.mxu0 0.0
      %520 = vmatpush1.msra.mxu0 0.0
      %521 = vmatprep.subr.mxu0 0.0
      %522 = vmatpush1.msra.mxu0 0.0
      %523 = vmatprep.subr.mxu0 0.0
      %524 = vmatpush1.msra.mxu0 0.0
      %525 = vmatprep.subr.mxu0 0.0
      %526 = vmatpush1.msra.mxu0 0.0
      %527 = vmatprep.subr.mxu0 0.0
      %528 = vmatpush1.msra.mxu0 0.0
      %529 = vmatprep.subr.mxu0 0.0
      %530 = vmatpush1.msra.mxu0 0.0
      %531 = vmatprep.subr.mxu0 0.0
      %532 = vmatpush1.msra.mxu0 0.0
      %533 = vmatprep.subr.mxu0 0.0
      %534 = vmatpush1.msra.mxu0 0.0
      %535 = vmatprep.subr.mxu0 0.0
      %536 = vmatpush1.msra.mxu0 0.0
      %537 = vmatprep.subr.mxu0 0.0
      %538 = vmatpush1.msra.mxu0 0.0
      %539 = vmatprep.subr.mxu0 0.0
      %540 = vmatpush1.msra.mxu0 0.0
      %541 = vmatprep.subr.mxu0 0.0
      %542 = vmatpush1.msra.mxu0 0.0
      %543 = vmatprep.subr.mxu0 0.0
      %544 = vmatpush1.msra.mxu0 0.0
      %545 = vmatprep.subr.mxu0 0.0
      %546 = vmatpush1.msra.mxu0 0.0
      %547 = vmatprep.subr.mxu0 0.0
      %548 = vmatpush1.msra.mxu0 0.0
      %549 = vmatprep.subr.mxu0 0.0
      %550 = vmatpush1.msra.mxu0 0.0
      %551 = vmatprep.subr.mxu0 0.0
      %552 = vmatpush1.msra.mxu0 0.0
      %553 = vmatprep.subr.mxu0 0.0
      %554 = vmatpush1.msra.mxu0 0.0
      %555 = vmatprep.subr.mxu0 0.0
      %556 = vmatpush1.msra.mxu0 0.0
      %557 = vmatprep.subr.mxu0 0.0
      %558 = vmatpush1.msra.mxu0 0.0
      %559 = vmatprep.mubr.f32.mxu0 0.0
      %560 = vmatmul.mubr.f32.gmra.mrb[0].mxu0 %v472
      %v561 = vpop.f32.mrb[0].mxu0
      %v562 = vadd.f32 %v469, %v561
      %v563 = vpop.f32.mrb[0].mxu0
      %564 = vmatprep.mubr.f32.mxu0 0.0
      %565 = vmatmul.mubr.f32.gmra.mrb[0].mxu0 %v475
      %v566 = vpop.f32.mrb[0].mxu0
      %v567 = vadd.f32 %v469, %v566
      %v568 = vpop.f32.mrb[0].mxu0
      %569 = vmatprep.mubr.f32.mxu0 0.0
      %570 = vmatmul.mubr.f32.gmra.mrb[0].mxu0 %v478
      %v571 = vpop.f32.mrb[0].mxu0
      %v572 = vadd.f32 %v469, %v571
      %v573 = vpop.f32.mrb[0].mxu0
      %574 = vmatprep.mubr.f32.mxu0 0.0
      %575 = vmatmul.mubr.f32.gmra.mrb[0].mxu0 %v481
      %v576 = vpop.f32.mrb[0].mxu0
      %v577 = vadd.f32 %v469, %v576
      %v578 = vpop.f32.mrb[0].mxu0
      %579 = vmatprep.mubr.f32.mxu0 0.0
      %580 = vmatmul.mubr.f32.gmra.mrb[0].mxu0 %v484
      %v581 = vpop.f32.mrb[0].mxu0
      %v582 = vadd.f32 %v469, %v581
      %v583 = vpop.f32.mrb[0].mxu0
      %584 = vmatprep.mubr.f32.mxu0 0.0
      %585 = vmatmul.mubr.f32.gmra.mrb[0].mxu0 %v487
      %v586 = vpop.f32.mrb[0].mxu0
      %v587 = vadd.f32 %v469, %v586
      %v588 = vpop.f32.mrb[0].mxu0
      %589 = vmatprep.mubr.f32.mxu0 0.0
      %590 = vmatmul.mubr.f32.gmra.mrb[0].mxu0 %v490
      %v591 = vpop.f32.mrb[0].mxu0
      %v592 = vadd.f32 %v469, %v591
      %v593 = vpop.f32.mrb[0].mxu0
      %594 = vmatprep.mubr.f32.mxu0 0.0
      %595 = vmatmul.mubr.f32.gmra.mrb[0].mxu0 %v493
      %v596 = vpop.f32.mrb[0].mxu0
      %v597 = vadd.f32 %v469, %v596
      %v598 = vpop.f32.mrb[0].mxu0
      %599 = vdwg.mxu0
      %v600 = vmul.f32 %v562, 0.70710677
      %v601 = vmul.f32 %v567, 0.70710677
      %v602 = vmul.f32 %v572, 0.70710677
      %v603 = vmul.f32 %v577, 0.70710677
      %v604 = vmul.f32 %v582, 0.70710677
      %v605 = vmul.f32 %v587, 0.70710677
      %v606 = vmul.f32 %v592, 0.70710677
      %v607 = vmul.f32 %v597, 0.70710677
      %v608 = vand.u32 2147483647, %v600
      %v609 = vand.u32 2147483647, %v601
      %v610 = vand.u32 2147483647, %v602
      %v611 = vand.u32 2147483647, %v603
      %v612 = vand.u32 2147483647, %v604
      %v613 = vand.u32 2147483647, %v605
      %v614 = vand.u32 2147483647, %v606
      %v615 = vand.u32 2147483647, %v607
      %v616 = vmul.f32 %v608, 0.3275911
      %v617 = vmul.f32 %v609, 0.3275911
      %v618 = vmul.f32 %v610, 0.3275911
      %v619 = vmul.f32 %v611, 0.3275911
      %v620 = vmul.f32 %v612, 0.3275911
      %v621 = vmul.f32 %v613, 0.3275911
      %v622 = vmul.f32 %v614, 0.3275911
      %v623 = vmul.f32 %v615, 0.3275911
      %v624 = vadd.f32 %v616, 1.0
      %v625 = vadd.f32 %v617, 1.0
      %v626 = vadd.f32 %v618, 1.0
      %v627 = vadd.f32 %v619, 1.0
      %v628 = vadd.f32 %v620, 1.0
      %v629 = vadd.f32 %v621, 1.0
      %v630 = vadd.f32 %v622, 1.0
      %v631 = vadd.f32 %v623, 1.0
      %v632 = vrcp.pop %v624
      %v633 = vmul.f32 1.0, %v632
      %v634 = vrcp.pop %v625
      %v635 = vmul.f32 1.0, %v634
      %v636 = vrcp.pop %v626
      %v637 = vmul.f32 1.0, %v636
      %v638 = vrcp.pop %v627
      %v639 = vmul.f32 1.0, %v638
      %v640 = vrcp.pop %v628
      %v641 = vmul.f32 1.0, %v640
      %v642 = vrcp.pop %v629
      %v643 = vmul.f32 1.0, %v642
      %v644 = vrcp.pop %v630
      %v645 = vmul.f32 1.0, %v644
      %v646 = vrcp.pop %v631
      %v647 = vmul.f32 1.0, %v646
      %v648 = vmul.f32 %v633, 1.0614054
      %v649 = vmul.f32 %v635, 1.0614054
      %v650 = vmul.f32 %v637, 1.0614054
      %v651 = vmul.f32 %v639, 1.0614054
      %v652 = vmul.f32 %v641, 1.0614054
      %v653 = vmul.f32 %v643, 1.0614054
      %v654 = vmul.f32 %v645, 1.0614054
      %v655 = vmul.f32 %v647, 1.0614054
      %v656 = vadd.f32 %v648, -1.4531521
      %v657 = vadd.f32 %v649, -1.4531521
      %v658 = vadd.f32 %v650, -1.4531521
      %v659 = vadd.f32 %v651, -1.4531521
      %v660 = vadd.f32 %v652, -1.4531521
      %v661 = vadd.f32 %v653, -1.4531521
      %v662 = vadd.f32 %v654, -1.4531521
      %v663 = vadd.f32 %v655, -1.4531521
      %v664 = vmul.f32 %v633, %v656
      %v665 = vmul.f32 %v635, %v657
      %v666 = vmul.f32 %v637, %v658
      %v667 = vmul.f32 %v639, %v659
      %v668 = vmul.f32 %v641, %v660
      %v669 = vmul.f32 %v643, %v661
      %v670 = vmul.f32 %v645, %v662
      %v671 = vmul.f32 %v647, %v663
      %v672 = vadd.f32 %v664, 1.4214138
      %v673 = vadd.f32 %v665, 1.4214138
      %v674 = vadd.f32 %v666, 1.4214138
      %v675 = vadd.f32 %v667, 1.4214138
      %v676 = vadd.f32 %v668, 1.4214138
      %v677 = vadd.f32 %v669, 1.4214138
      %v678 = vadd.f32 %v670, 1.4214138
      %v679 = vadd.f32 %v671, 1.4214138
      %v680 = vmul.f32 %v633, %v672
      %v681 = vmul.f32 %v635, %v673
      %v682 = vmul.f32 %v637, %v674
      %v683 = vmul.f32 %v639, %v675
      %v684 = vmul.f32 %v641, %v676
      %v685 = vmul.f32 %v643, %v677
      %v686 = vmul.f32 %v645, %v678
      %v687 = vmul.f32 %v647, %v679
      %v688 = vadd.f32 %v680, -0.28449672
      %v689 = vadd.f32 %v681, -0.28449672
      %v690 = vadd.f32 %v682, -0.28449672
      %v691 = vadd.f32 %v683, -0.28449672
      %v692 = vadd.f32 %v684, -0.28449672
      %v693 = vadd.f32 %v685, -0.28449672
      %v694 = vadd.f32 %v686, -0.28449672
      %v695 = vadd.f32 %v687, -0.28449672
      %v696 = vmul.f32 %v633, %v688
      %v697 = vmul.f32 %v635, %v689
      %v698 = vmul.f32 %v637, %v690
      %v699 = vmul.f32 %v639, %v691
      %v700 = vmul.f32 %v641, %v692
      %v701 = vmul.f32 %v643, %v693
      %v702 = vmul.f32 %v645, %v694
      %v703 = vmul.f32 %v647, %v695
      %v704 = vadd.f32 %v696, 0.2548296
      %v705 = vadd.f32 %v697, 0.2548296
      %v706 = vadd.f32 %v698, 0.2548296
      %v707 = vadd.f32 %v699, 0.2548296
      %v708 = vadd.f32 %v700, 0.2548296
      %v709 = vadd.f32 %v701, 0.2548296
      %v710 = vadd.f32 %v702, 0.2548296
      %v711 = vadd.f32 %v703, 0.2548296
      %v712 = vmul.f32 %v633, %v704
      %v713 = vmul.f32 %v635, %v705
      %v714 = vmul.f32 %v637, %v706
      %v715 = vmul.f32 %v639, %v707
      %v716 = vmul.f32 %v641, %v708
      %v717 = vmul.f32 %v643, %v709
      %v718 = vmul.f32 %v645, %v710
      %v719 = vmul.f32 %v647, %v711
      %v720 = vsub.f32 0.0, %v608
      %v721 = vsub.f32 0.0, %v609
      %v722 = vsub.f32 0.0, %v610
      %v723 = vsub.f32 0.0, %v611
      %v724 = vsub.f32 0.0, %v612
      %v725 = vsub.f32 0.0, %v613
      %v726 = vsub.f32 0.0, %v614
      %v727 = vsub.f32 0.0, %v615
      %v728 = vmul.f32 %v720, %v608
      %v729 = vmul.f32 %v721, %v609
      %v730 = vmul.f32 %v722, %v610
      %v731 = vmul.f32 %v723, %v611
      %v732 = vmul.f32 %v724, %v612
      %v733 = vmul.f32 %v725, %v613
      %v734 = vmul.f32 %v726, %v614
      %v735 = vmul.f32 %v727, %v615
      %v736 = vmul.f32 %v728, 1.442695
      %v737 = vpow.pop %v736
      %v738 = vmul.f32 %v729, 1.442695
      %v739 = vpow.pop %v738
      %v740 = vmul.f32 %v730, 1.442695
      %v741 = vpow.pop %v740
      %v742 = vmul.f32 %v731, 1.442695
      %v743 = vpow.pop %v742
      %v744 = vmul.f32 %v732, 1.442695
      %v745 = vpow.pop %v744
      %v746 = vmul.f32 %v733, 1.442695
      %v747 = vpow.pop %v746
      %v748 = vmul.f32 %v734, 1.442695
      %v749 = vpow.pop %v748
      %v750 = vmul.f32 %v735, 1.442695
      %v751 = vpow.pop %v750
      %v752 = vmul.f32 %v712, %v737
      %v753 = vmul.f32 %v713, %v739
      %v754 = vmul.f32 %v714, %v741
      %v755 = vmul.f32 %v715, %v743
      %v756 = vmul.f32 %v716, %v745
      %v757 = vmul.f32 %v717, %v747
      %v758 = vmul.f32 %v718, %v749
      %v759 = vmul.f32 %v719, %v751
      %v760 = vsub.f32 1.0, %v752
      %v761 = vsub.f32 1.0, %v753
      %v762 = vsub.f32 1.0, %v754
      %v763 = vsub.f32 1.0, %v755
      %v764 = vsub.f32 1.0, %v756
      %v765 = vsub.f32 1.0, %v757
      %v766 = vsub.f32 1.0, %v758
      %v767 = vsub.f32 1.0, %v759
      %vm768 = vcmp.lt.f32.partialorder %v600, 0.0
      %vm769 = vcmp.lt.f32.partialorder %v601, 0.0
      %vm770 = vcmp.lt.f32.partialorder %v602, 0.0
      %vm771 = vcmp.lt.f32.partialorder %v603, 0.0
      %vm772 = vcmp.lt.f32.partialorder %v604, 0.0
      %vm773 = vcmp.lt.f32.partialorder %v605, 0.0
      %vm774 = vcmp.lt.f32.partialorder %v606, 0.0
      %vm775 = vcmp.lt.f32.partialorder %v607, 0.0
      %v776 = vsub.f32 0.0, %v760
      %v777 = vsub.f32 0.0, %v761
      %v778 = vsub.f32 0.0, %v762
      %v779 = vsub.f32 0.0, %v763
      %v780 = vsub.f32 0.0, %v764
      %v781 = vsub.f32 0.0, %v765
      %v782 = vsub.f32 0.0, %v766
      %v783 = vsub.f32 0.0, %v767
      %v784 = vsel %vm768, %v776, %v760
      %v785 = vsel %vm769, %v777, %v761
      %v786 = vsel %vm770, %v778, %v762
      %v787 = vsel %vm771, %v779, %v763
      %v788 = vsel %vm772, %v780, %v764
      %v789 = vsel %vm773, %v781, %v765
      %v790 = vsel %vm774, %v782, %v766
      %v791 = vsel %vm775, %v783, %v767
      %v792 = vmul.f32 %v562, 0.5
      %v793 = vmul.f32 %v567, 0.5
      %v794 = vmul.f32 %v572, 0.5
      %v795 = vmul.f32 %v577, 0.5
      %v796 = vmul.f32 %v582, 0.5
      %v797 = vmul.f32 %v587, 0.5
      %v798 = vmul.f32 %v592, 0.5
      %v799 = vmul.f32 %v597, 0.5
      %v800 = vadd.f32 %v784, 1.0
      %v801 = vadd.f32 %v785, 1.0
      %v802 = vadd.f32 %v786, 1.0
      %v803 = vadd.f32 %v787, 1.0
      %v804 = vadd.f32 %v788, 1.0
      %v805 = vadd.f32 %v789, 1.0
      %v806 = vadd.f32 %v790, 1.0
      %v807 = vadd.f32 %v791, 1.0
      %v808 = vmul.f32 %v792, %v800
      %v809 = vmul.f32 %v793, %v801
      %v810 = vmul.f32 %v794, %v802
      %v811 = vmul.f32 %v795, %v803
      %v812 = vmul.f32 %v796, %v804
      %v813 = vmul.f32 %v797, %v805
      %v814 = vmul.f32 %v798, %v806
      %v815 = vmul.f32 %v799, %v807
      %v816 = vld [vmem:[%s5] sm:$0xff]
      %v817 = vld [vmem:[%s5 + $0x8] sm:$0xff]
      %v818 = vld [vmem:[%s5 + $0x10] sm:$0xff]
      %v819 = vld [vmem:[%s5 + $0x18] sm:$0xff]
      %v820 = vld [vmem:[%s5 + $0x20] sm:$0xff]
      %v821 = vld [vmem:[%s5 + $0x28] sm:$0xff]
      %v822 = vld [vmem:[%s5 + $0x30] sm:$0xff]
      %v823 = vld [vmem:[%s5 + $0x38] sm:$0xff]
      %v824 = vld [vmem:[%s6] sm:$0x1]
      %v826 = vlaneseq
      %v827 = vshrl.u32 %v826, 7
      %v828 = vsub.s32 0, %v827
      %v829 = vrot.slane %v824, %v828
      %vm831 = vcmask 523264
      %v833 = vsel %vm831, %v808, 0
      %v836 = vsel %vm831, %v809, 0
      %v839 = vsel %vm831, %v810, 0
      %v842 = vsel %vm831, %v811, 0
      %v845 = vsel %vm831, %v812, 0
      %v848 = vsel %vm831, %v813, 0
      %v851 = vsel %vm831, %v814, 0
      %v854 = vsel %vm831, %v815, 0
      %856 = vmatprep.subr.mxu0 0.0
      %857 = vmatpush1.msra.mxu0 %v816
      %858 = vmatprep.subr.mxu0 0.0
      %859 = vmatpush1.msra.mxu0 %v817
      %860 = vmatprep.subr.mxu0 0.0
      %861 = vmatpush1.msra.mxu0 %v818
      %862 = vmatprep.subr.mxu0 0.0
      %863 = vmatpush1.msra.mxu0 %v819
      %864 = vmatprep.subr.mxu0 0.0
      %865 = vmatpush1.msra.mxu0 %v820
      %866 = vmatprep.subr.mxu0 0.0
      %867 = vmatpush1.msra.mxu0 %v821
      %868 = vmatprep.subr.mxu0 0.0
      %869 = vmatpush1.msra.mxu0 %v822
      %870 = vmatprep.subr.mxu0 0.0
      %871 = vmatpush1.msra.mxu0 %v823
      %872 = vmatprep.subr.mxu0 0.0
      %873 = vmatpush1.msra.mxu0 0.0
      %874 = vmatprep.subr.mxu0 0.0
      %875 = vmatpush1.msra.mxu0 0.0
      %876 = vmatprep.subr.mxu0 0.0
      %877 = vmatpush1.msra.mxu0 0.0
      %878 = vmatprep.subr.mxu0 0.0
      %879 = vmatpush1.msra.mxu0 0.0
      %880 = vmatprep.subr.mxu0 0.0
      %881 = vmatpush1.msra.mxu0 0.0
      %882 = vmatprep.subr.mxu0 0.0
      %883 = vmatpush1.msra.mxu0 0.0
      %884 = vmatprep.subr.mxu0 0.0
      %885 = vmatpush1.msra.mxu0 0.0
      %886 = vmatprep.subr.mxu0 0.0
      %887 = vmatpush1.msra.mxu0 0.0
      %888 = vmatprep.subr.mxu0 0.0
      %889 = vmatpush1.msra.mxu0 0.0
      %890 = vmatprep.subr.mxu0 0.0
      %891 = vmatpush1.msra.mxu0 0.0
      %892 = vmatprep.subr.mxu0 0.0
      %893 = vmatpush1.msra.mxu0 0.0
      %894 = vmatprep.subr.mxu0 0.0
      %895 = vmatpush1.msra.mxu0 0.0
      %896 = vmatprep.subr.mxu0 0.0
      %897 = vmatpush1.msra.mxu0 0.0
      %898 = vmatprep.subr.mxu0 0.0
      %899 = vmatpush1.msra.mxu0 0.0
      %900 = vmatprep.subr.mxu0 0.0
      %901 = vmatpush1.msra.mxu0 0.0
      %902 = vmatprep.subr.mxu0 0.0
      %903 = vmatpush1.msra.mxu0 0.0
      %904 = vmatprep.subr.mxu0 0.0
      %905 = vmatpush1.msra.mxu0 0.0
      %906 = vmatprep.subr.mxu0 0.0
      %907 = vmatpush1.msra.mxu0 0.0
      %908 = vmatprep.subr.mxu0 0.0
      %909 = vmatpush1.msra.mxu0 0.0
      %910 = vmatprep.subr.mxu0 0.0
      %911 = vmatpush1.msra.mxu0 0.0
      %912 = vmatprep.subr.mxu0 0.0
      %913 = vmatpush1.msra.mxu0 0.0
      %914 = vmatprep.subr.mxu0 0.0
      %915 = vmatpush1.msra.mxu0 0.0
      %916 = vmatprep.subr.mxu0 0.0
      %917 = vmatpush1.msra.mxu0 0.0
      %918 = vmatprep.subr.mxu0 0.0
      %919 = vmatpush1.msra.mxu0 0.0
      %920 = vmatprep.mubr.f32.mxu0 0.0
      %921 = vmatmul.mubr.f32.gmra.mrb[0].mxu0 %v833
      %v922 = vpop.f32.mrb[0].mxu0
      %v923 = vadd.f32 %v829, %v922
      %v924 = vpop.f32.mrb[0].mxu0
      %925 = vmatprep.mubr.f32.mxu0 0.0
      %926 = vmatmul.mubr.f32.gmra.mrb[0].mxu0 %v836
      %v927 = vpop.f32.mrb[0].mxu0
      %v928 = vadd.f32 %v829, %v927
      %v929 = vpop.f32.mrb[0].mxu0
      %930 = vmatprep.mubr.f32.mxu0 0.0
      %931 = vmatmul.mubr.f32.gmra.mrb[0].mxu0 %v839
      %v932 = vpop.f32.mrb[0].mxu0
      %v933 = vadd.f32 %v829, %v932
      %v934 = vpop.f32.mrb[0].mxu0
      %935 = vmatprep.mubr.f32.mxu0 0.0
      %936 = vmatmul.mubr.f32.gmra.mrb[0].mxu0 %v842
      %v937 = vpop.f32.mrb[0].mxu0
      %v938 = vadd.f32 %v829, %v937
      %v939 = vpop.f32.mrb[0].mxu0
      %940 = vmatprep.mubr.f32.mxu0 0.0
      %941 = vmatmul.mubr.f32.gmra.mrb[0].mxu0 %v845
      %v942 = vpop.f32.mrb[0].mxu0
      %v943 = vadd.f32 %v829, %v942
      %v944 = vpop.f32.mrb[0].mxu0
      %945 = vmatprep.mubr.f32.mxu0 0.0
      %946 = vmatmul.mubr.f32.gmra.mrb[0].mxu0 %v848
      %v947 = vpop.f32.mrb[0].mxu0
      %v948 = vadd.f32 %v829, %v947
      %v949 = vpop.f32.mrb[0].mxu0
      %950 = vmatprep.mubr.f32.mxu0 0.0
      %951 = vmatmul.mubr.f32.gmra.mrb[0].mxu0 %v851
      %v952 = vpop.f32.mrb[0].mxu0
      %v953 = vadd.f32 %v829, %v952
      %v954 = vpop.f32.mrb[0].mxu0
      %955 = vmatprep.mubr.f32.mxu0 0.0
      %956 = vmatmul.mubr.f32.gmra.mrb[0].mxu0 %v854
      %v957 = vpop.f32.mrb[0].mxu0
      %v958 = vadd.f32 %v829, %v957
      %v959 = vpop.f32.mrb[0].mxu0
      %960 = vdwg.mxu0
      %v961 = vadd.f32 %v318, %v923
      %v962 = vadd.f32 %v319, %v928
      %v963 = vadd.f32 %v320, %v933
      %v964 = vadd.f32 %v321, %v938
      %v965 = vadd.f32 %v322, %v943
      %v966 = vadd.f32 %v323, %v948
      %v967 = vadd.f32 %v324, %v953
      %v968 = vadd.f32 %v325, %v958
      %969 = vst.msk [vmem:[%s316] sm:$0xff] %vm328, %v961
      %970 = vst.msk [vmem:[%s316 + $0x8] sm:$0xff] %vm328, %v962
      %971 = vst.msk [vmem:[%s316 + $0x10] sm:$0xff] %vm328, %v963
      %972 = vst.msk [vmem:[%s316 + $0x18] sm:$0xff] %vm328, %v964
      %973 = vst.msk [vmem:[%s316 + $0x20] sm:$0xff] %vm328, %v965
      %974 = vst.msk [vmem:[%s316 + $0x28] sm:$0xff] %vm328, %v966
      %975 = vst.msk [vmem:[%s316 + $0x30] sm:$0xff] %vm328, %v967
      %976 = vst.msk [vmem:[%s316 + $0x38] sm:$0xff] %vm328, %v968
      %s977 = smul.u32 8, %s23
      %p978 = scmp.lt.s32.totalorder %s22, 1
      %s979 = scalar_select %p978, %s22, 1
      %p980 = scmp.lt.s32.totalorder %s977, 7
      %s981 = scalar_select %p980, %s977, 7
      %s982 = smul.addr %s979, 8
      %s983 = sadd.s32 %s981, %s982
      %s984 = smul.addr %s983, 8
      %s985 = scalar_lea.vmem %s7, %s984
      // Predicated region
      $region49: #{wavelet_block_forward.7} parent=47 // pred_check
        %p986 = pneg %p204
      $region50: #{wavelet_block_forward.7} parent=47 // pred_check_branch
        %988 = sbr.rel (%p986) target = $region52
      $region51: #{wavelet_block_forward.7} parent=47 // pred_region
        %s989 = smul.u32 8, %s23
      $region52: #{wavelet_block_forward.7} parent=47 // pred_fallthru
        _
    $region48: #{wavelet_block_forward.7} parent=5 // pred_fallthru
      _
    %p990 = scmp.le.s32.totalorder 2, %s13
    // Predicated region
    $region53: #{wavelet_block_forward.7} parent=5 // pred_check
      %p991 = pneg %p990
    $region54: #{wavelet_block_forward.7} parent=5 // pred_check_branch
      %993 = sbr.rel (%p991) target = $region56
    $region55: #{wavelet_block_forward.7} parent=5 // pred_region
      %s994 = ssub.s32 %s13, 2
      // Predicated region
      $region57: #{wavelet_block_forward.7} parent=55 // pred_check
        %p995 = pneg %p210
      $region58: #{wavelet_block_forward.7} parent=55 // pred_check_branch
        %997 = sbr.rel (%p995) target = $region60
      $region59: #{wavelet_block_forward.7} parent=55 // pred_region
        %s998 = smul.u32 8, %s25
        %p999 = scmp.lt.s32.totalorder %s24, 1
        %s1000 = scalar_select %p999, %s24, 1
        %p1001 = scmp.lt.s32.totalorder %s998, 7
        %s1002 = scalar_select %p1001, %s998, 7
        %s1003 = smul.addr %s1000, 8
        %s1004 = sadd.s32 %s1002, %s1003
        %s1005 = smul.addr %s1004, 8
        %s1006 = scalar_lea.vmem %s7, %s1005
      $region60: #{wavelet_block_forward.7} parent=55 // pred_fallthru
        _
    $region56: #{wavelet_block_forward.7} parent=5 // pred_fallthru
      _
  $region6: #{wavelet_block_forward.7} parent=0 // loop_footer
    %s17 = sadd.s32 1, %s13
  $region7: #{wavelet_block_forward.7} parent=0 // loop_footer_branch
    %12 = sbr.rel target = $region3
  $region8: #{wavelet_block_forward.7} parent=0 // loop_exit
    _

// kernel: wavelet_block_forward.6
$region0: #{wavelet_block_forward.6}
  #allocation0 [shape = 'u32[]', space=smem, size = 0x4, offset = 0x4, fixed_abs, tag = 'smem constant byte address 0x4 - core index']
  #allocation1 [shape = 'u32[144,128]{1,0:T(1,128)}', space=vmem, size = 0x12000, scoped, tag = 'internal scratch']
  #allocation2 [shape = 'f32[16,16]{1,0:T(8,128)}', space=vmem, size = 0x2000, scoped, tag = 'scratch operand']
  #allocation3 [shape = 'f32[16,16]{1,0:T(8,128)}', space=vmem, size = 0x2000, scoped, tag = 'scratch operand']
  %s0 = inlined_call_operand.vmem [shape: f32[2,64,16], index: 0, kind: input, shape index: {}]
  %s1 = inlined_call_operand.vmem [shape: f32[2,64,16], index: 1, kind: input, shape index: {}]
  %s2 = inlined_call_operand.vmem [shape: f32[2,16,16], index: 2, kind: input, shape index: {}]
  %s3 = inlined_call_operand.vmem [shape: f32[2,64,4], index: 3, kind: input, shape index: {}]
  %s4 = inlined_call_operand.vmem [shape: f32[1,16], index: 4, kind: input, shape index: {}]
  %s5 = inlined_call_operand.vmem [shape: f32[1,16], index: 5, kind: input, shape index: {}]
  %s6 = inlined_call_operand.vmem [shape: f32[16,32], index: 6, kind: input, shape index: {}]
  %s7 = inlined_call_operand.vmem [shape: f32[1,32], index: 7, kind: input, shape index: {}]
  %s8 = inlined_call_operand.vmem [shape: f32[16,16], index: 8, kind: input, shape index: {}]
  %s9 = inlined_call_operand.vmem [shape: f32[4,16], index: 9, kind: input, shape index: {}]
  %s10 = inlined_call_operand.vmem [shape: f32[1,16], index: 10, kind: input, shape index: {}]
  %s11 = inlined_call_operand.vmem [shape: f32[2,64,16], index: 11, kind: output, shape index: {0}]
  %s12 = inlined_call_operand.vmem [shape: f32[2,4,64,16], index: 12, kind: output, shape index: {1}]
  %13 = xla_tuple %s11, %s12
  %s14 = sld [smem:[#allocation0]]
  $region89: #{wavelet_block_forward.6} parent=0
    _
  %s16 = ssub.s32 1, %s14
  %s17 = scalar_select 0, %s16, %s14
  loop: start=0, step=1, limit=4
  $region2: #{wavelet_block_forward.6} parent=0 // loop_pre_header
    _
  $region3: #{wavelet_block_forward.6} parent=0 // loop_header
    %s19 = sphi 0, %s23
    %p20 = scmp.ge.s32.totalorder %s19, 4
    %s26 = sphi 0, %s38
    %s27 = sphi 0, %s34
    %s28 = sphi 0, %s26
    %s29 = sphi 0, %s27
    %s30 = sphi 0, %s28
    %s31 = sphi 0, %s29
    %s43 = sphi 0, %s45
    %s46 = sphi 0, %s43
    %s47 = sphi 0, %s46
    %s63 = sphi 0, %s47
    %s71 = sphi 0, %s73
    %s74 = sphi 0, %s71
    %s75 = sphi 0, %s74
    %s91 = sphi 0, %s75
    %s97 = sphi 0, %s99
    %s100 = sphi 0, %s97
    %s101 = sphi 0, %s100
    %s117 = sphi 0, %s101
    %s125 = sphi 0, %s127
    %s128 = sphi 0, %s125
    %s129 = sphi 0, %s128
    %s145 = sphi 0, %s129
    %s149 = sphi 0, %s149
    %s151 = sphi 0, %s149
    %s152 = sphi 0, %s151
    %s166 = sphi 0, %s152
    %s170 = sphi 0, %s170
    %s172 = sphi 0, %s170
    %s173 = sphi 0, %s172
    %s187 = sphi 0, %s173
    %s191 = sphi 0, %s191
    %s193 = sphi 0, %s191
    %s194 = sphi 0, %s193
    %s208 = sphi 0, %s194
    %s212 = sphi 0, %s212
    %s214 = sphi 0, %s212
    %s215 = sphi 0, %s214
    %s229 = sphi 0, %s215
    %s233 = sphi 0, %s233
    %s235 = sphi 0, %s233
    %s236 = sphi 0, %s235
    %s250 = sphi 0, %s236
    %s254 = sphi 0, %s254
    %s256 = sphi 0, %s254
    %s257 = sphi 0, %s256
    %s271 = sphi 0, %s257
    %s275 = sphi 0, %s275
    %s277 = sphi 0, %s275
    %s278 = sphi 0, %s277
    %s292 = sphi 0, %s278
    %s300 = sphi 0, %s302
    %s303 = sphi 0, %s300
    %s304 = sphi 0, %s303
    %s320 = sphi 0, %s304
    %s328 = sphi 0, %s330
    %s331 = sphi 0, %s328
    %s332 = sphi 0, %s331
    %s348 = sphi 0, %s332
  $region4: #{wavelet_block_forward.6} parent=0 // loop_header_branch
    %22 = sbr.rel (%p20) target = $region8
  $region5: #{wavelet_block_forward.6} parent=0 // loop_body
    %s24 = ssub.s32 %s19, 1
    %s25 = ssub.s32 %s19, 2
    %s32 = sadd.s32 1, %s27
    %p33 = scmp.ge.s32.totalorder %s32, 1
    %s34 = scalar_select %p33, 0, %s32
    %s35 = sadd.s32 1, %s26
    %s36 = scalar_select %p33, %s35, %s26
    %p37 = scmp.ge.s32.totalorder %s36, 2
    %s38 = scalar_select %p37, 0, %s36
    %s39 = ssub.s32 %s26, %s38
    %s40 = ssub.s32 %s27, %s34
    %s41 = sor.u32 %s39, %s40
    %p42 = scmp.eq.s32.totalorder %s41, 0
    %s44 = sadd.s32 %s43, 1
    %s45 = scalar_select %p42, %s43, %s44
    %p48 = pneg %p42
    %p49 = scmp.eq.s32.totalorder %s19, 1
    %p50 = por %p48, %p49
    %p51 = scmp.ne.s32.totalorder %s43, %s46
    %p52 = scmp.eq.s32.totalorder %s19, 0
    %p53 = por %p51, %p52
    %p54 = scmp.ne.s32.totalorder %s43, %s46
    %p55 = scmp.eq.s32.totalorder %s24, 1
    %p56 = por %p54, %p55
    %p57 = scmp.ne.s32.totalorder %s46, %s47
    %p58 = scmp.eq.s32.totalorder %s24, 0
    %p59 = por %p57, %p58
    %p60 = scmp.ne.s32.totalorder %s46, %s47
    %p61 = scmp.eq.s32.totalorder %s25, 1
    %p62 = por %p60, %p61
    %p64 = scmp.ne.s32.totalorder %s47, %s63
    %p65 = scmp.eq.s32.totalorder %s25, 0
    %p66 = por %p64, %p65
    %s67 = ssub.s32 %s26, %s38
    %s68 = ssub.s32 %s27, %s34
    %s69 = sor.u32 %s67, %s68
    %p70 = scmp.eq.s32.totalorder %s69, 0
    %s72 = sadd.s32 %s71, 1
    %s73 = scalar_select %p70, %s71, %s72
    %p76 = pneg %p70
    %p77 = scmp.eq.s32.totalorder %s19, 1
    %p78 = por %p76, %p77
    %p79 = scmp.ne.s32.totalorder %s71, %s74
    %p80 = scmp.eq.s32.totalorder %s19, 0
    %p81 = por %p79, %p80
    %p82 = scmp.ne.s32.totalorder %s71, %s74
    %p83 = scmp.eq.s32.totalorder %s24, 1
    %p84 = por %p82, %p83
    %p85 = scmp.ne.s32.totalorder %s74, %s75
    %p86 = scmp.eq.s32.totalorder %s24, 0
    %p87 = por %p85, %p86
    %p88 = scmp.ne.s32.totalorder %s74, %s75
    %p89 = scmp.eq.s32.totalorder %s25, 1
    %p90 = por %p88, %p89
    %p92 = scmp.ne.s32.totalorder %s75, %s91
    %p93 = scmp.eq.s32.totalorder %s25, 0
    %p94 = por %p92, %p93
    %s95 = ssub.s32 %s26, %s38
    %p96 = scmp.eq.s32.totalorder %s95, 0
    %s98 = sadd.s32 %s97, 1
    %s99 = scalar_select %p96, %s97, %s98
    %p102 = pneg %p96
    %p103 = scmp.eq.s32.totalorder %s19, 1
    %p104 = por %p102, %p103
    %p105 = scmp.ne.s32.totalorder %s97, %s100
    %p106 = scmp.eq.s32.totalorder %s19, 0
    %p107 = por %p105, %p106
    %p108 = scmp.ne.s32.totalorder %s97, %s100
    %p109 = scmp.eq.s32.totalorder %s24, 1
    %p110 = por %p108, %p109
    %p111 = scmp.ne.s32.totalorder %s100, %s101
    %p112 = scmp.eq.s32.totalorder %s24, 0
    %p113 = por %p111, %p112
    %p114 = scmp.ne.s32.totalorder %s100, %s101
    %p115 = scmp.eq.s32.totalorder %s25, 1
    %p116 = por %p114, %p115
    %p118 = scmp.ne.s32.totalorder %s101, %s117
    %p119 = scmp.eq.s32.totalorder %s25, 0
    %p120 = por %p118, %p119
    %s121 = ssub.s32 %s26, %s38
    %s122 = ssub.s32 %s27, %s34
    %s123 = sor.u32 %s121, %s122
    %p124 = scmp.eq.s32.totalorder %s123, 0
    %s126 = sadd.s32 %s125, 1
    %s127 = scalar_select %p124, %s125, %s126
    %p130 = pneg %p124
    %p131 = scmp.eq.s32.totalorder %s19, 1
    %p132 = por %p130, %p131
    %p133 = scmp.ne.s32.totalorder %s125, %s128
    %p134 = scmp.eq.s32.totalorder %s19, 0
    %p135 = por %p133, %p134
    %p136 = scmp.ne.s32.totalorder %s125, %s128
    %p137 = scmp.eq.s32.totalorder %s24, 1
    %p138 = por %p136, %p137
    %p139 = scmp.ne.s32.totalorder %s128, %s129
    %p140 = scmp.eq.s32.totalorder %s24, 0
    %p141 = por %p139, %p140
    %p142 = scmp.ne.s32.totalorder %s128, %s129
    %p143 = scmp.eq.s32.totalorder %s25, 1
    %p144 = por %p142, %p143
    %p146 = scmp.ne.s32.totalorder %s129, %s145
    %p147 = scmp.eq.s32.totalorder %s25, 0
    %p148 = por %p146, %p147
    %s150 = sadd.s32 %s149, 1
    %p153 = scmp.eq.s32.totalorder %s19, 1
    %p154 = scmp.ne.s32.totalorder %s149, %s151
    %p155 = scmp.eq.s32.totalorder %s19, 0
    %p156 = por %p154, %p155
    %p157 = scmp.ne.s32.totalorder %s149, %s151
    %p158 = scmp.eq.s32.totalorder %s24, 1
    %p159 = por %p157, %p158
    %p160 = scmp.ne.s32.totalorder %s151, %s152
    %p161 = scmp.eq.s32.totalorder %s24, 0
    %p162 = por %p160, %p161
    %p163 = scmp.ne.s32.totalorder %s151, %s152
    %p164 = scmp.eq.s32.totalorder %s25, 1
    %p165 = por %p163, %p164
    %p167 = scmp.ne.s32.totalorder %s152, %s166
    %p168 = scmp.eq.s32.totalorder %s25, 0
    %p169 = por %p167, %p168
    %s171 = sadd.s32 %s170, 1
    %p174 = scmp.eq.s32.totalorder %s19, 1
    %p175 = scmp.ne.s32.totalorder %s170, %s172
    %p176 = scmp.eq.s32.totalorder %s19, 0
    %p177 = por %p175, %p176
    %p178 = scmp.ne.s32.totalorder %s170, %s172
    %p179 = scmp.eq.s32.totalorder %s24, 1
    %p180 = por %p178, %p179
    %p181 = scmp.ne.s32.totalorder %s172, %s173
    %p182 = scmp.eq.s32.totalorder %s24, 0
    %p183 = por %p181, %p182
    %p184 = scmp.ne.s32.totalorder %s172, %s173
    %p185 = scmp.eq.s32.totalorder %s25, 1
    %p186 = por %p184, %p185
    %p188 = scmp.ne.s32.totalorder %s173, %s187
    %p189 = scmp.eq.s32.totalorder %s25, 0
    %p190 = por %p188, %p189
    %s192 = sadd.s32 %s191, 1
    %p195 = scmp.eq.s32.totalorder %s19, 1
    %p196 = scmp.ne.s32.totalorder %s191, %s193
    %p197 = scmp.eq.s32.totalorder %s19, 0
    %p198 = por %p196, %p197
    %p199 = scmp.ne.s32.totalorder %s191, %s193
    %p200 = scmp.eq.s32.totalorder %s24, 1
    %p201 = por %p199, %p200
    %p202 = scmp.ne.s32.totalorder %s193, %s194
    %p203 = scmp.eq.s32.totalorder %s24, 0
    %p204 = por %p202, %p203
    %p205 = scmp.ne.s32.totalorder %s193, %s194
    %p206 = scmp.eq.s32.totalorder %s25, 1
    %p207 = por %p205, %p206
    %p209 = scmp.ne.s32.totalorder %s194, %s208
    %p210 = scmp.eq.s32.totalorder %s25, 0
    %p211 = por %p209, %p210
    %s213 = sadd.s32 %s212, 1
    %p216 = scmp.eq.s32.totalorder %s19, 1
    %p217 = scmp.ne.s32.totalorder %s212, %s214
    %p218 = scmp.eq.s32.totalorder %s19, 0
    %p219 = por %p217, %p218
    %p220 = scmp.ne.s32.totalorder %s212, %s214
    %p221 = scmp.eq.s32.totalorder %s24, 1
    %p222 = por %p220, %p221
    %p223 = scmp.ne.s32.totalorder %s214, %s215
    %p224 = scmp.eq.s32.totalorder %s24, 0
    %p225 = por %p223, %p224
    %p226 = scmp.ne.s32.totalorder %s214, %s215
    %p227 = scmp.eq.s32.totalorder %s25, 1
    %p228 = por %p226, %p227
    %p230 = scmp.ne.s32.totalorder %s215, %s229
    %p231 = scmp.eq.s32.totalorder %s25, 0
    %p232 = por %p230, %p231
    %s234 = sadd.s32 %s233, 1
    %p237 = scmp.eq.s32.totalorder %s19, 1
    %p238 = scmp.ne.s32.totalorder %s233, %s235
    %p239 = scmp.eq.s32.totalorder %s19, 0
    %p240 = por %p238, %p239
    %p241 = scmp.ne.s32.totalorder %s233, %s235
    %p242 = scmp.eq.s32.totalorder %s24, 1
    %p243 = por %p241, %p242
    %p244 = scmp.ne.s32.totalorder %s235, %s236
    %p245 = scmp.eq.s32.totalorder %s24, 0
    %p246 = por %p244, %p245
    %p247 = scmp.ne.s32.totalorder %s235, %s236
    %p248 = scmp.eq.s32.totalorder %s25, 1
    %p249 = por %p247, %p248
    %p251 = scmp.ne.s32.totalorder %s236, %s250
    %p252 = scmp.eq.s32.totalorder %s25, 0
    %p253 = por %p251, %p252
    %s255 = sadd.s32 %s254, 1
    %p258 = scmp.eq.s32.totalorder %s19, 1
    %p259 = scmp.ne.s32.totalorder %s254, %s256
    %p260 = scmp.eq.s32.totalorder %s19, 0
    %p261 = por %p259, %p260
    %p262 = scmp.ne.s32.totalorder %s254, %s256
    %p263 = scmp.eq.s32.totalorder %s24, 1
    %p264 = por %p262, %p263
    %p265 = scmp.ne.s32.totalorder %s256, %s257
    %p266 = scmp.eq.s32.totalorder %s24, 0
    %p267 = por %p265, %p266
    %p268 = scmp.ne.s32.totalorder %s256, %s257
    %p269 = scmp.eq.s32.totalorder %s25, 1
    %p270 = por %p268, %p269
    %p272 = scmp.ne.s32.totalorder %s257, %s271
    %p273 = scmp.eq.s32.totalorder %s25, 0
    %p274 = por %p272, %p273
    %s276 = sadd.s32 %s275, 1
    %p279 = scmp.eq.s32.totalorder %s19, 1
    %p280 = scmp.ne.s32.totalorder %s275, %s277
    %p281 = scmp.eq.s32.totalorder %s19, 0
    %p282 = por %p280, %p281
    %p283 = scmp.ne.s32.totalorder %s275, %s277
    %p284 = scmp.eq.s32.totalorder %s24, 1
    %p285 = por %p283, %p284
    %p286 = scmp.ne.s32.totalorder %s277, %s278
    %p287 = scmp.eq.s32.totalorder %s24, 0
    %p288 = por %p286, %p287
    %p289 = scmp.ne.s32.totalorder %s277, %s278
    %p290 = scmp.eq.s32.totalorder %s25, 1
    %p291 = por %p289, %p290
    %p293 = scmp.ne.s32.totalorder %s278, %s292
    %p294 = scmp.eq.s32.totalorder %s25, 0
    %p295 = por %p293, %p294
    %s296 = ssub.s32 %s26, %s38
    %s297 = ssub.s32 %s27, %s34
    %s298 = sor.u32 %s296, %s297
    %p299 = scmp.eq.s32.totalorder %s298, 0
    %s301 = sadd.s32 %s300, 1
    %s302 = scalar_select %p299, %s300, %s301
    %p305 = pneg %p299
    %p306 = scmp.eq.s32.totalorder %s19, 1
    %p307 = por %p305, %p306
    %p308 = scmp.ne.s32.totalorder %s300, %s303
    %p309 = scmp.eq.s32.totalorder %s19, 0
    %p310 = por %p308, %p309
    %p311 = scmp.ne.s32.totalorder %s300, %s303
    %p312 = scmp.eq.s32.totalorder %s24, 1
    %p313 = por %p311, %p312
    %p314 = scmp.ne.s32.totalorder %s303, %s304
    %p315 = scmp.eq.s32.totalorder %s24, 0
    %p316 = por %p314, %p315
    %p317 = scmp.ne.s32.totalorder %s303, %s304
    %p318 = scmp.eq.s32.totalorder %s25, 1
    %p319 = por %p317, %p318
    %p321 = scmp.ne.s32.totalorder %s304, %s320
    %p322 = scmp.eq.s32.totalorder %s25, 0
    %p323 = por %p321, %p322
    %s324 = ssub.s32 %s26, %s38
    %s325 = ssub.s32 %s27, %s34
    %s326 = sor.u32 %s324, %s325
    %p327 = scmp.eq.s32.totalorder %s326, 0
    %s329 = sadd.s32 %s328, 1
    %s330 = scalar_select %p327, %s328, %s329
    %p333 = pneg %p327
    %p334 = scmp.eq.s32.totalorder %s19, 1
    %p335 = por %p333, %p334
    %p336 = scmp.ne.s32.totalorder %s328, %s331
    %p337 = scmp.eq.s32.totalorder %s19, 0
    %p338 = por %p336, %p337
    %p339 = scmp.ne.s32.totalorder %s328, %s331
    %p340 = scmp.eq.s32.totalorder %s24, 1
    %p341 = por %p339, %p340
    %p342 = scmp.ne.s32.totalorder %s331, %s332
    %p343 = scmp.eq.s32.totalorder %s24, 0
    %p344 = por %p342, %p343
    %p345 = scmp.ne.s32.totalorder %s331, %s332
    %p346 = scmp.eq.s32.totalorder %s25, 1
    %p347 = por %p345, %p346
    %p349 = scmp.ne.s32.totalorder %s332, %s348
    %p350 = scmp.eq.s32.totalorder %s25, 0
    %p351 = por %p349, %p350
    %p352 = scmp.le.s32.totalorder 1, %s19
    %p353 = scmp.lt.s32.totalorder %s19, 3
    %p354 = pnand %p352, %p353
    %p355 = pneg %p354
    // Predicated region
    $region9: #{wavelet_block_forward.6} parent=5 // pred_check
      _
    $region10: #{wavelet_block_forward.6} parent=5 // pred_check_branch
      %357 = sbr.rel (%p354) target = $region12
    $region11: #{wavelet_block_forward.6} parent=5 // pred_region
      %s358 = ssub.s32 %s19, 1
      // Predicated region
      $region13: #{wavelet_block_forward.6} parent=11 // pred_check
        %p359 = pneg %p162
      $region14: #{wavelet_block_forward.6} parent=11 // pred_check_branch
        %361 = sbr.rel (%p359) target = $region16
      $region15: #{wavelet_block_forward.6} parent=11 // pred_region
        _
      $region16: #{wavelet_block_forward.6} parent=11 // pred_fallthru
        _
      // Predicated region
      $region17: #{wavelet_block_forward.6} parent=11 // pred_check
        %p362 = pneg %p183
      $region18: #{wavelet_block_forward.6} parent=11 // pred_check_branch
        %364 = sbr.rel (%p362) target = $region20
      $region19: #{wavelet_block_forward.6} parent=11 // pred_region
        _
      $region20: #{wavelet_block_forward.6} parent=11 // pred_fallthru
        _
      // Predicated region
      $region21: #{wavelet_block_forward.6} parent=11 // pred_check
        %p365 = pneg %p204
      $region22: #{wavelet_block_forward.6} parent=11 // pred_check_branch
        %367 = sbr.rel (%p365) target = $region24
      $region23: #{wavelet_block_forward.6} parent=11 // pred_region
        _
      $region24: #{wavelet_block_forward.6} parent=11 // pred_fallthru
        _
      // Predicated region
      $region25: #{wavelet_block_forward.6} parent=11 // pred_check
        %p368 = pneg %p225
      $region26: #{wavelet_block_forward.6} parent=11 // pred_check_branch
        %370 = sbr.rel (%p368) target = $region28
      $region27: #{wavelet_block_forward.6} parent=11 // pred_region
        _
      $region28: #{wavelet_block_forward.6} parent=11 // pred_fallthru
        _
      // Predicated region
      $region29: #{wavelet_block_forward.6} parent=11 // pred_check
        %p371 = pneg %p246
      $region30: #{wavelet_block_forward.6} parent=11 // pred_check_branch
        %373 = sbr.rel (%p371) target = $region32
      $region31: #{wavelet_block_forward.6} parent=11 // pred_region
        _
      $region32: #{wavelet_block_forward.6} parent=11 // pred_fallthru
        _
      // Predicated region
      $region33: #{wavelet_block_forward.6} parent=11 // pred_check
        %p374 = pneg %p267
      $region34: #{wavelet_block_forward.6} parent=11 // pred_check_branch
        %376 = sbr.rel (%p374) target = $region36
      $region35: #{wavelet_block_forward.6} parent=11 // pred_region
        _
      $region36: #{wavelet_block_forward.6} parent=11 // pred_fallthru
        _
      // Predicated region
      $region37: #{wavelet_block_forward.6} parent=11 // pred_check
        %p377 = pneg %p288
      $region38: #{wavelet_block_forward.6} parent=11 // pred_check_branch
        %379 = sbr.rel (%p377) target = $region40
      $region39: #{wavelet_block_forward.6} parent=11 // pred_region
        _
      $region40: #{wavelet_block_forward.6} parent=11 // pred_fallthru
        _
    $region12: #{wavelet_block_forward.6} parent=5 // pred_fallthru
      _
    %p380 = scmp.lt.s32.totalorder %s19, 2
    // Predicated region
    $region41: #{wavelet_block_forward.6} parent=5 // pred_check
      %p381 = pneg %p380
    $region42: #{wavelet_block_forward.6} parent=5 // pred_check_branch
      %383 = sbr.rel (%p381) target = $region44
    $region43: #{wavelet_block_forward.6} parent=5 // pred_region
      // Predicated region
      $region45: #{wavelet_block_forward.6} parent=43 // pred_check
        %p384 = pneg %p53
      $region46: #{wavelet_block_forward.6} parent=43 // pred_check_branch
        %386 = sbr.rel (%p384) target = $region48
      $region47: #{wavelet_block_forward.6} parent=43 // pred_region
        %s387 = smul.u32 8, %s27
        %p388 = scmp.lt.s32.totalorder %s26, 1
        %s389 = scalar_select %p388, %s26, 1
        %p390 = scmp.lt.s32.totalorder %s387, 7
        %s391 = scalar_select %p390, %s387, 7
        %s392 = smul.addr %s389, 8
        %s393 = sadd.s32 %s391, %s392
        %s394 = smul.addr %s393, 8
        %s395 = scalar_lea.vmem %s0, %s394
        %s396 = smul.u32 8, %s27
      $region48: #{wavelet_block_forward.6} parent=43 // pred_fallthru
        _
      // Predicated region
      $region49: #{wavelet_block_forward.6} parent=43 // pred_check
        %p397 = pneg %p81
      $region50: #{wavelet_block_forward.6} parent=43 // pred_check_branch
        %399 = sbr.rel (%p397) target = $region52
      $region51: #{wavelet_block_forward.6} parent=43 // pred_region
        %s400 = smul.u32 8, %s27
        %p401 = scmp.lt.s32.totalorder %s26, 1
        %s402 = scalar_select %p401, %s26, 1
        %p403 = scmp.lt.s32.totalorder %s400, 7
        %s404 = scalar_select %p403, %s400, 7
        %s405 = smul.addr %s402, 8
        %s406 = sadd.s32 %s404, %s405
        %s407 = smul.addr %s406, 8
        %s408 = scalar_lea.vmem %s1, %s407
        %s409 = smul.u32 8, %s27
      $region52: #{wavelet_block_forward.6} parent=43 // pred_fallthru
        _
      // Predicated region
      $region53: #{wavelet_block_forward.6} parent=43 // pred_check
        %p410 = pneg %p107
      $region54: #{wavelet_block_forward.6} parent=43 // pred_check_branch
        %412 = sbr.rel (%p410) target = $region56
      $region55: #{wavelet_block_forward.6} parent=43 // pred_region
        %p413 = scmp.lt.s32.totalorder %s26, 1
        %s414 = scalar_select %p413, %s26, 1
        %s415 = smul.addr %s414, 2
        %s416 = smul.addr %s415, 8
        %s417 = scalar_lea.vmem %s2, %s416
      $region56: #{wavelet_block_forward.6} parent=43 // pred_fallthru
        _
      // Predicated region
      $region57: #{wavelet_block_forward.6} parent=43 // pred_check
        %p418 = pneg %p135
      $region58: #{wavelet_block_forward.6} parent=43 // pred_check_branch
        %420 = sbr.rel (%p418) target = $region60
      $region59: #{wavelet_block_forward.6} parent=43 // pred_region
        %s421 = smul.u32 8, %s27
        %p422 = scmp.lt.s32.totalorder %s26, 1
        %s423 = scalar_select %p422, %s26, 1
        %p424 = scmp.lt.s32.totalorder %s421, 7
        %s425 = scalar_select %p424, %s421, 7
        %s426 = smul.addr %s423, 8
        %s427 = sadd.s32 %s425, %s426
        %s428 = smul.addr %s427, 8
        %s429 = scalar_lea.vmem %s3, %s428
        %s430 = smul.u32 8, %s27
      $region60: #{wavelet_block_forward.6} parent=43 // pred_fallthru
        _
    $region44: #{wavelet_block_forward.6} parent=5 // pred_fallthru
      _
    %p431 = scmp.le.s32.totalorder 1, %s19
    %p432 = scmp.lt.s32.totalorder %s19, 3
    %p433 = pnand %p431, %p432
    %p434 = pneg %p433
    // Predicated region
    $region61: #{wavelet_block_forward.6} parent=5 // pred_check
      _
    $region62: #{wavelet_block_forward.6} parent=5 // pred_check_branch
      %436 = sbr.rel (%p433) target = $region64
    $region63: #{wavelet_block_forward.6} parent=5 // pred_region
      %s437 = ssub.s32 %s19, 1
      %s438 = smul.u32 8, %s29
      %p439 = scmp.lt.s32.totalorder %s28, 1
      %s440 = scalar_select %p439, %s28, 1
      %p441 = scmp.lt.s32.totalorder %s438, 7
      %s442 = scalar_select %p441, %s438, 7
      %s443 = smul.addr %s440, 8
      %s444 = sadd.s32 %s442, %s443
      %s445 = smul.addr %s444, 8
      %s446 = scalar_lea.vmem %s0, %s445
      %p447 = pneg %p59
      %p448 = pneg %p56
      %s449 = smul.u32 8, %s29
      %p450 = scmp.lt.s32.totalorder %s28, 1
      %s451 = scalar_select %p450, %s28, 1
      %p452 = scmp.lt.s32.totalorder %s449, 7
      %s453 = scalar_select %p452, %s449, 7
      %s454 = smul.addr %s451, 8
      %s455 = sadd.s32 %s453, %s454
      %s456 = smul.addr %s455, 8
      %s457 = scalar_lea.vmem %s1, %s456
      %p458 = pneg %p87
      %p459 = pneg %p84
      %p460 = scmp.lt.s32.totalorder %s28, 1
      %s461 = scalar_select %p460, %s28, 1
      %s462 = smul.addr %s461, 2
      %s463 = smul.addr %s462, 8
      %s464 = scalar_lea.vmem %s2, %s463
      %p465 = pneg %p113
      %p466 = pneg %p110
      %s467 = smul.u32 8, %s29
      %p468 = scmp.lt.s32.totalorder %s28, 1
      %s469 = scalar_select %p468, %s28, 1
      %p470 = scmp.lt.s32.totalorder %s467, 7
      %s471 = scalar_select %p470, %s467, 7
      %s472 = smul.addr %s469, 8
      %s473 = sadd.s32 %s471, %s472
      %s474 = smul.addr %s473, 8
      %s475 = scalar_lea.vmem %s3, %s474
      %p476 = pneg %p141
      %p477 = pneg %p138
      %p478 = pneg %p162
      %p479 = pneg %p159
      %p480 = pneg %p183
      %p481 = pneg %p180
      %p482 = pneg %p204
      %p483 = pneg %p201
      %p484 = pneg %p225
      %p485 = pneg %p222
      %p486 = pneg %p246
      %p487 = pneg %p243
      %p488 = pneg %p267
      %p489 = pneg %p264
      %p490 = pneg %p288
      %p491 = pneg %p285
      %p492 = pneg %p316
      %p493 = pneg %p313
      %s494 = smul.u32 8, %s29
      %p495 = scmp.lt.s32.totalorder %s28, 1
      %s496 = scalar_select %p495, %s28, 1
      %p497 = scmp.lt.s32.totalorder %s494, 7
      %s498 = scalar_select %p497, %s494, 7
      %s499 = smul.addr %s496, 8
      %s500 = sadd.s32 %s498, %s499
      %s501 = smul.addr %s500, 8
      %s502 = scalar_lea.vmem %s11, %s501
      %p503 = pneg %p344
      %p504 = pneg %p341
      %s505 = smul.u32 8, %s29
      %p506 = scmp.lt.s32.totalorder %s28, 1
      %s507 = scalar_select %p506, %s28, 1
      %p508 = scmp.lt.s32.totalorder %s505, 7
      %s509 = scalar_select %p508, %s505, 7
      %s510 = smul.addr %s507, 32
      %s511 = sadd.s32 %s509, %s510
      %s512 = smul.addr %s511, 8
      %s513 = scalar_lea.vmem %s12, %s512
      %s514 = smul.u32 8, %s29
      %p515 = scmp.lt.s32.totalorder %s28, 1
      %s516 = scalar_select %p515, %s28, 1
      %p517 = scmp.lt.s32.totalorder %s514, 7
      %s518 = scalar_select %p517, %s514, 7
      %s519 = smul.addr %s516, 8
      %s520 = sadd.s32 %s518, %s519
      %s521 = smul.addr %s520, 8
      %s522 = scalar_lea.vmem %s0, %s521
      %s523 = smul.u32 8, %s29
      %s524 = smul.u32 8, %s29
      %p525 = scmp.lt.s32.totalorder %s28, 1
      %s526 = scalar_select %p525, %s28, 1
      %p527 = scmp.lt.s32.totalorder %s524, 7
      %s528 = scalar_select %p527, %s524, 7
      %s529 = smul.addr %s526, 8
      %s530 = sadd.s32 %s528, %s529
      %s531 = smul.addr %s530, 8
      %s532 = scalar_lea.vmem %s1, %s531
      %s533 = smul.u32 8, %s29
      %p534 = scmp.lt.s32.totalorder %s28, 1
      %s535 = scalar_select %p534, %s28, 1
      %s536 = smul.addr %s535, 2
      %s537 = smul.addr %s536, 8
      %s538 = scalar_lea.vmem %s2, %s537
      %s539 = smul.u32 8, %s29
      %p540 = scmp.lt.s32.totalorder %s28, 1
      %s541 = scalar_select %p540, %s28, 1
      %p542 = scmp.lt.s32.totalorder %s539, 7
      %s543 = scalar_select %p542, %s539, 7
      %s544 = smul.addr %s541, 8
      %s545 = sadd.s32 %s543, %s544
      %s546 = smul.addr %s545, 8
      %s547 = scalar_lea.vmem %s3, %s546
      %s548 = smul.u32 8, %s29
      %s549 = smul.u32 8, %s29
      %p550 = scmp.lt.s32.totalorder %s28, 1
      %s551 = scalar_select %p550, %s28, 1
      %p552 = scmp.lt.s32.totalorder %s549, 7
      %s553 = scalar_select %p552, %s549, 7
      %s554 = smul.addr %s551, 8
      %s555 = sadd.s32 %s553, %s554
      %s556 = smul.addr %s555, 8
      %s557 = scalar_lea.vmem %s11, %s556
      %s558 = smul.u32 8, %s29
      %s559 = smul.u32 8, %s29
      %p560 = scmp.lt.s32.totalorder %s28, 1
      %s561 = scalar_select %p560, %s28, 1
      %p562 = scmp.lt.s32.totalorder %s559, 7
      %s563 = scalar_select %p562, %s559, 7
      %s564 = smul.addr %s561, 32
      %s565 = sadd.s32 %s563, %s564
      %s566 = smul.addr %s565, 8
      %s567 = scalar_lea.vmem %s12, %s566
      %s568 = smul.u32 8, %s29
      %p569 = scmp.eq.s32.totalorder %s29, 0
      // Predicated region
      $region65: #{wavelet_block_forward.6} parent=63 // pred_check
        %p570 = pneg %p569
      $region66: #{wavelet_block_forward.6} parent=63 // pred_check_branch
        %572 = sbr.rel (%p570) target = $region68
      $region67: #{wavelet_block_forward.6} parent=63 // pred_region
        %v573 = vld [vmem:[%s538] sm:$0xff]
        %v574 = vld [vmem:[%s538 + $0x8] sm:$0xff]
        %v575 = vld [vmem:[%s4] sm:$0x1]
        %v576 = vld [vmem:[%s5] sm:$0x1]
        %vm577 = vcmask 130048
        %v578 = vsel %vm577, %v573, 0.0
        %579 = vadd.xlane.f32.xlu0 %v578
        %v580 = vpop.xlane.xlu0 %579
        %v581 = vsel %vm577, %v574, 0.0
        %582 = vadd.xlane.f32.xlu0 %v581
        %v583 = vpop.xlane.xlu0 %582
        %v584 = vrcp.pop 16.0
        %v585 = vmul.f32 %v580, %v584
        %v586 = vmul.f32 %v583, %v584
        %v587 = vsub.f32 %v573, %v585
        %v588 = vsub.f32 %v574, %v586
        %v589 = vmul.f32 %v587, %v587
        %v590 = vmul.f32 %v588, %v588
        %v591 = vsel %vm577, %v589, 0.0
        %592 = vadd.xlane.f32.xlu0 %v591
        %v593 = vpop.xlane.xlu0 %592
        %v594 = vsel %vm577, %v590, 0.0
        %595 = vadd.xlane.f32.xlu0 %v594
        %v596 = vpop.xlane.xlu0 %595
        %v597 = vmul.f32 %v593, %v584
        %v598 = vmul.f32 %v596, %v584
        %v599 = vadd.f32 %v597, 1e-05
        %v600 = vadd.f32 %v598, 1e-05
        %v601 = vrsqrt.pop %v599
        %v602 = vrsqrt.pop %v600
        %v603 = vmul.f32 %v587, %v601
        %v604 = vmul.f32 %v588, %v602
        %v606 = vlaneseq
        %v607 = vshrl.u32 %v606, 7
        %v608 = vsub.s32 0, %v607
        %v609 = vrot.slane %v575, %v608
        %v611 = vmul.f32 %v603, %v609
        %v612 = vmul.f32 %v604, %v609
        %v614 = vlaneseq
        %v615 = vshrl.u32 %v614, 7
        %v616 = vsub.s32 0, %v615
        %v617 = vrot.slane %v576, %v616
        %v619 = vadd.f32 %v611, %v617
        %v620 = vadd.f32 %v612, %v617
        %v621 = vld [vmem:[%s6] sm:$0xff]
        %v622 = vld [vmem:[%s6 + $0x8] sm:$0xff]
        %v623 = vld [vmem:[%s7] sm:$0x1]
        %v625 = vlaneseq
        %v626 = vshrl.u32 %v625, 7
        %v627 = vsub.s32 0, %v626
        %v628 = vrot.slane %v623, %v627
        %v631 = vsel %vm577, %v619, 0
        %v634 = vsel %vm577, %v620, 0
        %636 = vmatprep.subr.mxu0 0.0
        %637 = vmatpush1.msra.mxu0 %v621
        %638 = vmatprep.subr.mxu0 0.0
        %639 = vmatpush1.msra.mxu0 %v622
        %640 = vmatprep.subr.mxu0 0.0
        %641 = vmatpush1.msra.mxu0 0.0
        %642 = vmatprep.subr.mxu0 0.0
        %643 = vmatpush1.msra.mxu0 0.0
        %644 = vmatprep.subr.mxu0 0.0
        %645 = vmatpush1.msra.mxu0 0.0
        %646 = vmatprep.subr.mxu0 0.0
        %647 = vmatpush1.msra.mxu0 0.0
        %648 = vmatprep.subr.mxu0 0.0
        %649 = vmatpush1.msra.mxu0 0.0
        %650 = vmatprep.subr.mxu0 0.0
        %651 = vmatpush1.msra.mxu0 0.0
        %652 = vmatprep.subr.mxu0 0.0
        %653 = vmatpush1.msra.mxu0 0.0
        %654 = vmatprep.subr.mxu0 0.0
        %655 = vmatpush1.msra.mxu0 0.0
        %656 = vmatprep.subr.mxu0 0.0
        %657 = vmatpush1.msra.mxu0 0.0
        %658 = vmatprep.subr.mxu0 0.0
        %659 = vmatpush1.msra.mxu0 0.0
        %660 = vmatprep.subr.mxu0 0.0
        %661 = vmatpush1.msra.mxu0 0.0
        %662 = vmatprep.subr.mxu0 0.0
        %663 = vmatpush1.msra.mxu0 0.0
        %664 = vmatprep.subr.mxu0 0.0
        %665 = vmatpush1.msra.mxu0 0.0
        %666 = vmatprep.subr.mxu0 0.0
        %667 = vmatpush1.msra.mxu0 0.0
        %668 = vmatprep.subr.mxu0 0.0
        %669 = vmatpush1.msra.mxu0 0.0
        %670 = vmatprep.subr.mxu0 0.0
        %671 = vmatpush1.msra.mxu0 0.0
        %672 = vmatprep.subr.mxu0 0.0
        %673 = vmatpush1.msra.mxu0 0.0
        %674 = vmatprep.subr.mxu0 0.0
        %675 = vmatpush1.msra.mxu0 0.0
        %676 = vmatprep.subr.mxu0 0.0
        %677 = vmatpush1.msra.mxu0 0.0
        %678 = vmatprep.subr.mxu0 0.0
        %679 = vmatpush1.msra.mxu0 0.0
        %680 = vmatprep.subr.mxu0 0.0
        %681 = vmatpush1.msra.mxu0 0.0
        %682 = vmatprep.subr.mxu0 0.0
        %683 = vmatpush1.msra.mxu0 0.0
        %684 = vmatprep.subr.mxu0 0.0
        %685 = vmatpush1.msra.mxu0 0.0
        %686 = vmatprep.subr.mxu0 0.0
        %687 = vmatpush1.msra.mxu0 0.0
        %688 = vmatprep.subr.mxu0 0.0
        %689 = vmatpush1.msra.mxu0 0.0
        %690 = vmatprep.subr.mxu0 0.0
        %691 = vmatpush1.msra.mxu0 0.0
        %692 = vmatprep.subr.mxu0 0.0
        %693 = vmatpush1.msra.mxu0 0.0
        %694 = vmatprep.subr.mxu0 0.0
        %695 = vmatpush1.msra.mxu0 0.0
        %696 = vmatprep.subr.mxu0 0.0
        %697 = vmatpush1.msra.mxu0 0.0
        %698 = vmatprep.subr.mxu0 0.0
        %699 = vmatpush1.msra.mxu0 0.0
        %700 = vmatprep.mubr.f32.mxu0 0.0
        %701 = vmatmul.mubr.f32.gmra.mrb[0].mxu0 %v631
        %v702 = vpop.f32.mrb[0].mxu0
        %v703 = vadd.f32 %v628, %v702
        %v704 = vpop.f32.mrb[0].mxu0
        %705 = vmatprep.mubr.f32.mxu0 0.0
        %706 = vmatmul.mubr.f32.gmra.mrb[0].mxu0 %v634
        %v707 = vpop.f32.mrb[0].mxu0
        %v708 = vadd.f32 %v628, %v707
        %v709 = vpop.f32.mrb[0].mxu0
        %710 = vdwg.mxu0
        %711 = vst.msk [vmem:[#allocation2] sm:$0xff] %vm577, %v703
        %712 = vst.msk [vmem:[#allocation2 + $0x8] sm:$0xff] %vm577, %v708
        %715 = vrot.lane.b32.xlu0 %v703, 112
        %v716 = vpop.permute.xlu0 %715
        %717 = vrot.lane.b32.xlu0 %v708, 112
        %v718 = vpop.permute.xlu0 %717
        %721 = vst.msk [vmem:[#allocation3] sm:$0xff] %vm577, %v716
        %722 = vst.msk [vmem:[#allocation3 + $0x8] sm:$0xff] %vm577, %v718
      $region68: #{wavelet_block_forward.6} parent=63 // pred_fallthru
        _
      %v723 = vld [vmem:[#allocation2] sm:$0xff]
      %v724 = vld [vmem:[#allocation2 + $0x8] sm:$0xff]
      %v725 = vld [vmem:[#allocation3] sm:$0xff]
      %v726 = vld [vmem:[#allocation3 + $0x8] sm:$0xff]
      %v727 = vld [vmem:[%s522] sm:$0xff]
      %v728 = vld [vmem:[%s522 + $0x8] sm:$0xff]
      %v729 = vld [vmem:[%s522 + $0x10] sm:$0xff]
      %v730 = vld [vmem:[%s522 + $0x18] sm:$0xff]
      %v731 = vld [vmem:[%s522 + $0x20] sm:$0xff]
      %v732 = vld [vmem:[%s522 + $0x28] sm:$0xff]
      %v733 = vld [vmem:[%s522 + $0x30] sm:$0xff]
      %v734 = vld [vmem:[%s522 + $0x38] sm:$0xff]
      %v735 = vld [vmem:[%s547] sm:$0xff]
      %v736 = vld [vmem:[%s547 + $0x8] sm:$0xff]
      %v737 = vld [vmem:[%s547 + $0x10] sm:$0xff]
      %v738 = vld [vmem:[%s547 + $0x18] sm:$0xff]
      %v739 = vld [vmem:[%s547 + $0x20] sm:$0xff]
      %v740 = vld [vmem:[%s547 + $0x28] sm:$0xff]
      %v741 = vld [vmem:[%s547 + $0x30] sm:$0xff]
      %v742 = vld [vmem:[%s547 + $0x38] sm:$0xff]
      %v743 = vld [vmem:[%s9] sm:$0xf]
      %vm744 = vcmask 31744
      %v746 = vsel %vm744, %v735, 0
      %v749 = vsel %vm744, %v736, 0
      %v752 = vsel %vm744, %v737, 0
      %v755 = vsel %vm744, %v738, 0
      %v758 = vsel %vm744, %v739, 0
      %v761 = vsel %vm744, %v740, 0
      %v764 = vsel %vm744, %v741, 0
      %v767 = vsel %vm744, %v742, 0
      %vm769 = vcmask 1043456
      %v771 = vsel %vm769, %v743, 0
      %773 = vmatprep.subr.mxu0 0.0
      %774 = vmatpush1.msra.mxu0 %v771
      %775 = vmatprep.subr.mxu0 0.0
      %776 = vmatpush1.msra.mxu0 0.0
      %777 = vmatprep.subr.mxu0 0.0
      %778 = vmatpush1.msra.mxu0 0.0
      %779 = vmatprep.subr.mxu0 0.0
      %780 = vmatpush1.msra.mxu0 0.0
      %781 = vmatprep.subr.mxu0 0.0
      %782 = vmatpush1.msra.mxu0 0.0
      %783 = vmatprep.subr.mxu0 0.0
      %784 = vmatpush1.msra.mxu0 0.0
      %785 = vmatprep.subr.mxu0 0.0
      %786 = vmatpush1.msra.mxu0 0.0
      %787 = vmatprep.subr.mxu0 0.0
      %788 = vmatpush1.msra.mxu0 0.0
      %789 = vmatprep.subr.mxu0 0.0
      %790 = vmatpush1.msra.mxu0 0.0
      %791 = vmatprep.subr.mxu0 0.0
      %792 = vmatpush1.msra.mxu0 0.0
      %793 = vmatprep.subr.mxu0 0.0
      %794 = vmatpush1.msra.mxu0 0.0
      %795 = vmatprep.subr.mxu0 0.0
      %796 = vmatpush1.msra.mxu0 0.0
      %797 = vmatprep.subr.mxu0 0.0
      %798 = vmatpush1.msra.mxu0 0.0
      %799 = vmatprep.subr.mxu0 0.0
      %800 = vmatpush1.msra.mxu0 0.0
      %801 = vmatprep.subr.mxu0 0.0
      %802 = vmatpush1.msra.mxu0 0.0
      %803 = vmatprep.subr.mxu0 0.0
      %804 = vmatpush1.msra.mxu0 0.0
      %805 = vmatprep.subr.mxu0 0.0
      %806 = vmatpush1.msra.mxu0 0.0
      %807 = vmatprep.subr.mxu0 0.0
      %808 = vmatpush1.msra.mxu0 0.0
      %809 = vmatprep.subr.mxu0 0.0
      %810 = vmatpush1.msra.mxu0 0.0
      %811 = vmatprep.subr.mxu0 0.0
      %812 = vmatpush1.msra.mxu0 0.0
      %813 = vmatprep.subr.mxu0 0.0
      %814 = vmatpush1.msra.mxu0 0.0
      %815 = vmatprep.subr.mxu0 0.0
      %816 = vmatpush1.msra.mxu0 0.0
      %817 = vmatprep.subr.mxu0 0.0
      %818 = vmatpush1.msra.mxu0 0.0
      %819 = vmatprep.subr.mxu0 0.0
      %820 = vmatpush1.msra.mxu0 0.0
      %821 = vmatprep.subr.mxu0 0.0
      %822 = vmatpush1.msra.mxu0 0.0
      %823 = vmatprep.subr.mxu0 0.0
      %824 = vmatpush1.msra.mxu0 0.0
      %825 = vmatprep.subr.mxu0 0.0
      %826 = vmatpush1.msra.mxu0 0.0
      %827 = vmatprep.subr.mxu0 0.0
      %828 = vmatpush1.msra.mxu0 0.0
      %829 = vmatprep.subr.mxu0 0.0
      %830 = vmatpush1.msra.mxu0 0.0
      %831 = vmatprep.subr.mxu0 0.0
      %832 = vmatpush1.msra.mxu0 0.0
      %833 = vmatprep.subr.mxu0 0.0
      %834 = vmatpush1.msra.mxu0 0.0
      %835 = vmatprep.subr.mxu0 0.0
      %836 = vmatpush1.msra.mxu0 0.0
      %837 = vmatprep.mubr.f32.mxu0 0.0
      %838 = vmatmul.mubr.f32.gmra.mrb[0].mxu0 %v746
      %v839 = vpop.f32.mrb[0].mxu0
      %v840 = vadd.f32 0.0, %v839
      %v841 = vpop.f32.mrb[0].mxu0
      %842 = vmatprep.mubr.f32.mxu0 0.0
      %843 = vmatmul.mubr.f32.gmra.mrb[0].mxu0 %v749
      %v844 = vpop.f32.mrb[0].mxu0
      %v845 = vadd.f32 0.0, %v844
      %v846 = vpop.f32.mrb[0].mxu0
      %847 = vmatprep.mubr.f32.mxu0 0.0
      %848 = vmatmul.mubr.f32.gmra.mrb[0].mxu0 %v752
      %v849 = vpop.f32.mrb[0].mxu0
      %v850 = vadd.f32 0.0, %v849
      %v851 = vpop.f32.mrb[0].mxu0
      %852 = vmatprep.mubr.f32.mxu0 0.0
      %853 = vmatmul.mubr.f32.gmra.mrb[0].mxu0 %v755
      %v854 = vpop.f32.mrb[0].mxu0
      %v855 = vadd.f32 0.0, %v854
      %v856 = vpop.f32.mrb[0].mxu0
      %857 = vmatprep.mubr.f32.mxu0 0.0
      %858 = vmatmul.mubr.f32.gmra.mrb[0].mxu0 %v758
      %v859 = vpop.f32.mrb[0].mxu0
      %v860 = vadd.f32 0.0, %v859
      %v861 = vpop.f32.mrb[0].mxu0
      %862 = vmatprep.mubr.f32.mxu0 0.0
      %863 = vmatmul.mubr.f32.gmra.mrb[0].mxu0 %v761
      %v864 = vpop.f32.mrb[0].mxu0
      %v865 = vadd.f32 0.0, %v864
      %v866 = vpop.f32.mrb[0].mxu0
      %867 = vmatprep.mubr.f32.mxu0 0.0
      %868 = vmatmul.mubr.f32.gmra.mrb[0].mxu0 %v764
      %v869 = vpop.f32.mrb[0].mxu0
      %v870 = vadd.f32 0.0, %v869
      %v871 = vpop.f32.mrb[0].mxu0
      %872 = vmatprep.mubr.f32.mxu0 0.0
      %873 = vmatmul.mubr.f32.gmra.mrb[0].mxu0 %v767
      %v874 = vpop.f32.mrb[0].mxu0
      %v875 = vadd.f32 0.0, %v874
      %v876 = vpop.f32.mrb[0].mxu0
      %877 = vdwg.mxu0
      %v878 = vadd.f32 %v727, %v840
      %v879 = vadd.f32 %v728, %v845
      %v880 = vadd.f32 %v729, %v850
      %v881 = vadd.f32 %v730, %v855
      %v882 = vadd.f32 %v731, %v860
      %v883 = vadd.f32 %v732, %v865
      %v884 = vadd.f32 %v733, %v870
      %v885 = vadd.f32 %v734, %v875
      %v886 = vld [vmem:[%s10] sm:$0x1]
      %v888 = vlaneseq
      %v889 = vshrl.u32 %v888, 7
      %v890 = vsub.s32 0, %v889
      %v891 = vrot.slane %v886, %v890
      %v893 = vadd.f32 %v878, %v891
      %v894 = vadd.f32 %v879, %v891
      %v895 = vadd.f32 %v880, %v891
      %v896 = vadd.f32 %v881, %v891
      %v897 = vadd.f32 %v882, %v891
      %v898 = vadd.f32 %v883, %v891
      %v899 = vadd.f32 %v884, %v891
      %v900 = vadd.f32 %v885, %v891
      %v901 = vld [vmem:[%s532] sm:$0xff]
      %v902 = vld [vmem:[%s532 + $0x8] sm:$0xff]
      %v903 = vld [vmem:[%s532 + $0x10] sm:$0xff]
      %v904 = vld [vmem:[%s532 + $0x18] sm:$0xff]
      %v905 = vld [vmem:[%s532 + $0x20] sm:$0xff]
      %v906 = vld [vmem:[%s532 + $0x28] sm:$0xff]
      %v907 = vld [vmem:[%s532 + $0x30] sm:$0xff]
      %v908 = vld [vmem:[%s532 + $0x38] sm:$0xff]
      %v909 = vmul.f32 %v901, 0.5
      %v910 = vmul.f32 %v902, 0.5
      %v911 = vmul.f32 %v903, 0.5
      %v912 = vmul.f32 %v904, 0.5
      %v913 = vmul.f32 %v905, 0.5
      %v914 = vmul.f32 %v906, 0.5
      %v915 = vmul.f32 %v907, 0.5
      %v916 = vmul.f32 %v908, 0.5
      %v918 = vsel %vm744, %v909, 0
      %v921 = vsel %vm744, %v910, 0
      %v924 = vsel %vm744, %v911, 0
      %v927 = vsel %vm744, %v912, 0
      %v930 = vsel %vm744, %v913, 0
      %v933 = vsel %vm744, %v914, 0
      %v936 = vsel %vm744, %v915, 0
      %v939 = vsel %vm744, %v916, 0
      %v942 = vsel %vm744, %v723, 0
      %v945 = vsel %vm744, %v724, 0
      %947 = vmatprep.subr.mxu0 0.0
      %948 = vmatpush1.xpose.msra.mxu0 %v942
      %949 = vmatprep.subr.mxu0 0.0
      %950 = vmatpush1.xpose.msra.mxu0 %v945
      %951 = vmatprep.subr.mxu0 0.0
      %952 = vmatpush1.xpose.msra.mxu0 0.0
      %953 = vmatprep.subr.mxu0 0.0
      %954 = vmatpush1.xpose.msra.mxu0 0.0
      %955 = vmatprep.subr.mxu0 0.0
      %956 = vmatpush1.xpose.msra.mxu0 0.0
      %957 = vmatprep.subr.mxu0 0.0
      %958 = vmatpush1.xpose.msra.mxu0 0.0
      %959 = vmatprep.subr.mxu0 0.0
      %960 = vmatpush1.xpose.msra.mxu0 0.0
      %961 = vmatprep.subr.mxu0 0.0
      %962 = vmatpush1.xpose.msra.mxu0 0.0
      %963 = vmatprep.subr.mxu0 0.0
      %964 = vmatpush1.xpose.msra.mxu0 0.0
      %965 = vmatprep.subr.mxu0 0.0
      %966 = vmatpush1.xpose.msra.mxu0 0.0
      %967 = vmatprep.subr.mxu0 0.0
      %968 = vmatpush1.xpose.msra.mxu0 0.0
      %969 = vmatprep.subr.mxu0 0.0
      %970 = vmatpush1.xpose.msra.mxu0 0.0
      %971 = vmatprep.subr.mxu0 0.0
      %972 = vmatpush1.xpose.msra.mxu0 0.0
      %973 = vmatprep.subr.mxu0 0.0
      %974 = vmatpush1.xpose.msra.mxu0 0.0
      %975 = vmatprep.subr.mxu0 0.0
      %976 = vmatpush1.xpose.msra.mxu0 0.0
      %977 = vmatprep.subr.mxu0 0.0
      %978 = vmatpush1.xpose.msra.mxu0 0.0
      %979 = vmatprep.subr.mxu0 0.0
      %980 = vmatpush1.xpose.msra.mxu0 0.0
      %981 = vmatprep.subr.mxu0 0.0
      %982 = vmatpush1.xpose.msra.mxu0 0.0
      %983 = vmatprep.subr.mxu0 0.0
      %984 = vmatpush1.xpose.msra.mxu0 0.0
      %985 = vmatprep.subr.mxu0 0.0
      %986 = vmatpush1.xpose.msra.mxu0 0.0
      %987 = vmatprep.subr.mxu0 0.0
      %988 = vmatpush1.xpose.msra.mxu0 0.0
      %989 = vmatprep.subr.mxu0 0.0
      %990 = vmatpush1.xpose.msra.mxu0 0.0
      %991 = vmatprep.subr.mxu0 0.0
      %992 = vmatpush1.xpose.msra.mxu0 0.0
      %993 = vmatprep.subr.mxu0 0.0
      %994 = vmatpush1.xpose.msra.mxu0 0.0
      %995 = vmatprep.subr.mxu0 0.0
      %996 = vmatpush1.xpose.msra.mxu0 0.0
      %997 = vmatprep.subr.mxu0 0.0
      %998 = vmatpush1.xpose.msra.mxu0 0.0
      %999 = vmatprep.subr.mxu0 0.0
      %1000 = vmatpush1.xpose.msra.mxu0 0.0
      %1001 = vmatprep.subr.mxu0 0.0
      %1002 = vmatpush1.xpose.msra.mxu0 0.0
      %1003 = vmatprep.subr.mxu0 0.0
      %1004 = vmatpush1.xpose.msra.mxu0 0.0
      %1005 = vmatprep.subr.mxu0 0.0
      %1006 = vmatpush1.xpose.msra.mxu0 0.0
      %1007 = vmatprep.subr.mxu0 0.0
      %1008 = vmatpush1.xpose.msra.mxu0 0.0
      %1009 = vmatprep.subr.mxu0 0.0
      %1010 = vmatpush1.xpose.msra.mxu0 0.0
      %1011 = vmatprep.mubr.f32.mxu0 0.0
      %1012 = vmatmul.mubr.f32.gmra.mrb[0].mxu0 %v918
      %v1013 = vpop.f32.mrb[0].mxu0
      %v1014 = vadd.f32 0.0, %v1013
      %v1015 = vpop.f32.mrb[0].mxu0
      %1016 = vmatprep.mubr.f32.mxu0 0.0
      %1017 = vmatmul.mubr.f32.gmra.mrb[0].mxu0 %v921
      %v1018 = vpop.f32.mrb[0].mxu0
      %v1019 = vadd.f32 0.0, %v1018
      %v1020 = vpop.f32.mrb[0].mxu0
      %1021 = vmatprep.mubr.f32.mxu0 0.0
      %1022 = vmatmul.mubr.f32.gmra.mrb[0].mxu0 %v924
      %v1023 = vpop.f32.mrb[0].mxu0
      %v1024 = vadd.f32 0.0, %v1023
      %v1025 = vpop.f32.mrb[0].mxu0
      %1026 = vmatprep.mubr.f32.mxu0 0.0
      %1027 = vmatmul.mubr.f32.gmra.mrb[0].mxu0 %v927
      %v1028 = vpop.f32.mrb[0].mxu0
      %v1029 = vadd.f32 0.0, %v1028
      %v1030 = vpop.f32.mrb[0].mxu0
      %1031 = vmatprep.mubr.f32.mxu0 0.0
      %1032 = vmatmul.mubr.f32.gmra.mrb[0].mxu0 %v930
      %v1033 = vpop.f32.mrb[0].mxu0
      %v1034 = vadd.f32 0.0, %v1033
      %v1035 = vpop.f32.mrb[0].mxu0
      %1036 = vmatprep.mubr.f32.mxu0 0.0
      %1037 = vmatmul.mubr.f32.gmra.mrb[0].mxu0 %v933
      %v1038 = vpop.f32.mrb[0].mxu0
      %v1039 = vadd.f32 0.0, %v1038
      %v1040 = vpop.f32.mrb[0].mxu0
      %1041 = vmatprep.mubr.f32.mxu0 0.0
      %1042 = vmatmul.mubr.f32.gmra.mrb[0].mxu0 %v936
      %v1043 = vpop.f32.mrb[0].mxu0
      %v1044 = vadd.f32 0.0, %v1043
      %v1045 = vpop.f32.mrb[0].mxu0
      %1046 = vmatprep.mubr.f32.mxu0 0.0
      %1047 = vmatmul.mubr.f32.gmra.mrb[0].mxu0 %v939
      %v1048 = vpop.f32.mrb[0].mxu0
      %v1049 = vadd.f32 0.0, %v1048
      %v1050 = vpop.f32.mrb[0].mxu0
      %1051 = vdwg.mxu0
      %vm1052 = vcmask 130048
      %v1053 = vsel %vm1052, %v1014, -inf
      %1054 = vmax.xlane.f32.xlu0 %v1053
      %v1055 = vpop.xlane.xlu0 %1054
      %v1056 = vsel %vm1052, %v1019, -inf
      %1057 = vmax.xlane.f32.xlu0 %v1056
      %v1058 = vpop.xlane.xlu0 %1057
      %v1059 = vsel %vm1052, %v1024, -inf
      %1060 = vmax.xlane.f32.xlu0 %v1059
      %v1061 = vpop.xlane.xlu0 %1060
      %v1062 = vsel %vm1052, %v1029, -inf
      %1063 = vmax.xlane.f32.xlu0 %v1062
      %v1064 = vpop.xlane.xlu0 %1063
      %v1065 = vsel %vm1052, %v1034, -inf
      %1066 = vmax.xlane.f32.xlu0 %v1065
      %v1067 = vpop.xlane.xlu0 %1066
      %v1068 = vsel %vm1052, %v1039, -inf
      %1069 = vmax.xlane.f32.xlu0 %v1068
      %v1070 = vpop.xlane.xlu0 %1069
      %v1071 = vsel %vm1052, %v1044, -inf
      %1072 = vmax.xlane.f32.xlu0 %v1071
      %v1073 = vpop.xlane.xlu0 %1072
      %v1074 = vsel %vm1052, %v1049, -inf
      %1075 = vmax.xlane.f32.xlu0 %v1074
      %v1076 = vpop.xlane.xlu0 %1075
      %v1077 = vsub.f32 %v1014, %v1055
      %v1078 = vsub.f32 %v1019, %v1058
      %v1079 = vsub.f32 %v1024, %v1061
      %v1080 = vsub.f32 %v1029, %v1064
      %v1081 = vsub.f32 %v1034, %v1067
      %v1082 = vsub.f32 %v1039, %v1070
      %v1083 = vsub.f32 %v1044, %v1073
      %v1084 = vsub.f32 %v1049, %v1076
      %v1085 = vmul.f32 %v1077, 1.442695
      %v1086 = vpow.pop %v1085
      %v1087 = vmul.f32 %v1078, 1.442695
      %v1088 = vpow.pop %v1087
      %v1089 = vmul.f32 %v1079, 1.442695
      %v1090 = vpow.pop %v1089
      %v1091 = vmul.f32 %v1080, 1.442695
      %v1092 = vpow.pop %v1091
      %v1093 = vmul.f32 %v1081, 1.442695
      %v1094 = vpow.pop %v1093
      %v1095 = vmul.f32 %v1082, 1.442695
      %v1096 = vpow.pop %v1095
      %v1097 = vmul.f32 %v1083, 1.442695
      %v1098 = vpow.pop %v1097
      %v1099 = vmul.f32 %v1084, 1.442695
      %v1100 = vpow.pop %v1099
      %v1101 = vsel %vm1052, %v1086, 0.0
      %1102 = vadd.xlane.f32.xlu0 %v1101
      %v1103 = vpop.xlane.xlu0 %1102
      %v1104 = vsel %vm1052, %v1088, 0.0
      %1105 = vadd.xlane.f32.xlu0 %v1104
      %v1106 = vpop.xlane.xlu0 %1105
      %v1107 = vsel %vm1052, %v1090, 0.0
      %1108 = vadd.xlane.f32.xlu0 %v1107
      %v1109 = vpop.xlane.xlu0 %1108
      %v1110 = vsel %vm1052, %v1092, 0.0
      %1111 = vadd.xlane.f32.xlu0 %v1110
      %v1112 = vpop.xlane.xlu0 %1111
      %v1113 = vsel %vm1052, %v1094, 0.0
      %1114 = vadd.xlane.f32.xlu0 %v1113
      %v1115 = vpop.xlane.xlu0 %1114
      %v1116 = vsel %vm1052, %v1096, 0.0
      %1117 = vadd.xlane.f32.xlu0 %v1116
      %v1118 = vpop.xlane.xlu0 %1117
      %v1119 = vsel %vm1052, %v1098, 0.0
      %1120 = vadd.xlane.f32.xlu0 %v1119
      %v1121 = vpop.xlane.xlu0 %1120
      %v1122 = vsel %vm1052, %v1100, 0.0
      %1123 = vadd.xlane.f32.xlu0 %v1122
      %v1124 = vpop.xlane.xlu0 %1123
      %v1125 = vrcp.pop %v1103
      %v1126 = vmul.f32 1.0, %v1125
      %v1127 = vrcp.pop %v1106
      %v1128 = vmul.f32 1.0, %v1127
      %v1129 = vrcp.pop %v1109
      %v1130 = vmul.f32 1.0, %v1129
      %v1131 = vrcp.pop %v1112
      %v1132 = vmul.f32 1.0, %v1131
      %v1133 = vrcp.pop %v1115
      %v1134 = vmul.f32 1.0, %v1133
      %v1135 = vrcp.pop %v1118
      %v1136 = vmul.f32 1.0, %v1135
      %v1137 = vrcp.pop %v1121
      %v1138 = vmul.f32 1.0, %v1137
      %v1139 = vrcp.pop %v1124
      %v1140 = vmul.f32 1.0, %v1139
      %v1141 = vmul.f32 %v1086, %v1126
      %v1142 = vmul.f32 %v1088, %v1128
      %v1143 = vmul.f32 %v1090, %v1130
      %v1144 = vmul.f32 %v1092, %v1132
      %v1145 = vmul.f32 %v1094, %v1134
      %v1146 = vmul.f32 %v1096, %v1136
      %v1147 = vmul.f32 %v1098, %v1138
      %v1148 = vmul.f32 %v1100, %v1140
      %v1150 = vsel %vm1052, %v1141, 0
      %v1153 = vsel %vm1052, %v1142, 0
      %v1156 = vsel %vm1052, %v1143, 0
      %v1159 = vsel %vm1052, %v1144, 0
      %v1162 = vsel %vm1052, %v1145, 0
      %v1165 = vsel %vm1052, %v1146, 0
      %v1168 = vsel %vm1052, %v1147, 0
      %v1171 = vsel %vm1052, %v1148, 0
      %1173 = vmatprep.subr.mxu0 0.0
      %1174 = vmatpush1.msra.mxu0 %v725
      %1175 = vmatprep.subr.mxu0 0.0
      %1176 = vmatpush1.msra.mxu0 %v726
      %1177 = vmatprep.subr.mxu0 0.0
      %1178 = vmatpush1.msra.mxu0 0.0
      %1179 = vmatprep.subr.mxu0 0.0
      %1180 = vmatpush1.msra.mxu0 0.0
      %1181 = vmatprep.subr.mxu0 0.0
      %1182 = vmatpush1.msra.mxu0 0.0
      %1183 = vmatprep.subr.mxu0 0.0
      %1184 = vmatpush1.msra.mxu0 0.0
      %1185 = vmatprep.subr.mxu0 0.0
      %1186 = vmatpush1.msra.mxu0 0.0
      %1187 = vmatprep.subr.mxu0 0.0
      %1188 = vmatpush1.msra.mxu0 0.0
      %1189 = vmatprep.subr.mxu0 0.0
      %1190 = vmatpush1.msra.mxu0 0.0
      %1191 = vmatprep.subr.mxu0 0.0
      %1192 = vmatpush1.msra.mxu0 0.0
      %1193 = vmatprep.subr.mxu0 0.0
      %1194 = vmatpush1.msra.mxu0 0.0
      %1195 = vmatprep.subr.mxu0 0.0
      %1196 = vmatpush1.msra.mxu0 0.0
      %1197 = vmatprep.subr.mxu0 0.0
      %1198 = vmatpush1.msra.mxu0 0.0
      %1199 = vmatprep.subr.mxu0 0.0
      %1200 = vmatpush1.msra.mxu0 0.0
      %1201 = vmatprep.subr.mxu0 0.0
      %1202 = vmatpush1.msra.mxu0 0.0
      %1203 = vmatprep.subr.mxu0 0.0
      %1204 = vmatpush1.msra.mxu0 0.0
      %1205 = vmatprep.subr.mxu0 0.0
      %1206 = vmatpush1.msra.mxu0 0.0
      %1207 = vmatprep.subr.mxu0 0.0
      %1208 = vmatpush1.msra.mxu0 0.0
      %1209 = vmatprep.subr.mxu0 0.0
      %1210 = vmatpush1.msra.mxu0 0.0
      %1211 = vmatprep.subr.mxu0 0.0
      %1212 = vmatpush1.msra.mxu0 0.0
      %1213 = vmatprep.subr.mxu0 0.0
      %1214 = vmatpush1.msra.mxu0 0.0
      %1215 = vmatprep.subr.mxu0 0.0
      %1216 = vmatpush1.msra.mxu0 0.0
      %1217 = vmatprep.subr.mxu0 0.0
      %1218 = vmatpush1.msra.mxu0 0.0
      %1219 = vmatprep.subr.mxu0 0.0
      %1220 = vmatpush1.msra.mxu0 0.0
      %1221 = vmatprep.subr.mxu0 0.0
      %1222 = vmatpush1.msra.mxu0 0.0
      %1223 = vmatprep.subr.mxu0 0.0
      %1224 = vmatpush1.msra.mxu0 0.0
      %1225 = vmatprep.subr.mxu0 0.0
      %1226 = vmatpush1.msra.mxu0 0.0
      %1227 = vmatprep.subr.mxu0 0.0
      %1228 = vmatpush1.msra.mxu0 0.0
      %1229 = vmatprep.subr.mxu0 0.0
      %1230 = vmatpush1.msra.mxu0 0.0
      %1231 = vmatprep.subr.mxu0 0.0
      %1232 = vmatpush1.msra.mxu0 0.0
      %1233 = vmatprep.subr.mxu0 0.0
      %1234 = vmatpush1.msra.mxu0 0.0
      %1235 = vmatprep.subr.mxu0 0.0
      %1236 = vmatpush1.msra.mxu0 0.0
      %1237 = vmatprep.mubr.f32.mxu0 0.0
      %1238 = vmatmul.mubr.f32.gmra.mrb[0].mxu0 %v1150
      %v1239 = vpop.f32.mrb[0].mxu0
      %v1240 = vadd.f32 0.0, %v1239
      %v1241 = vpop.f32.mrb[0].mxu0
      %1242 = vmatprep.mubr.f32.mxu0 0.0
      %1243 = vmatmul.mubr.f32.gmra.mrb[0].mxu0 %v1153
      %v1244 = vpop.f32.mrb[0].mxu0
      %v1245 = vadd.f32 0.0, %v1244
      %v1246 = vpop.f32.mrb[0].mxu0
      %1247 = vmatprep.mubr.f32.mxu0 0.0
      %1248 = vmatmul.mubr.f32.gmra.mrb[0].mxu0 %v1156
      %v1249 = vpop.f32.mrb[0].mxu0
      %v1250 = vadd.f32 0.0, %v1249
      %v1251 = vpop.f32.mrb[0].mxu0
      %1252 = vmatprep.mubr.f32.mxu0 0.0
      %1253 = vmatmul.mubr.f32.gmra.mrb[0].mxu0 %v1159
      %v1254 = vpop.f32.mrb[0].mxu0
      %v1255 = vadd.f32 0.0, %v1254
      %v1256 = vpop.f32.mrb[0].mxu0
      %1257 = vmatprep.mubr.f32.mxu0 0.0
      %1258 = vmatmul.mubr.f32.gmra.mrb[0].mxu0 %v1162
      %v1259 = vpop.f32.mrb[0].mxu0
      %v1260 = vadd.f32 0.0, %v1259
      %v1261 = vpop.f32.mrb[0].mxu0
      %1262 = vmatprep.mubr.f32.mxu0 0.0
      %1263 = vmatmul.mubr.f32.gmra.mrb[0].mxu0 %v1165
      %v1264 = vpop.f32.mrb[0].mxu0
      %v1265 = vadd.f32 0.0, %v1264
      %v1266 = vpop.f32.mrb[0].mxu0
      %1267 = vmatprep.mubr.f32.mxu0 0.0
      %1268 = vmatmul.mubr.f32.gmra.mrb[0].mxu0 %v1168
      %v1269 = vpop.f32.mrb[0].mxu0
      %v1270 = vadd.f32 0.0, %v1269
      %v1271 = vpop.f32.mrb[0].mxu0
      %1272 = vmatprep.mubr.f32.mxu0 0.0
      %1273 = vmatmul.mubr.f32.gmra.mrb[0].mxu0 %v1171
      %v1274 = vpop.f32.mrb[0].mxu0
      %v1275 = vadd.f32 0.0, %v1274
      %v1276 = vpop.f32.mrb[0].mxu0
      %1277 = vdwg.mxu0
      %1278 = vrot.lane.b32.xlu0 %v909, 124
      %v1279 = vpop.permute.xlu0 %1278
      %1280 = vrot.lane.b32.xlu0 %v910, 124
      %v1281 = vpop.permute.xlu0 %1280
      %1282 = vrot.lane.b32.xlu0 %v911, 124
      %v1283 = vpop.permute.xlu0 %1282
      %1284 = vrot.lane.b32.xlu0 %v912, 124
      %v1285 = vpop.permute.xlu0 %1284
      %1286 = vrot.lane.b32.xlu0 %v913, 124
      %v1287 = vpop.permute.xlu0 %1286
      %1288 = vrot.lane.b32.xlu0 %v914, 124
      %v1289 = vpop.permute.xlu0 %1288
      %1290 = vrot.lane.b32.xlu0 %v915, 124
      %v1291 = vpop.permute.xlu0 %1290
      %1292 = vrot.lane.b32.xlu0 %v916, 124
      %v1293 = vpop.permute.xlu0 %1292
      %1294 = vrot.lane.b32.xlu0 %v723, 124
      %v1295 = vpop.permute.xlu0 %1294
      %1296 = vrot.lane.b32.xlu0 %v724, 124
      %v1297 = vpop.permute.xlu0 %1296
      %v1298 = vsel %vm744, %v1279, 0
      %v1300 = vsel %vm744, %v1281, 0
      %v1302 = vsel %vm744, %v1283, 0
      %v1304 = vsel %vm744, %v1285, 0
      %v1306 = vsel %vm744, %v1287, 0
      %v1308 = vsel %vm744, %v1289, 0
      %v1310 = vsel %vm744, %v1291, 0
      %v1312 = vsel %vm744, %v1293, 0
      %v1314 = vsel %vm744, %v1295, 0
      %v1316 = vsel %vm744, %v1297, 0
      %1318 = vmatprep.subr.mxu0 0.0
      %1319 = vmatpush1.xpose.msra.mxu0 %v1314
      %1320 = vmatprep.subr.mxu0 0.0
      %1321 = vmatpush1.xpose.msra.mxu0 %v1316
      %1322 = vmatprep.subr.mxu0 0.0
      %1323 = vmatpush1.xpose.msra.mxu0 0.0
      %1324 = vmatprep.subr.mxu0 0.0
      %1325 = vmatpush1.xpose.msra.mxu0 0.0
      %1326 = vmatprep.subr.mxu0 0.0
      %1327 = vmatpush1.xpose.msra.mxu0 0.0
      %1328 = vmatprep.subr.mxu0 0.0
      %1329 = vmatpush1.xpose.msra.mxu0 0.0
      %1330 = vmatprep.subr.mxu0 0.0
      %1331 = vmatpush1.xpose.msra.mxu0 0.0
      %1332 = vmatprep.subr.mxu0 0.0
      %1333 = vmatpush1.xpose.msra.mxu0 0.0
      %1334 = vmatprep.subr.mxu0 0.0
      %1335 = vmatpush1.xpose.msra.mxu0 0.0
      %1336 = vmatprep.subr.mxu0 0.0
      %1337 = vmatpush1.xpose.msra.mxu0 0.0
      %1338 = vmatprep.subr.mxu0 0.0
      %1339 = vmatpush1.xpose.msra.mxu0 0.0
      %1340 = vmatprep.subr.mxu0 0.0
      %1341 = vmatpush1.xpose.msra.mxu0 0.0
      %1342 = vmatprep.subr.mxu0 0.0
      %1343 = vmatpush1.xpose.msra.mxu0 0.0
      %1344 = vmatprep.subr.mxu0 0.0
      %1345 = vmatpush1.xpose.msra.mxu0 0.0
      %1346 = vmatprep.subr.mxu0 0.0
      %1347 = vmatpush1.xpose.msra.mxu0 0.0
      %1348 = vmatprep.subr.mxu0 0.0
      %1349 = vmatpush1.xpose.msra.mxu0 0.0
      %1350 = vmatprep.subr.mxu0 0.0
      %1351 = vmatpush1.xpose.msra.mxu0 0.0
      %1352 = vmatprep.subr.mxu0 0.0
      %1353 = vmatpush1.xpose.msra.mxu0 0.0
      %1354 = vmatprep.subr.mxu0 0.0
      %1355 = vmatpush1.xpose.msra.mxu0 0.0
      %1356 = vmatprep.subr.mxu0 0.0
      %1357 = vmatpush1.xpose.msra.mxu0 0.0
      %1358 = vmatprep.subr.mxu0 0.0
      %1359 = vmatpush1.xpose.msra.mxu0 0.0
      %1360 = vmatprep.subr.mxu0 0.0
      %1361 = vmatpush1.xpose.msra.mxu0 0.0
      %1362 = vmatprep.subr.mxu0 0.0
      %1363 = vmatpush1.xpose.msra.mxu0 0.0
      %1364 = vmatprep.subr.mxu0 0.0
      %1365 = vmatpush1.xpose.msra.mxu0 0.0
      %1366 = vmatprep.subr.mxu0 0.0
      %1367 = vmatpush1.xpose.msra.mxu0 0.0
      %1368 = vmatprep.subr.mxu0 0.0
      %1369 = vmatpush1.xpose.msra.mxu0 0.0
      %1370 = vmatprep.subr.mxu0 0.0
      %1371 = vmatpush1.xpose.msra.mxu0 0.0
      %1372 = vmatprep.subr.mxu0 0.0
      %1373 = vmatpush1.xpose.msra.mxu0 0.0
      %1374 = vmatprep.subr.mxu0 0.0
      %1375 = vmatpush1.xpose.msra.mxu0 0.0
      %1376 = vmatprep.subr.mxu0 0.0
      %1377 = vmatpush1.xpose.msra.mxu0 0.0
      %1378 = vmatprep.subr.mxu0 0.0
      %1379 = vmatpush1.xpose.msra.mxu0 0.0
      %1380 = vmatprep.subr.mxu0 0.0
      %1381 = vmatpush1.xpose.msra.mxu0 0.0
      %1382 = vmatprep.mubr.f32.mxu0 0.0
      %1383 = vmatmul.mubr.f32.gmra.mrb[0].mxu0 %v1298
      %v1384 = vpop.f32.mrb[0].mxu0
      %v1385 = vadd.f32 0.0, %v1384
      %v1386 = vpop.f32.mrb[0].mxu0
      %1387 = vmatprep.mubr.f32.mxu0 0.0
      %1388 = vmatmul.mubr.f32.gmra.mrb[0].mxu0 %v1300
      %v1389 = vpop.f32.mrb[0].mxu0
      %v1390 = vadd.f32 0.0, %v1389
      %v1391 = vpop.f32.mrb[0].mxu0
      %1392 = vmatprep.mubr.f32.mxu0 0.0
      %1393 = vmatmul.mubr.f32.gmra.mrb[0].mxu0 %v1302
      %v1394 = vpop.f32.mrb[0].mxu0
      %v1395 = vadd.f32 0.0, %v1394
      %v1396 = vpop.f32.mrb[0].mxu0
      %1397 = vmatprep.mubr.f32.mxu0 0.0
      %1398 = vmatmul.mubr.f32.gmra.mrb[0].mxu0 %v1304
      %v1399 = vpop.f32.mrb[0].mxu0
      %v1400 = vadd.f32 0.0, %v1399
      %v1401 = vpop.f32.mrb[0].mxu0
      %1402 = vmatprep.mubr.f32.mxu0 0.0
      %1403 = vmatmul.mubr.f32.gmra.mrb[0].mxu0 %v1306
      %v1404 = vpop.f32.mrb[0].mxu0
      %v1405 = vadd.f32 0.0, %v1404
      %v1406 = vpop.f32.mrb[0].mxu0
      %1407 = vmatprep.mubr.f32.mxu0 0.0
      %1408 = vmatmul.mubr.f32.gmra.mrb[0].mxu0 %v1308
      %v1409 = vpop.f32.mrb[0].mxu0
      %v1410 = vadd.f32 0.0, %v1409
      %v1411 = vpop.f32.mrb[0].mxu0
      %1412 = vmatprep.mubr.f32.mxu0 0.0
      %1413 = vmatmul.mubr.f32.gmra.mrb[0].mxu0 %v1310
      %v1414 = vpop.f32.mrb[0].mxu0
      %v1415 = vadd.f32 0.0, %v1414
      %v1416 = vpop.f32.mrb[0].mxu0
      %1417 = vmatprep.mubr.f32.mxu0 0.0
      %1418 = vmatmul.mubr.f32.gmra.mrb[0].mxu0 %v1312
      %v1419 = vpop.f32.mrb[0].mxu0
      %v1420 = vadd.f32 0.0, %v1419
      %v1421 = vpop.f32.mrb[0].mxu0
      %1422 = vdwg.mxu0
      %v1423 = vsel %vm1052, %v1385, -inf
      %1424 = vmax.xlane.f32.xlu0 %v1423
      %v1425 = vpop.xlane.xlu0 %1424
      %v1426 = vsel %vm1052, %v1390, -inf
      %1427 = vmax.xlane.f32.xlu0 %v1426
      %v1428 = vpop.xlane.xlu0 %1427
      %v1429 = vsel %vm1052, %v1395, -inf
      %1430 = vmax.xlane.f32.xlu0 %v1429
      %v1431 = vpop.xlane.xlu0 %1430
      %v1432 = vsel %vm1052, %v1400, -inf
      %1433 = vmax.xlane.f32.xlu0 %v1432
      %v1434 = vpop.xlane.xlu0 %1433
      %v1435 = vsel %vm1052, %v1405, -inf
      %1436 = vmax.xlane.f32.xlu0 %v1435
      %v1437 = vpop.xlane.xlu0 %1436
      %v1438 = vsel %vm1052, %v1410, -inf
      %1439 = vmax.xlane.f32.xlu0 %v1438
      %v1440 = vpop.xlane.xlu0 %1439
      %v1441 = vsel %vm1052, %v1415, -inf
      %1442 = vmax.xlane.f32.xlu0 %v1441
      %v1443 = vpop.xlane.xlu0 %1442
      %v1444 = vsel %vm1052, %v1420, -inf
      %1445 = vmax.xlane.f32.xlu0 %v1444
      %v1446 = vpop.xlane.xlu0 %1445
      %v1447 = vsub.f32 %v1385, %v1425
      %v1448 = vsub.f32 %v1390, %v1428
      %v1449 = vsub.f32 %v1395, %v1431
      %v1450 = vsub.f32 %v1400, %v1434
      %v1451 = vsub.f32 %v1405, %v1437
      %v1452 = vsub.f32 %v1410, %v1440
      %v1453 = vsub.f32 %v1415, %v1443
      %v1454 = vsub.f32 %v1420, %v1446
      %v1455 = vmul.f32 %v1447, 1.442695
      %v1456 = vpow.pop %v1455
      %v1457 = vmul.f32 %v1448, 1.442695
      %v1458 = vpow.pop %v1457
      %v1459 = vmul.f32 %v1449, 1.442695
      %v1460 = vpow.pop %v1459
      %v1461 = vmul.f32 %v1450, 1.442695
      %v1462 = vpow.pop %v1461
      %v1463 = vmul.f32 %v1451, 1.442695
      %v1464 = vpow.pop %v1463
      %v1465 = vmul.f32 %v1452, 1.442695
      %v1466 = vpow.pop %v1465
      %v1467 = vmul.f32 %v1453, 1.442695
      %v1468 = vpow.pop %v1467
      %v1469 = vmul.f32 %v1454, 1.442695
      %v1470 = vpow.pop %v1469
      %v1471 = vsel %vm1052, %v1456, 0.0
      %1472 = vadd.xlane.f32.xlu0 %v1471
      %v1473 = vpop.xlane.xlu0 %1472
      %v1474 = vsel %vm1052, %v1458, 0.0
      %1475 = vadd.xlane.f32.xlu0 %v1474
      %v1476 = vpop.xlane.xlu0 %1475
      %v1477 = vsel %vm1052, %v1460, 0.0
      %1478 = vadd.xlane.f32.xlu0 %v1477
      %v1479 = vpop.xlane.xlu0 %1478
      %v1480 = vsel %vm1052, %v1462, 0.0
      %1481 = vadd.xlane.f32.xlu0 %v1480
      %v1482 = vpop.xlane.xlu0 %1481
      %v1483 = vsel %vm1052, %v1464, 0.0
      %1484 = vadd.xlane.f32.xlu0 %v1483
      %v1485 = vpop.xlane.xlu0 %1484
      %v1486 = vsel %vm1052, %v1466, 0.0
      %1487 = vadd.xlane.f32.xlu0 %v1486
      %v1488 = vpop.xlane.xlu0 %1487
      %v1489 = vsel %vm1052, %v1468, 0.0
      %1490 = vadd.xlane.f32.xlu0 %v1489
      %v1491 = vpop.xlane.xlu0 %1490
      %v1492 = vsel %vm1052, %v1470, 0.0
      %1493 = vadd.xlane.f32.xlu0 %v1492
      %v1494 = vpop.xlane.xlu0 %1493
      %v1495 = vrcp.pop %v1473
      %v1496 = vmul.f32 1.0, %v1495
      %v1497 = vrcp.pop %v1476
      %v1498 = vmul.f32 1.0, %v1497
      %v1499 = vrcp.pop %v1479
      %v1500 = vmul.f32 1.0, %v1499
      %v1501 = vrcp.pop %v1482
      %v1502 = vmul.f32 1.0, %v1501
      %v1503 = vrcp.pop %v1485
      %v1504 = vmul.f32 1.0, %v1503
      %v1505 = vrcp.pop %v1488
      %v1506 = vmul.f32 1.0, %v1505
      %v1507 = vrcp.pop %v1491
      %v1508 = vmul.f32 1.0, %v1507
      %v1509 = vrcp.pop %v1494
      %v1510 = vmul.f32 1.0, %v1509
      %v1511 = vmul.f32 %v1456, %v1496
      %v1512 = vmul.f32 %v1458, %v1498
      %v1513 = vmul.f32 %v1460, %v1500
      %v1514 = vmul.f32 %v1462, %v1502
      %v1515 = vmul.f32 %v1464, %v1504
      %v1516 = vmul.f32 %v1466, %v1506
      %v1517 = vmul.f32 %v1468, %v1508
      %v1518 = vmul.f32 %v1470, %v1510
      %1521 = vrot.lane.b32.xlu0 %v725, 124
      %v1522 = vpop.permute.xlu0 %1521
      %1523 = vrot.lane.b32.xlu0 %v726, 124
      %v1524 = vpop.permute.xlu0 %1523
      %v1528 = vsel %vm1052, %v1511, 0
      %v1531 = vsel %vm1052, %v1512, 0
      %v1534 = vsel %vm1052, %v1513, 0
      %v1537 = vsel %vm1052, %v1514, 0
      %v1540 = vsel %vm1052, %v1515, 0
      %v1543 = vsel %vm1052, %v1516, 0
      %v1546 = vsel %vm1052, %v1517, 0
      %v1549 = vsel %vm1052, %v1518, 0
      %1551 = vmatprep.subr.mxu0 0.0
      %1552 = vmatpush1.msra.mxu0 %v1522
      %1553 = vmatprep.subr.mxu0 0.0
      %1554 = vmatpush1.msra.mxu0 %v1524
      %1555 = vmatprep.subr.mxu0 0.0
      %1556 = vmatpush1.msra.mxu0 0.0
      %1557 = vmatprep.subr.mxu0 0.0
      %1558 = vmatpush1.msra.mxu0 0.0
      %1559 = vmatprep.subr.mxu0 0.0
      %1560 = vmatpush1.msra.mxu0 0.0
      %1561 = vmatprep.subr.mxu0 0.0
      %1562 = vmatpush1.msra.mxu0 0.0
      %1563 = vmatprep.subr.mxu0 0.0
      %1564 = vmatpush1.msra.mxu0 0.0
      %1565 = vmatprep.subr.mxu0 0.0
      %1566 = vmatpush1.msra.mxu0 0.0
      %1567 = vmatprep.subr.mxu0 0.0
      %1568 = vmatpush1.msra.mxu0 0.0
      %1569 = vmatprep.subr.mxu0 0.0
      %1570 = vmatpush1.msra.mxu0 0.0
      %1571 = vmatprep.subr.mxu0 0.0
      %1572 = vmatpush1.msra.mxu0 0.0
      %1573 = vmatprep.subr.mxu0 0.0
      %1574 = vmatpush1.msra.mxu0 0.0
      %1575 = vmatprep.subr.mxu0 0.0
      %1576 = vmatpush1.msra.mxu0 0.0
      %1577 = vmatprep.subr.mxu0 0.0
      %1578 = vmatpush1.msra.mxu0 0.0
      %1579 = vmatprep.subr.mxu0 0.0
      %1580 = vmatpush1.msra.mxu0 0.0
      %1581 = vmatprep.subr.mxu0 0.0
      %1582 = vmatpush1.msra.mxu0 0.0
      %1583 = vmatprep.subr.mxu0 0.0
      %1584 = vmatpush1.msra.mxu0 0.0
      %1585 = vmatprep.subr.mxu0 0.0
      %1586 = vmatpush1.msra.mxu0 0.0
      %1587 = vmatprep.subr.mxu0 0.0
      %1588 = vmatpush1.msra.mxu0 0.0
      %1589 = vmatprep.subr.mxu0 0.0
      %1590 = vmatpush1.msra.mxu0 0.0
      %1591 = vmatprep.subr.mxu0 0.0
      %1592 = vmatpush1.msra.mxu0 0.0
      %1593 = vmatprep.subr.mxu0 0.0
      %1594 = vmatpush1.msra.mxu0 0.0
      %1595 = vmatprep.subr.mxu0 0.0
      %1596 = vmatpush1.msra.mxu0 0.0
      %1597 = vmatprep.subr.mxu0 0.0
      %1598 = vmatpush1.msra.mxu0 0.0
      %1599 = vmatprep.subr.mxu0 0.0
      %1600 = vmatpush1.msra.mxu0 0.0
      %1601 = vmatprep.subr.mxu0 0.0
      %1602 = vmatpush1.msra.mxu0 0.0
      %1603 = vmatprep.subr.mxu0 0.0
      %1604 = vmatpush1.msra.mxu0 0.0
      %1605 = vmatprep.subr.mxu0 0.0
      %1606 = vmatpush1.msra.mxu0 0.0
      %1607 = vmatprep.subr.mxu0 0.0
      %1608 = vmatpush1.msra.mxu0 0.0
      %1609 = vmatprep.subr.mxu0 0.0
      %1610 = vmatpush1.msra.mxu0 0.0
      %1611 = vmatprep.subr.mxu0 0.0
      %1612 = vmatpush1.msra.mxu0 0.0
      %1613 = vmatprep.subr.mxu0 0.0
      %1614 = vmatpush1.msra.mxu0 0.0
      %1615 = vmatprep.mubr.f32.mxu0 0.0
      %1616 = vmatmul.mubr.f32.gmra.mrb[0].mxu0 %v1528
      %v1617 = vpop.f32.mrb[0].mxu0
      %v1618 = vadd.f32 0.0, %v1617
      %v1619 = vpop.f32.mrb[0].mxu0
      %1620 = vmatprep.mubr.f32.mxu0 0.0
      %1621 = vmatmul.mubr.f32.gmra.mrb[0].mxu0 %v1531
      %v1622 = vpop.f32.mrb[0].mxu0
      %v1623 = vadd.f32 0.0, %v1622
      %v1624 = vpop.f32.mrb[0].mxu0
      %1625 = vmatprep.mubr.f32.mxu0 0.0
      %1626 = vmatmul.mubr.f32.gmra.mrb[0].mxu0 %v1534
      %v1627 = vpop.f32.mrb[0].mxu0
      %v1628 = vadd.f32 0.0, %v1627
      %v1629 = vpop.f32.mrb[0].mxu0
      %1630 = vmatprep.mubr.f32.mxu0 0.0
      %1631 = vmatmul.mubr.f32.gmra.mrb[0].mxu0 %v1537
      %v1632 = vpop.f32.mrb[0].mxu0
      %v1633 = vadd.f32 0.0, %v1632
      %v1634 = vpop.f32.mrb[0].mxu0
      %1635 = vmatprep.mubr.f32.mxu0 0.0
      %1636 = vmatmul.mubr.f32.gmra.mrb[0].mxu0 %v1540
      %v1637 = vpop.f32.mrb[0].mxu0
      %v1638 = vadd.f32 0.0, %v1637
      %v1639 = vpop.f32.mrb[0].mxu0
      %1640 = vmatprep.mubr.f32.mxu0 0.0
      %1641 = vmatmul.mubr.f32.gmra.mrb[0].mxu0 %v1543
      %v1642 = vpop.f32.mrb[0].mxu0
      %v1643 = vadd.f32 0.0, %v1642
      %v1644 = vpop.f32.mrb[0].mxu0
      %1645 = vmatprep.mubr.f32.mxu0 0.0
      %1646 = vmatmul.mubr.f32.gmra.mrb[0].mxu0 %v1546
      %v1647 = vpop.f32.mrb[0].mxu0
      %v1648 = vadd.f32 0.0, %v1647
      %v1649 = vpop.f32.mrb[0].mxu0
      %1650 = vmatprep.mubr.f32.mxu0 0.0
      %1651 = vmatmul.mubr.f32.gmra.mrb[0].mxu0 %v1549
      %v1652 = vpop.f32.mrb[0].mxu0
      %v1653 = vadd.f32 0.0, %v1652
      %v1654 = vpop.f32.mrb[0].mxu0
      %1655 = vdwg.mxu0
      %1656 = vrot.lane.b32.xlu0 %v909, 120
      %v1657 = vpop.permute.xlu0 %1656
      %1658 = vrot.lane.b32.xlu0 %v910, 120
      %v1659 = vpop.permute.xlu0 %1658
      %1660 = vrot.lane.b32.xlu0 %v911, 120
      %v1661 = vpop.permute.xlu0 %1660
      %1662 = vrot.lane.b32.xlu0 %v912, 120
      %v1663 = vpop.permute.xlu0 %1662
      %1664 = vrot.lane.b32.xlu0 %v913, 120
      %v1665 = vpop.permute.xlu0 %1664
      %1666 = vrot.lane.b32.xlu0 %v914, 120
      %v1667 = vpop.permute.xlu0 %1666
      %1668 = vrot.lane.b32.xlu0 %v915, 120
      %v1669 = vpop.permute.xlu0 %1668
      %1670 = vrot.lane.b32.xlu0 %v916, 120
      %v1671 = vpop.permute.xlu0 %1670
      %1672 = vrot.lane.b32.xlu0 %v723, 120
      %v1673 = vpop.permute.xlu0 %1672
      %1674 = vrot.lane.b32.xlu0 %v724, 120
      %v1675 = vpop.permute.xlu0 %1674
      %v1676 = vsel %vm744, %v1657, 0
      %v1678 = vsel %vm744, %v1659, 0
      %v1680 = vsel %vm744, %v1661, 0
      %v1682 = vsel %vm744, %v1663, 0
      %v1684 = vsel %vm744, %v1665, 0
      %v1686 = vsel %vm744, %v1667, 0
      %v1688 = vsel %vm744, %v1669, 0
      %v1690 = vsel %vm744, %v1671, 0
      %v1692 = vsel %vm744, %v1673, 0
      %v1694 = vsel %vm744, %v1675, 0
      %1696 = vmatprep.subr.mxu0 0.0
      %1697 = vmatpush1.xpose.msra.mxu0 %v1692
      %1698 = vmatprep.subr.mxu0 0.0
      %1699 = vmatpush1.xpose.msra.mxu0 %v1694
      %1700 = vmatprep.subr.mxu0 0.0
      %1701 = vmatpush1.xpose.msra.mxu0 0.0
      %1702 = vmatprep.subr.mxu0 0.0
      %1703 = vmatpush1.xpose.msra.mxu0 0.0
      %1704 = vmatprep.subr.mxu0 0.0
      %1705 = vmatpush1.xpose.msra.mxu0 0.0
      %1706 = vmatprep.subr.mxu0 0.0
      %1707 = vmatpush1.xpose.msra.mxu0 0.0
      %1708 = vmatprep.subr.mxu0 0.0
      %1709 = vmatpush1.xpose.msra.mxu0 0.0
      %1710 = vmatprep.subr.mxu0 0.0
      %1711 = vmatpush1.xpose.msra.mxu0 0.0
      %1712 = vmatprep.subr.mxu0 0.0
      %1713 = vmatpush1.xpose.msra.mxu0 0.0
      %1714 = vmatprep.subr.mxu0 0.0
      %1715 = vmatpush1.xpose.msra.mxu0 0.0
      %1716 = vmatprep.subr.mxu0 0.0
      %1717 = vmatpush1.xpose.msra.mxu0 0.0
      %1718 = vmatprep.subr.mxu0 0.0
      %1719 = vmatpush1.xpose.msra.mxu0 0.0
      %1720 = vmatprep.subr.mxu0 0.0
      %1721 = vmatpush1.xpose.msra.mxu0 0.0
      %1722 = vmatprep.subr.mxu0 0.0
      %1723 = vmatpush1.xpose.msra.mxu0 0.0
      %1724 = vmatprep.subr.mxu0 0.0
      %1725 = vmatpush1.xpose.msra.mxu0 0.0
      %1726 = vmatprep.subr.mxu0 0.0
      %1727 = vmatpush1.xpose.msra.mxu0 0.0
      %1728 = vmatprep.subr.mxu0 0.0
      %1729 = vmatpush1.xpose.msra.mxu0 0.0
      %1730 = vmatprep.subr.mxu0 0.0
      %1731 = vmatpush1.xpose.msra.mxu0 0.0
      %1732 = vmatprep.subr.mxu0 0.0
      %1733 = vmatpush1.xpose.msra.mxu0 0.0
      %1734 = vmatprep.subr.mxu0 0.0
      %1735 = vmatpush1.xpose.msra.mxu0 0.0
      %1736 = vmatprep.subr.mxu0 0.0
      %1737 = vmatpush1.xpose.msra.mxu0 0.0
      %1738 = vmatprep.subr.mxu0 0.0
      %1739 = vmatpush1.xpose.msra.mxu0 0.0
      %1740 = vmatprep.subr.mxu0 0.0
      %1741 = vmatpush1.xpose.msra.mxu0 0.0
      %1742 = vmatprep.subr.mxu0 0.0
      %1743 = vmatpush1.xpose.msra.mxu0 0.0
      %1744 = vmatprep.subr.mxu0 0.0
      %1745 = vmatpush1.xpose.msra.mxu0 0.0
      %1746 = vmatprep.subr.mxu0 0.0
      %1747 = vmatpush1.xpose.msra.mxu0 0.0
      %1748 = vmatprep.subr.mxu0 0.0
      %1749 = vmatpush1.xpose.msra.mxu0 0.0
      %1750 = vmatprep.subr.mxu0 0.0
      %1751 = vmatpush1.xpose.msra.mxu0 0.0
      %1752 = vmatprep.subr.mxu0 0.0
      %1753 = vmatpush1.xpose.msra.mxu0 0.0
      %1754 = vmatprep.subr.mxu0 0.0
      %1755 = vmatpush1.xpose.msra.mxu0 0.0
      %1756 = vmatprep.subr.mxu0 0.0
      %1757 = vmatpush1.xpose.msra.mxu0 0.0
      %1758 = vmatprep.subr.mxu0 0.0
      %1759 = vmatpush1.xpose.msra.mxu0 0.0
      %1760 = vmatprep.mubr.f32.mxu0 0.0
      %1761 = vmatmul.mubr.f32.gmra.mrb[0].mxu0 %v1676
      %v1762 = vpop.f32.mrb[0].mxu0
      %v1763 = vadd.f32 0.0, %v1762
      %v1764 = vpop.f32.mrb[0].mxu0
      %1765 = vmatprep.mubr.f32.mxu0 0.0
      %1766 = vmatmul.mubr.f32.gmra.mrb[0].mxu0 %v1678
      %v1767 = vpop.f32.mrb[0].mxu0
      %v1768 = vadd.f32 0.0, %v1767
      %v1769 = vpop.f32.mrb[0].mxu0
      %1770 = vmatprep.mubr.f32.mxu0 0.0
      %1771 = vmatmul.mubr.f32.gmra.mrb[0].mxu0 %v1680
      %v1772 = vpop.f32.mrb[0].mxu0
      %v1773 = vadd.f32 0.0, %v1772
      %v1774 = vpop.f32.mrb[0].mxu0
      %1775 = vmatprep.mubr.f32.mxu0 0.0
      %1776 = vmatmul.mubr.f32.gmra.mrb[0].mxu0 %v1682
      %v1777 = vpop.f32.mrb[0].mxu0
      %v1778 = vadd.f32 0.0, %v1777
      %v1779 = vpop.f32.mrb[0].mxu0
      %1780 = vmatprep.mubr.f32.mxu0 0.0
      %1781 = vmatmul.mubr.f32.gmra.mrb[0].mxu0 %v1684
      %v1782 = vpop.f32.mrb[0].mxu0
      %v1783 = vadd.f32 0.0, %v1782
      %v1784 = vpop.f32.mrb[0].mxu0
      %1785 = vmatprep.mubr.f32.mxu0 0.0
      %1786 = vmatmul.mubr.f32.gmra.mrb[0].mxu0 %v1686
      %v1787 = vpop.f32.mrb[0].mxu0
      %v1788 = vadd.f32 0.0, %v1787
      %v1789 = vpop.f32.mrb[0].mxu0
      %1790 = vmatprep.mubr.f32.mxu0 0.0
      %1791 = vmatmul.mubr.f32.gmra.mrb[0].mxu0 %v1688
      %v1792 = vpop.f32.mrb[0].mxu0
      %v1793 = vadd.f32 0.0, %v1792
      %v1794 = vpop.f32.mrb[0].mxu0
      %1795 = vmatprep.mubr.f32.mxu0 0.0
      %1796 = vmatmul.mubr.f32.gmra.mrb[0].mxu0 %v1690
      %v1797 = vpop.f32.mrb[0].mxu0
      %v1798 = vadd.f32 0.0, %v1797
      %v1799 = vpop.f32.mrb[0].mxu0
      %1800 = vdwg.mxu0
      %v1801 = vsel %vm1052, %v1763, -inf
      %1802 = vmax.xlane.f32.xlu0 %v1801
      %v1803 = vpop.xlane.xlu0 %1802
      %v1804 = vsel %vm1052, %v1768, -inf
      %1805 = vmax.xlane.f32.xlu0 %v1804
      %v1806 = vpop.xlane.xlu0 %1805
      %v1807 = vsel %vm1052, %v1773, -inf
      %1808 = vmax.xlane.f32.xlu0 %v1807
      %v1809 = vpop.xlane.xlu0 %1808
      %v1810 = vsel %vm1052, %v1778, -inf
      %1811 = vmax.xlane.f32.xlu0 %v1810
      %v1812 = vpop.xlane.xlu0 %1811
      %v1813 = vsel %vm1052, %v1783, -inf
      %1814 = vmax.xlane.f32.xlu0 %v1813
      %v1815 = vpop.xlane.xlu0 %1814
      %v1816 = vsel %vm1052, %v1788, -inf
      %1817 = vmax.xlane.f32.xlu0 %v1816
      %v1818 = vpop.xlane.xlu0 %1817
      %v1819 = vsel %vm1052, %v1793, -inf
      %1820 = vmax.xlane.f32.xlu0 %v1819
      %v1821 = vpop.xlane.xlu0 %1820
      %v1822 = vsel %vm1052, %v1798, -inf
      %1823 = vmax.xlane.f32.xlu0 %v1822
      %v1824 = vpop.xlane.xlu0 %1823
      %v1825 = vsub.f32 %v1763, %v1803
      %v1826 = vsub.f32 %v1768, %v1806
      %v1827 = vsub.f32 %v1773, %v1809
      %v1828 = vsub.f32 %v1778, %v1812
      %v1829 = vsub.f32 %v1783, %v1815
      %v1830 = vsub.f32 %v1788, %v1818
      %v1831 = vsub.f32 %v1793, %v1821
      %v1832 = vsub.f32 %v1798, %v1824
      %v1833 = vmul.f32 %v1825, 1.442695
      %v1834 = vpow.pop %v1833
      %v1835 = vmul.f32 %v1826, 1.442695
      %v1836 = vpow.pop %v1835
      %v1837 = vmul.f32 %v1827, 1.442695
      %v1838 = vpow.pop %v1837
      %v1839 = vmul.f32 %v1828, 1.442695
      %v1840 = vpow.pop %v1839
      %v1841 = vmul.f32 %v1829, 1.442695
      %v1842 = vpow.pop %v1841
      %v1843 = vmul.f32 %v1830, 1.442695
      %v1844 = vpow.pop %v1843
      %v1845 = vmul.f32 %v1831, 1.442695
      %v1846 = vpow.pop %v1845
      %v1847 = vmul.f32 %v1832, 1.442695
      %v1848 = vpow.pop %v1847
      %v1849 = vsel %vm1052, %v1834, 0.0
      %1850 = vadd.xlane.f32.xlu0 %v1849
      %v1851 = vpop.xlane.xlu0 %1850
      %v1852 = vsel %vm1052, %v1836, 0.0
      %1853 = vadd.xlane.f32.xlu0 %v1852
      %v1854 = vpop.xlane.xlu0 %1853
      %v1855 = vsel %vm1052, %v1838, 0.0
      %1856 = vadd.xlane.f32.xlu0 %v1855
      %v1857 = vpop.xlane.xlu0 %1856
      %v1858 = vsel %vm1052, %v1840, 0.0
      %1859 = vadd.xlane.f32.xlu0 %v1858
      %v1860 = vpop.xlane.xlu0 %1859
      %v1861 = vsel %vm1052, %v1842, 0.0
      %1862 = vadd.xlane.f32.xlu0 %v1861
      %v1863 = vpop.xlane.xlu0 %1862
      %v1864 = vsel %vm1052, %v1844, 0.0
      %1865 = vadd.xlane.f32.xlu0 %v1864
      %v1866 = vpop.xlane.xlu0 %1865
      %v1867 = vsel %vm1052, %v1846, 0.0
      %1868 = vadd.xlane.f32.xlu0 %v1867
      %v1869 = vpop.xlane.xlu0 %1868
      %v1870 = vsel %vm1052, %v1848, 0.0
      %1871 = vadd.xlane.f32.xlu0 %v1870
      %v1872 = vpop.xlane.xlu0 %1871
      %v1873 = vrcp.pop %v1851
      %v1874 = vmul.f32 1.0, %v1873
      %v1875 = vrcp.pop %v1854
      %v1876 = vmul.f32 1.0, %v1875
      %v1877 = vrcp.pop %v1857
      %v1878 = vmul.f32 1.0, %v1877
      %v1879 = vrcp.pop %v1860
      %v1880 = vmul.f32 1.0, %v1879
      %v1881 = vrcp.pop %v1863
      %v1882 = vmul.f32 1.0, %v1881
      %v1883 = vrcp.pop %v1866
      %v1884 = vmul.f32 1.0, %v1883
      %v1885 = vrcp.pop %v1869
      %v1886 = vmul.f32 1.0, %v1885
      %v1887 = vrcp.pop %v1872
      %v1888 = vmul.f32 1.0, %v1887
      %v1889 = vmul.f32 %v1834, %v1874
      %v1890 = vmul.f32 %v1836, %v1876
      %v1891 = vmul.f32 %v1838, %v1878
      %v1892 = vmul.f32 %v1840, %v1880
      %v1893 = vmul.f32 %v1842, %v1882
      %v1894 = vmul.f32 %v1844, %v1884
      %v1895 = vmul.f32 %v1846, %v1886
      %v1896 = vmul.f32 %v1848, %v1888
      %1897 = vrot.lane.b32.xlu0 %v725, 120
      %v1898 = vpop.permute.xlu0 %1897
      %1899 = vrot.lane.b32.xlu0 %v726, 120
      %v1900 = vpop.permute.xlu0 %1899
      %v1904 = vsel %vm1052, %v1889, 0
      %v1907 = vsel %vm1052, %v1890, 0
      %v1910 = vsel %vm1052, %v1891, 0
      %v1913 = vsel %vm1052, %v1892, 0
      %v1916 = vsel %vm1052, %v1893, 0
      %v1919 = vsel %vm1052, %v1894, 0
      %v1922 = vsel %vm1052, %v1895, 0
      %v1925 = vsel %vm1052, %v1896, 0
      %1927 = vmatprep.subr.mxu0 0.0
      %1928 = vmatpush1.msra.mxu0 %v1898
      %1929 = vmatprep.subr.mxu0 0.0
      %1930 = vmatpush1.msra.mxu0 %v1900
      %1931 = vmatprep.subr.mxu0 0.0
      %1932 = vmatpush1.msra.mxu0 0.0
      %1933 = vmatprep.subr.mxu0 0.0
      %1934 = vmatpush1.msra.mxu0 0.0
      %1935 = vmatprep.subr.mxu0 0.0
      %1936 = vmatpush1.msra.mxu0 0.0
      %1937 = vmatprep.subr.mxu0 0.0
      %1938 = vmatpush1.msra.mxu0 0.0
      %1939 = vmatprep.subr.mxu0 0.0
      %1940 = vmatpush1.msra.mxu0 0.0
      %1941 = vmatprep.subr.mxu0 0.0
      %1942 = vmatpush1.msra.mxu0 0.0
      %1943 = vmatprep.subr.mxu0 0.0
      %1944 = vmatpush1.msra.mxu0 0.0
      %1945 = vmatprep.subr.mxu0 0.0
      %1946 = vmatpush1.msra.mxu0 0.0
      %1947 = vmatprep.subr.mxu0 0.0
      %1948 = vmatpush1.msra.mxu0 0.0
      %1949 = vmatprep.subr.mxu0 0.0
      %1950 = vmatpush1.msra.mxu0 0.0
      %1951 = vmatprep.subr.mxu0 0.0
      %1952 = vmatpush1.msra.mxu0 0.0
      %1953 = vmatprep.subr.mxu0 0.0
      %1954 = vmatpush1.msra.mxu0 0.0
      %1955 = vmatprep.subr.mxu0 0.0
      %1956 = vmatpush1.msra.mxu0 0.0
      %1957 = vmatprep.subr.mxu0 0.0
      %1958 = vmatpush1.msra.mxu0 0.0
      %1959 = vmatprep.subr.mxu0 0.0
      %1960 = vmatpush1.msra.mxu0 0.0
      %1961 = vmatprep.subr.mxu0 0.0
      %1962 = vmatpush1.msra.mxu0 0.0
      %1963 = vmatprep.subr.mxu0 0.0
      %1964 = vmatpush1.msra.mxu0 0.0
      %1965 = vmatprep.subr.mxu0 0.0
      %1966 = vmatpush1.msra.mxu0 0.0
      %1967 = vmatprep.subr.mxu0 0.0
      %1968 = vmatpush1.msra.mxu0 0.0
      %1969 = vmatprep.subr.mxu0 0.0
      %1970 = vmatpush1.msra.mxu0 0.0
      %1971 = vmatprep.subr.mxu0 0.0
      %1972 = vmatpush1.msra.mxu0 0.0
      %1973 = vmatprep.subr.mxu0 0.0
      %1974 = vmatpush1.msra.mxu0 0.0
      %1975 = vmatprep.subr.mxu0 0.0
      %1976 = vmatpush1.msra.mxu0 0.0
      %1977 = vmatprep.subr.mxu0 0.0
      %1978 = vmatpush1.msra.mxu0 0.0
      %1979 = vmatprep.subr.mxu0 0.0
      %1980 = vmatpush1.msra.mxu0 0.0
      %1981 = vmatprep.subr.mxu0 0.0
      %1982 = vmatpush1.msra.mxu0 0.0
      %1983 = vmatprep.subr.mxu0 0.0
      %1984 = vmatpush1.msra.mxu0 0.0
      %1985 = vmatprep.subr.mxu0 0.0
      %1986 = vmatpush1.msra.mxu0 0.0
      %1987 = vmatprep.subr.mxu0 0.0
      %1988 = vmatpush1.msra.mxu0 0.0
      %1989 = vmatprep.subr.mxu0 0.0
      %1990 = vmatpush1.msra.mxu0 0.0
      %1991 = vmatprep.mubr.f32.mxu0 0.0
      %1992 = vmatmul.mubr.f32.gmra.mrb[0].mxu0 %v1904
      %v1993 = vpop.f32.mrb[0].mxu0
      %v1994 = vadd.f32 0.0, %v1993
      %v1995 = vpop.f32.mrb[0].mxu0
      %1996 = vmatprep.mubr.f32.mxu0 0.0
      %1997 = vmatmul.mubr.f32.gmra.mrb[0].mxu0 %v1907
      %v1998 = vpop.f32.mrb[0].mxu0
      %v1999 = vadd.f32 0.0, %v1998
      %v2000 = vpop.f32.mrb[0].mxu0
      %2001 = vmatprep.mubr.f32.mxu0 0.0
      %2002 = vmatmul.mubr.f32.gmra.mrb[0].mxu0 %v1910
      %v2003 = vpop.f32.mrb[0].mxu0
      %v2004 = vadd.f32 0.0, %v2003
      %v2005 = vpop.f32.mrb[0].mxu0
      %2006 = vmatprep.mubr.f32.mxu0 0.0
      %2007 = vmatmul.mubr.f32.gmra.mrb[0].mxu0 %v1913
      %v2008 = vpop.f32.mrb[0].mxu0
      %v2009 = vadd.f32 0.0, %v2008
      %v2010 = vpop.f32.mrb[0].mxu0
      %2011 = vmatprep.mubr.f32.mxu0 0.0
      %2012 = vmatmul.mubr.f32.gmra.mrb[0].mxu0 %v1916
      %v2013 = vpop.f32.mrb[0].mxu0
      %v2014 = vadd.f32 0.0, %v2013
      %v2015 = vpop.f32.mrb[0].mxu0
      %2016 = vmatprep.mubr.f32.mxu0 0.0
      %2017 = vmatmul.mubr.f32.gmra.mrb[0].mxu0 %v1919
      %v2018 = vpop.f32.mrb[0].mxu0
      %v2019 = vadd.f32 0.0, %v2018
      %v2020 = vpop.f32.mrb[0].mxu0
      %2021 = vmatprep.mubr.f32.mxu0 0.0
      %2022 = vmatmul.mubr.f32.gmra.mrb[0].mxu0 %v1922
      %v2023 = vpop.f32.mrb[0].mxu0
      %v2024 = vadd.f32 0.0, %v2023
      %v2025 = vpop.f32.mrb[0].mxu0
      %2026 = vmatprep.mubr.f32.mxu0 0.0
      %2027 = vmatmul.mubr.f32.gmra.mrb[0].mxu0 %v1925
      %v2028 = vpop.f32.mrb[0].mxu0
      %v2029 = vadd.f32 0.0, %v2028
      %v2030 = vpop.f32.mrb[0].mxu0
      %2031 = vdwg.mxu0
      %2032 = vrot.lane.b32.xlu0 %v909, 116
      %v2033 = vpop.permute.xlu0 %2032
      %2034 = vrot.lane.b32.xlu0 %v910, 116
      %v2035 = vpop.permute.xlu0 %2034
      %2036 = vrot.lane.b32.xlu0 %v911, 116
      %v2037 = vpop.permute.xlu0 %2036
      %2038 = vrot.lane.b32.xlu0 %v912, 116
      %v2039 = vpop.permute.xlu0 %2038
      %2040 = vrot.lane.b32.xlu0 %v913, 116
      %v2041 = vpop.permute.xlu0 %2040
      %2042 = vrot.lane.b32.xlu0 %v914, 116
      %v2043 = vpop.permute.xlu0 %2042
      %2044 = vrot.lane.b32.xlu0 %v915, 116
      %v2045 = vpop.permute.xlu0 %2044
      %2046 = vrot.lane.b32.xlu0 %v916, 116
      %v2047 = vpop.permute.xlu0 %2046
      %2048 = vrot.lane.b32.xlu0 %v723, 116
      %v2049 = vpop.permute.xlu0 %2048
      %2050 = vrot.lane.b32.xlu0 %v724, 116
      %v2051 = vpop.permute.xlu0 %2050
      %v2052 = vsel %vm744, %v2033, 0
      %v2054 = vsel %vm744, %v2035, 0
      %v2056 = vsel %vm744, %v2037, 0
      %v2058 = vsel %vm744, %v2039, 0
      %v2060 = vsel %vm744, %v2041, 0
      %v2062 = vsel %vm744, %v2043, 0
      %v2064 = vsel %vm744, %v2045, 0
      %v2066 = vsel %vm744, %v2047, 0
      %v2068 = vsel %vm744, %v2049, 0
      %v2070 = vsel %vm744, %v2051, 0
      %2072 = vmatprep.subr.mxu0 0.0
      %2073 = vmatpush1.xpose.msra.mxu0 %v2068
      %2074 = vmatprep.subr.mxu0 0.0
      %2075 = vmatpush1.xpose.msra.mxu0 %v2070
      %2076 = vmatprep.subr.mxu0 0.0
      %2077 = vmatpush1.xpose.msra.mxu0 0.0
      %2078 = vmatprep.subr.mxu0 0.0
      %2079 = vmatpush1.xpose.msra.mxu0 0.0
      %2080 = vmatprep.subr.mxu0 0.0
      %2081 = vmatpush1.xpose.msra.mxu0 0.0
      %2082 = vmatprep.subr.mxu0 0.0
      %2083 = vmatpush1.xpose.msra.mxu0 0.0
      %2084 = vmatprep.subr.mxu0 0.0
      %2085 = vmatpush1.xpose.msra.mxu0 0.0
      %2086 = vmatprep.subr.mxu0 0.0
      %2087 = vmatpush1.xpose.msra.mxu0 0.0
      %2088 = vmatprep.subr.mxu0 0.0
      %2089 = vmatpush1.xpose.msra.mxu0 0.0
      %2090 = vmatprep.subr.mxu0 0.0
      %2091 = vmatpush1.xpose.msra.mxu0 0.0
      %2092 = vmatprep.subr.mxu0 0.0
      %2093 = vmatpush1.xpose.msra.mxu0 0.0
      %2094 = vmatprep.subr.mxu0 0.0
      %2095 = vmatpush1.xpose.msra.mxu0 0.0
      %2096 = vmatprep.subr.mxu0 0.0
      %2097 = vmatpush1.xpose.msra.mxu0 0.0
      %2098 = vmatprep.subr.mxu0 0.0
      %2099 = vmatpush1.xpose.msra.mxu0 0.0
      %2100 = vmatprep.subr.mxu0 0.0
      %2101 = vmatpush1.xpose.msra.mxu0 0.0
      %2102 = vmatprep.subr.mxu0 0.0
      %2103 = vmatpush1.xpose.msra.mxu0 0.0
      %2104 = vmatprep.subr.mxu0 0.0
      %2105 = vmatpush1.xpose.msra.mxu0 0.0
      %2106 = vmatprep.subr.mxu0 0.0
      %2107 = vmatpush1.xpose.msra.mxu0 0.0
      %2108 = vmatprep.subr.mxu0 0.0
      %2109 = vmatpush1.xpose.msra.mxu0 0.0
      %2110 = vmatprep.subr.mxu0 0.0
      %2111 = vmatpush1.xpose.msra.mxu0 0.0
      %2112 = vmatprep.subr.mxu0 0.0
      %2113 = vmatpush1.xpose.msra.mxu0 0.0
      %2114 = vmatprep.subr.mxu0 0.0
      %2115 = vmatpush1.xpose.msra.mxu0 0.0
      %2116 = vmatprep.subr.mxu0 0.0
      %2117 = vmatpush1.xpose.msra.mxu0 0.0
      %2118 = vmatprep.subr.mxu0 0.0
      %2119 = vmatpush1.xpose.msra.mxu0 0.0
      %2120 = vmatprep.subr.mxu0 0.0
      %2121 = vmatpush1.xpose.msra.mxu0 0.0
      %2122 = vmatprep.subr.mxu0 0.0
      %2123 = vmatpush1.xpose.msra.mxu0 0.0
      %2124 = vmatprep.subr.mxu0 0.0
      %2125 = vmatpush1.xpose.msra.mxu0 0.0
      %2126 = vmatprep.subr.mxu0 0.0
      %2127 = vmatpush1.xpose.msra.mxu0 0.0
      %2128 = vmatprep.subr.mxu0 0.0
      %2129 = vmatpush1.xpose.msra.mxu0 0.0
      %2130 = vmatprep.subr.mxu0 0.0
      %2131 = vmatpush1.xpose.msra.mxu0 0.0
      %2132 = vmatprep.subr.mxu0 0.0
      %2133 = vmatpush1.xpose.msra.mxu0 0.0
      %2134 = vmatprep.subr.mxu0 0.0
      %2135 = vmatpush1.xpose.msra.mxu0 0.0
      %2136 = vmatprep.mubr.f32.mxu0 0.0
      %2137 = vmatmul.mubr.f32.gmra.mrb[0].mxu0 %v2052
      %v2138 = vpop.f32.mrb[0].mxu0
      %v2139 = vadd.f32 0.0, %v2138
      %v2140 = vpop.f32.mrb[0].mxu0
      %2141 = vmatprep.mubr.f32.mxu0 0.0
      %2142 = vmatmul.mubr.f32.gmra.mrb[0].mxu0 %v2054
      %v2143 = vpop.f32.mrb[0].mxu0
      %v2144 = vadd.f32 0.0, %v2143
      %v2145 = vpop.f32.mrb[0].mxu0
      %2146 = vmatprep.mubr.f32.mxu0 0.0
      %2147 = vmatmul.mubr.f32.gmra.mrb[0].mxu0 %v2056
      %v2148 = vpop.f32.mrb[0].mxu0
      %v2149 = vadd.f32 0.0, %v2148
      %v2150 = vpop.f32.mrb[0].mxu0
      %2151 = vmatprep.mubr.f32.mxu0 0.0
      %2152 = vmatmul.mubr.f32.gmra.mrb[0].mxu0 %v2058
      %v2153 = vpop.f32.mrb[0].mxu0
      %v2154 = vadd.f32 0.0, %v2153
      %v2155 = vpop.f32.mrb[0].mxu0
      %2156 = vmatprep.mubr.f32.mxu0 0.0
      %2157 = vmatmul.mubr.f32.gmra.mrb[0].mxu0 %v2060
      %v2158 = vpop.f32.mrb[0].mxu0
      %v2159 = vadd.f32 0.0, %v2158
      %v2160 = vpop.f32.mrb[0].mxu0
      %2161 = vmatprep.mubr.f32.mxu0 0.0
      %2162 = vmatmul.mubr.f32.gmra.mrb[0].mxu0 %v2062
      %v2163 = vpop.f32.mrb[0].mxu0
      %v2164 = vadd.f32 0.0, %v2163
      %v2165 = vpop.f32.mrb[0].mxu0
      %2166 = vmatprep.mubr.f32.mxu0 0.0
      %2167 = vmatmul.mubr.f32.gmra.mrb[0].mxu0 %v2064
      %v2168 = vpop.f32.mrb[0].mxu0
      %v2169 = vadd.f32 0.0, %v2168
      %v2170 = vpop.f32.mrb[0].mxu0
      %2171 = vmatprep.mubr.f32.mxu0 0.0
      %2172 = vmatmul.mubr.f32.gmra.mrb[0].mxu0 %v2066
      %v2173 = vpop.f32.mrb[0].mxu0
      %v2174 = vadd.f32 0.0, %v2173
      %v2175 = vpop.f32.mrb[0].mxu0
      %2176 = vdwg.mxu0
      %v2177 = vsel %vm1052, %v2139, -inf
      %2178 = vmax.xlane.f32.xlu0 %v2177
      %v2179 = vpop.xlane.xlu0 %2178
      %v2180 = vsel %vm1052, %v2144, -inf
      %2181 = vmax.xlane.f32.xlu0 %v2180
      %v2182 = vpop.xlane.xlu0 %2181
      %v2183 = vsel %vm1052, %v2149, -inf
      %2184 = vmax.xlane.f32.xlu0 %v2183
      %v2185 = vpop.xlane.xlu0 %2184
      %v2186 = vsel %vm1052, %v2154, -inf
      %2187 = vmax.xlane.f32.xlu0 %v2186
      %v2188 = vpop.xlane.xlu0 %2187
      %v2189 = vsel %vm1052, %v2159, -inf
      %2190 = vmax.xlane.f32.xlu0 %v2189
      %v2191 = vpop.xlane.xlu0 %2190
      %v2192 = vsel %vm1052, %v2164, -inf
      %2193 = vmax.xlane.f32.xlu0 %v2192
      %v2194 = vpop.xlane.xlu0 %2193
      %v2195 = vsel %vm1052, %v2169, -inf
      %2196 = vmax.xlane.f32.xlu0 %v2195
      %v2197 = vpop.xlane.xlu0 %2196
      %v2198 = vsel %vm1052, %v2174, -inf
      %2199 = vmax.xlane.f32.xlu0 %v2198
      %v2200 = vpop.xlane.xlu0 %2199
      %v2201 = vsub.f32 %v2139, %v2179
      %v2202 = vsub.f32 %v2144, %v2182
      %v2203 = vsub.f32 %v2149, %v2185
      %v2204 = vsub.f32 %v2154, %v2188
      %v2205 = vsub.f32 %v2159, %v2191
      %v2206 = vsub.f32 %v2164, %v2194
      %v2207 = vsub.f32 %v2169, %v2197
      %v2208 = vsub.f32 %v2174, %v2200
      %v2209 = vmul.f32 %v2201, 1.442695
      %v2210 = vpow.pop %v2209
      %v2211 = vmul.f32 %v2202, 1.442695
      %v2212 = vpow.pop %v2211
      %v2213 = vmul.f32 %v2203, 1.442695
      %v2214 = vpow.pop %v2213
      %v2215 = vmul.f32 %v2204, 1.442695
      %v2216 = vpow.pop %v2215
      %v2217 = vmul.f32 %v2205, 1.442695
      %v2218 = vpow.pop %v2217
      %v2219 = vmul.f32 %v2206, 1.442695
      %v2220 = vpow.pop %v2219
      %v2221 = vmul.f32 %v2207, 1.442695
      %v2222 = vpow.pop %v2221
      %v2223 = vmul.f32 %v2208, 1.442695
      %v2224 = vpow.pop %v2223
      %v2225 = vsel %vm1052, %v2210, 0.0
      %2226 = vadd.xlane.f32.xlu0 %v2225
      %v2227 = vpop.xlane.xlu0 %2226
      %v2228 = vsel %vm1052, %v2212, 0.0
      %2229 = vadd.xlane.f32.xlu0 %v2228
      %v2230 = vpop.xlane.xlu0 %2229
      %v2231 = vsel %vm1052, %v2214, 0.0
      %2232 = vadd.xlane.f32.xlu0 %v2231
      %v2233 = vpop.xlane.xlu0 %2232
      %v2234 = vsel %vm1052, %v2216, 0.0
      %2235 = vadd.xlane.f32.xlu0 %v2234
      %v2236 = vpop.xlane.xlu0 %2235
      %v2237 = vsel %vm1052, %v2218, 0.0
      %2238 = vadd.xlane.f32.xlu0 %v2237
      %v2239 = vpop.xlane.xlu0 %2238
      %v2240 = vsel %vm1052, %v2220, 0.0
      %2241 = vadd.xlane.f32.xlu0 %v2240
      %v2242 = vpop.xlane.xlu0 %2241
      %v2243 = vsel %vm1052, %v2222, 0.0
      %2244 = vadd.xlane.f32.xlu0 %v2243
      %v2245 = vpop.xlane.xlu0 %2244
      %v2246 = vsel %vm1052, %v2224, 0.0
      %2247 = vadd.xlane.f32.xlu0 %v2246
      %v2248 = vpop.xlane.xlu0 %2247
      %v2249 = vrcp.pop %v2227
      %v2250 = vmul.f32 1.0, %v2249
      %v2251 = vrcp.pop %v2230
      %v2252 = vmul.f32 1.0, %v2251
      %v2253 = vrcp.pop %v2233
      %v2254 = vmul.f32 1.0, %v2253
      %v2255 = vrcp.pop %v2236
      %v2256 = vmul.f32 1.0, %v2255
      %v2257 = vrcp.pop %v2239
      %v2258 = vmul.f32 1.0, %v2257
      %v2259 = vrcp.pop %v2242
      %v2260 = vmul.f32 1.0, %v2259
      %v2261 = vrcp.pop %v2245
      %v2262 = vmul.f32 1.0, %v2261
      %v2263 = vrcp.pop %v2248
      %v2264 = vmul.f32 1.0, %v2263
      %v2265 = vmul.f32 %v2210, %v2250
      %v2266 = vmul.f32 %v2212, %v2252
      %v2267 = vmul.f32 %v2214, %v2254
      %v2268 = vmul.f32 %v2216, %v2256
      %v2269 = vmul.f32 %v2218, %v2258
      %v2270 = vmul.f32 %v2220, %v2260
      %v2271 = vmul.f32 %v2222, %v2262
      %v2272 = vmul.f32 %v2224, %v2264
      %2273 = vrot.lane.b32.xlu0 %v725, 116
      %v2274 = vpop.permute.xlu0 %2273
      %2275 = vrot.lane.b32.xlu0 %v726, 116
      %v2276 = vpop.permute.xlu0 %2275
      %v2280 = vsel %vm1052, %v2265, 0
      %v2283 = vsel %vm1052, %v2266, 0
      %v2286 = vsel %vm1052, %v2267, 0
      %v2289 = vsel %vm1052, %v2268, 0
      %v2292 = vsel %vm1052, %v2269, 0
      %v2295 = vsel %vm1052, %v2270, 0
      %v2298 = vsel %vm1052, %v2271, 0
      %v2301 = vsel %vm1052, %v2272, 0
      %2303 = vmatprep.subr.mxu0 0.0
      %2304 = vmatpush1.msra.mxu0 %v2274
      %2305 = vmatprep.subr.mxu0 0.0
      %2306 = vmatpush1.msra.mxu0 %v2276
      %2307 = vmatprep.subr.mxu0 0.0
      %2308 = vmatpush1.msra.mxu0 0.0
      %2309 = vmatprep.subr.mxu0 0.0
      %2310 = vmatpush1.msra.mxu0 0.0
      %2311 = vmatprep.subr.mxu0 0.0
      %2312 = vmatpush1.msra.mxu0 0.0
      %2313 = vmatprep.subr.mxu0 0.0
      %2314 = vmatpush1.msra.mxu0 0.0
      %2315 = vmatprep.subr.mxu0 0.0
      %2316 = vmatpush1.msra.mxu0 0.0
      %2317 = vmatprep.subr.mxu0 0.0
      %2318 = vmatpush1.msra.mxu0 0.0
      %2319 = vmatprep.subr.mxu0 0.0
      %2320 = vmatpush1.msra.mxu0 0.0
      %2321 = vmatprep.subr.mxu0 0.0
      %2322 = vmatpush1.msra.mxu0 0.0
      %2323 = vmatprep.subr.mxu0 0.0
      %2324 = vmatpush1.msra.mxu0 0.0
      %2325 = vmatprep.subr.mxu0 0.0
      %2326 = vmatpush1.msra.mxu0 0.0
      %2327 = vmatprep.subr.mxu0 0.0
      %2328 = vmatpush1.msra.mxu0 0.0
      %2329 = vmatprep.subr.mxu0 0.0
      %2330 = vmatpush1.msra.mxu0 0.0
      %2331 = vmatprep.subr.mxu0 0.0
      %2332 = vmatpush1.msra.mxu0 0.0
      %2333 = vmatprep.subr.mxu0 0.0
      %2334 = vmatpush1.msra.mxu0 0.0
      %2335 = vmatprep.subr.mxu0 0.0
      %2336 = vmatpush1.msra.mxu0 0.0
      %2337 = vmatprep.subr.mxu0 0.0
      %2338 = vmatpush1.msra.mxu0 0.0
      %2339 = vmatprep.subr.mxu0 0.0
      %2340 = vmatpush1.msra.mxu0 0.0
      %2341 = vmatprep.subr.mxu0 0.0
      %2342 = vmatpush1.msra.mxu0 0.0
      %2343 = vmatprep.subr.mxu0 0.0
      %2344 = vmatpush1.msra.mxu0 0.0
      %2345 = vmatprep.subr.mxu0 0.0
      %2346 = vmatpush1.msra.mxu0 0.0
      %2347 = vmatprep.subr.mxu0 0.0
      %2348 = vmatpush1.msra.mxu0 0.0
      %2349 = vmatprep.subr.mxu0 0.0
      %2350 = vmatpush1.msra.mxu0 0.0
      %2351 = vmatprep.subr.mxu0 0.0
      %2352 = vmatpush1.msra.mxu0 0.0
      %2353 = vmatprep.subr.mxu0 0.0
      %2354 = vmatpush1.msra.mxu0 0.0
      %2355 = vmatprep.subr.mxu0 0.0
      %2356 = vmatpush1.msra.mxu0 0.0
      %2357 = vmatprep.subr.mxu0 0.0
      %2358 = vmatpush1.msra.mxu0 0.0
      %2359 = vmatprep.subr.mxu0 0.0
      %2360 = vmatpush1.msra.mxu0 0.0
      %2361 = vmatprep.subr.mxu0 0.0
      %2362 = vmatpush1.msra.mxu0 0.0
      %2363 = vmatprep.subr.mxu0 0.0
      %2364 = vmatpush1.msra.mxu0 0.0
      %2365 = vmatprep.subr.mxu0 0.0
      %2366 = vmatpush1.msra.mxu0 0.0
      %2367 = vmatprep.mubr.f32.mxu0 0.0
      %2368 = vmatmul.mubr.f32.gmra.mrb[0].mxu0 %v2280
      %v2369 = vpop.f32.mrb[0].mxu0
      %v2370 = vadd.f32 0.0, %v2369
      %v2371 = vpop.f32.mrb[0].mxu0
      %2372 = vmatprep.mubr.f32.mxu0 0.0
      %2373 = vmatmul.mubr.f32.gmra.mrb[0].mxu0 %v2283
      %v2374 = vpop.f32.mrb[0].mxu0
      %v2375 = vadd.f32 0.0, %v2374
      %v2376 = vpop.f32.mrb[0].mxu0
      %2377 = vmatprep.mubr.f32.mxu0 0.0
      %2378 = vmatmul.mubr.f32.gmra.mrb[0].mxu0 %v2286
      %v2379 = vpop.f32.mrb[0].mxu0
      %v2380 = vadd.f32 0.0, %v2379
      %v2381 = vpop.f32.mrb[0].mxu0
      %2382 = vmatprep.mubr.f32.mxu0 0.0
      %2383 = vmatmul.mubr.f32.gmra.mrb[0].mxu0 %v2289
      %v2384 = vpop.f32.mrb[0].mxu0
      %v2385 = vadd.f32 0.0, %v2384
      %v2386 = vpop.f32.mrb[0].mxu0
      %2387 = vmatprep.mubr.f32.mxu0 0.0
      %2388 = vmatmul.mubr.f32.gmra.mrb[0].mxu0 %v2292
      %v2389 = vpop.f32.mrb[0].mxu0
      %v2390 = vadd.f32 0.0, %v2389
      %v2391 = vpop.f32.mrb[0].mxu0
      %2392 = vmatprep.mubr.f32.mxu0 0.0
      %2393 = vmatmul.mubr.f32.gmra.mrb[0].mxu0 %v2295
      %v2394 = vpop.f32.mrb[0].mxu0
      %v2395 = vadd.f32 0.0, %v2394
      %v2396 = vpop.f32.mrb[0].mxu0
      %2397 = vmatprep.mubr.f32.mxu0 0.0
      %2398 = vmatmul.mubr.f32.gmra.mrb[0].mxu0 %v2298
      %v2399 = vpop.f32.mrb[0].mxu0
      %v2400 = vadd.f32 0.0, %v2399
      %v2401 = vpop.f32.mrb[0].mxu0
      %2402 = vmatprep.mubr.f32.mxu0 0.0
      %2403 = vmatmul.mubr.f32.gmra.mrb[0].mxu0 %v2301
      %v2404 = vpop.f32.mrb[0].mxu0
      %v2405 = vadd.f32 0.0, %v2404
      %v2406 = vpop.f32.mrb[0].mxu0
      %2407 = vdwg.mxu0
      %2408 = vst.msk [vmem:[%s567] sm:$0xff] %vm1052, %v1141
      %2409 = vst.msk [vmem:[%s567 + $0x8] sm:$0xff] %vm1052, %v1142
      %2410 = vst.msk [vmem:[%s567 + $0x10] sm:$0xff] %vm1052, %v1143
      %2411 = vst.msk [vmem:[%s567 + $0x18] sm:$0xff] %vm1052, %v1144
      %2412 = vst.msk [vmem:[%s567 + $0x20] sm:$0xff] %vm1052, %v1145
      %2413 = vst.msk [vmem:[%s567 + $0x28] sm:$0xff] %vm1052, %v1146
      %2414 = vst.msk [vmem:[%s567 + $0x30] sm:$0xff] %vm1052, %v1147
      %2415 = vst.msk [vmem:[%s567 + $0x38] sm:$0xff] %vm1052, %v1148
      %2416 = vst.msk [vmem:[%s567 + $0x40] sm:$0xff] %vm1052, %v1511
      %2417 = vst.msk [vmem:[%s567 + $0x48] sm:$0xff] %vm1052, %v1512
      %2418 = vst.msk [vmem:[%s567 + $0x50] sm:$0xff] %vm1052, %v1513
      %2419 = vst.msk [vmem:[%s567 + $0x58] sm:$0xff] %vm1052, %v1514
      %2420 = vst.msk [vmem:[%s567 + $0x60] sm:$0xff] %vm1052, %v1515
      %2421 = vst.msk [vmem:[%s567 + $0x68] sm:$0xff] %vm1052, %v1516
      %2422 = vst.msk [vmem:[%s567 + $0x70] sm:$0xff] %vm1052, %v1517
      %2423 = vst.msk [vmem:[%s567 + $0x78] sm:$0xff] %vm1052, %v1518
      %2424 = vst.msk [vmem:[%s567 + $0x80] sm:$0xff] %vm1052, %v1889
      %2425 = vst.msk [vmem:[%s567 + $0x88] sm:$0xff] %vm1052, %v1890
      %2426 = vst.msk [vmem:[%s567 + $0x90] sm:$0xff] %vm1052, %v1891
      %2427 = vst.msk [vmem:[%s567 + $0x98] sm:$0xff] %vm1052, %v1892
      %2428 = vst.msk [vmem:[%s567 + $0xa0] sm:$0xff] %vm1052, %v1893
      %2429 = vst.msk [vmem:[%s567 + $0xa8] sm:$0xff] %vm1052, %v1894
      %2430 = vst.msk [vmem:[%s567 + $0xb0] sm:$0xff] %vm1052, %v1895
      %2431 = vst.msk [vmem:[%s567 + $0xb8] sm:$0xff] %vm1052, %v1896
      %2432 = vst.msk [vmem:[%s567 + $0xc0] sm:$0xff] %vm1052, %v2265
      %2433 = vst.msk [vmem:[%s567 + $0xc8] sm:$0xff] %vm1052, %v2266
      %2434 = vst.msk [vmem:[%s567 + $0xd0] sm:$0xff] %vm1052, %v2267
      %2435 = vst.msk [vmem:[%s567 + $0xd8] sm:$0xff] %vm1052, %v2268
      %2436 = vst.msk [vmem:[%s567 + $0xe0] sm:$0xff] %vm1052, %v2269
      %2437 = vst.msk [vmem:[%s567 + $0xe8] sm:$0xff] %vm1052, %v2270
      %2438 = vst.msk [vmem:[%s567 + $0xf0] sm:$0xff] %vm1052, %v2271
      %2439 = vst.msk [vmem:[%s567 + $0xf8] sm:$0xff] %vm1052, %v2272
      %2448 = vrot.lane.b32.xlu0 %v1618, 4
      %v2449 = vpop.permute.xlu0 %2448
      %2450 = vrot.lane.b32.xlu0 %v1623, 4
      %v2451 = vpop.permute.xlu0 %2450
      %2452 = vrot.lane.b32.xlu0 %v1628, 4
      %v2453 = vpop.permute.xlu0 %2452
      %2454 = vrot.lane.b32.xlu0 %v1633, 4
      %v2455 = vpop.permute.xlu0 %2454
      %2456 = vrot.lane.b32.xlu0 %v1638, 4
      %v2457 = vpop.permute.xlu0 %2456
      %2458 = vrot.lane.b32.xlu0 %v1643, 4
      %v2459 = vpop.permute.xlu0 %2458
      %2460 = vrot.lane.b32.xlu0 %v1648, 4
      %v2461 = vpop.permute.xlu0 %2460
      %2462 = vrot.lane.b32.xlu0 %v1653, 4
      %v2463 = vpop.permute.xlu0 %2462
      %2480 = vrot.lane.b32.xlu0 %v1994, 8
      %v2481 = vpop.permute.xlu0 %2480
      %2482 = vrot.lane.b32.xlu0 %v1999, 8
      %v2483 = vpop.permute.xlu0 %2482
      %2484 = vrot.lane.b32.xlu0 %v2004, 8
      %v2485 = vpop.permute.xlu0 %2484
      %2486 = vrot.lane.b32.xlu0 %v2009, 8
      %v2487 = vpop.permute.xlu0 %2486
      %2488 = vrot.lane.b32.xlu0 %v2014, 8
      %v2489 = vpop.permute.xlu0 %2488
      %2490 = vrot.lane.b32.xlu0 %v2019, 8
      %v2491 = vpop.permute.xlu0 %2490
      %2492 = vrot.lane.b32.xlu0 %v2024, 8
      %v2493 = vpop.permute.xlu0 %2492
      %2494 = vrot.lane.b32.xlu0 %v2029, 8
      %v2495 = vpop.permute.xlu0 %2494
      %2512 = vrot.lane.b32.xlu0 %v2370, 12
      %v2513 = vpop.permute.xlu0 %2512
      %2514 = vrot.lane.b32.xlu0 %v2375, 12
      %v2515 = vpop.permute.xlu0 %2514
      %2516 = vrot.lane.b32.xlu0 %v2380, 12
      %v2517 = vpop.permute.xlu0 %2516
      %2518 = vrot.lane.b32.xlu0 %v2385, 12
      %v2519 = vpop.permute.xlu0 %2518
      %2520 = vrot.lane.b32.xlu0 %v2390, 12
      %v2521 = vpop.permute.xlu0 %2520
      %2522 = vrot.lane.b32.xlu0 %v2395, 12
      %v2523 = vpop.permute.xlu0 %2522
      %2524 = vrot.lane.b32.xlu0 %v2400, 12
      %v2525 = vpop.permute.xlu0 %2524
      %2526 = vrot.lane.b32.xlu0 %v2405, 12
      %v2527 = vpop.permute.xlu0 %2526
      %v2536 = vsel %vm744, %v1240, %v2449
      %v2537 = vsel %vm744, %v1245, %v2451
      %v2538 = vsel %vm744, %v1250, %v2453
      %v2539 = vsel %vm744, %v1255, %v2455
      %v2540 = vsel %vm744, %v1260, %v2457
      %v2541 = vsel %vm744, %v1265, %v2459
      %v2542 = vsel %vm744, %v1270, %v2461
      %v2543 = vsel %vm744, %v1275, %v2463
      %vm2544 = vcmask 64512
      %v2545 = vsel %vm2544, %v2536, %v2481
      %v2546 = vsel %vm2544, %v2537, %v2483
      %v2547 = vsel %vm2544, %v2538, %v2485
      %v2548 = vsel %vm2544, %v2539, %v2487
      %v2549 = vsel %vm2544, %v2540, %v2489
      %v2550 = vsel %vm2544, %v2541, %v2491
      %v2551 = vsel %vm2544, %v2542, %v2493
      %v2552 = vsel %vm2544, %v2543, %v2495
      %vm2553 = vcmask 97280
      %v2554 = vsel %vm2553, %v2545, %v2513
      %v2555 = vsel %vm2553, %v2546, %v2515
      %v2556 = vsel %vm2553, %v2547, %v2517
      %v2557 = vsel %vm2553, %v2548, %v2519
      %v2558 = vsel %vm2553, %v2549, %v2521
      %v2559 = vsel %vm2553, %v2550, %v2523
      %v2560 = vsel %vm2553, %v2551, %v2525
      %v2561 = vsel %vm2553, %v2552, %v2527
      %v2562 = vld [vmem:[%s8] sm:$0xff]
      %v2563 = vld [vmem:[%s8 + $0x8] sm:$0xff]
      %v2565 = vsel %vm1052, %v2554, 0
      %v2568 = vsel %vm1052, %v2555, 0
      %v2571 = vsel %vm1052, %v2556, 0
      %v2574 = vsel %vm1052, %v2557, 0
      %v2577 = vsel %vm1052, %v2558, 0
      %v2580 = vsel %vm1052, %v2559, 0
      %v2583 = vsel %vm1052, %v2560, 0
      %v2586 = vsel %vm1052, %v2561, 0
      %2588 = vmatprep.subr.mxu0 0.0
      %2589 = vmatpush1.msra.mxu0 %v2562
      %2590 = vmatprep.subr.mxu0 0.0
      %2591 = vmatpush1.msra.mxu0 %v2563
      %2592 = vmatprep.subr.mxu0 0.0
      %2593 = vmatpush1.msra.mxu0 0.0
      %2594 = vmatprep.subr.mxu0 0.0
      %2595 = vmatpush1.msra.mxu0 0.0
      %2596 = vmatprep.subr.mxu0 0.0
      %2597 = vmatpush1.msra.mxu0 0.0
      %2598 = vmatprep.subr.mxu0 0.0
      %2599 = vmatpush1.msra.mxu0 0.0
      %2600 = vmatprep.subr.mxu0 0.0
      %2601 = vmatpush1.msra.mxu0 0.0
      %2602 = vmatprep.subr.mxu0 0.0
      %2603 = vmatpush1.msra.mxu0 0.0
      %2604 = vmatprep.subr.mxu0 0.0
      %2605 = vmatpush1.msra.mxu0 0.0
      %2606 = vmatprep.subr.mxu0 0.0
      %2607 = vmatpush1.msra.mxu0 0.0
      %2608 = vmatprep.subr.mxu0 0.0
      %2609 = vmatpush1.msra.mxu0 0.0
      %2610 = vmatprep.subr.mxu0 0.0
      %2611 = vmatpush1.msra.mxu0 0.0
      %2612 = vmatprep.subr.mxu0 0.0
      %2613 = vmatpush1.msra.mxu0 0.0
      %2614 = vmatprep.subr.mxu0 0.0
      %2615 = vmatpush1.msra.mxu0 0.0
      %2616 = vmatprep.subr.mxu0 0.0
      %2617 = vmatpush1.msra.mxu0 0.0
      %2618 = vmatprep.subr.mxu0 0.0
      %2619 = vmatpush1.msra.mxu0 0.0
      %2620 = vmatprep.subr.mxu0 0.0
      %2621 = vmatpush1.msra.mxu0 0.0
      %2622 = vmatprep.subr.mxu0 0.0
      %2623 = vmatpush1.msra.mxu0 0.0
      %2624 = vmatprep.subr.mxu0 0.0
      %2625 = vmatpush1.msra.mxu0 0.0
      %2626 = vmatprep.subr.mxu0 0.0
      %2627 = vmatpush1.msra.mxu0 0.0
      %2628 = vmatprep.subr.mxu0 0.0
      %2629 = vmatpush1.msra.mxu0 0.0
      %2630 = vmatprep.subr.mxu0 0.0
      %2631 = vmatpush1.msra.mxu0 0.0
      %2632 = vmatprep.subr.mxu0 0.0
      %2633 = vmatpush1.msra.mxu0 0.0
      %2634 = vmatprep.subr.mxu0 0.0
      %2635 = vmatpush1.msra.mxu0 0.0
      %2636 = vmatprep.subr.mxu0 0.0
      %2637 = vmatpush1.msra.mxu0 0.0
      %2638 = vmatprep.subr.mxu0 0.0
      %2639 = vmatpush1.msra.mxu0 0.0
      %2640 = vmatprep.subr.mxu0 0.0
      %2641 = vmatpush1.msra.mxu0 0.0
      %2642 = vmatprep.subr.mxu0 0.0
      %2643 = vmatpush1.msra.mxu0 0.0
      %2644 = vmatprep.subr.mxu0 0.0
      %2645 = vmatpush1.msra.mxu0 0.0
      %2646 = vmatprep.subr.mxu0 0.0
      %2647 = vmatpush1.msra.mxu0 0.0
      %2648 = vmatprep.subr.mxu0 0.0
      %2649 = vmatpush1.msra.mxu0 0.0
      %2650 = vmatprep.subr.mxu0 0.0
      %2651 = vmatpush1.msra.mxu0 0.0
      %2652 = vmatprep.mubr.f32.mxu0 0.0
      %2653 = vmatmul.mubr.f32.gmra.mrb[0].mxu0 %v2565
      %v2654 = vpop.f32.mrb[0].mxu0
      %v2655 = vadd.f32 0.0, %v2654
      %v2656 = vpop.f32.mrb[0].mxu0
      %2657 = vmatprep.mubr.f32.mxu0 0.0
      %2658 = vmatmul.mubr.f32.gmra.mrb[0].mxu0 %v2568
      %v2659 = vpop.f32.mrb[0].mxu0
      %v2660 = vadd.f32 0.0, %v2659
      %v2661 = vpop.f32.mrb[0].mxu0
      %2662 = vmatprep.mubr.f32.mxu0 0.0
      %2663 = vmatmul.mubr.f32.gmra.mrb[0].mxu0 %v2571
      %v2664 = vpop.f32.mrb[0].mxu0
      %v2665 = vadd.f32 0.0, %v2664
      %v2666 = vpop.f32.mrb[0].mxu0
      %2667 = vmatprep.mubr.f32.mxu0 0.0
      %2668 = vmatmul.mubr.f32.gmra.mrb[0].mxu0 %v2574
      %v2669 = vpop.f32.mrb[0].mxu0
      %v2670 = vadd.f32 0.0, %v2669
      %v2671 = vpop.f32.mrb[0].mxu0
      %2672 = vmatprep.mubr.f32.mxu0 0.0
      %2673 = vmatmul.mubr.f32.gmra.mrb[0].mxu0 %v2577
      %v2674 = vpop.f32.mrb[0].mxu0
      %v2675 = vadd.f32 0.0, %v2674
      %v2676 = vpop.f32.mrb[0].mxu0
      %2677 = vmatprep.mubr.f32.mxu0 0.0
      %2678 = vmatmul.mubr.f32.gmra.mrb[0].mxu0 %v2580
      %v2679 = vpop.f32.mrb[0].mxu0
      %v2680 = vadd.f32 0.0, %v2679
      %v2681 = vpop.f32.mrb[0].mxu0
      %2682 = vmatprep.mubr.f32.mxu0 0.0
      %2683 = vmatmul.mubr.f32.gmra.mrb[0].mxu0 %v2583
      %v2684 = vpop.f32.mrb[0].mxu0
      %v2685 = vadd.f32 0.0, %v2684
      %v2686 = vpop.f32.mrb[0].mxu0
      %2687 = vmatprep.mubr.f32.mxu0 0.0
      %2688 = vmatmul.mubr.f32.gmra.mrb[0].mxu0 %v2586
      %v2689 = vpop.f32.mrb[0].mxu0
      %v2690 = vadd.f32 0.0, %v2689
      %v2691 = vpop.f32.mrb[0].mxu0
      %2692 = vdwg.mxu0
      %v2693 = vadd.f32 %v893, %v2655
      %v2694 = vadd.f32 %v894, %v2660
      %v2695 = vadd.f32 %v895, %v2665
      %v2696 = vadd.f32 %v896, %v2670
      %v2697 = vadd.f32 %v897, %v2675
      %v2698 = vadd.f32 %v898, %v2680
      %v2699 = vadd.f32 %v899, %v2685
      %v2700 = vadd.f32 %v900, %v2690
      %2701 = vst.msk [vmem:[%s557] sm:$0xff] %vm1052, %v2693
      %2702 = vst.msk [vmem:[%s557 + $0x8] sm:$0xff] %vm1052, %v2694
      %2703 = vst.msk [vmem:[%s557 + $0x10] sm:$0xff] %vm1052, %v2695
      %2704 = vst.msk [vmem:[%s557 + $0x18] sm:$0xff] %vm1052, %v2696
      %2705 = vst.msk [vmem:[%s557 + $0x20] sm:$0xff] %vm1052, %v2697
      %2706 = vst.msk [vmem:[%s557 + $0x28] sm:$0xff] %vm1052, %v2698
      %2707 = vst.msk [vmem:[%s557 + $0x30] sm:$0xff] %vm1052, %v2699
      %2708 = vst.msk [vmem:[%s557 + $0x38] sm:$0xff] %vm1052, %v2700
      %s2709 = smul.u32 8, %s29
      %p2710 = scmp.lt.s32.totalorder %s28, 1
      %s2711 = scalar_select %p2710, %s28, 1
      %p2712 = scmp.lt.s32.totalorder %s2709, 7
      %s2713 = scalar_select %p2712, %s2709, 7
      %s2714 = smul.addr %s2711, 8
      %s2715 = sadd.s32 %s2713, %s2714
      %s2716 = smul.addr %s2715, 8
      %s2717 = scalar_lea.vmem %s11, %s2716
      %s2718 = smul.u32 8, %s29
      %p2719 = scmp.lt.s32.totalorder %s28, 1
      %s2720 = scalar_select %p2719, %s28, 1
      %p2721 = scmp.lt.s32.totalorder %s2718, 7
      %s2722 = scalar_select %p2721, %s2718, 7
      %s2723 = smul.addr %s2720, 32
      %s2724 = sadd.s32 %s2722, %s2723
      %s2725 = smul.addr %s2724, 8
      %s2726 = scalar_lea.vmem %s12, %s2725
      // Predicated region
      $region69: #{wavelet_block_forward.6} parent=63 // pred_check
        %p2727 = pneg %p313
      $region70: #{wavelet_block_forward.6} parent=63 // pred_check_branch
        %2729 = sbr.rel (%p2727) target = $region72
      $region71: #{wavelet_block_forward.6} parent=63 // pred_region
        %s2730 = smul.u32 8, %s29
      $region72: #{wavelet_block_forward.6} parent=63 // pred_fallthru
        _
      // Predicated region
      $region73: #{wavelet_block_forward.6} parent=63 // pred_check
        %p2731 = pneg %p341
      $region74: #{wavelet_block_forward.6} parent=63 // pred_check_branch
        %2733 = sbr.rel (%p2731) target = $region76
      $region75: #{wavelet_block_forward.6} parent=63 // pred_region
        %s2734 = smul.u32 8, %s29
      $region76: #{wavelet_block_forward.6} parent=63 // pred_fallthru
        _
    $region64: #{wavelet_block_forward.6} parent=5 // pred_fallthru
      _
    %p2735 = scmp.le.s32.totalorder 2, %s19
    // Predicated region
    $region77: #{wavelet_block_forward.6} parent=5 // pred_check
      %p2736 = pneg %p2735
    $region78: #{wavelet_block_forward.6} parent=5 // pred_check_branch
      %2738 = sbr.rel (%p2736) target = $region80
    $region79: #{wavelet_block_forward.6} parent=5 // pred_region
      %s2739 = ssub.s32 %s19, 2
      // Predicated region
      $region81: #{wavelet_block_forward.6} parent=79 // pred_check
        %p2740 = pneg %p319
      $region82: #{wavelet_block_forward.6} parent=79 // pred_check_branch
        %2742 = sbr.rel (%p2740) target = $region84
      $region83: #{wavelet_block_forward.6} parent=79 // pred_region
        %s2743 = smul.u32 8, %s31
        %p2744 = scmp.lt.s32.totalorder %s30, 1
        %s2745 = scalar_select %p2744, %s30, 1
        %p2746 = scmp.lt.s32.totalorder %s2743, 7
        %s2747 = scalar_select %p2746, %s2743, 7
        %s2748 = smul.addr %s2745, 8
        %s2749 = sadd.s32 %s2747, %s2748
        %s2750 = smul.addr %s2749, 8
        %s2751 = scalar_lea.vmem %s11, %s2750
      $region84: #{wavelet_block_forward.6} parent=79 // pred_fallthru
        _
      // Predicated region
      $region85: #{wavelet_block_forward.6} parent=79 // pred_check
        %p2752 = pneg %p347
      $region86: #{wavelet_block_forward.6} parent=79 // pred_check_branch
        %2754 = sbr.rel (%p2752) target = $region88
      $region87: #{wavelet_block_forward.6} parent=79 // pred_region
        %s2755 = smul.u32 8, %s31
        %p2756 = scmp.lt.s32.totalorder %s30, 1
        %s2757 = scalar_select %p2756, %s30, 1
        %p2758 = scmp.lt.s32.totalorder %s2755, 7
        %s2759 = scalar_select %p2758, %s2755, 7
        %s2760 = smul.addr %s2757, 32
        %s2761 = sadd.s32 %s2759, %s2760
        %s2762 = smul.addr %s2761, 8
        %s2763 = scalar_lea.vmem %s12, %s2762
      $region88: #{wavelet_block_forward.6} parent=79 // pred_fallthru
        _
    $region80: #{wavelet_block_forward.6} parent=5 // pred_fallthru
      _
  $region6: #{wavelet_block_forward.6} parent=0 // loop_footer
    %s23 = sadd.s32 1, %s19
  $region7: #{wavelet_block_forward.6} parent=0 // loop_footer_branch
    %18 = sbr.rel target = $region3
  $region8: #{wavelet_block_forward.6} parent=0 // loop_exit
    _

</llo_original>
